<compile_context>
chip_gen: v5e
topology: v5e:2x2
jax: 0.10.0
libtpu: 0.0.40
codegen_flags: <defaults>
</compile_context>

<pallas_src>
import jax
import jax.numpy as jnp
from jax.experimental import pallas as pl
from jax.experimental.pallas import tpu as pltpu

NUM_CLASSES = 10
EMB_DIM = 10
EMB_PAD = 16          # embedding rows padded 10 -> 16 (sublane-friendly one-hot K)
H1, H2, H3 = 1024, 512, 256
LANE = 128


def _round_up(x, m):
    return (x + m - 1) // m * m


def _num_tensorcores_per_chip():
    """Best-effort query of TensorCores per chip (v7x=2); safe fallback to 1."""
    try:
        d = jax.devices()[0]
        if d.platform != "tpu":
            return 1
        for attr in ("num_cores", "core_count"):
            v = getattr(d, attr, None)
            if isinstance(v, int) and v > 0:
                return v
    except Exception:
        pass
    return 1


# ----------------------------------------------------------------------------- kernel
def _mlp_kernel(lbl_ref, x_ref,
                w1_ref, wemb_ref, b1_ref,
                w2_ref, b2_ref,
                w3_ref, b3_ref,
                w4_ref, b4_ref,
                out_ref):
    tb = x_ref.shape[0]

    # Fused embedding lookup: one-hot(labels) @ (embedding @ W1_emb). The 0/1
    # one-hot selection is exact, so this equals a per-row gather of the
    # per-class layer-1 contribution, done on the MXU (K=16, negligible cost).
    lbl = lbl_ref[...]                                                  # [TB, 1] i32
    cls = jax.lax.broadcasted_iota(jnp.int32, (tb, wemb_ref.shape[0]), 1)
    onehot = (cls == lbl).astype(jnp.bfloat16)                          # [TB, 16]

    x = x_ref[...].astype(jnp.bfloat16)                                 # [TB, in_dim]

    # hidden_1: Linear(input_dim + 10, 1024) + ReLU   (Dropout(0.3) = eval identity)
    h = (jnp.dot(x, w1_ref[...], preferred_element_type=jnp.float32)
         + jnp.dot(onehot, wemb_ref[...], preferred_element_type=jnp.float32)
         + b1_ref[...])
    h = jnp.maximum(h, 0.0).astype(jnp.bfloat16)

    # hidden_2: Linear(1024, 512) + ReLU
    h = jnp.dot(h, w2_ref[...], preferred_element_type=jnp.float32) + b2_ref[...]
    h = jnp.maximum(h, 0.0).astype(jnp.bfloat16)

    # hidden_3: Linear(512, 256) + ReLU
    h = jnp.dot(h, w3_ref[...], preferred_element_type=jnp.float32) + b3_ref[...]
    h = jnp.maximum(h, 0.0).astype(jnp.bfloat16)

    # hidden_4: Linear(256, out) + Sigmoid (128-lane padded, lane-dense bf16 store).
    # exp and approx reciprocal both land on the EUP slot; clamp vs approx error.
    h = jnp.dot(h, w4_ref[...], preferred_element_type=jnp.float32) + b4_ref[...]
    sig = jnp.minimum(pl.reciprocal(1.0 + jnp.exp(-h), approx=True), 1.0)
    out_ref[...] = sig.astype(out_ref.dtype)


# ----------------------------------------------------------------------------- wrapper
def conditional_discriminator_forward(x, labels, kp, *, tile_b=256, num_cores=None):
    """x: [B, input_dim] float, labels: [B] int, kp: packed kernel params."""
    if num_cores is None:
        num_cores = _num_tensorcores_per_chip()

    B, in_dim = x.shape
    N_pad = kp["w4"].shape[1]
    out_dim = kp["out_dim"]

    # Batch tiling: ~tile_b rows per tile, single tile for small batches,
    # grid rounded to a multiple of the TensorCore count for megacore sharding.
    n_tiles = max(num_cores, pl.cdiv(B, tile_b))
    if num_cores > 1:
        n_tiles = _round_up(n_tiles, num_cores)
    TB = _round_up(pl.cdiv(B, n_tiles), 16)
    B_pad = n_tiles * TB
    grid = (n_tiles,)

    # Only remaining wrapper glue: pad the ragged batch tail (single cheap op each).
    x_pad = jnp.pad(x.astype(jnp.float32), ((0, B_pad - B), (0, 0)))
    lbl_pad = jnp.pad(labels.astype(jnp.int32), (0, B_pad - B)).reshape(B_pad, 1)

    def const_spec(shape):  # weights/biases: constant block index -> resident in VMEM
        return pl.BlockSpec(shape, lambda i: (0, 0))

    in_specs = [
        pl.BlockSpec((TB, 1), lambda i: (i, 0)),        # labels
        pl.BlockSpec((TB, in_dim), lambda i: (i, 0)),   # x
        const_spec((in_dim, H1)), const_spec((EMB_PAD, H1)), const_spec((1, H1)),
        const_spec((H1, H2)), const_spec((1, H2)),
        const_spec((H2, H3)), const_spec((1, H3)),
        const_spec((H3, N_pad)), const_spec((1, N_pad)),
    ]
    out_spec = pl.BlockSpec((TB, N_pad), lambda i: (i, 0))

    weight_elems = in_dim * H1 + EMB_PAD * H1 + H1 * H2 + H2 * H3 + H3 * N_pad
    cost = pl.CostEstimate(
        flops=2 * B_pad * weight_elems,
        transcendentals=B_pad * N_pad,
        bytes_accessed=(2 * weight_elems + 4 * (H1 + H2 + H3 + N_pad)
                        + 4 * B_pad * in_dim + 4 * B_pad + 2 * B_pad * N_pad),
    )

    fn = pl.pallas_call(
        _mlp_kernel,
        out_shape=jax.ShapeDtypeStruct((B_pad, N_pad), jnp.bfloat16),
        grid=grid,
        in_specs=in_specs,
        out_specs=out_spec,
        compiler_params=pltpu.CompilerParams(dimension_semantics=("parallel",)),
        cost_estimate=cost,
    )
    out = fn(
        lbl_pad, x_pad,
        kp["w1x"], kp["wemb"], kp["b1"],
        kp["w2"], kp["b2"],
        kp["w3"], kp["b3"],
        kp["w4"], kp["b4"],
    )
    return out[:B, :out_dim].astype(jnp.float32)


# ----------------------------------------------------------------------------- params
def init_params(key, input_dim, output_dim):
    """Deterministic synthetic f32 parameters matching the module's __init__ shapes.

    Linear weights are stored pre-transposed as [in_features, out_features]."""
    in_dim = input_dim + EMB_DIM
    keys = jax.random.split(key, 9)

    def lin(kw, fan_in, fan_out):
        scale = 1.0 / jnp.sqrt(jnp.float32(fan_in))
        return jax.random.uniform(kw, (fan_in, fan_out), jnp.float32, -scale, scale)

    return {
        "embedding": jax.random.normal(keys[0], (NUM_CLASSES, EMB_DIM), jnp.float32),
        "w1": lin(keys[1], in_dim, H1),
        "b1": jax.random.uniform(keys[2], (1, H1), jnp.float32, -0.01, 0.01),
        "w2": lin(keys[3], H1, H2),
        "b2": jax.random.uniform(keys[4], (1, H2), jnp.float32, -0.01, 0.01),
        "w3": lin(keys[5], H2, H3),
        "b3": jax.random.uniform(keys[6], (1, H3), jnp.float32, -0.01, 0.01),
        "w4": lin(keys[7], H3, output_dim),
        "b4": jax.random.uniform(keys[8], (1, output_dim), jnp.float32, -0.01, 0.01),
    }


def pack_params(raw, input_dim, output_dim):
    """bf16 weights; embedding folded into layer 1; last-layer N padded to 128."""
    N_pad = _round_up(max(output_dim, 1), LANE)

    w1 = raw["w1"]                                           # [input_dim + 10, 1024]
    w1x = w1[:input_dim].astype(jnp.bfloat16)                # image part of layer 1
    # Per-class layer-1 contribution: embedding @ W1[input_dim:], padded 10 -> 16 rows.
    wemb_real = (raw["embedding"] @ w1[input_dim:]).astype(jnp.bfloat16)
    wemb = jnp.zeros((EMB_PAD, H1), jnp.bfloat16).at[:NUM_CLASSES].set(wemb_real)

    w4 = jnp.zeros((H3, N_pad), jnp.bfloat16).at[:, :output_dim].set(
        raw["w4"].astype(jnp.bfloat16))
    b4 = jnp.zeros((1, N_pad), jnp.float32).at[:, :output_dim].set(raw["b4"])

    return {
        "w1x": w1x, "wemb": wemb, "b1": raw["b1"].astype(jnp.float32),
        "w2": raw["w2"].astype(jnp.bfloat16), "b2": raw["b2"].astype(jnp.float32),
        "w3": raw["w3"].astype(jnp.bfloat16), "b3": raw["b3"].astype(jnp.float32),
        "w4": w4, "b4": b4,
        "out_dim": output_dim,
    }


def _reference_forward(x, labels, kp):
    """Pure-JAX reference using the same packed (bf16) params / casts."""
    x16 = x.astype(jnp.bfloat16)
    emb_contrib = jnp.take(kp["wemb"], labels, axis=0).astype(jnp.float32)
    h = (jnp.dot(x16, kp["w1x"], preferred_element_type=jnp.float32)
         + emb_contrib + kp["b1"])
    h = jnp.maximum(h, 0.0).astype(jnp.bfloat16)
    h = jnp.maximum(jnp.dot(h, kp["w2"], preferred_element_type=jnp.float32) + kp["b2"],
                    0.0).astype(jnp.bfloat16)
    h = jnp.maximum(jnp.dot(h, kp["w3"], preferred_element_type=jnp.float32) + kp["b3"],
                    0.0).astype(jnp.bfloat16)
    h = jnp.dot(h, kp["w4"], preferred_element_type=jnp.float32) + kp["b4"]
    return jax.nn.sigmoid(h)[:, :kp["out_dim"]].astype(jnp.float32)


# ----------------------------------------------------------------------------- demo
if __name__ == "__main__":
    key = jax.random.PRNGKey(0)
    k_x, k_lbl, k_p = jax.random.split(key, 3)

    batch = 200        # exercises ragged-tail padding / tile selection
    input_dim = 32     # small flattened "image"
    output_dim = 1     # real/fake score

    x = jax.random.normal(k_x, (batch, input_dim), jnp.float32)
    labels = jax.random.randint(k_lbl, (batch,), 0, NUM_CLASSES, jnp.int32)

    raw_params = init_params(k_p, input_dim, output_dim)
    kparams = pack_params(raw_params, input_dim, output_dim)

    out = conditional_discriminator_forward(x, labels, kparams)
    out = jax.block_until_ready(out)

    ref = _reference_forward(x, labels, kparams)

    assert out.shape == (batch, output_dim)
    assert bool(jnp.all((out >= 0.0) & (out <= 1.0)))
    assert bool(jnp.allclose(out, ref, atol=8e-3, rtol=2e-2))
    print("KERNEL_OK")
</pallas_src>

<mosaic_0001>
module attributes {stable_mosaic.version = 11 : i64} {
  func.func @_mlp_kernel(%arg0: i32, %arg1: memref<208x1xi32, #tpu.memory_space<vmem>>, %arg2: memref<208x32xf32, #tpu.memory_space<vmem>>, %arg3: memref<32x1024xbf16, #tpu.memory_space<vmem>>, %arg4: memref<16x1024xbf16, #tpu.memory_space<vmem>>, %arg5: memref<1x1024xf32, #tpu.memory_space<vmem>>, %arg6: memref<1024x512xbf16, #tpu.memory_space<vmem>>, %arg7: memref<1x512xf32, #tpu.memory_space<vmem>>, %arg8: memref<512x256xbf16, #tpu.memory_space<vmem>>, %arg9: memref<1x256xf32, #tpu.memory_space<vmem>>, %arg10: memref<256x128xbf16, #tpu.memory_space<vmem>>, %arg11: memref<1x128xf32, #tpu.memory_space<vmem>>, %arg12: memref<208x128xbf16, #tpu.memory_space<vmem>>) attributes {dimension_semantics = [#tpu.dimension_semantics<parallel>], iteration_bounds = array<i64: 1>, scalar_prefetch = 0 : i64, scratch_operands = 0 : i64, tpu.core_type = #tpu.core_type<tc>, window_params = [{transform_indices = @transform_0, window_bounds = array<i64: 208, 1>}, {transform_indices = @transform_1, window_bounds = array<i64: 208, 32>}, {pipeline_mode = #tpu.pipeline_mode<synchronous>, transform_indices = @transform_2, window_bounds = array<i64: 32, 1024>}, {pipeline_mode = #tpu.pipeline_mode<synchronous>, transform_indices = @transform_3, window_bounds = array<i64: 16, 1024>}, {pipeline_mode = #tpu.pipeline_mode<synchronous>, transform_indices = @transform_4, window_bounds = array<i64: 1, 1024>}, {pipeline_mode = #tpu.pipeline_mode<synchronous>, transform_indices = @transform_5, window_bounds = array<i64: 1024, 512>}, {pipeline_mode = #tpu.pipeline_mode<synchronous>, transform_indices = @transform_6, window_bounds = array<i64: 1, 512>}, {pipeline_mode = #tpu.pipeline_mode<synchronous>, transform_indices = @transform_7, window_bounds = array<i64: 512, 256>}, {pipeline_mode = #tpu.pipeline_mode<synchronous>, transform_indices = @transform_8, window_bounds = array<i64: 1, 256>}, {pipeline_mode = #tpu.pipeline_mode<synchronous>, transform_indices = @transform_9, window_bounds = array<i64: 256, 128>}, {pipeline_mode = #tpu.pipeline_mode<synchronous>, transform_indices = @transform_10, window_bounds = array<i64: 1, 128>}, {transform_indices = @transform_11, window_bounds = array<i64: 208, 128>}]} {
    %c0 = arith.constant 0 : index
    %c0_0 = arith.constant 0 : index
    %0 = vector.load %arg1[%c0, %c0_0] : memref<208x1xi32, #tpu.memory_space<vmem>>, vector<208x1xi32>
    %1 = tpu.iota {dimensions = array<i32: 1>} : vector<208x16xi32>
    %2 = vector.broadcast %0 : vector<208x1xi32> to vector<208x16xi32>
    %3 = arith.cmpi eq, %1, %2 : vector<208x16xi32>
    %4 = arith.extui %3 : vector<208x16xi1> to vector<208x16xi32>
    %5 = arith.sitofp %4 : vector<208x16xi32> to vector<208x16xf32>
    %6 = arith.truncf %5 : vector<208x16xf32> to vector<208x16xbf16>
    %c0_1 = arith.constant 0 : index
    %c0_2 = arith.constant 0 : index
    %7 = vector.load %arg2[%c0_1, %c0_2] : memref<208x32xf32, #tpu.memory_space<vmem>>, vector<208x32xf32>
    %8 = arith.truncf %7 : vector<208x32xf32> to vector<208x32xbf16>
    %c0_3 = arith.constant 0 : index
    %c0_4 = arith.constant 0 : index
    %9 = vector.load %arg3[%c0_3, %c0_4] : memref<32x1024xbf16, #tpu.memory_space<vmem>>, vector<32x1024xbf16>
    %cst = arith.constant dense<0.000000e+00> : vector<208x1024xf32>
    %10 = tpu.matmul %8, %9, %cst {dimension_numbers = #tpu.dot_dimension_numbers<[1], [0], [0], [1], [0, 0, 1, 1], [], []>} : vector<208x32xbf16>, vector<32x1024xbf16>, vector<208x1024xf32> -> vector<208x1024xf32>
    %c0_5 = arith.constant 0 : index
    %c0_6 = arith.constant 0 : index
    %11 = vector.load %arg4[%c0_5, %c0_6] : memref<16x1024xbf16, #tpu.memory_space<vmem>>, vector<16x1024xbf16>
    %cst_7 = arith.constant dense<0.000000e+00> : vector<208x1024xf32>
    %12 = tpu.matmul %6, %11, %cst_7 {dimension_numbers = #tpu.dot_dimension_numbers<[1], [0], [0], [1], [0, 0, 1, 1], [], []>} : vector<208x16xbf16>, vector<16x1024xbf16>, vector<208x1024xf32> -> vector<208x1024xf32>
    %13 = arith.addf %10, %12 : vector<208x1024xf32>
    %c0_8 = arith.constant 0 : index
    %c0_9 = arith.constant 0 : index
    %14 = vector.load %arg5[%c0_8, %c0_9] : memref<1x1024xf32, #tpu.memory_space<vmem>>, vector<1x1024xf32>
    %15 = vector.broadcast %14 : vector<1x1024xf32> to vector<208x1024xf32>
    %16 = arith.addf %13, %15 : vector<208x1024xf32>
    %cst_10 = arith.constant 0.000000e+00 : f32
    %17 = vector.broadcast %cst_10 : f32 to vector<208x1024xf32>
    %18 = arith.maximumf %16, %17 : vector<208x1024xf32>
    %19 = arith.truncf %18 : vector<208x1024xf32> to vector<208x1024xbf16>
    %c0_11 = arith.constant 0 : index
    %c0_12 = arith.constant 0 : index
    %20 = vector.load %arg6[%c0_11, %c0_12] : memref<1024x512xbf16, #tpu.memory_space<vmem>>, vector<1024x512xbf16>
    %cst_13 = arith.constant dense<0.000000e+00> : vector<208x512xf32>
    %21 = tpu.matmul %19, %20, %cst_13 {dimension_numbers = #tpu.dot_dimension_numbers<[1], [0], [0], [1], [0, 0, 1, 1], [], []>} : vector<208x1024xbf16>, vector<1024x512xbf16>, vector<208x512xf32> -> vector<208x512xf32>
    %c0_14 = arith.constant 0 : index
    %c0_15 = arith.constant 0 : index
    %22 = vector.load %arg7[%c0_14, %c0_15] : memref<1x512xf32, #tpu.memory_space<vmem>>, vector<1x512xf32>
    %23 = vector.broadcast %22 : vector<1x512xf32> to vector<208x512xf32>
    %24 = arith.addf %21, %23 : vector<208x512xf32>
    %cst_16 = arith.constant 0.000000e+00 : f32
    %25 = vector.broadcast %cst_16 : f32 to vector<208x512xf32>
    %26 = arith.maximumf %24, %25 : vector<208x512xf32>
    %27 = arith.truncf %26 : vector<208x512xf32> to vector<208x512xbf16>
    %c0_17 = arith.constant 0 : index
    %c0_18 = arith.constant 0 : index
    %28 = vector.load %arg8[%c0_17, %c0_18] : memref<512x256xbf16, #tpu.memory_space<vmem>>, vector<512x256xbf16>
    %cst_19 = arith.constant dense<0.000000e+00> : vector<208x256xf32>
    %29 = tpu.matmul %27, %28, %cst_19 {dimension_numbers = #tpu.dot_dimension_numbers<[1], [0], [0], [1], [0, 0, 1, 1], [], []>} : vector<208x512xbf16>, vector<512x256xbf16>, vector<208x256xf32> -> vector<208x256xf32>
    %c0_20 = arith.constant 0 : index
    %c0_21 = arith.constant 0 : index
    %30 = vector.load %arg9[%c0_20, %c0_21] : memref<1x256xf32, #tpu.memory_space<vmem>>, vector<1x256xf32>
    %31 = vector.broadcast %30 : vector<1x256xf32> to vector<208x256xf32>
    %32 = arith.addf %29, %31 : vector<208x256xf32>
    %cst_22 = arith.constant 0.000000e+00 : f32
    %33 = vector.broadcast %cst_22 : f32 to vector<208x256xf32>
    %34 = arith.maximumf %32, %33 : vector<208x256xf32>
    %35 = arith.truncf %34 : vector<208x256xf32> to vector<208x256xbf16>
    %c0_23 = arith.constant 0 : index
    %c0_24 = arith.constant 0 : index
    %36 = vector.load %arg10[%c0_23, %c0_24] : memref<256x128xbf16, #tpu.memory_space<vmem>>, vector<256x128xbf16>
    %cst_25 = arith.constant dense<0.000000e+00> : vector<208x128xf32>
    %37 = tpu.matmul %35, %36, %cst_25 {dimension_numbers = #tpu.dot_dimension_numbers<[1], [0], [0], [1], [0, 0, 1, 1], [], []>} : vector<208x256xbf16>, vector<256x128xbf16>, vector<208x128xf32> -> vector<208x128xf32>
    %c0_26 = arith.constant 0 : index
    %c0_27 = arith.constant 0 : index
    %38 = vector.load %arg11[%c0_26, %c0_27] : memref<1x128xf32, #tpu.memory_space<vmem>>, vector<1x128xf32>
    %39 = vector.broadcast %38 : vector<1x128xf32> to vector<208x128xf32>
    %40 = arith.addf %37, %39 : vector<208x128xf32>
    %cst_28 = arith.constant 0.000000e+00 : f32
    %41 = vector.broadcast %cst_28 : f32 to vector<208x128xf32>
    %42 = arith.subf %41, %40 : vector<208x128xf32>
    %43 = math.exp %42 : vector<208x128xf32>
    %cst_29 = arith.constant 1.000000e+00 : f32
    %44 = vector.broadcast %cst_29 : f32 to vector<208x128xf32>
    %45 = arith.addf %44, %43 : vector<208x128xf32>
    %46 = tpu.reciprocal %45 {approx = true} : vector<208x128xf32> -> vector<208x128xf32>
    %cst_30 = arith.constant 1.000000e+00 : f32
    %47 = vector.broadcast %cst_30 : f32 to vector<208x128xf32>
    %48 = arith.minimumf %46, %47 : vector<208x128xf32>
    %49 = arith.truncf %48 : vector<208x128xf32> to vector<208x128xbf16>
    %c0_31 = arith.constant 0 : index
    %c0_32 = arith.constant 0 : index
    %50 = vector.load %arg12[%c0_31, %c0_32] : memref<208x128xbf16, #tpu.memory_space<vmem>>, vector<208x128xbf16>
    tpu.vector_store %arg12[%c0_31, %c0_32], %49 {strides = array<i32>} : memref<208x128xbf16, #tpu.memory_space<vmem>>, vector<208x128xbf16>,
    return
  }
  func.func @transform_0(%arg0: i32) -> (i32, i32) {
    %c0_i32 = arith.constant 0 : i32
    %c0_i32_0 = arith.constant 0 : i32
    return %arg0, %c0_i32 : i32, i32
  }
  func.func @transform_1(%arg0: i32) -> (i32, i32) {
    %c0_i32 = arith.constant 0 : i32
    %c0_i32_0 = arith.constant 0 : i32
    return %arg0, %c0_i32 : i32, i32
  }
  func.func @transform_2(%arg0: i32) -> (i32, i32) {
    %c0_i32 = arith.constant 0 : i32
    %c0_i32_0 = arith.constant 0 : i32
    %c0_i32_1 = arith.constant 0 : i32
    return %c0_i32, %c0_i32_0 : i32, i32
  }
  func.func @transform_3(%arg0: i32) -> (i32, i32) {
    %c0_i32 = arith.constant 0 : i32
    %c0_i32_0 = arith.constant 0 : i32
    %c0_i32_1 = arith.constant 0 : i32
    return %c0_i32, %c0_i32_0 : i32, i32
  }
  func.func @transform_4(%arg0: i32) -> (i32, i32) {
    %c0_i32 = arith.constant 0 : i32
    %c0_i32_0 = arith.constant 0 : i32
    %c0_i32_1 = arith.constant 0 : i32
    return %c0_i32, %c0_i32_0 : i32, i32
  }
  func.func @transform_5(%arg0: i32) -> (i32, i32) {
    %c0_i32 = arith.constant 0 : i32
    %c0_i32_0 = arith.constant 0 : i32
    %c0_i32_1 = arith.constant 0 : i32
    return %c0_i32, %c0_i32_0 : i32, i32
  }
  func.func @transform_6(%arg0: i32) -> (i32, i32) {
    %c0_i32 = arith.constant 0 : i32
    %c0_i32_0 = arith.constant 0 : i32
    %c0_i32_1 = arith.constant 0 : i32
    return %c0_i32, %c0_i32_0 : i32, i32
  }
  func.func @transform_7(%arg0: i32) -> (i32, i32) {
    %c0_i32 = arith.constant 0 : i32
    %c0_i32_0 = arith.constant 0 : i32
    %c0_i32_1 = arith.constant 0 : i32
    return %c0_i32, %c0_i32_0 : i32, i32
  }
  func.func @transform_8(%arg0: i32) -> (i32, i32) {
    %c0_i32 = arith.constant 0 : i32
    %c0_i32_0 = arith.constant 0 : i32
    %c0_i32_1 = arith.constant 0 : i32
    return %c0_i32, %c0_i32_0 : i32, i32
  }
  func.func @transform_9(%arg0: i32) -> (i32, i32) {
    %c0_i32 = arith.constant 0 : i32
    %c0_i32_0 = arith.constant 0 : i32
    %c0_i32_1 = arith.constant 0 : i32
    return %c0_i32, %c0_i32_0 : i32, i32
  }
  func.func @transform_10(%arg0: i32) -> (i32, i32) {
    %c0_i32 = arith.constant 0 : i32
    %c0_i32_0 = arith.constant 0 : i32
    %c0_i32_1 = arith.constant 0 : i32
    return %c0_i32, %c0_i32_0 : i32, i32
  }
  func.func @transform_11(%arg0: i32) -> (i32, i32) {
    %c0_i32 = arith.constant 0 : i32
    %c0_i32_0 = arith.constant 0 : i32
    return %arg0, %c0_i32 : i32, i32
  }
}

</mosaic_0001>

<llo_original>
// kernel: tpu_custom_call.1
$region0: #{tpu_custom_call.1}
  #allocation0 [shape = 'u32[]', space=smem, size = 0x4, offset = 0x4, fixed_abs, tag = 'smem constant byte address 0x4 - core index']
  #allocation1 [shape = 'u32[72,128]{1,0:T(1,128)}', space=vmem, size = 0x9000, scoped, tag = 'internal scratch']
  %s0 = inlined_call_operand.vmem [shape: s32[208,1], index: 0, kind: input, shape index: {}]
  %s1 = inlined_call_operand.vmem [shape: f32[208,32], index: 1, kind: input, shape index: {}]
  %s2 = inlined_call_operand.vmem [shape: bf16[32,1024], index: 2, kind: input, shape index: {}]
  %s3 = inlined_call_operand.vmem [shape: bf16[16,1024], index: 3, kind: input, shape index: {}]
  %s4 = inlined_call_operand.vmem [shape: f32[1,1024], index: 4, kind: input, shape index: {}]
  %s5 = inlined_call_operand.hbm [shape: bf16[1024,512], index: 5, kind: input, shape index: {}]
  %s6 = inlined_call_operand.vmem [shape: f32[1,512], index: 6, kind: input, shape index: {}]
  %s7 = inlined_call_operand.hbm [shape: bf16[512,256], index: 7, kind: input, shape index: {}]
  %s8 = inlined_call_operand.vmem [shape: f32[1,256], index: 8, kind: input, shape index: {}]
  %s9 = inlined_call_operand.vmem [shape: bf16[256,128], index: 9, kind: input, shape index: {}]
  %s10 = inlined_call_operand.vmem [shape: f32[1,128], index: 10, kind: input, shape index: {}]
  %s11 = inlined_call_operand.hbm [shape: bf16[208,128], index: 11, kind: output, shape index: {}]
  %s12 = sld [smem:[#allocation0]]
  $region62: #{tpu_custom_call.1} parent=0
    _
  %s14 = ssub.s32 1, %s12
  %s15 = scalar_select 0, %s14, %s12
  $region1: #{tpu_custom_call.1} parent=0
    #allocation2 [shape = 'u8[1048576]{0}', space=vmem, size = 0x100000, scoped, tag = 'input window, operand 5, single buffered']
    #allocation3 [shape = 's32[1]{0}', space=sflag, size = 0x4, scoped, tag = 'scoped memory for tpu_custom_call.1']
    #allocation4 [shape = 's32[1]{0}', space=sflag, size = 0x4, scoped, tag = 'scoped memory for tpu_custom_call.1']
    #allocation5 [shape = 'u8[262144]{0}', space=vmem, size = 0x40000, scoped, tag = 'input window, operand 7, single buffered']
    #allocation6 [shape = 's32[1]{0}', space=sflag, size = 0x4, scoped, tag = 'scoped memory for tpu_custom_call.1']
    #allocation7 [shape = 'u8[53248]{0}', space=vmem, size = 0xd000, scoped, tag = 'output window, operand 0, single buffered']
    %16 = vsyncpa [#allocation3], 0
    %17 = vsyncpa [#allocation6], 0
    %18 = vsyncpa [#allocation4], 0
    // Predicated region
    $region2: #{tpu_custom_call.1} parent=1 // pred_check
      _
    $region3: #{tpu_custom_call.1} parent=1 // pred_check_branch
      %20 = sbr.rel (0) target = $region5
    $region4: #{tpu_custom_call.1} parent=1 // pred_region
      _
    $region5: #{tpu_custom_call.1} parent=1 // pred_fallthru
      _
    // Predicated region
    $region6: #{tpu_custom_call.1} parent=1 // pred_check
      _
    $region7: #{tpu_custom_call.1} parent=1 // pred_check_branch
      %22 = sbr.rel (0) target = $region9
    $region8: #{tpu_custom_call.1} parent=1 // pred_region
      _
    $region9: #{tpu_custom_call.1} parent=1 // pred_fallthru
      _
    // Predicated region
    $region10: #{tpu_custom_call.1} parent=1 // pred_check
      _
    $region11: #{tpu_custom_call.1} parent=1 // pred_check_branch
      %24 = sbr.rel (0) target = $region13
    $region12: #{tpu_custom_call.1} parent=1 // pred_region
      _
    $region13: #{tpu_custom_call.1} parent=1 // pred_fallthru
      _
    // Predicated region
    $region14: #{tpu_custom_call.1} parent=1 // pred_check
      _
    $region15: #{tpu_custom_call.1} parent=1 // pred_check_branch
      %26 = sbr.rel (0) target = $region17
    $region16: #{tpu_custom_call.1} parent=1 // pred_region
      _
    $region17: #{tpu_custom_call.1} parent=1 // pred_fallthru
      _
    // Predicated region
    $region18: #{tpu_custom_call.1} parent=1 // pred_check
      _
    $region19: #{tpu_custom_call.1} parent=1 // pred_check_branch
      %28 = sbr.rel (0) target = $region21
    $region20: #{tpu_custom_call.1} parent=1 // pred_region
      _
    $region21: #{tpu_custom_call.1} parent=1 // pred_fallthru
      _
    // Predicated region
    $region22: #{tpu_custom_call.1} parent=1 // pred_check
      _
    $region23: #{tpu_custom_call.1} parent=1 // pred_check_branch
      %30 = sbr.rel (0) target = $region25
    $region24: #{tpu_custom_call.1} parent=1 // pred_region
      %32 = vsyncadd [#allocation3], 0
      %s33 = sshll.u32 %s5, 4
      %s34 = int_to_ptr.hbm [resolvable:$true] %s33
      %s35 = sshll.u32 [#allocation2], 4
      %s36 = int_to_ptr.vmem [resolvable:$true] %s35
      %41 = dma.hbm_to_vmem [thread:$0]  %s34, 32768, %s36, [#allocation3], 256, 256, 16
    $region25: #{tpu_custom_call.1} parent=1 // pred_fallthru
      _
    // Predicated region
    $region26: #{tpu_custom_call.1} parent=1 // pred_check
      _
    $region27: #{tpu_custom_call.1} parent=1 // pred_check_branch
      %43 = sbr.rel (0) target = $region29
    $region28: #{tpu_custom_call.1} parent=1 // pred_region
      _
    $region29: #{tpu_custom_call.1} parent=1 // pred_fallthru
      _
    // Predicated region
    $region30: #{tpu_custom_call.1} parent=1 // pred_check
      _
    $region31: #{tpu_custom_call.1} parent=1 // pred_check_branch
      %45 = sbr.rel (0) target = $region33
    $region32: #{tpu_custom_call.1} parent=1 // pred_region
      %47 = vsyncadd [#allocation6], 0
      %s48 = sshll.u32 %s7, 4
      %s49 = int_to_ptr.hbm [resolvable:$true] %s48
      %s50 = sshll.u32 [#allocation5], 4
      %s51 = int_to_ptr.vmem [resolvable:$true] %s50
      %56 = dma.hbm_to_vmem [thread:$0]  %s49, 8192, %s51, [#allocation6], 128, 128, 8
    $region33: #{tpu_custom_call.1} parent=1 // pred_fallthru
      _
    // Predicated region
    $region34: #{tpu_custom_call.1} parent=1 // pred_check
      _
    $region35: #{tpu_custom_call.1} parent=1 // pred_check_branch
      %58 = sbr.rel (0) target = $region37
    $region36: #{tpu_custom_call.1} parent=1 // pred_region
      _
    $region37: #{tpu_custom_call.1} parent=1 // pred_fallthru
      _
    // Predicated region
    $region38: #{tpu_custom_call.1} parent=1 // pred_check
      _
    $region39: #{tpu_custom_call.1} parent=1 // pred_check_branch
      %60 = sbr.rel (0) target = $region41
    $region40: #{tpu_custom_call.1} parent=1 // pred_region
      _
    $region41: #{tpu_custom_call.1} parent=1 // pred_fallthru
      _
    // Predicated region
    $region42: #{tpu_custom_call.1} parent=1 // pred_check
      _
    $region43: #{tpu_custom_call.1} parent=1 // pred_check_branch
      %62 = sbr.rel (0) target = $region45
    $region44: #{tpu_custom_call.1} parent=1 // pred_region
      _
    $region45: #{tpu_custom_call.1} parent=1 // pred_fallthru
      _
    // Predicated region
    $region46: #{tpu_custom_call.1} parent=1 // pred_check
      _
    $region47: #{tpu_custom_call.1} parent=1 // pred_check_branch
      %64 = sbr.rel (0) target = $region49
    $region48: #{tpu_custom_call.1} parent=1 // pred_region
      %66 = dma.done [#allocation3], 32768
    $region49: #{tpu_custom_call.1} parent=1 // pred_fallthru
      _
    // Predicated region
    $region50: #{tpu_custom_call.1} parent=1 // pred_check
      _
    $region51: #{tpu_custom_call.1} parent=1 // pred_check_branch
      %68 = sbr.rel (0) target = $region53
    $region52: #{tpu_custom_call.1} parent=1 // pred_region
      %70 = dma.done [#allocation6], 8192
    $region53: #{tpu_custom_call.1} parent=1 // pred_fallthru
      _
    %v72 = vld [vmem:[%s0] sm:$0xff]
    %v73 = vld [vmem:[%s0 + $0x8] sm:$0xff]
    %v74 = vld [vmem:[%s0 + $0x10] sm:$0xff]
    %v75 = vld [vmem:[%s0 + $0x18] sm:$0xff]
    %v76 = vld [vmem:[%s0 + $0x20] sm:$0xff]
    %v77 = vld [vmem:[%s0 + $0x28] sm:$0xff]
    %v78 = vld [vmem:[%s0 + $0x30] sm:$0xff]
    %v79 = vld [vmem:[%s0 + $0x38] sm:$0xff]
    %v80 = vld [vmem:[%s0 + $0x40] sm:$0xff]
    %v81 = vld [vmem:[%s0 + $0x48] sm:$0xff]
    %v82 = vld [vmem:[%s0 + $0x50] sm:$0xff]
    %v83 = vld [vmem:[%s0 + $0x58] sm:$0xff]
    %v84 = vld [vmem:[%s0 + $0x60] sm:$0xff]
    %v85 = vld [vmem:[%s0 + $0x68] sm:$0xff]
    %v86 = vld [vmem:[%s0 + $0x70] sm:$0xff]
    %v87 = vld [vmem:[%s0 + $0x78] sm:$0xff]
    %v88 = vld [vmem:[%s0 + $0x80] sm:$0xff]
    %v89 = vld [vmem:[%s0 + $0x88] sm:$0xff]
    %v90 = vld [vmem:[%s0 + $0x90] sm:$0xff]
    %v91 = vld [vmem:[%s0 + $0x98] sm:$0xff]
    %v92 = vld [vmem:[%s0 + $0xa0] sm:$0xff]
    %v93 = vld [vmem:[%s0 + $0xa8] sm:$0xff]
    %v94 = vld [vmem:[%s0 + $0xb0] sm:$0xff]
    %v95 = vld [vmem:[%s0 + $0xb8] sm:$0xff]
    %v96 = vld [vmem:[%s0 + $0xc0] sm:$0xff]
    %v97 = vld [vmem:[%s0 + $0xc8] sm:$0xff]
    %v98 = vlaneseq
    %v99 = vand.u32 %v98, 127
    %100 = vset.pattern.permute.xlu0 0
    %101 = vperm.xlu0 %100, %v72
    %v102 = vpop.permute.xlu0 %101
    %103 = vset.pattern.permute.xlu0 0
    %104 = vperm.xlu0 %103, %v73
    %v105 = vpop.permute.xlu0 %104
    %106 = vset.pattern.permute.xlu0 0
    %107 = vperm.xlu0 %106, %v74
    %v108 = vpop.permute.xlu0 %107
    %109 = vset.pattern.permute.xlu0 0
    %110 = vperm.xlu0 %109, %v75
    %v111 = vpop.permute.xlu0 %110
    %112 = vset.pattern.permute.xlu0 0
    %113 = vperm.xlu0 %112, %v76
    %v114 = vpop.permute.xlu0 %113
    %115 = vset.pattern.permute.xlu0 0
    %116 = vperm.xlu0 %115, %v77
    %v117 = vpop.permute.xlu0 %116
    %118 = vset.pattern.permute.xlu0 0
    %119 = vperm.xlu0 %118, %v78
    %v120 = vpop.permute.xlu0 %119
    %121 = vset.pattern.permute.xlu0 0
    %122 = vperm.xlu0 %121, %v79
    %v123 = vpop.permute.xlu0 %122
    %124 = vset.pattern.permute.xlu0 0
    %125 = vperm.xlu0 %124, %v80
    %v126 = vpop.permute.xlu0 %125
    %127 = vset.pattern.permute.xlu0 0
    %128 = vperm.xlu0 %127, %v81
    %v129 = vpop.permute.xlu0 %128
    %130 = vset.pattern.permute.xlu0 0
    %131 = vperm.xlu0 %130, %v82
    %v132 = vpop.permute.xlu0 %131
    %133 = vset.pattern.permute.xlu0 0
    %134 = vperm.xlu0 %133, %v83
    %v135 = vpop.permute.xlu0 %134
    %136 = vset.pattern.permute.xlu0 0
    %137 = vperm.xlu0 %136, %v84
    %v138 = vpop.permute.xlu0 %137
    %139 = vset.pattern.permute.xlu0 0
    %140 = vperm.xlu0 %139, %v85
    %v141 = vpop.permute.xlu0 %140
    %142 = vset.pattern.permute.xlu0 0
    %143 = vperm.xlu0 %142, %v86
    %v144 = vpop.permute.xlu0 %143
    %145 = vset.pattern.permute.xlu0 0
    %146 = vperm.xlu0 %145, %v87
    %v147 = vpop.permute.xlu0 %146
    %148 = vset.pattern.permute.xlu0 0
    %149 = vperm.xlu0 %148, %v88
    %v150 = vpop.permute.xlu0 %149
    %151 = vset.pattern.permute.xlu0 0
    %152 = vperm.xlu0 %151, %v89
    %v153 = vpop.permute.xlu0 %152
    %154 = vset.pattern.permute.xlu0 0
    %155 = vperm.xlu0 %154, %v90
    %v156 = vpop.permute.xlu0 %155
    %157 = vset.pattern.permute.xlu0 0
    %158 = vperm.xlu0 %157, %v91
    %v159 = vpop.permute.xlu0 %158
    %160 = vset.pattern.permute.xlu0 0
    %161 = vperm.xlu0 %160, %v92
    %v162 = vpop.permute.xlu0 %161
    %163 = vset.pattern.permute.xlu0 0
    %164 = vperm.xlu0 %163, %v93
    %v165 = vpop.permute.xlu0 %164
    %166 = vset.pattern.permute.xlu0 0
    %167 = vperm.xlu0 %166, %v94
    %v168 = vpop.permute.xlu0 %167
    %169 = vset.pattern.permute.xlu0 0
    %170 = vperm.xlu0 %169, %v95
    %v171 = vpop.permute.xlu0 %170
    %172 = vset.pattern.permute.xlu0 0
    %173 = vperm.xlu0 %172, %v96
    %v174 = vpop.permute.xlu0 %173
    %175 = vset.pattern.permute.xlu0 0
    %176 = vperm.xlu0 %175, %v97
    %v177 = vpop.permute.xlu0 %176
    %vm178 = vcmp.eq.s32.totalorder %v99, %v102
    %vm179 = vcmp.eq.s32.totalorder %v99, %v105
    %vm180 = vcmp.eq.s32.totalorder %v99, %v108
    %vm181 = vcmp.eq.s32.totalorder %v99, %v111
    %vm182 = vcmp.eq.s32.totalorder %v99, %v114
    %vm183 = vcmp.eq.s32.totalorder %v99, %v117
    %vm184 = vcmp.eq.s32.totalorder %v99, %v120
    %vm185 = vcmp.eq.s32.totalorder %v99, %v123
    %vm186 = vcmp.eq.s32.totalorder %v99, %v126
    %vm187 = vcmp.eq.s32.totalorder %v99, %v129
    %vm188 = vcmp.eq.s32.totalorder %v99, %v132
    %vm189 = vcmp.eq.s32.totalorder %v99, %v135
    %vm190 = vcmp.eq.s32.totalorder %v99, %v138
    %vm191 = vcmp.eq.s32.totalorder %v99, %v141
    %vm192 = vcmp.eq.s32.totalorder %v99, %v144
    %vm193 = vcmp.eq.s32.totalorder %v99, %v147
    %vm194 = vcmp.eq.s32.totalorder %v99, %v150
    %vm195 = vcmp.eq.s32.totalorder %v99, %v153
    %vm196 = vcmp.eq.s32.totalorder %v99, %v156
    %vm197 = vcmp.eq.s32.totalorder %v99, %v159
    %vm198 = vcmp.eq.s32.totalorder %v99, %v162
    %vm199 = vcmp.eq.s32.totalorder %v99, %v165
    %vm200 = vcmp.eq.s32.totalorder %v99, %v168
    %vm201 = vcmp.eq.s32.totalorder %v99, %v171
    %vm202 = vcmp.eq.s32.totalorder %v99, %v174
    %vm203 = vcmp.eq.s32.totalorder %v99, %v177
    %v204 = vsel %vm178, 1, 0
    %v205 = vsel %vm179, 1, 0
    %v206 = vsel %vm180, 1, 0
    %v207 = vsel %vm181, 1, 0
    %v208 = vsel %vm182, 1, 0
    %v209 = vsel %vm183, 1, 0
    %v210 = vsel %vm184, 1, 0
    %v211 = vsel %vm185, 1, 0
    %v212 = vsel %vm186, 1, 0
    %v213 = vsel %vm187, 1, 0
    %v214 = vsel %vm188, 1, 0
    %v215 = vsel %vm189, 1, 0
    %v216 = vsel %vm190, 1, 0
    %v217 = vsel %vm191, 1, 0
    %v218 = vsel %vm192, 1, 0
    %v219 = vsel %vm193, 1, 0
    %v220 = vsel %vm194, 1, 0
    %v221 = vsel %vm195, 1, 0
    %v222 = vsel %vm196, 1, 0
    %v223 = vsel %vm197, 1, 0
    %v224 = vsel %vm198, 1, 0
    %v225 = vsel %vm199, 1, 0
    %v226 = vsel %vm200, 1, 0
    %v227 = vsel %vm201, 1, 0
    %v228 = vsel %vm202, 1, 0
    %v229 = vsel %vm203, 1, 0
    %v230 = vcvt.s32.f32 %v204
    %v231 = vcvt.s32.f32 %v205
    %v232 = vcvt.s32.f32 %v206
    %v233 = vcvt.s32.f32 %v207
    %v234 = vcvt.s32.f32 %v208
    %v235 = vcvt.s32.f32 %v209
    %v236 = vcvt.s32.f32 %v210
    %v237 = vcvt.s32.f32 %v211
    %v238 = vcvt.s32.f32 %v212
    %v239 = vcvt.s32.f32 %v213
    %v240 = vcvt.s32.f32 %v214
    %v241 = vcvt.s32.f32 %v215
    %v242 = vcvt.s32.f32 %v216
    %v243 = vcvt.s32.f32 %v217
    %v244 = vcvt.s32.f32 %v218
    %v245 = vcvt.s32.f32 %v219
    %v246 = vcvt.s32.f32 %v220
    %v247 = vcvt.s32.f32 %v221
    %v248 = vcvt.s32.f32 %v222
    %v249 = vcvt.s32.f32 %v223
    %v250 = vcvt.s32.f32 %v224
    %v251 = vcvt.s32.f32 %v225
    %v252 = vcvt.s32.f32 %v226
    %v253 = vcvt.s32.f32 %v227
    %v254 = vcvt.s32.f32 %v228
    %v255 = vcvt.s32.f32 %v229
    %v256 = vpack.c.bf16 %v231, %v230
    %v257 = vpack.c.bf16 %v233, %v232
    %v258 = vpack.c.bf16 %v235, %v234
    %v259 = vpack.c.bf16 %v237, %v236
    %v260 = vpack.c.bf16 %v239, %v238
    %v261 = vpack.c.bf16 %v241, %v240
    %v262 = vpack.c.bf16 %v243, %v242
    %v263 = vpack.c.bf16 %v245, %v244
    %v264 = vpack.c.bf16 %v247, %v246
    %v265 = vpack.c.bf16 %v249, %v248
    %v266 = vpack.c.bf16 %v251, %v250
    %v267 = vpack.c.bf16 %v253, %v252
    %v268 = vpack.c.bf16 %v255, %v254
    %v269 = vld [vmem:[%s1] sm:$0xff]
    %v270 = vld [vmem:[%s1 + $0x8] sm:$0xff]
    %v271 = vld [vmem:[%s1 + $0x10] sm:$0xff]
    %v272 = vld [vmem:[%s1 + $0x18] sm:$0xff]
    %v273 = vld [vmem:[%s1 + $0x20] sm:$0xff]
    %v274 = vld [vmem:[%s1 + $0x28] sm:$0xff]
    %v275 = vld [vmem:[%s1 + $0x30] sm:$0xff]
    %v276 = vld [vmem:[%s1 + $0x38] sm:$0xff]
    %v277 = vld [vmem:[%s1 + $0x40] sm:$0xff]
    %v278 = vld [vmem:[%s1 + $0x48] sm:$0xff]
    %v279 = vld [vmem:[%s1 + $0x50] sm:$0xff]
    %v280 = vld [vmem:[%s1 + $0x58] sm:$0xff]
    %v281 = vld [vmem:[%s1 + $0x60] sm:$0xff]
    %v282 = vld [vmem:[%s1 + $0x68] sm:$0xff]
    %v283 = vld [vmem:[%s1 + $0x70] sm:$0xff]
    %v284 = vld [vmem:[%s1 + $0x78] sm:$0xff]
    %v285 = vld [vmem:[%s1 + $0x80] sm:$0xff]
    %v286 = vld [vmem:[%s1 + $0x88] sm:$0xff]
    %v287 = vld [vmem:[%s1 + $0x90] sm:$0xff]
    %v288 = vld [vmem:[%s1 + $0x98] sm:$0xff]
    %v289 = vld [vmem:[%s1 + $0xa0] sm:$0xff]
    %v290 = vld [vmem:[%s1 + $0xa8] sm:$0xff]
    %v291 = vld [vmem:[%s1 + $0xb0] sm:$0xff]
    %v292 = vld [vmem:[%s1 + $0xb8] sm:$0xff]
    %v293 = vld [vmem:[%s1 + $0xc0] sm:$0xff]
    %v294 = vld [vmem:[%s1 + $0xc8] sm:$0xff]
    %v295 = vpack.c.bf16 %v270, %v269
    %v296 = vpack.c.bf16 %v272, %v271
    %v297 = vpack.c.bf16 %v274, %v273
    %v298 = vpack.c.bf16 %v276, %v275
    %v299 = vpack.c.bf16 %v278, %v277
    %v300 = vpack.c.bf16 %v280, %v279
    %v301 = vpack.c.bf16 %v282, %v281
    %v302 = vpack.c.bf16 %v284, %v283
    %v303 = vpack.c.bf16 %v286, %v285
    %v304 = vpack.c.bf16 %v288, %v287
    %v305 = vpack.c.bf16 %v290, %v289
    %v306 = vpack.c.bf16 %v292, %v291
    %v307 = vpack.c.bf16 %v294, %v293
    %v308 = vld [vmem:[%s2] sm:$0xff]
    %v309 = vld [vmem:[%s2 + $0x8] sm:$0xff]
    %v310 = vld [vmem:[%s2 + $0x10] sm:$0xff]
    %v311 = vld [vmem:[%s2 + $0x18] sm:$0xff]
    %v312 = vld [vmem:[%s2 + $0x20] sm:$0xff]
    %v313 = vld [vmem:[%s2 + $0x28] sm:$0xff]
    %v314 = vld [vmem:[%s2 + $0x30] sm:$0xff]
    %v315 = vld [vmem:[%s2 + $0x38] sm:$0xff]
    %v316 = vld [vmem:[%s2 + $0x40] sm:$0xff]
    %v317 = vld [vmem:[%s2 + $0x48] sm:$0xff]
    %v318 = vld [vmem:[%s2 + $0x50] sm:$0xff]
    %v319 = vld [vmem:[%s2 + $0x58] sm:$0xff]
    %v320 = vld [vmem:[%s2 + $0x60] sm:$0xff]
    %v321 = vld [vmem:[%s2 + $0x68] sm:$0xff]
    %v322 = vld [vmem:[%s2 + $0x70] sm:$0xff]
    %v323 = vld [vmem:[%s2 + $0x78] sm:$0xff]
    %v324 = vld [vmem:[%s3] sm:$0xff]
    %v325 = vld [vmem:[%s3 + $0x8] sm:$0xff]
    %v326 = vld [vmem:[%s3 + $0x10] sm:$0xff]
    %v327 = vld [vmem:[%s3 + $0x18] sm:$0xff]
    %v328 = vld [vmem:[%s3 + $0x20] sm:$0xff]
    %v329 = vld [vmem:[%s3 + $0x28] sm:$0xff]
    %v330 = vld [vmem:[%s3 + $0x30] sm:$0xff]
    %v331 = vld [vmem:[%s3 + $0x38] sm:$0xff]
    %v340 = vunpack.c.l.b16 %v324
    %v341 = vunpack.c.h.b16 %v324
    %v342 = vunpack.c.l.b16 %v325
    %v343 = vunpack.c.h.b16 %v325
    %v344 = vunpack.c.l.b16 %v326
    %v345 = vunpack.c.h.b16 %v326
    %v346 = vunpack.c.l.b16 %v327
    %v347 = vunpack.c.h.b16 %v327
    %v348 = vunpack.c.l.b16 %v328
    %v349 = vunpack.c.h.b16 %v328
    %v350 = vunpack.c.l.b16 %v329
    %v351 = vunpack.c.h.b16 %v329
    %v352 = vunpack.c.l.b16 %v330
    %v353 = vunpack.c.h.b16 %v330
    %v354 = vunpack.c.l.b16 %v331
    %v355 = vunpack.c.h.b16 %v331
    %v356 = vpack.c.b16 %v348, %v340
    %v357 = vpack.c.b16 %v349, %v341
    %v358 = vpack.c.b16 %v350, %v342
    %v359 = vpack.c.b16 %v351, %v343
    %v360 = vpack.c.b16 %v352, %v344
    %v361 = vpack.c.b16 %v353, %v345
    %v362 = vpack.c.b16 %v354, %v346
    %v363 = vpack.c.b16 %v355, %v347
    %vm372 = vcmask 130048
    %v374 = vsel %vm372, %v256, 0
    %v377 = vsel %vm372, %v257, 0
    %v380 = vsel %vm372, %v258, 0
    %v383 = vsel %vm372, %v259, 0
    %v386 = vsel %vm372, %v260, 0
    %v389 = vsel %vm372, %v261, 0
    %v392 = vsel %vm372, %v262, 0
    %v395 = vsel %vm372, %v263, 0
    %v398 = vsel %vm372, %v264, 0
    %v401 = vsel %vm372, %v265, 0
    %v404 = vsel %vm372, %v266, 0
    %v407 = vsel %vm372, %v267, 0
    %v410 = vsel %vm372, %v268, 0
    %412 = vmatpush.bf16.msra.mxu0 0
    %413 = vmatpush.bf16.msra.mxu0 0
    %414 = vmatpush.bf16.msra.mxu0 0
    %415 = vmatpush.bf16.msra.mxu0 0
    %416 = vmatpush.bf16.msra.mxu0 0
    %417 = vmatpush.bf16.msra.mxu0 0
    %418 = vmatpush.bf16.msra.mxu0 0
    %419 = vmatpush.bf16.msra.mxu0 %v356
    %420 = vmatmul.bf16.gmra.mxu0 %v374
    %v421 = vpop.f32.mrf.mxu0
    %v422 = vadd.f32 0.0, %v421
    %v423 = vpop.f32.mrf.mxu0
    %v424 = vadd.f32 0.0, %v423
    %425 = vmatmul.bf16.gmra.mxu0 %v377
    %v426 = vpop.f32.mrf.mxu0
    %v427 = vadd.f32 0.0, %v426
    %v428 = vpop.f32.mrf.mxu0
    %v429 = vadd.f32 0.0, %v428
    %430 = vmatmul.bf16.gmra.mxu0 %v380
    %v431 = vpop.f32.mrf.mxu0
    %v432 = vadd.f32 0.0, %v431
    %v433 = vpop.f32.mrf.mxu0
    %v434 = vadd.f32 0.0, %v433
    %435 = vmatmul.bf16.gmra.mxu0 %v383
    %v436 = vpop.f32.mrf.mxu0
    %v437 = vadd.f32 0.0, %v436
    %v438 = vpop.f32.mrf.mxu0
    %v439 = vadd.f32 0.0, %v438
    %440 = vmatmul.bf16.gmra.mxu0 %v386
    %v441 = vpop.f32.mrf.mxu0
    %v442 = vadd.f32 0.0, %v441
    %v443 = vpop.f32.mrf.mxu0
    %v444 = vadd.f32 0.0, %v443
    %445 = vmatmul.bf16.gmra.mxu0 %v389
    %v446 = vpop.f32.mrf.mxu0
    %v447 = vadd.f32 0.0, %v446
    %v448 = vpop.f32.mrf.mxu0
    %v449 = vadd.f32 0.0, %v448
    %450 = vmatmul.bf16.gmra.mxu0 %v392
    %v451 = vpop.f32.mrf.mxu0
    %v452 = vadd.f32 0.0, %v451
    %v453 = vpop.f32.mrf.mxu0
    %v454 = vadd.f32 0.0, %v453
    %455 = vmatmul.bf16.gmra.mxu0 %v395
    %v456 = vpop.f32.mrf.mxu0
    %v457 = vadd.f32 0.0, %v456
    %v458 = vpop.f32.mrf.mxu0
    %v459 = vadd.f32 0.0, %v458
    %460 = vmatmul.bf16.gmra.mxu0 %v398
    %v461 = vpop.f32.mrf.mxu0
    %v462 = vadd.f32 0.0, %v461
    %v463 = vpop.f32.mrf.mxu0
    %v464 = vadd.f32 0.0, %v463
    %465 = vmatmul.bf16.gmra.mxu0 %v401
    %v466 = vpop.f32.mrf.mxu0
    %v467 = vadd.f32 0.0, %v466
    %v468 = vpop.f32.mrf.mxu0
    %v469 = vadd.f32 0.0, %v468
    %470 = vmatmul.bf16.gmra.mxu0 %v404
    %v471 = vpop.f32.mrf.mxu0
    %v472 = vadd.f32 0.0, %v471
    %v473 = vpop.f32.mrf.mxu0
    %v474 = vadd.f32 0.0, %v473
    %475 = vmatmul.bf16.gmra.mxu0 %v407
    %v476 = vpop.f32.mrf.mxu0
    %v477 = vadd.f32 0.0, %v476
    %v478 = vpop.f32.mrf.mxu0
    %v479 = vadd.f32 0.0, %v478
    %480 = vmatmul.bf16.gmra.mxu0 %v410
    %v481 = vpop.f32.mrf.mxu0
    %v482 = vadd.f32 0.0, %v481
    %v483 = vpop.f32.mrf.mxu0
    %v484 = vadd.f32 0.0, %v483
    %485 = vdwg.mxu0
    %486 = vmatpush.bf16.msra.mxu0 0
    %487 = vmatpush.bf16.msra.mxu0 0
    %488 = vmatpush.bf16.msra.mxu0 0
    %489 = vmatpush.bf16.msra.mxu0 0
    %490 = vmatpush.bf16.msra.mxu0 0
    %491 = vmatpush.bf16.msra.mxu0 0
    %492 = vmatpush.bf16.msra.mxu0 0
    %493 = vmatpush.bf16.msra.mxu0 %v357
    %494 = vmatmul.bf16.gmra.mxu0 %v374
    %v495 = vpop.f32.mrf.mxu0
    %v496 = vadd.f32 0.0, %v495
    %v497 = vpop.f32.mrf.mxu0
    %v498 = vadd.f32 0.0, %v497
    %499 = vmatmul.bf16.gmra.mxu0 %v377
    %v500 = vpop.f32.mrf.mxu0
    %v501 = vadd.f32 0.0, %v500
    %v502 = vpop.f32.mrf.mxu0
    %v503 = vadd.f32 0.0, %v502
    %504 = vmatmul.bf16.gmra.mxu0 %v380
    %v505 = vpop.f32.mrf.mxu0
    %v506 = vadd.f32 0.0, %v505
    %v507 = vpop.f32.mrf.mxu0
    %v508 = vadd.f32 0.0, %v507
    %509 = vmatmul.bf16.gmra.mxu0 %v383
    %v510 = vpop.f32.mrf.mxu0
    %v511 = vadd.f32 0.0, %v510
    %v512 = vpop.f32.mrf.mxu0
    %v513 = vadd.f32 0.0, %v512
    %514 = vmatmul.bf16.gmra.mxu0 %v386
    %v515 = vpop.f32.mrf.mxu0
    %v516 = vadd.f32 0.0, %v515
    %v517 = vpop.f32.mrf.mxu0
    %v518 = vadd.f32 0.0, %v517
    %519 = vmatmul.bf16.gmra.mxu0 %v389
    %v520 = vpop.f32.mrf.mxu0
    %v521 = vadd.f32 0.0, %v520
    %v522 = vpop.f32.mrf.mxu0
    %v523 = vadd.f32 0.0, %v522
    %524 = vmatmul.bf16.gmra.mxu0 %v392
    %v525 = vpop.f32.mrf.mxu0
    %v526 = vadd.f32 0.0, %v525
    %v527 = vpop.f32.mrf.mxu0
    %v528 = vadd.f32 0.0, %v527
    %529 = vmatmul.bf16.gmra.mxu0 %v395
    %v530 = vpop.f32.mrf.mxu0
    %v531 = vadd.f32 0.0, %v530
    %v532 = vpop.f32.mrf.mxu0
    %v533 = vadd.f32 0.0, %v532
    %534 = vmatmul.bf16.gmra.mxu0 %v398
    %v535 = vpop.f32.mrf.mxu0
    %v536 = vadd.f32 0.0, %v535
    %v537 = vpop.f32.mrf.mxu0
    %v538 = vadd.f32 0.0, %v537
    %539 = vmatmul.bf16.gmra.mxu0 %v401
    %v540 = vpop.f32.mrf.mxu0
    %v541 = vadd.f32 0.0, %v540
    %v542 = vpop.f32.mrf.mxu0
    %v543 = vadd.f32 0.0, %v542
    %544 = vmatmul.bf16.gmra.mxu0 %v404
    %v545 = vpop.f32.mrf.mxu0
    %v546 = vadd.f32 0.0, %v545
    %v547 = vpop.f32.mrf.mxu0
    %v548 = vadd.f32 0.0, %v547
    %549 = vmatmul.bf16.gmra.mxu0 %v407
    %v550 = vpop.f32.mrf.mxu0
    %v551 = vadd.f32 0.0, %v550
    %v552 = vpop.f32.mrf.mxu0
    %v553 = vadd.f32 0.0, %v552
    %554 = vmatmul.bf16.gmra.mxu0 %v410
    %v555 = vpop.f32.mrf.mxu0
    %v556 = vadd.f32 0.0, %v555
    %v557 = vpop.f32.mrf.mxu0
    %v558 = vadd.f32 0.0, %v557
    %559 = vdwg.mxu0
    %560 = vmatpush.bf16.msra.mxu0 0
    %561 = vmatpush.bf16.msra.mxu0 0
    %562 = vmatpush.bf16.msra.mxu0 0
    %563 = vmatpush.bf16.msra.mxu0 0
    %564 = vmatpush.bf16.msra.mxu0 0
    %565 = vmatpush.bf16.msra.mxu0 0
    %566 = vmatpush.bf16.msra.mxu0 0
    %567 = vmatpush.bf16.msra.mxu0 %v358
    %568 = vmatmul.bf16.gmra.mxu0 %v374
    %v569 = vpop.f32.mrf.mxu0
    %v570 = vadd.f32 0.0, %v569
    %v571 = vpop.f32.mrf.mxu0
    %v572 = vadd.f32 0.0, %v571
    %573 = vmatmul.bf16.gmra.mxu0 %v377
    %v574 = vpop.f32.mrf.mxu0
    %v575 = vadd.f32 0.0, %v574
    %v576 = vpop.f32.mrf.mxu0
    %v577 = vadd.f32 0.0, %v576
    %578 = vmatmul.bf16.gmra.mxu0 %v380
    %v579 = vpop.f32.mrf.mxu0
    %v580 = vadd.f32 0.0, %v579
    %v581 = vpop.f32.mrf.mxu0
    %v582 = vadd.f32 0.0, %v581
    %583 = vmatmul.bf16.gmra.mxu0 %v383
    %v584 = vpop.f32.mrf.mxu0
    %v585 = vadd.f32 0.0, %v584
    %v586 = vpop.f32.mrf.mxu0
    %v587 = vadd.f32 0.0, %v586
    %588 = vmatmul.bf16.gmra.mxu0 %v386
    %v589 = vpop.f32.mrf.mxu0
    %v590 = vadd.f32 0.0, %v589
    %v591 = vpop.f32.mrf.mxu0
    %v592 = vadd.f32 0.0, %v591
    %593 = vmatmul.bf16.gmra.mxu0 %v389
    %v594 = vpop.f32.mrf.mxu0
    %v595 = vadd.f32 0.0, %v594
    %v596 = vpop.f32.mrf.mxu0
    %v597 = vadd.f32 0.0, %v596
    %598 = vmatmul.bf16.gmra.mxu0 %v392
    %v599 = vpop.f32.mrf.mxu0
    %v600 = vadd.f32 0.0, %v599
    %v601 = vpop.f32.mrf.mxu0
    %v602 = vadd.f32 0.0, %v601
    %603 = vmatmul.bf16.gmra.mxu0 %v395
    %v604 = vpop.f32.mrf.mxu0
    %v605 = vadd.f32 0.0, %v604
    %v606 = vpop.f32.mrf.mxu0
    %v607 = vadd.f32 0.0, %v606
    %608 = vmatmul.bf16.gmra.mxu0 %v398
    %v609 = vpop.f32.mrf.mxu0
    %v610 = vadd.f32 0.0, %v609
    %v611 = vpop.f32.mrf.mxu0
    %v612 = vadd.f32 0.0, %v611
    %613 = vmatmul.bf16.gmra.mxu0 %v401
    %v614 = vpop.f32.mrf.mxu0
    %v615 = vadd.f32 0.0, %v614
    %v616 = vpop.f32.mrf.mxu0
    %v617 = vadd.f32 0.0, %v616
    %618 = vmatmul.bf16.gmra.mxu0 %v404
    %v619 = vpop.f32.mrf.mxu0
    %v620 = vadd.f32 0.0, %v619
    %v621 = vpop.f32.mrf.mxu0
    %v622 = vadd.f32 0.0, %v621
    %623 = vmatmul.bf16.gmra.mxu0 %v407
    %v624 = vpop.f32.mrf.mxu0
    %v625 = vadd.f32 0.0, %v624
    %v626 = vpop.f32.mrf.mxu0
    %v627 = vadd.f32 0.0, %v626
    %628 = vmatmul.bf16.gmra.mxu0 %v410
    %v629 = vpop.f32.mrf.mxu0
    %v630 = vadd.f32 0.0, %v629
    %v631 = vpop.f32.mrf.mxu0
    %v632 = vadd.f32 0.0, %v631
    %633 = vdwg.mxu0
    %634 = vmatpush.bf16.msra.mxu0 0
    %635 = vmatpush.bf16.msra.mxu0 0
    %636 = vmatpush.bf16.msra.mxu0 0
    %637 = vmatpush.bf16.msra.mxu0 0
    %638 = vmatpush.bf16.msra.mxu0 0
    %639 = vmatpush.bf16.msra.mxu0 0
    %640 = vmatpush.bf16.msra.mxu0 0
    %641 = vmatpush.bf16.msra.mxu0 %v359
    %642 = vmatmul.bf16.gmra.mxu0 %v374
    %v643 = vpop.f32.mrf.mxu0
    %v644 = vadd.f32 0.0, %v643
    %v645 = vpop.f32.mrf.mxu0
    %v646 = vadd.f32 0.0, %v645
    %647 = vmatmul.bf16.gmra.mxu0 %v377
    %v648 = vpop.f32.mrf.mxu0
    %v649 = vadd.f32 0.0, %v648
    %v650 = vpop.f32.mrf.mxu0
    %v651 = vadd.f32 0.0, %v650
    %652 = vmatmul.bf16.gmra.mxu0 %v380
    %v653 = vpop.f32.mrf.mxu0
    %v654 = vadd.f32 0.0, %v653
    %v655 = vpop.f32.mrf.mxu0
    %v656 = vadd.f32 0.0, %v655
    %657 = vmatmul.bf16.gmra.mxu0 %v383
    %v658 = vpop.f32.mrf.mxu0
    %v659 = vadd.f32 0.0, %v658
    %v660 = vpop.f32.mrf.mxu0
    %v661 = vadd.f32 0.0, %v660
    %662 = vmatmul.bf16.gmra.mxu0 %v386
    %v663 = vpop.f32.mrf.mxu0
    %v664 = vadd.f32 0.0, %v663
    %v665 = vpop.f32.mrf.mxu0
    %v666 = vadd.f32 0.0, %v665
    %667 = vmatmul.bf16.gmra.mxu0 %v389
    %v668 = vpop.f32.mrf.mxu0
    %v669 = vadd.f32 0.0, %v668
    %v670 = vpop.f32.mrf.mxu0
    %v671 = vadd.f32 0.0, %v670
    %672 = vmatmul.bf16.gmra.mxu0 %v392
    %v673 = vpop.f32.mrf.mxu0
    %v674 = vadd.f32 0.0, %v673
    %v675 = vpop.f32.mrf.mxu0
    %v676 = vadd.f32 0.0, %v675
    %677 = vmatmul.bf16.gmra.mxu0 %v395
    %v678 = vpop.f32.mrf.mxu0
    %v679 = vadd.f32 0.0, %v678
    %v680 = vpop.f32.mrf.mxu0
    %v681 = vadd.f32 0.0, %v680
    %682 = vmatmul.bf16.gmra.mxu0 %v398
    %v683 = vpop.f32.mrf.mxu0
    %v684 = vadd.f32 0.0, %v683
    %v685 = vpop.f32.mrf.mxu0
    %v686 = vadd.f32 0.0, %v685
    %687 = vmatmul.bf16.gmra.mxu0 %v401
    %v688 = vpop.f32.mrf.mxu0
    %v689 = vadd.f32 0.0, %v688
    %v690 = vpop.f32.mrf.mxu0
    %v691 = vadd.f32 0.0, %v690
    %692 = vmatmul.bf16.gmra.mxu0 %v404
    %v693 = vpop.f32.mrf.mxu0
    %v694 = vadd.f32 0.0, %v693
    %v695 = vpop.f32.mrf.mxu0
    %v696 = vadd.f32 0.0, %v695
    %697 = vmatmul.bf16.gmra.mxu0 %v407
    %v698 = vpop.f32.mrf.mxu0
    %v699 = vadd.f32 0.0, %v698
    %v700 = vpop.f32.mrf.mxu0
    %v701 = vadd.f32 0.0, %v700
    %702 = vmatmul.bf16.gmra.mxu0 %v410
    %v703 = vpop.f32.mrf.mxu0
    %v704 = vadd.f32 0.0, %v703
    %v705 = vpop.f32.mrf.mxu0
    %v706 = vadd.f32 0.0, %v705
    %707 = vdwg.mxu0
    %708 = vmatpush.bf16.msra.mxu0 0
    %709 = vmatpush.bf16.msra.mxu0 0
    %710 = vmatpush.bf16.msra.mxu0 0
    %711 = vmatpush.bf16.msra.mxu0 0
    %712 = vmatpush.bf16.msra.mxu0 0
    %713 = vmatpush.bf16.msra.mxu0 0
    %714 = vmatpush.bf16.msra.mxu0 0
    %715 = vmatpush.bf16.msra.mxu0 %v360
    %716 = vmatmul.bf16.gmra.mxu0 %v374
    %v717 = vpop.f32.mrf.mxu0
    %v718 = vadd.f32 0.0, %v717
    %v719 = vpop.f32.mrf.mxu0
    %v720 = vadd.f32 0.0, %v719
    %721 = vmatmul.bf16.gmra.mxu0 %v377
    %v722 = vpop.f32.mrf.mxu0
    %v723 = vadd.f32 0.0, %v722
    %v724 = vpop.f32.mrf.mxu0
    %v725 = vadd.f32 0.0, %v724
    %726 = vmatmul.bf16.gmra.mxu0 %v380
    %v727 = vpop.f32.mrf.mxu0
    %v728 = vadd.f32 0.0, %v727
    %v729 = vpop.f32.mrf.mxu0
    %v730 = vadd.f32 0.0, %v729
    %731 = vmatmul.bf16.gmra.mxu0 %v383
    %v732 = vpop.f32.mrf.mxu0
    %v733 = vadd.f32 0.0, %v732
    %v734 = vpop.f32.mrf.mxu0
    %v735 = vadd.f32 0.0, %v734
    %736 = vmatmul.bf16.gmra.mxu0 %v386
    %v737 = vpop.f32.mrf.mxu0
    %v738 = vadd.f32 0.0, %v737
    %v739 = vpop.f32.mrf.mxu0
    %v740 = vadd.f32 0.0, %v739
    %741 = vmatmul.bf16.gmra.mxu0 %v389
    %v742 = vpop.f32.mrf.mxu0
    %v743 = vadd.f32 0.0, %v742
    %v744 = vpop.f32.mrf.mxu0
    %v745 = vadd.f32 0.0, %v744
    %746 = vmatmul.bf16.gmra.mxu0 %v392
    %v747 = vpop.f32.mrf.mxu0
    %v748 = vadd.f32 0.0, %v747
    %v749 = vpop.f32.mrf.mxu0
    %v750 = vadd.f32 0.0, %v749
    %751 = vmatmul.bf16.gmra.mxu0 %v395
    %v752 = vpop.f32.mrf.mxu0
    %v753 = vadd.f32 0.0, %v752
    %v754 = vpop.f32.mrf.mxu0
    %v755 = vadd.f32 0.0, %v754
    %756 = vmatmul.bf16.gmra.mxu0 %v398
    %v757 = vpop.f32.mrf.mxu0
    %v758 = vadd.f32 0.0, %v757
    %v759 = vpop.f32.mrf.mxu0
    %v760 = vadd.f32 0.0, %v759
    %761 = vmatmul.bf16.gmra.mxu0 %v401
    %v762 = vpop.f32.mrf.mxu0
    %v763 = vadd.f32 0.0, %v762
    %v764 = vpop.f32.mrf.mxu0
    %v765 = vadd.f32 0.0, %v764
    %766 = vmatmul.bf16.gmra.mxu0 %v404
    %v767 = vpop.f32.mrf.mxu0
    %v768 = vadd.f32 0.0, %v767
    %v769 = vpop.f32.mrf.mxu0
    %v770 = vadd.f32 0.0, %v769
    %771 = vmatmul.bf16.gmra.mxu0 %v407
    %v772 = vpop.f32.mrf.mxu0
    %v773 = vadd.f32 0.0, %v772
    %v774 = vpop.f32.mrf.mxu0
    %v775 = vadd.f32 0.0, %v774
    %776 = vmatmul.bf16.gmra.mxu0 %v410
    %v777 = vpop.f32.mrf.mxu0
    %v778 = vadd.f32 0.0, %v777
    %v779 = vpop.f32.mrf.mxu0
    %v780 = vadd.f32 0.0, %v779
    %781 = vdwg.mxu0
    %782 = vmatpush.bf16.msra.mxu0 0
    %783 = vmatpush.bf16.msra.mxu0 0
    %784 = vmatpush.bf16.msra.mxu0 0
    %785 = vmatpush.bf16.msra.mxu0 0
    %786 = vmatpush.bf16.msra.mxu0 0
    %787 = vmatpush.bf16.msra.mxu0 0
    %788 = vmatpush.bf16.msra.mxu0 0
    %789 = vmatpush.bf16.msra.mxu0 %v361
    %790 = vmatmul.bf16.gmra.mxu0 %v374
    %v791 = vpop.f32.mrf.mxu0
    %v792 = vadd.f32 0.0, %v791
    %v793 = vpop.f32.mrf.mxu0
    %v794 = vadd.f32 0.0, %v793
    %795 = vmatmul.bf16.gmra.mxu0 %v377
    %v796 = vpop.f32.mrf.mxu0
    %v797 = vadd.f32 0.0, %v796
    %v798 = vpop.f32.mrf.mxu0
    %v799 = vadd.f32 0.0, %v798
    %800 = vmatmul.bf16.gmra.mxu0 %v380
    %v801 = vpop.f32.mrf.mxu0
    %v802 = vadd.f32 0.0, %v801
    %v803 = vpop.f32.mrf.mxu0
    %v804 = vadd.f32 0.0, %v803
    %805 = vmatmul.bf16.gmra.mxu0 %v383
    %v806 = vpop.f32.mrf.mxu0
    %v807 = vadd.f32 0.0, %v806
    %v808 = vpop.f32.mrf.mxu0
    %v809 = vadd.f32 0.0, %v808
    %810 = vmatmul.bf16.gmra.mxu0 %v386
    %v811 = vpop.f32.mrf.mxu0
    %v812 = vadd.f32 0.0, %v811
    %v813 = vpop.f32.mrf.mxu0
    %v814 = vadd.f32 0.0, %v813
    %815 = vmatmul.bf16.gmra.mxu0 %v389
    %v816 = vpop.f32.mrf.mxu0
    %v817 = vadd.f32 0.0, %v816
    %v818 = vpop.f32.mrf.mxu0
    %v819 = vadd.f32 0.0, %v818
    %820 = vmatmul.bf16.gmra.mxu0 %v392
    %v821 = vpop.f32.mrf.mxu0
    %v822 = vadd.f32 0.0, %v821
    %v823 = vpop.f32.mrf.mxu0
    %v824 = vadd.f32 0.0, %v823
    %825 = vmatmul.bf16.gmra.mxu0 %v395
    %v826 = vpop.f32.mrf.mxu0
    %v827 = vadd.f32 0.0, %v826
    %v828 = vpop.f32.mrf.mxu0
    %v829 = vadd.f32 0.0, %v828
    %830 = vmatmul.bf16.gmra.mxu0 %v398
    %v831 = vpop.f32.mrf.mxu0
    %v832 = vadd.f32 0.0, %v831
    %v833 = vpop.f32.mrf.mxu0
    %v834 = vadd.f32 0.0, %v833
    %835 = vmatmul.bf16.gmra.mxu0 %v401
    %v836 = vpop.f32.mrf.mxu0
    %v837 = vadd.f32 0.0, %v836
    %v838 = vpop.f32.mrf.mxu0
    %v839 = vadd.f32 0.0, %v838
    %840 = vmatmul.bf16.gmra.mxu0 %v404
    %v841 = vpop.f32.mrf.mxu0
    %v842 = vadd.f32 0.0, %v841
    %v843 = vpop.f32.mrf.mxu0
    %v844 = vadd.f32 0.0, %v843
    %845 = vmatmul.bf16.gmra.mxu0 %v407
    %v846 = vpop.f32.mrf.mxu0
    %v847 = vadd.f32 0.0, %v846
    %v848 = vpop.f32.mrf.mxu0
    %v849 = vadd.f32 0.0, %v848
    %850 = vmatmul.bf16.gmra.mxu0 %v410
    %v851 = vpop.f32.mrf.mxu0
    %v852 = vadd.f32 0.0, %v851
    %v853 = vpop.f32.mrf.mxu0
    %v854 = vadd.f32 0.0, %v853
    %855 = vdwg.mxu0
    %856 = vmatpush.bf16.msra.mxu0 0
    %857 = vmatpush.bf16.msra.mxu0 0
    %858 = vmatpush.bf16.msra.mxu0 0
    %859 = vmatpush.bf16.msra.mxu0 0
    %860 = vmatpush.bf16.msra.mxu0 0
    %861 = vmatpush.bf16.msra.mxu0 0
    %862 = vmatpush.bf16.msra.mxu0 0
    %863 = vmatpush.bf16.msra.mxu0 %v362
    %864 = vmatmul.bf16.gmra.mxu0 %v374
    %v865 = vpop.f32.mrf.mxu0
    %v866 = vadd.f32 0.0, %v865
    %v867 = vpop.f32.mrf.mxu0
    %v868 = vadd.f32 0.0, %v867
    %869 = vmatmul.bf16.gmra.mxu0 %v377
    %v870 = vpop.f32.mrf.mxu0
    %v871 = vadd.f32 0.0, %v870
    %v872 = vpop.f32.mrf.mxu0
    %v873 = vadd.f32 0.0, %v872
    %874 = vmatmul.bf16.gmra.mxu0 %v380
    %v875 = vpop.f32.mrf.mxu0
    %v876 = vadd.f32 0.0, %v875
    %v877 = vpop.f32.mrf.mxu0
    %v878 = vadd.f32 0.0, %v877
    %879 = vmatmul.bf16.gmra.mxu0 %v383
    %v880 = vpop.f32.mrf.mxu0
    %v881 = vadd.f32 0.0, %v880
    %v882 = vpop.f32.mrf.mxu0
    %v883 = vadd.f32 0.0, %v882
    %884 = vmatmul.bf16.gmra.mxu0 %v386
    %v885 = vpop.f32.mrf.mxu0
    %v886 = vadd.f32 0.0, %v885
    %v887 = vpop.f32.mrf.mxu0
    %v888 = vadd.f32 0.0, %v887
    %889 = vmatmul.bf16.gmra.mxu0 %v389
    %v890 = vpop.f32.mrf.mxu0
    %v891 = vadd.f32 0.0, %v890
    %v892 = vpop.f32.mrf.mxu0
    %v893 = vadd.f32 0.0, %v892
    %894 = vmatmul.bf16.gmra.mxu0 %v392
    %v895 = vpop.f32.mrf.mxu0
    %v896 = vadd.f32 0.0, %v895
    %v897 = vpop.f32.mrf.mxu0
    %v898 = vadd.f32 0.0, %v897
    %899 = vmatmul.bf16.gmra.mxu0 %v395
    %v900 = vpop.f32.mrf.mxu0
    %v901 = vadd.f32 0.0, %v900
    %v902 = vpop.f32.mrf.mxu0
    %v903 = vadd.f32 0.0, %v902
    %904 = vmatmul.bf16.gmra.mxu0 %v398
    %v905 = vpop.f32.mrf.mxu0
    %v906 = vadd.f32 0.0, %v905
    %v907 = vpop.f32.mrf.mxu0
    %v908 = vadd.f32 0.0, %v907
    %909 = vmatmul.bf16.gmra.mxu0 %v401
    %v910 = vpop.f32.mrf.mxu0
    %v911 = vadd.f32 0.0, %v910
    %v912 = vpop.f32.mrf.mxu0
    %v913 = vadd.f32 0.0, %v912
    %914 = vmatmul.bf16.gmra.mxu0 %v404
    %v915 = vpop.f32.mrf.mxu0
    %v916 = vadd.f32 0.0, %v915
    %v917 = vpop.f32.mrf.mxu0
    %v918 = vadd.f32 0.0, %v917
    %919 = vmatmul.bf16.gmra.mxu0 %v407
    %v920 = vpop.f32.mrf.mxu0
    %v921 = vadd.f32 0.0, %v920
    %v922 = vpop.f32.mrf.mxu0
    %v923 = vadd.f32 0.0, %v922
    %924 = vmatmul.bf16.gmra.mxu0 %v410
    %v925 = vpop.f32.mrf.mxu0
    %v926 = vadd.f32 0.0, %v925
    %v927 = vpop.f32.mrf.mxu0
    %v928 = vadd.f32 0.0, %v927
    %929 = vdwg.mxu0
    %930 = vmatpush.bf16.msra.mxu0 0
    %931 = vmatpush.bf16.msra.mxu0 0
    %932 = vmatpush.bf16.msra.mxu0 0
    %933 = vmatpush.bf16.msra.mxu0 0
    %934 = vmatpush.bf16.msra.mxu0 0
    %935 = vmatpush.bf16.msra.mxu0 0
    %936 = vmatpush.bf16.msra.mxu0 0
    %937 = vmatpush.bf16.msra.mxu0 %v363
    %938 = vmatmul.bf16.gmra.mxu0 %v374
    %v939 = vpop.f32.mrf.mxu0
    %v940 = vadd.f32 0.0, %v939
    %v941 = vpop.f32.mrf.mxu0
    %v942 = vadd.f32 0.0, %v941
    %943 = vmatmul.bf16.gmra.mxu0 %v377
    %v944 = vpop.f32.mrf.mxu0
    %v945 = vadd.f32 0.0, %v944
    %v946 = vpop.f32.mrf.mxu0
    %v947 = vadd.f32 0.0, %v946
    %948 = vmatmul.bf16.gmra.mxu0 %v380
    %v949 = vpop.f32.mrf.mxu0
    %v950 = vadd.f32 0.0, %v949
    %v951 = vpop.f32.mrf.mxu0
    %v952 = vadd.f32 0.0, %v951
    %953 = vmatmul.bf16.gmra.mxu0 %v383
    %v954 = vpop.f32.mrf.mxu0
    %v955 = vadd.f32 0.0, %v954
    %v956 = vpop.f32.mrf.mxu0
    %v957 = vadd.f32 0.0, %v956
    %958 = vmatmul.bf16.gmra.mxu0 %v386
    %v959 = vpop.f32.mrf.mxu0
    %v960 = vadd.f32 0.0, %v959
    %v961 = vpop.f32.mrf.mxu0
    %v962 = vadd.f32 0.0, %v961
    %963 = vmatmul.bf16.gmra.mxu0 %v389
    %v964 = vpop.f32.mrf.mxu0
    %v965 = vadd.f32 0.0, %v964
    %v966 = vpop.f32.mrf.mxu0
    %v967 = vadd.f32 0.0, %v966
    %968 = vmatmul.bf16.gmra.mxu0 %v392
    %v969 = vpop.f32.mrf.mxu0
    %v970 = vadd.f32 0.0, %v969
    %v971 = vpop.f32.mrf.mxu0
    %v972 = vadd.f32 0.0, %v971
    %973 = vmatmul.bf16.gmra.mxu0 %v395
    %v974 = vpop.f32.mrf.mxu0
    %v975 = vadd.f32 0.0, %v974
    %v976 = vpop.f32.mrf.mxu0
    %v977 = vadd.f32 0.0, %v976
    %978 = vmatmul.bf16.gmra.mxu0 %v398
    %v979 = vpop.f32.mrf.mxu0
    %v980 = vadd.f32 0.0, %v979
    %v981 = vpop.f32.mrf.mxu0
    %v982 = vadd.f32 0.0, %v981
    %983 = vmatmul.bf16.gmra.mxu0 %v401
    %v984 = vpop.f32.mrf.mxu0
    %v985 = vadd.f32 0.0, %v984
    %v986 = vpop.f32.mrf.mxu0
    %v987 = vadd.f32 0.0, %v986
    %988 = vmatmul.bf16.gmra.mxu0 %v404
    %v989 = vpop.f32.mrf.mxu0
    %v990 = vadd.f32 0.0, %v989
    %v991 = vpop.f32.mrf.mxu0
    %v992 = vadd.f32 0.0, %v991
    %993 = vmatmul.bf16.gmra.mxu0 %v407
    %v994 = vpop.f32.mrf.mxu0
    %v995 = vadd.f32 0.0, %v994
    %v996 = vpop.f32.mrf.mxu0
    %v997 = vadd.f32 0.0, %v996
    %998 = vmatmul.bf16.gmra.mxu0 %v410
    %v999 = vpop.f32.mrf.mxu0
    %v1000 = vadd.f32 0.0, %v999
    %v1001 = vpop.f32.mrf.mxu0
    %v1002 = vadd.f32 0.0, %v1001
    %1003 = vdwg.mxu0
    %v1020 = vunpack.c.l.b16 %v308
    %v1021 = vunpack.c.h.b16 %v308
    %v1022 = vunpack.c.l.b16 %v309
    %v1023 = vunpack.c.h.b16 %v309
    %v1024 = vunpack.c.l.b16 %v310
    %v1025 = vunpack.c.h.b16 %v310
    %v1026 = vunpack.c.l.b16 %v311
    %v1027 = vunpack.c.h.b16 %v311
    %v1028 = vunpack.c.l.b16 %v312
    %v1029 = vunpack.c.h.b16 %v312
    %v1030 = vunpack.c.l.b16 %v313
    %v1031 = vunpack.c.h.b16 %v313
    %v1032 = vunpack.c.l.b16 %v314
    %v1033 = vunpack.c.h.b16 %v314
    %v1034 = vunpack.c.l.b16 %v315
    %v1035 = vunpack.c.h.b16 %v315
    %v1036 = vunpack.c.l.b16 %v316
    %v1037 = vunpack.c.h.b16 %v316
    %v1038 = vunpack.c.l.b16 %v317
    %v1039 = vunpack.c.h.b16 %v317
    %v1040 = vunpack.c.l.b16 %v318
    %v1041 = vunpack.c.h.b16 %v318
    %v1042 = vunpack.c.l.b16 %v319
    %v1043 = vunpack.c.h.b16 %v319
    %v1044 = vunpack.c.l.b16 %v320
    %v1045 = vunpack.c.h.b16 %v320
    %v1046 = vunpack.c.l.b16 %v321
    %v1047 = vunpack.c.h.b16 %v321
    %v1048 = vunpack.c.l.b16 %v322
    %v1049 = vunpack.c.h.b16 %v322
    %v1050 = vunpack.c.l.b16 %v323
    %v1051 = vunpack.c.h.b16 %v323
    %v1052 = vpack.c.b16 %v1028, %v1020
    %v1053 = vpack.c.b16 %v1029, %v1021
    %v1054 = vpack.c.b16 %v1030, %v1022
    %v1055 = vpack.c.b16 %v1031, %v1023
    %v1056 = vpack.c.b16 %v1032, %v1024
    %v1057 = vpack.c.b16 %v1033, %v1025
    %v1058 = vpack.c.b16 %v1034, %v1026
    %v1059 = vpack.c.b16 %v1035, %v1027
    %v1060 = vpack.c.b16 %v1044, %v1036
    %v1061 = vpack.c.b16 %v1045, %v1037
    %v1062 = vpack.c.b16 %v1046, %v1038
    %v1063 = vpack.c.b16 %v1047, %v1039
    %v1064 = vpack.c.b16 %v1048, %v1040
    %v1065 = vpack.c.b16 %v1049, %v1041
    %v1066 = vpack.c.b16 %v1050, %v1042
    %v1067 = vpack.c.b16 %v1051, %v1043
    %vm1084 = vcmask 261120
    %v1086 = vsel %vm1084, %v295, 0
    %v1089 = vsel %vm1084, %v296, 0
    %v1092 = vsel %vm1084, %v297, 0
    %v1095 = vsel %vm1084, %v298, 0
    %v1098 = vsel %vm1084, %v299, 0
    %v1101 = vsel %vm1084, %v300, 0
    %v1104 = vsel %vm1084, %v301, 0
    %v1107 = vsel %vm1084, %v302, 0
    %v1110 = vsel %vm1084, %v303, 0
    %v1113 = vsel %vm1084, %v304, 0
    %v1116 = vsel %vm1084, %v305, 0
    %v1119 = vsel %vm1084, %v306, 0
    %v1122 = vsel %vm1084, %v307, 0
    %1124 = vmatpush.bf16.msra.mxu0 0
    %1125 = vmatpush.bf16.msra.mxu0 0
    %1126 = vmatpush.bf16.msra.mxu0 0
    %1127 = vmatpush.bf16.msra.mxu0 0
    %1128 = vmatpush.bf16.msra.mxu0 0
    %1129 = vmatpush.bf16.msra.mxu0 0
    %1130 = vmatpush.bf16.msra.mxu0 %v1060
    %1131 = vmatpush.bf16.msra.mxu0 %v1052
    %1132 = vmatmul.bf16.gmra.mxu0 %v1086
    %v1133 = vpop.f32.mrf.mxu0
    %v1134 = vadd.f32 %v422, %v1133
    %v1135 = vpop.f32.mrf.mxu0
    %v1136 = vadd.f32 %v424, %v1135
    %1137 = vmatmul.bf16.gmra.mxu0 %v1089
    %v1138 = vpop.f32.mrf.mxu0
    %v1139 = vadd.f32 %v427, %v1138
    %v1140 = vpop.f32.mrf.mxu0
    %v1141 = vadd.f32 %v429, %v1140
    %1142 = vmatmul.bf16.gmra.mxu0 %v1092
    %v1143 = vpop.f32.mrf.mxu0
    %v1144 = vadd.f32 %v432, %v1143
    %v1145 = vpop.f32.mrf.mxu0
    %v1146 = vadd.f32 %v434, %v1145
    %1147 = vmatmul.bf16.gmra.mxu0 %v1095
    %v1148 = vpop.f32.mrf.mxu0
    %v1149 = vadd.f32 %v437, %v1148
    %v1150 = vpop.f32.mrf.mxu0
    %v1151 = vadd.f32 %v439, %v1150
    %1152 = vmatmul.bf16.gmra.mxu0 %v1098
    %v1153 = vpop.f32.mrf.mxu0
    %v1154 = vadd.f32 %v442, %v1153
    %v1155 = vpop.f32.mrf.mxu0
    %v1156 = vadd.f32 %v444, %v1155
    %1157 = vmatmul.bf16.gmra.mxu0 %v1101
    %v1158 = vpop.f32.mrf.mxu0
    %v1159 = vadd.f32 %v447, %v1158
    %v1160 = vpop.f32.mrf.mxu0
    %v1161 = vadd.f32 %v449, %v1160
    %1162 = vmatmul.bf16.gmra.mxu0 %v1104
    %v1163 = vpop.f32.mrf.mxu0
    %v1164 = vadd.f32 %v452, %v1163
    %v1165 = vpop.f32.mrf.mxu0
    %v1166 = vadd.f32 %v454, %v1165
    %1167 = vmatmul.bf16.gmra.mxu0 %v1107
    %v1168 = vpop.f32.mrf.mxu0
    %v1169 = vadd.f32 %v457, %v1168
    %v1170 = vpop.f32.mrf.mxu0
    %v1171 = vadd.f32 %v459, %v1170
    %1172 = vmatmul.bf16.gmra.mxu0 %v1110
    %v1173 = vpop.f32.mrf.mxu0
    %v1174 = vadd.f32 %v462, %v1173
    %v1175 = vpop.f32.mrf.mxu0
    %v1176 = vadd.f32 %v464, %v1175
    %1177 = vmatmul.bf16.gmra.mxu0 %v1113
    %v1178 = vpop.f32.mrf.mxu0
    %v1179 = vadd.f32 %v467, %v1178
    %v1180 = vpop.f32.mrf.mxu0
    %v1181 = vadd.f32 %v469, %v1180
    %1182 = vmatmul.bf16.gmra.mxu0 %v1116
    %v1183 = vpop.f32.mrf.mxu0
    %v1184 = vadd.f32 %v472, %v1183
    %v1185 = vpop.f32.mrf.mxu0
    %v1186 = vadd.f32 %v474, %v1185
    %1187 = vmatmul.bf16.gmra.mxu0 %v1119
    %v1188 = vpop.f32.mrf.mxu0
    %v1189 = vadd.f32 %v477, %v1188
    %v1190 = vpop.f32.mrf.mxu0
    %v1191 = vadd.f32 %v479, %v1190
    %1192 = vmatmul.bf16.gmra.mxu0 %v1122
    %v1193 = vpop.f32.mrf.mxu0
    %v1194 = vadd.f32 %v482, %v1193
    %v1195 = vpop.f32.mrf.mxu0
    %v1196 = vadd.f32 %v484, %v1195
    %1197 = vdwg.mxu0
    %1198 = vmatpush.bf16.msra.mxu0 0
    %1199 = vmatpush.bf16.msra.mxu0 0
    %1200 = vmatpush.bf16.msra.mxu0 0
    %1201 = vmatpush.bf16.msra.mxu0 0
    %1202 = vmatpush.bf16.msra.mxu0 0
    %1203 = vmatpush.bf16.msra.mxu0 0
    %1204 = vmatpush.bf16.msra.mxu0 %v1061
    %1205 = vmatpush.bf16.msra.mxu0 %v1053
    %1206 = vmatmul.bf16.gmra.mxu0 %v1086
    %v1207 = vpop.f32.mrf.mxu0
    %v1208 = vadd.f32 %v496, %v1207
    %v1209 = vpop.f32.mrf.mxu0
    %v1210 = vadd.f32 %v498, %v1209
    %1211 = vmatmul.bf16.gmra.mxu0 %v1089
    %v1212 = vpop.f32.mrf.mxu0
    %v1213 = vadd.f32 %v501, %v1212
    %v1214 = vpop.f32.mrf.mxu0
    %v1215 = vadd.f32 %v503, %v1214
    %1216 = vmatmul.bf16.gmra.mxu0 %v1092
    %v1217 = vpop.f32.mrf.mxu0
    %v1218 = vadd.f32 %v506, %v1217
    %v1219 = vpop.f32.mrf.mxu0
    %v1220 = vadd.f32 %v508, %v1219
    %1221 = vmatmul.bf16.gmra.mxu0 %v1095
    %v1222 = vpop.f32.mrf.mxu0
    %v1223 = vadd.f32 %v511, %v1222
    %v1224 = vpop.f32.mrf.mxu0
    %v1225 = vadd.f32 %v513, %v1224
    %1226 = vmatmul.bf16.gmra.mxu0 %v1098
    %v1227 = vpop.f32.mrf.mxu0
    %v1228 = vadd.f32 %v516, %v1227
    %v1229 = vpop.f32.mrf.mxu0
    %v1230 = vadd.f32 %v518, %v1229
    %1231 = vmatmul.bf16.gmra.mxu0 %v1101
    %v1232 = vpop.f32.mrf.mxu0
    %v1233 = vadd.f32 %v521, %v1232
    %v1234 = vpop.f32.mrf.mxu0
    %v1235 = vadd.f32 %v523, %v1234
    %1236 = vmatmul.bf16.gmra.mxu0 %v1104
    %v1237 = vpop.f32.mrf.mxu0
    %v1238 = vadd.f32 %v526, %v1237
    %v1239 = vpop.f32.mrf.mxu0
    %v1240 = vadd.f32 %v528, %v1239
    %1241 = vmatmul.bf16.gmra.mxu0 %v1107
    %v1242 = vpop.f32.mrf.mxu0
    %v1243 = vadd.f32 %v531, %v1242
    %v1244 = vpop.f32.mrf.mxu0
    %v1245 = vadd.f32 %v533, %v1244
    %1246 = vmatmul.bf16.gmra.mxu0 %v1110
    %v1247 = vpop.f32.mrf.mxu0
    %v1248 = vadd.f32 %v536, %v1247
    %v1249 = vpop.f32.mrf.mxu0
    %v1250 = vadd.f32 %v538, %v1249
    %1251 = vmatmul.bf16.gmra.mxu0 %v1113
    %v1252 = vpop.f32.mrf.mxu0
    %v1253 = vadd.f32 %v541, %v1252
    %v1254 = vpop.f32.mrf.mxu0
    %v1255 = vadd.f32 %v543, %v1254
    %1256 = vmatmul.bf16.gmra.mxu0 %v1116
    %v1257 = vpop.f32.mrf.mxu0
    %v1258 = vadd.f32 %v546, %v1257
    %v1259 = vpop.f32.mrf.mxu0
    %v1260 = vadd.f32 %v548, %v1259
    %1261 = vmatmul.bf16.gmra.mxu0 %v1119
    %v1262 = vpop.f32.mrf.mxu0
    %v1263 = vadd.f32 %v551, %v1262
    %v1264 = vpop.f32.mrf.mxu0
    %v1265 = vadd.f32 %v553, %v1264
    %1266 = vmatmul.bf16.gmra.mxu0 %v1122
    %v1267 = vpop.f32.mrf.mxu0
    %v1268 = vadd.f32 %v556, %v1267
    %v1269 = vpop.f32.mrf.mxu0
    %v1270 = vadd.f32 %v558, %v1269
    %1271 = vdwg.mxu0
    %1272 = vmatpush.bf16.msra.mxu0 0
    %1273 = vmatpush.bf16.msra.mxu0 0
    %1274 = vmatpush.bf16.msra.mxu0 0
    %1275 = vmatpush.bf16.msra.mxu0 0
    %1276 = vmatpush.bf16.msra.mxu0 0
    %1277 = vmatpush.bf16.msra.mxu0 0
    %1278 = vmatpush.bf16.msra.mxu0 %v1062
    %1279 = vmatpush.bf16.msra.mxu0 %v1054
    %1280 = vmatmul.bf16.gmra.mxu0 %v1086
    %v1281 = vpop.f32.mrf.mxu0
    %v1282 = vadd.f32 %v570, %v1281
    %v1283 = vpop.f32.mrf.mxu0
    %v1284 = vadd.f32 %v572, %v1283
    %1285 = vmatmul.bf16.gmra.mxu0 %v1089
    %v1286 = vpop.f32.mrf.mxu0
    %v1287 = vadd.f32 %v575, %v1286
    %v1288 = vpop.f32.mrf.mxu0
    %v1289 = vadd.f32 %v577, %v1288
    %1290 = vmatmul.bf16.gmra.mxu0 %v1092
    %v1291 = vpop.f32.mrf.mxu0
    %v1292 = vadd.f32 %v580, %v1291
    %v1293 = vpop.f32.mrf.mxu0
    %v1294 = vadd.f32 %v582, %v1293
    %1295 = vmatmul.bf16.gmra.mxu0 %v1095
    %v1296 = vpop.f32.mrf.mxu0
    %v1297 = vadd.f32 %v585, %v1296
    %v1298 = vpop.f32.mrf.mxu0
    %v1299 = vadd.f32 %v587, %v1298
    %1300 = vmatmul.bf16.gmra.mxu0 %v1098
    %v1301 = vpop.f32.mrf.mxu0
    %v1302 = vadd.f32 %v590, %v1301
    %v1303 = vpop.f32.mrf.mxu0
    %v1304 = vadd.f32 %v592, %v1303
    %1305 = vmatmul.bf16.gmra.mxu0 %v1101
    %v1306 = vpop.f32.mrf.mxu0
    %v1307 = vadd.f32 %v595, %v1306
    %v1308 = vpop.f32.mrf.mxu0
    %v1309 = vadd.f32 %v597, %v1308
    %1310 = vmatmul.bf16.gmra.mxu0 %v1104
    %v1311 = vpop.f32.mrf.mxu0
    %v1312 = vadd.f32 %v600, %v1311
    %v1313 = vpop.f32.mrf.mxu0
    %v1314 = vadd.f32 %v602, %v1313
    %1315 = vmatmul.bf16.gmra.mxu0 %v1107
    %v1316 = vpop.f32.mrf.mxu0
    %v1317 = vadd.f32 %v605, %v1316
    %v1318 = vpop.f32.mrf.mxu0
    %v1319 = vadd.f32 %v607, %v1318
    %1320 = vmatmul.bf16.gmra.mxu0 %v1110
    %v1321 = vpop.f32.mrf.mxu0
    %v1322 = vadd.f32 %v610, %v1321
    %v1323 = vpop.f32.mrf.mxu0
    %v1324 = vadd.f32 %v612, %v1323
    %1325 = vmatmul.bf16.gmra.mxu0 %v1113
    %v1326 = vpop.f32.mrf.mxu0
    %v1327 = vadd.f32 %v615, %v1326
    %v1328 = vpop.f32.mrf.mxu0
    %v1329 = vadd.f32 %v617, %v1328
    %1330 = vmatmul.bf16.gmra.mxu0 %v1116
    %v1331 = vpop.f32.mrf.mxu0
    %v1332 = vadd.f32 %v620, %v1331
    %v1333 = vpop.f32.mrf.mxu0
    %v1334 = vadd.f32 %v622, %v1333
    %1335 = vmatmul.bf16.gmra.mxu0 %v1119
    %v1336 = vpop.f32.mrf.mxu0
    %v1337 = vadd.f32 %v625, %v1336
    %v1338 = vpop.f32.mrf.mxu0
    %v1339 = vadd.f32 %v627, %v1338
    %1340 = vmatmul.bf16.gmra.mxu0 %v1122
    %v1341 = vpop.f32.mrf.mxu0
    %v1342 = vadd.f32 %v630, %v1341
    %v1343 = vpop.f32.mrf.mxu0
    %v1344 = vadd.f32 %v632, %v1343
    %1345 = vdwg.mxu0
    %1346 = vmatpush.bf16.msra.mxu0 0
    %1347 = vmatpush.bf16.msra.mxu0 0
    %1348 = vmatpush.bf16.msra.mxu0 0
    %1349 = vmatpush.bf16.msra.mxu0 0
    %1350 = vmatpush.bf16.msra.mxu0 0
    %1351 = vmatpush.bf16.msra.mxu0 0
    %1352 = vmatpush.bf16.msra.mxu0 %v1063
    %1353 = vmatpush.bf16.msra.mxu0 %v1055
    %1354 = vmatmul.bf16.gmra.mxu0 %v1086
    %v1355 = vpop.f32.mrf.mxu0
    %v1356 = vadd.f32 %v644, %v1355
    %v1357 = vpop.f32.mrf.mxu0
    %v1358 = vadd.f32 %v646, %v1357
    %1359 = vmatmul.bf16.gmra.mxu0 %v1089
    %v1360 = vpop.f32.mrf.mxu0
    %v1361 = vadd.f32 %v649, %v1360
    %v1362 = vpop.f32.mrf.mxu0
    %v1363 = vadd.f32 %v651, %v1362
    %1364 = vmatmul.bf16.gmra.mxu0 %v1092
    %v1365 = vpop.f32.mrf.mxu0
    %v1366 = vadd.f32 %v654, %v1365
    %v1367 = vpop.f32.mrf.mxu0
    %v1368 = vadd.f32 %v656, %v1367
    %1369 = vmatmul.bf16.gmra.mxu0 %v1095
    %v1370 = vpop.f32.mrf.mxu0
    %v1371 = vadd.f32 %v659, %v1370
    %v1372 = vpop.f32.mrf.mxu0
    %v1373 = vadd.f32 %v661, %v1372
    %1374 = vmatmul.bf16.gmra.mxu0 %v1098
    %v1375 = vpop.f32.mrf.mxu0
    %v1376 = vadd.f32 %v664, %v1375
    %v1377 = vpop.f32.mrf.mxu0
    %v1378 = vadd.f32 %v666, %v1377
    %1379 = vmatmul.bf16.gmra.mxu0 %v1101
    %v1380 = vpop.f32.mrf.mxu0
    %v1381 = vadd.f32 %v669, %v1380
    %v1382 = vpop.f32.mrf.mxu0
    %v1383 = vadd.f32 %v671, %v1382
    %1384 = vmatmul.bf16.gmra.mxu0 %v1104
    %v1385 = vpop.f32.mrf.mxu0
    %v1386 = vadd.f32 %v674, %v1385
    %v1387 = vpop.f32.mrf.mxu0
    %v1388 = vadd.f32 %v676, %v1387
    %1389 = vmatmul.bf16.gmra.mxu0 %v1107
    %v1390 = vpop.f32.mrf.mxu0
    %v1391 = vadd.f32 %v679, %v1390
    %v1392 = vpop.f32.mrf.mxu0
    %v1393 = vadd.f32 %v681, %v1392
    %1394 = vmatmul.bf16.gmra.mxu0 %v1110
    %v1395 = vpop.f32.mrf.mxu0
    %v1396 = vadd.f32 %v684, %v1395
    %v1397 = vpop.f32.mrf.mxu0
    %v1398 = vadd.f32 %v686, %v1397
    %1399 = vmatmul.bf16.gmra.mxu0 %v1113
    %v1400 = vpop.f32.mrf.mxu0
    %v1401 = vadd.f32 %v689, %v1400
    %v1402 = vpop.f32.mrf.mxu0
    %v1403 = vadd.f32 %v691, %v1402
    %1404 = vmatmul.bf16.gmra.mxu0 %v1116
    %v1405 = vpop.f32.mrf.mxu0
    %v1406 = vadd.f32 %v694, %v1405
    %v1407 = vpop.f32.mrf.mxu0
    %v1408 = vadd.f32 %v696, %v1407
    %1409 = vmatmul.bf16.gmra.mxu0 %v1119
    %v1410 = vpop.f32.mrf.mxu0
    %v1411 = vadd.f32 %v699, %v1410
    %v1412 = vpop.f32.mrf.mxu0
    %v1413 = vadd.f32 %v701, %v1412
    %1414 = vmatmul.bf16.gmra.mxu0 %v1122
    %v1415 = vpop.f32.mrf.mxu0
    %v1416 = vadd.f32 %v704, %v1415
    %v1417 = vpop.f32.mrf.mxu0
    %v1418 = vadd.f32 %v706, %v1417
    %1419 = vdwg.mxu0
    %1420 = vmatpush.bf16.msra.mxu0 0
    %1421 = vmatpush.bf16.msra.mxu0 0
    %1422 = vmatpush.bf16.msra.mxu0 0
    %1423 = vmatpush.bf16.msra.mxu0 0
    %1424 = vmatpush.bf16.msra.mxu0 0
    %1425 = vmatpush.bf16.msra.mxu0 0
    %1426 = vmatpush.bf16.msra.mxu0 %v1064
    %1427 = vmatpush.bf16.msra.mxu0 %v1056
    %1428 = vmatmul.bf16.gmra.mxu0 %v1086
    %v1429 = vpop.f32.mrf.mxu0
    %v1430 = vadd.f32 %v718, %v1429
    %v1431 = vpop.f32.mrf.mxu0
    %v1432 = vadd.f32 %v720, %v1431
    %1433 = vmatmul.bf16.gmra.mxu0 %v1089
    %v1434 = vpop.f32.mrf.mxu0
    %v1435 = vadd.f32 %v723, %v1434
    %v1436 = vpop.f32.mrf.mxu0
    %v1437 = vadd.f32 %v725, %v1436
    %1438 = vmatmul.bf16.gmra.mxu0 %v1092
    %v1439 = vpop.f32.mrf.mxu0
    %v1440 = vadd.f32 %v728, %v1439
    %v1441 = vpop.f32.mrf.mxu0
    %v1442 = vadd.f32 %v730, %v1441
    %1443 = vmatmul.bf16.gmra.mxu0 %v1095
    %v1444 = vpop.f32.mrf.mxu0
    %v1445 = vadd.f32 %v733, %v1444
    %v1446 = vpop.f32.mrf.mxu0
    %v1447 = vadd.f32 %v735, %v1446
    %1448 = vmatmul.bf16.gmra.mxu0 %v1098
    %v1449 = vpop.f32.mrf.mxu0
    %v1450 = vadd.f32 %v738, %v1449
    %v1451 = vpop.f32.mrf.mxu0
    %v1452 = vadd.f32 %v740, %v1451
    %1453 = vmatmul.bf16.gmra.mxu0 %v1101
    %v1454 = vpop.f32.mrf.mxu0
    %v1455 = vadd.f32 %v743, %v1454
    %v1456 = vpop.f32.mrf.mxu0
    %v1457 = vadd.f32 %v745, %v1456
    %1458 = vmatmul.bf16.gmra.mxu0 %v1104
    %v1459 = vpop.f32.mrf.mxu0
    %v1460 = vadd.f32 %v748, %v1459
    %v1461 = vpop.f32.mrf.mxu0
    %v1462 = vadd.f32 %v750, %v1461
    %1463 = vmatmul.bf16.gmra.mxu0 %v1107
    %v1464 = vpop.f32.mrf.mxu0
    %v1465 = vadd.f32 %v753, %v1464
    %v1466 = vpop.f32.mrf.mxu0
    %v1467 = vadd.f32 %v755, %v1466
    %1468 = vmatmul.bf16.gmra.mxu0 %v1110
    %v1469 = vpop.f32.mrf.mxu0
    %v1470 = vadd.f32 %v758, %v1469
    %v1471 = vpop.f32.mrf.mxu0
    %v1472 = vadd.f32 %v760, %v1471
    %1473 = vmatmul.bf16.gmra.mxu0 %v1113
    %v1474 = vpop.f32.mrf.mxu0
    %v1475 = vadd.f32 %v763, %v1474
    %v1476 = vpop.f32.mrf.mxu0
    %v1477 = vadd.f32 %v765, %v1476
    %1478 = vmatmul.bf16.gmra.mxu0 %v1116
    %v1479 = vpop.f32.mrf.mxu0
    %v1480 = vadd.f32 %v768, %v1479
    %v1481 = vpop.f32.mrf.mxu0
    %v1482 = vadd.f32 %v770, %v1481
    %1483 = vmatmul.bf16.gmra.mxu0 %v1119
    %v1484 = vpop.f32.mrf.mxu0
    %v1485 = vadd.f32 %v773, %v1484
    %v1486 = vpop.f32.mrf.mxu0
    %v1487 = vadd.f32 %v775, %v1486
    %1488 = vmatmul.bf16.gmra.mxu0 %v1122
    %v1489 = vpop.f32.mrf.mxu0
    %v1490 = vadd.f32 %v778, %v1489
    %v1491 = vpop.f32.mrf.mxu0
    %v1492 = vadd.f32 %v780, %v1491
    %1493 = vdwg.mxu0
    %1494 = vmatpush.bf16.msra.mxu0 0
    %1495 = vmatpush.bf16.msra.mxu0 0
    %1496 = vmatpush.bf16.msra.mxu0 0
    %1497 = vmatpush.bf16.msra.mxu0 0
    %1498 = vmatpush.bf16.msra.mxu0 0
    %1499 = vmatpush.bf16.msra.mxu0 0
    %1500 = vmatpush.bf16.msra.mxu0 %v1065
    %1501 = vmatpush.bf16.msra.mxu0 %v1057
    %1502 = vmatmul.bf16.gmra.mxu0 %v1086
    %v1503 = vpop.f32.mrf.mxu0
    %v1504 = vadd.f32 %v792, %v1503
    %v1505 = vpop.f32.mrf.mxu0
    %v1506 = vadd.f32 %v794, %v1505
    %1507 = vmatmul.bf16.gmra.mxu0 %v1089
    %v1508 = vpop.f32.mrf.mxu0
    %v1509 = vadd.f32 %v797, %v1508
    %v1510 = vpop.f32.mrf.mxu0
    %v1511 = vadd.f32 %v799, %v1510
    %1512 = vmatmul.bf16.gmra.mxu0 %v1092
    %v1513 = vpop.f32.mrf.mxu0
    %v1514 = vadd.f32 %v802, %v1513
    %v1515 = vpop.f32.mrf.mxu0
    %v1516 = vadd.f32 %v804, %v1515
    %1517 = vmatmul.bf16.gmra.mxu0 %v1095
    %v1518 = vpop.f32.mrf.mxu0
    %v1519 = vadd.f32 %v807, %v1518
    %v1520 = vpop.f32.mrf.mxu0
    %v1521 = vadd.f32 %v809, %v1520
    %1522 = vmatmul.bf16.gmra.mxu0 %v1098
    %v1523 = vpop.f32.mrf.mxu0
    %v1524 = vadd.f32 %v812, %v1523
    %v1525 = vpop.f32.mrf.mxu0
    %v1526 = vadd.f32 %v814, %v1525
    %1527 = vmatmul.bf16.gmra.mxu0 %v1101
    %v1528 = vpop.f32.mrf.mxu0
    %v1529 = vadd.f32 %v817, %v1528
    %v1530 = vpop.f32.mrf.mxu0
    %v1531 = vadd.f32 %v819, %v1530
    %1532 = vmatmul.bf16.gmra.mxu0 %v1104
    %v1533 = vpop.f32.mrf.mxu0
    %v1534 = vadd.f32 %v822, %v1533
    %v1535 = vpop.f32.mrf.mxu0
    %v1536 = vadd.f32 %v824, %v1535
    %1537 = vmatmul.bf16.gmra.mxu0 %v1107
    %v1538 = vpop.f32.mrf.mxu0
    %v1539 = vadd.f32 %v827, %v1538
    %v1540 = vpop.f32.mrf.mxu0
    %v1541 = vadd.f32 %v829, %v1540
    %1542 = vmatmul.bf16.gmra.mxu0 %v1110
    %v1543 = vpop.f32.mrf.mxu0
    %v1544 = vadd.f32 %v832, %v1543
    %v1545 = vpop.f32.mrf.mxu0
    %v1546 = vadd.f32 %v834, %v1545
    %1547 = vmatmul.bf16.gmra.mxu0 %v1113
    %v1548 = vpop.f32.mrf.mxu0
    %v1549 = vadd.f32 %v837, %v1548
    %v1550 = vpop.f32.mrf.mxu0
    %v1551 = vadd.f32 %v839, %v1550
    %1552 = vmatmul.bf16.gmra.mxu0 %v1116
    %v1553 = vpop.f32.mrf.mxu0
    %v1554 = vadd.f32 %v842, %v1553
    %v1555 = vpop.f32.mrf.mxu0
    %v1556 = vadd.f32 %v844, %v1555
    %1557 = vmatmul.bf16.gmra.mxu0 %v1119
    %v1558 = vpop.f32.mrf.mxu0
    %v1559 = vadd.f32 %v847, %v1558
    %v1560 = vpop.f32.mrf.mxu0
    %v1561 = vadd.f32 %v849, %v1560
    %1562 = vmatmul.bf16.gmra.mxu0 %v1122
    %v1563 = vpop.f32.mrf.mxu0
    %v1564 = vadd.f32 %v852, %v1563
    %v1565 = vpop.f32.mrf.mxu0
    %v1566 = vadd.f32 %v854, %v1565
    %1567 = vdwg.mxu0
    %1568 = vmatpush.bf16.msra.mxu0 0
    %1569 = vmatpush.bf16.msra.mxu0 0
    %1570 = vmatpush.bf16.msra.mxu0 0
    %1571 = vmatpush.bf16.msra.mxu0 0
    %1572 = vmatpush.bf16.msra.mxu0 0
    %1573 = vmatpush.bf16.msra.mxu0 0
    %1574 = vmatpush.bf16.msra.mxu0 %v1066
    %1575 = vmatpush.bf16.msra.mxu0 %v1058
    %1576 = vmatmul.bf16.gmra.mxu0 %v1086
    %v1577 = vpop.f32.mrf.mxu0
    %v1578 = vadd.f32 %v866, %v1577
    %v1579 = vpop.f32.mrf.mxu0
    %v1580 = vadd.f32 %v868, %v1579
    %1581 = vmatmul.bf16.gmra.mxu0 %v1089
    %v1582 = vpop.f32.mrf.mxu0
    %v1583 = vadd.f32 %v871, %v1582
    %v1584 = vpop.f32.mrf.mxu0
    %v1585 = vadd.f32 %v873, %v1584
    %1586 = vmatmul.bf16.gmra.mxu0 %v1092
    %v1587 = vpop.f32.mrf.mxu0
    %v1588 = vadd.f32 %v876, %v1587
    %v1589 = vpop.f32.mrf.mxu0
    %v1590 = vadd.f32 %v878, %v1589
    %1591 = vmatmul.bf16.gmra.mxu0 %v1095
    %v1592 = vpop.f32.mrf.mxu0
    %v1593 = vadd.f32 %v881, %v1592
    %v1594 = vpop.f32.mrf.mxu0
    %v1595 = vadd.f32 %v883, %v1594
    %1596 = vmatmul.bf16.gmra.mxu0 %v1098
    %v1597 = vpop.f32.mrf.mxu0
    %v1598 = vadd.f32 %v886, %v1597
    %v1599 = vpop.f32.mrf.mxu0
    %v1600 = vadd.f32 %v888, %v1599
    %1601 = vmatmul.bf16.gmra.mxu0 %v1101
    %v1602 = vpop.f32.mrf.mxu0
    %v1603 = vadd.f32 %v891, %v1602
    %v1604 = vpop.f32.mrf.mxu0
    %v1605 = vadd.f32 %v893, %v1604
    %1606 = vmatmul.bf16.gmra.mxu0 %v1104
    %v1607 = vpop.f32.mrf.mxu0
    %v1608 = vadd.f32 %v896, %v1607
    %v1609 = vpop.f32.mrf.mxu0
    %v1610 = vadd.f32 %v898, %v1609
    %1611 = vmatmul.bf16.gmra.mxu0 %v1107
    %v1612 = vpop.f32.mrf.mxu0
    %v1613 = vadd.f32 %v901, %v1612
    %v1614 = vpop.f32.mrf.mxu0
    %v1615 = vadd.f32 %v903, %v1614
    %1616 = vmatmul.bf16.gmra.mxu0 %v1110
    %v1617 = vpop.f32.mrf.mxu0
    %v1618 = vadd.f32 %v906, %v1617
    %v1619 = vpop.f32.mrf.mxu0
    %v1620 = vadd.f32 %v908, %v1619
    %1621 = vmatmul.bf16.gmra.mxu0 %v1113
    %v1622 = vpop.f32.mrf.mxu0
    %v1623 = vadd.f32 %v911, %v1622
    %v1624 = vpop.f32.mrf.mxu0
    %v1625 = vadd.f32 %v913, %v1624
    %1626 = vmatmul.bf16.gmra.mxu0 %v1116
    %v1627 = vpop.f32.mrf.mxu0
    %v1628 = vadd.f32 %v916, %v1627
    %v1629 = vpop.f32.mrf.mxu0
    %v1630 = vadd.f32 %v918, %v1629
    %1631 = vmatmul.bf16.gmra.mxu0 %v1119
    %v1632 = vpop.f32.mrf.mxu0
    %v1633 = vadd.f32 %v921, %v1632
    %v1634 = vpop.f32.mrf.mxu0
    %v1635 = vadd.f32 %v923, %v1634
    %1636 = vmatmul.bf16.gmra.mxu0 %v1122
    %v1637 = vpop.f32.mrf.mxu0
    %v1638 = vadd.f32 %v926, %v1637
    %v1639 = vpop.f32.mrf.mxu0
    %v1640 = vadd.f32 %v928, %v1639
    %1641 = vdwg.mxu0
    %1642 = vmatpush.bf16.msra.mxu0 0
    %1643 = vmatpush.bf16.msra.mxu0 0
    %1644 = vmatpush.bf16.msra.mxu0 0
    %1645 = vmatpush.bf16.msra.mxu0 0
    %1646 = vmatpush.bf16.msra.mxu0 0
    %1647 = vmatpush.bf16.msra.mxu0 0
    %1648 = vmatpush.bf16.msra.mxu0 %v1067
    %1649 = vmatpush.bf16.msra.mxu0 %v1059
    %1650 = vmatmul.bf16.gmra.mxu0 %v1086
    %v1651 = vpop.f32.mrf.mxu0
    %v1652 = vadd.f32 %v940, %v1651
    %v1653 = vpop.f32.mrf.mxu0
    %v1654 = vadd.f32 %v942, %v1653
    %1655 = vmatmul.bf16.gmra.mxu0 %v1089
    %v1656 = vpop.f32.mrf.mxu0
    %v1657 = vadd.f32 %v945, %v1656
    %v1658 = vpop.f32.mrf.mxu0
    %v1659 = vadd.f32 %v947, %v1658
    %1660 = vmatmul.bf16.gmra.mxu0 %v1092
    %v1661 = vpop.f32.mrf.mxu0
    %v1662 = vadd.f32 %v950, %v1661
    %v1663 = vpop.f32.mrf.mxu0
    %v1664 = vadd.f32 %v952, %v1663
    %1665 = vmatmul.bf16.gmra.mxu0 %v1095
    %v1666 = vpop.f32.mrf.mxu0
    %v1667 = vadd.f32 %v955, %v1666
    %v1668 = vpop.f32.mrf.mxu0
    %v1669 = vadd.f32 %v957, %v1668
    %1670 = vmatmul.bf16.gmra.mxu0 %v1098
    %v1671 = vpop.f32.mrf.mxu0
    %v1672 = vadd.f32 %v960, %v1671
    %v1673 = vpop.f32.mrf.mxu0
    %v1674 = vadd.f32 %v962, %v1673
    %1675 = vmatmul.bf16.gmra.mxu0 %v1101
    %v1676 = vpop.f32.mrf.mxu0
    %v1677 = vadd.f32 %v965, %v1676
    %v1678 = vpop.f32.mrf.mxu0
    %v1679 = vadd.f32 %v967, %v1678
    %1680 = vmatmul.bf16.gmra.mxu0 %v1104
    %v1681 = vpop.f32.mrf.mxu0
    %v1682 = vadd.f32 %v970, %v1681
    %v1683 = vpop.f32.mrf.mxu0
    %v1684 = vadd.f32 %v972, %v1683
    %1685 = vmatmul.bf16.gmra.mxu0 %v1107
    %v1686 = vpop.f32.mrf.mxu0
    %v1687 = vadd.f32 %v975, %v1686
    %v1688 = vpop.f32.mrf.mxu0
    %v1689 = vadd.f32 %v977, %v1688
    %1690 = vmatmul.bf16.gmra.mxu0 %v1110
    %v1691 = vpop.f32.mrf.mxu0
    %v1692 = vadd.f32 %v980, %v1691
    %v1693 = vpop.f32.mrf.mxu0
    %v1694 = vadd.f32 %v982, %v1693
    %1695 = vmatmul.bf16.gmra.mxu0 %v1113
    %v1696 = vpop.f32.mrf.mxu0
    %v1697 = vadd.f32 %v985, %v1696
    %v1698 = vpop.f32.mrf.mxu0
    %v1699 = vadd.f32 %v987, %v1698
    %1700 = vmatmul.bf16.gmra.mxu0 %v1116
    %v1701 = vpop.f32.mrf.mxu0
    %v1702 = vadd.f32 %v990, %v1701
    %v1703 = vpop.f32.mrf.mxu0
    %v1704 = vadd.f32 %v992, %v1703
    %1705 = vmatmul.bf16.gmra.mxu0 %v1119
    %v1706 = vpop.f32.mrf.mxu0
    %v1707 = vadd.f32 %v995, %v1706
    %v1708 = vpop.f32.mrf.mxu0
    %v1709 = vadd.f32 %v997, %v1708
    %1710 = vmatmul.bf16.gmra.mxu0 %v1122
    %v1711 = vpop.f32.mrf.mxu0
    %v1712 = vadd.f32 %v1000, %v1711
    %v1713 = vpop.f32.mrf.mxu0
    %v1714 = vadd.f32 %v1002, %v1713
    %1715 = vdwg.mxu0
    %v1716 = vld [vmem:[%s4] sm:$0xff]
    %v1718 = vperm.slane %v1716, 0
    %v1719 = vperm.slane %v1716, 1
    %v1720 = vperm.slane %v1716, 2
    %v1721 = vperm.slane %v1716, 3
    %v1722 = vperm.slane %v1716, 4
    %v1723 = vperm.slane %v1716, 5
    %v1724 = vperm.slane %v1716, 6
    %v1725 = vperm.slane %v1716, 7
    %v1734 = vadd.f32 %v1134, %v1718
    %v1735 = vadd.f32 %v1208, %v1719
    %v1736 = vadd.f32 %v1282, %v1720
    %v1737 = vadd.f32 %v1356, %v1721
    %v1738 = vadd.f32 %v1430, %v1722
    %v1739 = vadd.f32 %v1504, %v1723
    %v1740 = vadd.f32 %v1578, %v1724
    %v1741 = vadd.f32 %v1652, %v1725
    %v1742 = vadd.f32 %v1136, %v1718
    %v1743 = vadd.f32 %v1210, %v1719
    %v1744 = vadd.f32 %v1284, %v1720
    %v1745 = vadd.f32 %v1358, %v1721
    %v1746 = vadd.f32 %v1432, %v1722
    %v1747 = vadd.f32 %v1506, %v1723
    %v1748 = vadd.f32 %v1580, %v1724
    %v1749 = vadd.f32 %v1654, %v1725
    %v1750 = vadd.f32 %v1139, %v1718
    %v1751 = vadd.f32 %v1213, %v1719
    %v1752 = vadd.f32 %v1287, %v1720
    %v1753 = vadd.f32 %v1361, %v1721
    %v1754 = vadd.f32 %v1435, %v1722
    %v1755 = vadd.f32 %v1509, %v1723
    %v1756 = vadd.f32 %v1583, %v1724
    %v1757 = vadd.f32 %v1657, %v1725
    %v1758 = vadd.f32 %v1141, %v1718
    %v1759 = vadd.f32 %v1215, %v1719
    %v1760 = vadd.f32 %v1289, %v1720
    %v1761 = vadd.f32 %v1363, %v1721
    %v1762 = vadd.f32 %v1437, %v1722
    %v1763 = vadd.f32 %v1511, %v1723
    %v1764 = vadd.f32 %v1585, %v1724
    %v1765 = vadd.f32 %v1659, %v1725
    %v1766 = vadd.f32 %v1144, %v1718
    %v1767 = vadd.f32 %v1218, %v1719
    %v1768 = vadd.f32 %v1292, %v1720
    %v1769 = vadd.f32 %v1366, %v1721
    %v1770 = vadd.f32 %v1440, %v1722
    %v1771 = vadd.f32 %v1514, %v1723
    %v1772 = vadd.f32 %v1588, %v1724
    %v1773 = vadd.f32 %v1662, %v1725
    %v1774 = vadd.f32 %v1146, %v1718
    %v1775 = vadd.f32 %v1220, %v1719
    %v1776 = vadd.f32 %v1294, %v1720
    %v1777 = vadd.f32 %v1368, %v1721
    %v1778 = vadd.f32 %v1442, %v1722
    %v1779 = vadd.f32 %v1516, %v1723
    %v1780 = vadd.f32 %v1590, %v1724
    %v1781 = vadd.f32 %v1664, %v1725
    %v1782 = vadd.f32 %v1149, %v1718
    %v1783 = vadd.f32 %v1223, %v1719
    %v1784 = vadd.f32 %v1297, %v1720
    %v1785 = vadd.f32 %v1371, %v1721
    %v1786 = vadd.f32 %v1445, %v1722
    %v1787 = vadd.f32 %v1519, %v1723
    %v1788 = vadd.f32 %v1593, %v1724
    %v1789 = vadd.f32 %v1667, %v1725
    %v1790 = vadd.f32 %v1151, %v1718
    %v1791 = vadd.f32 %v1225, %v1719
    %v1792 = vadd.f32 %v1299, %v1720
    %v1793 = vadd.f32 %v1373, %v1721
    %v1794 = vadd.f32 %v1447, %v1722
    %v1795 = vadd.f32 %v1521, %v1723
    %v1796 = vadd.f32 %v1595, %v1724
    %v1797 = vadd.f32 %v1669, %v1725
    %v1798 = vadd.f32 %v1154, %v1718
    %v1799 = vadd.f32 %v1228, %v1719
    %v1800 = vadd.f32 %v1302, %v1720
    %v1801 = vadd.f32 %v1376, %v1721
    %v1802 = vadd.f32 %v1450, %v1722
    %v1803 = vadd.f32 %v1524, %v1723
    %v1804 = vadd.f32 %v1598, %v1724
    %v1805 = vadd.f32 %v1672, %v1725
    %v1806 = vadd.f32 %v1156, %v1718
    %v1807 = vadd.f32 %v1230, %v1719
    %v1808 = vadd.f32 %v1304, %v1720
    %v1809 = vadd.f32 %v1378, %v1721
    %v1810 = vadd.f32 %v1452, %v1722
    %v1811 = vadd.f32 %v1526, %v1723
    %v1812 = vadd.f32 %v1600, %v1724
    %v1813 = vadd.f32 %v1674, %v1725
    %v1814 = vadd.f32 %v1159, %v1718
    %v1815 = vadd.f32 %v1233, %v1719
    %v1816 = vadd.f32 %v1307, %v1720
    %v1817 = vadd.f32 %v1381, %v1721
    %v1818 = vadd.f32 %v1455, %v1722
    %v1819 = vadd.f32 %v1529, %v1723
    %v1820 = vadd.f32 %v1603, %v1724
    %v1821 = vadd.f32 %v1677, %v1725
    %v1822 = vadd.f32 %v1161, %v1718
    %v1823 = vadd.f32 %v1235, %v1719
    %v1824 = vadd.f32 %v1309, %v1720
    %v1825 = vadd.f32 %v1383, %v1721
    %v1826 = vadd.f32 %v1457, %v1722
    %v1827 = vadd.f32 %v1531, %v1723
    %v1828 = vadd.f32 %v1605, %v1724
    %v1829 = vadd.f32 %v1679, %v1725
    %v1830 = vadd.f32 %v1164, %v1718
    %v1831 = vadd.f32 %v1238, %v1719
    %v1832 = vadd.f32 %v1312, %v1720
    %v1833 = vadd.f32 %v1386, %v1721
    %v1834 = vadd.f32 %v1460, %v1722
    %v1835 = vadd.f32 %v1534, %v1723
    %v1836 = vadd.f32 %v1608, %v1724
    %v1837 = vadd.f32 %v1682, %v1725
    %v1838 = vadd.f32 %v1166, %v1718
    %v1839 = vadd.f32 %v1240, %v1719
    %v1840 = vadd.f32 %v1314, %v1720
    %v1841 = vadd.f32 %v1388, %v1721
    %v1842 = vadd.f32 %v1462, %v1722
    %v1843 = vadd.f32 %v1536, %v1723
    %v1844 = vadd.f32 %v1610, %v1724
    %v1845 = vadd.f32 %v1684, %v1725
    %v1846 = vadd.f32 %v1169, %v1718
    %v1847 = vadd.f32 %v1243, %v1719
    %v1848 = vadd.f32 %v1317, %v1720
    %v1849 = vadd.f32 %v1391, %v1721
    %v1850 = vadd.f32 %v1465, %v1722
    %v1851 = vadd.f32 %v1539, %v1723
    %v1852 = vadd.f32 %v1613, %v1724
    %v1853 = vadd.f32 %v1687, %v1725
    %v1854 = vadd.f32 %v1171, %v1718
    %v1855 = vadd.f32 %v1245, %v1719
    %v1856 = vadd.f32 %v1319, %v1720
    %v1857 = vadd.f32 %v1393, %v1721
    %v1858 = vadd.f32 %v1467, %v1722
    %v1859 = vadd.f32 %v1541, %v1723
    %v1860 = vadd.f32 %v1615, %v1724
    %v1861 = vadd.f32 %v1689, %v1725
    %v1862 = vadd.f32 %v1174, %v1718
    %v1863 = vadd.f32 %v1248, %v1719
    %v1864 = vadd.f32 %v1322, %v1720
    %v1865 = vadd.f32 %v1396, %v1721
    %v1866 = vadd.f32 %v1470, %v1722
    %v1867 = vadd.f32 %v1544, %v1723
    %v1868 = vadd.f32 %v1618, %v1724
    %v1869 = vadd.f32 %v1692, %v1725
    %v1870 = vadd.f32 %v1176, %v1718
    %v1871 = vadd.f32 %v1250, %v1719
    %v1872 = vadd.f32 %v1324, %v1720
    %v1873 = vadd.f32 %v1398, %v1721
    %v1874 = vadd.f32 %v1472, %v1722
    %v1875 = vadd.f32 %v1546, %v1723
    %v1876 = vadd.f32 %v1620, %v1724
    %v1877 = vadd.f32 %v1694, %v1725
    %v1878 = vadd.f32 %v1179, %v1718
    %v1879 = vadd.f32 %v1253, %v1719
    %v1880 = vadd.f32 %v1327, %v1720
    %v1881 = vadd.f32 %v1401, %v1721
    %v1882 = vadd.f32 %v1475, %v1722
    %v1883 = vadd.f32 %v1549, %v1723
    %v1884 = vadd.f32 %v1623, %v1724
    %v1885 = vadd.f32 %v1697, %v1725
    %v1886 = vadd.f32 %v1181, %v1718
    %v1887 = vadd.f32 %v1255, %v1719
    %v1888 = vadd.f32 %v1329, %v1720
    %v1889 = vadd.f32 %v1403, %v1721
    %v1890 = vadd.f32 %v1477, %v1722
    %v1891 = vadd.f32 %v1551, %v1723
    %v1892 = vadd.f32 %v1625, %v1724
    %v1893 = vadd.f32 %v1699, %v1725
    %v1894 = vadd.f32 %v1184, %v1718
    %v1895 = vadd.f32 %v1258, %v1719
    %v1896 = vadd.f32 %v1332, %v1720
    %v1897 = vadd.f32 %v1406, %v1721
    %v1898 = vadd.f32 %v1480, %v1722
    %v1899 = vadd.f32 %v1554, %v1723
    %v1900 = vadd.f32 %v1628, %v1724
    %v1901 = vadd.f32 %v1702, %v1725
    %v1902 = vadd.f32 %v1186, %v1718
    %v1903 = vadd.f32 %v1260, %v1719
    %v1904 = vadd.f32 %v1334, %v1720
    %v1905 = vadd.f32 %v1408, %v1721
    %v1906 = vadd.f32 %v1482, %v1722
    %v1907 = vadd.f32 %v1556, %v1723
    %v1908 = vadd.f32 %v1630, %v1724
    %v1909 = vadd.f32 %v1704, %v1725
    %v1910 = vadd.f32 %v1189, %v1718
    %v1911 = vadd.f32 %v1263, %v1719
    %v1912 = vadd.f32 %v1337, %v1720
    %v1913 = vadd.f32 %v1411, %v1721
    %v1914 = vadd.f32 %v1485, %v1722
    %v1915 = vadd.f32 %v1559, %v1723
    %v1916 = vadd.f32 %v1633, %v1724
    %v1917 = vadd.f32 %v1707, %v1725
    %v1918 = vadd.f32 %v1191, %v1718
    %v1919 = vadd.f32 %v1265, %v1719
    %v1920 = vadd.f32 %v1339, %v1720
    %v1921 = vadd.f32 %v1413, %v1721
    %v1922 = vadd.f32 %v1487, %v1722
    %v1923 = vadd.f32 %v1561, %v1723
    %v1924 = vadd.f32 %v1635, %v1724
    %v1925 = vadd.f32 %v1709, %v1725
    %v1926 = vadd.f32 %v1194, %v1718
    %v1927 = vadd.f32 %v1268, %v1719
    %v1928 = vadd.f32 %v1342, %v1720
    %v1929 = vadd.f32 %v1416, %v1721
    %v1930 = vadd.f32 %v1490, %v1722
    %v1931 = vadd.f32 %v1564, %v1723
    %v1932 = vadd.f32 %v1638, %v1724
    %v1933 = vadd.f32 %v1712, %v1725
    %v1934 = vadd.f32 %v1196, %v1718
    %v1935 = vadd.f32 %v1270, %v1719
    %v1936 = vadd.f32 %v1344, %v1720
    %v1937 = vadd.f32 %v1418, %v1721
    %v1938 = vadd.f32 %v1492, %v1722
    %v1939 = vadd.f32 %v1566, %v1723
    %v1940 = vadd.f32 %v1640, %v1724
    %v1941 = vadd.f32 %v1714, %v1725
    %v1942 = vmax.f32 %v1734, 0.0
    %v1943 = vmax.f32 %v1735, 0.0
    %v1944 = vmax.f32 %v1736, 0.0
    %v1945 = vmax.f32 %v1737, 0.0
    %v1946 = vmax.f32 %v1738, 0.0
    %v1947 = vmax.f32 %v1739, 0.0
    %v1948 = vmax.f32 %v1740, 0.0
    %v1949 = vmax.f32 %v1741, 0.0
    %v1950 = vmax.f32 %v1742, 0.0
    %v1951 = vmax.f32 %v1743, 0.0
    %v1952 = vmax.f32 %v1744, 0.0
    %v1953 = vmax.f32 %v1745, 0.0
    %v1954 = vmax.f32 %v1746, 0.0
    %v1955 = vmax.f32 %v1747, 0.0
    %v1956 = vmax.f32 %v1748, 0.0
    %v1957 = vmax.f32 %v1749, 0.0
    %v1958 = vmax.f32 %v1750, 0.0
    %v1959 = vmax.f32 %v1751, 0.0
    %v1960 = vmax.f32 %v1752, 0.0
    %v1961 = vmax.f32 %v1753, 0.0
    %v1962 = vmax.f32 %v1754, 0.0
    %v1963 = vmax.f32 %v1755, 0.0
    %v1964 = vmax.f32 %v1756, 0.0
    %v1965 = vmax.f32 %v1757, 0.0
    %v1966 = vmax.f32 %v1758, 0.0
    %v1967 = vmax.f32 %v1759, 0.0
    %v1968 = vmax.f32 %v1760, 0.0
    %v1969 = vmax.f32 %v1761, 0.0
    %v1970 = vmax.f32 %v1762, 0.0
    %v1971 = vmax.f32 %v1763, 0.0
    %v1972 = vmax.f32 %v1764, 0.0
    %v1973 = vmax.f32 %v1765, 0.0
    %v1974 = vmax.f32 %v1766, 0.0
    %v1975 = vmax.f32 %v1767, 0.0
    %v1976 = vmax.f32 %v1768, 0.0
    %v1977 = vmax.f32 %v1769, 0.0
    %v1978 = vmax.f32 %v1770, 0.0
    %v1979 = vmax.f32 %v1771, 0.0
    %v1980 = vmax.f32 %v1772, 0.0
    %v1981 = vmax.f32 %v1773, 0.0
    %v1982 = vmax.f32 %v1774, 0.0
    %v1983 = vmax.f32 %v1775, 0.0
    %v1984 = vmax.f32 %v1776, 0.0
    %v1985 = vmax.f32 %v1777, 0.0
    %v1986 = vmax.f32 %v1778, 0.0
    %v1987 = vmax.f32 %v1779, 0.0
    %v1988 = vmax.f32 %v1780, 0.0
    %v1989 = vmax.f32 %v1781, 0.0
    %v1990 = vmax.f32 %v1782, 0.0
    %v1991 = vmax.f32 %v1783, 0.0
    %v1992 = vmax.f32 %v1784, 0.0
    %v1993 = vmax.f32 %v1785, 0.0
    %v1994 = vmax.f32 %v1786, 0.0
    %v1995 = vmax.f32 %v1787, 0.0
    %v1996 = vmax.f32 %v1788, 0.0
    %v1997 = vmax.f32 %v1789, 0.0
    %v1998 = vmax.f32 %v1790, 0.0
    %v1999 = vmax.f32 %v1791, 0.0
    %v2000 = vmax.f32 %v1792, 0.0
    %v2001 = vmax.f32 %v1793, 0.0
    %v2002 = vmax.f32 %v1794, 0.0
    %v2003 = vmax.f32 %v1795, 0.0
    %v2004 = vmax.f32 %v1796, 0.0
    %v2005 = vmax.f32 %v1797, 0.0
    %v2006 = vmax.f32 %v1798, 0.0
    %v2007 = vmax.f32 %v1799, 0.0
    %v2008 = vmax.f32 %v1800, 0.0
    %v2009 = vmax.f32 %v1801, 0.0
    %v2010 = vmax.f32 %v1802, 0.0
    %v2011 = vmax.f32 %v1803, 0.0
    %v2012 = vmax.f32 %v1804, 0.0
    %v2013 = vmax.f32 %v1805, 0.0
    %v2014 = vmax.f32 %v1806, 0.0
    %v2015 = vmax.f32 %v1807, 0.0
    %v2016 = vmax.f32 %v1808, 0.0
    %v2017 = vmax.f32 %v1809, 0.0
    %v2018 = vmax.f32 %v1810, 0.0
    %v2019 = vmax.f32 %v1811, 0.0
    %v2020 = vmax.f32 %v1812, 0.0
    %v2021 = vmax.f32 %v1813, 0.0
    %v2022 = vmax.f32 %v1814, 0.0
    %v2023 = vmax.f32 %v1815, 0.0
    %v2024 = vmax.f32 %v1816, 0.0
    %v2025 = vmax.f32 %v1817, 0.0
    %v2026 = vmax.f32 %v1818, 0.0
    %v2027 = vmax.f32 %v1819, 0.0
    %v2028 = vmax.f32 %v1820, 0.0
    %v2029 = vmax.f32 %v1821, 0.0
    %v2030 = vmax.f32 %v1822, 0.0
    %v2031 = vmax.f32 %v1823, 0.0
    %v2032 = vmax.f32 %v1824, 0.0
    %v2033 = vmax.f32 %v1825, 0.0
    %v2034 = vmax.f32 %v1826, 0.0
    %v2035 = vmax.f32 %v1827, 0.0
    %v2036 = vmax.f32 %v1828, 0.0
    %v2037 = vmax.f32 %v1829, 0.0
    %v2038 = vmax.f32 %v1830, 0.0
    %v2039 = vmax.f32 %v1831, 0.0
    %v2040 = vmax.f32 %v1832, 0.0
    %v2041 = vmax.f32 %v1833, 0.0
    %v2042 = vmax.f32 %v1834, 0.0
    %v2043 = vmax.f32 %v1835, 0.0
    %v2044 = vmax.f32 %v1836, 0.0
    %v2045 = vmax.f32 %v1837, 0.0
    %v2046 = vmax.f32 %v1838, 0.0
    %v2047 = vmax.f32 %v1839, 0.0
    %v2048 = vmax.f32 %v1840, 0.0
    %v2049 = vmax.f32 %v1841, 0.0
    %v2050 = vmax.f32 %v1842, 0.0
    %v2051 = vmax.f32 %v1843, 0.0
    %v2052 = vmax.f32 %v1844, 0.0
    %v2053 = vmax.f32 %v1845, 0.0
    %v2054 = vmax.f32 %v1846, 0.0
    %v2055 = vmax.f32 %v1847, 0.0
    %v2056 = vmax.f32 %v1848, 0.0
    %v2057 = vmax.f32 %v1849, 0.0
    %v2058 = vmax.f32 %v1850, 0.0
    %v2059 = vmax.f32 %v1851, 0.0
    %v2060 = vmax.f32 %v1852, 0.0
    %v2061 = vmax.f32 %v1853, 0.0
    %v2062 = vmax.f32 %v1854, 0.0
    %v2063 = vmax.f32 %v1855, 0.0
    %v2064 = vmax.f32 %v1856, 0.0
    %v2065 = vmax.f32 %v1857, 0.0
    %v2066 = vmax.f32 %v1858, 0.0
    %v2067 = vmax.f32 %v1859, 0.0
    %v2068 = vmax.f32 %v1860, 0.0
    %v2069 = vmax.f32 %v1861, 0.0
    %v2070 = vmax.f32 %v1862, 0.0
    %v2071 = vmax.f32 %v1863, 0.0
    %v2072 = vmax.f32 %v1864, 0.0
    %v2073 = vmax.f32 %v1865, 0.0
    %v2074 = vmax.f32 %v1866, 0.0
    %v2075 = vmax.f32 %v1867, 0.0
    %v2076 = vmax.f32 %v1868, 0.0
    %v2077 = vmax.f32 %v1869, 0.0
    %v2078 = vmax.f32 %v1870, 0.0
    %v2079 = vmax.f32 %v1871, 0.0
    %v2080 = vmax.f32 %v1872, 0.0
    %v2081 = vmax.f32 %v1873, 0.0
    %v2082 = vmax.f32 %v1874, 0.0
    %v2083 = vmax.f32 %v1875, 0.0
    %v2084 = vmax.f32 %v1876, 0.0
    %v2085 = vmax.f32 %v1877, 0.0
    %v2086 = vmax.f32 %v1878, 0.0
    %v2087 = vmax.f32 %v1879, 0.0
    %v2088 = vmax.f32 %v1880, 0.0
    %v2089 = vmax.f32 %v1881, 0.0
    %v2090 = vmax.f32 %v1882, 0.0
    %v2091 = vmax.f32 %v1883, 0.0
    %v2092 = vmax.f32 %v1884, 0.0
    %v2093 = vmax.f32 %v1885, 0.0
    %v2094 = vmax.f32 %v1886, 0.0
    %v2095 = vmax.f32 %v1887, 0.0
    %v2096 = vmax.f32 %v1888, 0.0
    %v2097 = vmax.f32 %v1889, 0.0
    %v2098 = vmax.f32 %v1890, 0.0
    %v2099 = vmax.f32 %v1891, 0.0
    %v2100 = vmax.f32 %v1892, 0.0
    %v2101 = vmax.f32 %v1893, 0.0
    %v2102 = vmax.f32 %v1894, 0.0
    %v2103 = vmax.f32 %v1895, 0.0
    %v2104 = vmax.f32 %v1896, 0.0
    %v2105 = vmax.f32 %v1897, 0.0
    %v2106 = vmax.f32 %v1898, 0.0
    %v2107 = vmax.f32 %v1899, 0.0
    %v2108 = vmax.f32 %v1900, 0.0
    %v2109 = vmax.f32 %v1901, 0.0
    %v2110 = vmax.f32 %v1902, 0.0
    %v2111 = vmax.f32 %v1903, 0.0
    %v2112 = vmax.f32 %v1904, 0.0
    %v2113 = vmax.f32 %v1905, 0.0
    %v2114 = vmax.f32 %v1906, 0.0
    %v2115 = vmax.f32 %v1907, 0.0
    %v2116 = vmax.f32 %v1908, 0.0
    %v2117 = vmax.f32 %v1909, 0.0
    %v2118 = vmax.f32 %v1910, 0.0
    %v2119 = vmax.f32 %v1911, 0.0
    %v2120 = vmax.f32 %v1912, 0.0
    %v2121 = vmax.f32 %v1913, 0.0
    %v2122 = vmax.f32 %v1914, 0.0
    %v2123 = vmax.f32 %v1915, 0.0
    %v2124 = vmax.f32 %v1916, 0.0
    %v2125 = vmax.f32 %v1917, 0.0
    %v2126 = vmax.f32 %v1918, 0.0
    %v2127 = vmax.f32 %v1919, 0.0
    %v2128 = vmax.f32 %v1920, 0.0
    %v2129 = vmax.f32 %v1921, 0.0
    %v2130 = vmax.f32 %v1922, 0.0
    %v2131 = vmax.f32 %v1923, 0.0
    %v2132 = vmax.f32 %v1924, 0.0
    %v2133 = vmax.f32 %v1925, 0.0
    %v2134 = vmax.f32 %v1926, 0.0
    %v2135 = vmax.f32 %v1927, 0.0
    %v2136 = vmax.f32 %v1928, 0.0
    %v2137 = vmax.f32 %v1929, 0.0
    %v2138 = vmax.f32 %v1930, 0.0
    %v2139 = vmax.f32 %v1931, 0.0
    %v2140 = vmax.f32 %v1932, 0.0
    %v2141 = vmax.f32 %v1933, 0.0
    %v2142 = vmax.f32 %v1934, 0.0
    %v2143 = vmax.f32 %v1935, 0.0
    %v2144 = vmax.f32 %v1936, 0.0
    %v2145 = vmax.f32 %v1937, 0.0
    %v2146 = vmax.f32 %v1938, 0.0
    %v2147 = vmax.f32 %v1939, 0.0
    %v2148 = vmax.f32 %v1940, 0.0
    %v2149 = vmax.f32 %v1941, 0.0
    %v2150 = vpack.c.bf16 %v1950, %v1942
    %v2151 = vpack.c.bf16 %v1951, %v1943
    %v2152 = vpack.c.bf16 %v1952, %v1944
    %v2153 = vpack.c.bf16 %v1953, %v1945
    %v2154 = vpack.c.bf16 %v1954, %v1946
    %v2155 = vpack.c.bf16 %v1955, %v1947
    %v2156 = vpack.c.bf16 %v1956, %v1948
    %v2157 = vpack.c.bf16 %v1957, %v1949
    %v2158 = vpack.c.bf16 %v1966, %v1958
    %v2159 = vpack.c.bf16 %v1967, %v1959
    %v2160 = vpack.c.bf16 %v1968, %v1960
    %v2161 = vpack.c.bf16 %v1969, %v1961
    %v2162 = vpack.c.bf16 %v1970, %v1962
    %v2163 = vpack.c.bf16 %v1971, %v1963
    %v2164 = vpack.c.bf16 %v1972, %v1964
    %v2165 = vpack.c.bf16 %v1973, %v1965
    %v2166 = vpack.c.bf16 %v1982, %v1974
    %v2167 = vpack.c.bf16 %v1983, %v1975
    %v2168 = vpack.c.bf16 %v1984, %v1976
    %v2169 = vpack.c.bf16 %v1985, %v1977
    %v2170 = vpack.c.bf16 %v1986, %v1978
    %v2171 = vpack.c.bf16 %v1987, %v1979
    %v2172 = vpack.c.bf16 %v1988, %v1980
    %v2173 = vpack.c.bf16 %v1989, %v1981
    %v2174 = vpack.c.bf16 %v1998, %v1990
    %v2175 = vpack.c.bf16 %v1999, %v1991
    %v2176 = vpack.c.bf16 %v2000, %v1992
    %v2177 = vpack.c.bf16 %v2001, %v1993
    %v2178 = vpack.c.bf16 %v2002, %v1994
    %v2179 = vpack.c.bf16 %v2003, %v1995
    %v2180 = vpack.c.bf16 %v2004, %v1996
    %v2181 = vpack.c.bf16 %v2005, %v1997
    %v2182 = vpack.c.bf16 %v2014, %v2006
    %v2183 = vpack.c.bf16 %v2015, %v2007
    %v2184 = vpack.c.bf16 %v2016, %v2008
    %v2185 = vpack.c.bf16 %v2017, %v2009
    %v2186 = vpack.c.bf16 %v2018, %v2010
    %v2187 = vpack.c.bf16 %v2019, %v2011
    %v2188 = vpack.c.bf16 %v2020, %v2012
    %v2189 = vpack.c.bf16 %v2021, %v2013
    %v2190 = vpack.c.bf16 %v2030, %v2022
    %v2191 = vpack.c.bf16 %v2031, %v2023
    %v2192 = vpack.c.bf16 %v2032, %v2024
    %v2193 = vpack.c.bf16 %v2033, %v2025
    %v2194 = vpack.c.bf16 %v2034, %v2026
    %v2195 = vpack.c.bf16 %v2035, %v2027
    %v2196 = vpack.c.bf16 %v2036, %v2028
    %v2197 = vpack.c.bf16 %v2037, %v2029
    %v2198 = vpack.c.bf16 %v2046, %v2038
    %v2199 = vpack.c.bf16 %v2047, %v2039
    %v2200 = vpack.c.bf16 %v2048, %v2040
    %v2201 = vpack.c.bf16 %v2049, %v2041
    %v2202 = vpack.c.bf16 %v2050, %v2042
    %v2203 = vpack.c.bf16 %v2051, %v2043
    %v2204 = vpack.c.bf16 %v2052, %v2044
    %v2205 = vpack.c.bf16 %v2053, %v2045
    %v2206 = vpack.c.bf16 %v2062, %v2054
    %v2207 = vpack.c.bf16 %v2063, %v2055
    %v2208 = vpack.c.bf16 %v2064, %v2056
    %v2209 = vpack.c.bf16 %v2065, %v2057
    %v2210 = vpack.c.bf16 %v2066, %v2058
    %v2211 = vpack.c.bf16 %v2067, %v2059
    %v2212 = vpack.c.bf16 %v2068, %v2060
    %v2213 = vpack.c.bf16 %v2069, %v2061
    %v2214 = vpack.c.bf16 %v2078, %v2070
    %v2215 = vpack.c.bf16 %v2079, %v2071
    %v2216 = vpack.c.bf16 %v2080, %v2072
    %v2217 = vpack.c.bf16 %v2081, %v2073
    %v2218 = vpack.c.bf16 %v2082, %v2074
    %v2219 = vpack.c.bf16 %v2083, %v2075
    %v2220 = vpack.c.bf16 %v2084, %v2076
    %v2221 = vpack.c.bf16 %v2085, %v2077
    %v2222 = vpack.c.bf16 %v2094, %v2086
    %v2223 = vpack.c.bf16 %v2095, %v2087
    %v2224 = vpack.c.bf16 %v2096, %v2088
    %v2225 = vpack.c.bf16 %v2097, %v2089
    %v2226 = vpack.c.bf16 %v2098, %v2090
    %v2227 = vpack.c.bf16 %v2099, %v2091
    %v2228 = vpack.c.bf16 %v2100, %v2092
    %v2229 = vpack.c.bf16 %v2101, %v2093
    %v2230 = vpack.c.bf16 %v2110, %v2102
    %v2231 = vpack.c.bf16 %v2111, %v2103
    %v2232 = vpack.c.bf16 %v2112, %v2104
    %v2233 = vpack.c.bf16 %v2113, %v2105
    %v2234 = vpack.c.bf16 %v2114, %v2106
    %v2235 = vpack.c.bf16 %v2115, %v2107
    %v2236 = vpack.c.bf16 %v2116, %v2108
    %v2237 = vpack.c.bf16 %v2117, %v2109
    %v2238 = vpack.c.bf16 %v2126, %v2118
    %v2239 = vpack.c.bf16 %v2127, %v2119
    %v2240 = vpack.c.bf16 %v2128, %v2120
    %v2241 = vpack.c.bf16 %v2129, %v2121
    %v2242 = vpack.c.bf16 %v2130, %v2122
    %v2243 = vpack.c.bf16 %v2131, %v2123
    %v2244 = vpack.c.bf16 %v2132, %v2124
    %v2245 = vpack.c.bf16 %v2133, %v2125
    %v2246 = vpack.c.bf16 %v2142, %v2134
    %v2247 = vpack.c.bf16 %v2143, %v2135
    %v2248 = vpack.c.bf16 %v2144, %v2136
    %v2249 = vpack.c.bf16 %v2145, %v2137
    %v2250 = vpack.c.bf16 %v2146, %v2138
    %v2251 = vpack.c.bf16 %v2147, %v2139
    %v2252 = vpack.c.bf16 %v2148, %v2140
    %v2253 = vpack.c.bf16 %v2149, %v2141
    %v2254 = vld [vmem:[#allocation2] sm:$0xff]
    %v2255 = vld [vmem:[#allocation2 + $0x8] sm:$0xff]
    %v2256 = vld [vmem:[#allocation2 + $0x10] sm:$0xff]
    %v2257 = vld [vmem:[#allocation2 + $0x18] sm:$0xff]
    %v2258 = vld [vmem:[#allocation2 + $0x20] sm:$0xff]
    %v2259 = vld [vmem:[#allocation2 + $0x28] sm:$0xff]
    %v2260 = vld [vmem:[#allocation2 + $0x30] sm:$0xff]
    %v2261 = vld [vmem:[#allocation2 + $0x38] sm:$0xff]
    %v2262 = vld [vmem:[#allocation2 + $0x40] sm:$0xff]
    %v2263 = vld [vmem:[#allocation2 + $0x48] sm:$0xff]
    %v2264 = vld [vmem:[#allocation2 + $0x50] sm:$0xff]
    %v2265 = vld [vmem:[#allocation2 + $0x58] sm:$0xff]
    %v2266 = vld [vmem:[#allocation2 + $0x60] sm:$0xff]
    %v2267 = vld [vmem:[#allocation2 + $0x68] sm:$0xff]
    %v2268 = vld [vmem:[#allocation2 + $0x70] sm:$0xff]
    %v2269 = vld [vmem:[#allocation2 + $0x78] sm:$0xff]
    %v2270 = vld [vmem:[#allocation2 + $0x80] sm:$0xff]
    %v2271 = vld [vmem:[#allocation2 + $0x88] sm:$0xff]
    %v2272 = vld [vmem:[#allocation2 + $0x90] sm:$0xff]
    %v2273 = vld [vmem:[#allocation2 + $0x98] sm:$0xff]
    %v2274 = vld [vmem:[#allocation2 + $0xa0] sm:$0xff]
    %v2275 = vld [vmem:[#allocation2 + $0xa8] sm:$0xff]
    %v2276 = vld [vmem:[#allocation2 + $0xb0] sm:$0xff]
    %v2277 = vld [vmem:[#allocation2 + $0xb8] sm:$0xff]
    %v2278 = vld [vmem:[#allocation2 + $0xc0] sm:$0xff]
    %v2279 = vld [vmem:[#allocation2 + $0xc8] sm:$0xff]
    %v2280 = vld [vmem:[#allocation2 + $0xd0] sm:$0xff]
    %v2281 = vld [vmem:[#allocation2 + $0xd8] sm:$0xff]
    %v2282 = vld [vmem:[#allocation2 + $0xe0] sm:$0xff]
    %v2283 = vld [vmem:[#allocation2 + $0xe8] sm:$0xff]
    %v2284 = vld [vmem:[#allocation2 + $0xf0] sm:$0xff]
    %v2285 = vld [vmem:[#allocation2 + $0xf8] sm:$0xff]
    %v2286 = vld [vmem:[#allocation2 + $0x100] sm:$0xff]
    %v2287 = vld [vmem:[#allocation2 + $0x108] sm:$0xff]
    %v2288 = vld [vmem:[#allocation2 + $0x110] sm:$0xff]
    %v2289 = vld [vmem:[#allocation2 + $0x118] sm:$0xff]
    %v2290 = vld [vmem:[#allocation2 + $0x120] sm:$0xff]
    %v2291 = vld [vmem:[#allocation2 + $0x128] sm:$0xff]
    %v2292 = vld [vmem:[#allocation2 + $0x130] sm:$0xff]
    %v2293 = vld [vmem:[#allocation2 + $0x138] sm:$0xff]
    %v2294 = vld [vmem:[#allocation2 + $0x140] sm:$0xff]
    %v2295 = vld [vmem:[#allocation2 + $0x148] sm:$0xff]
    %v2296 = vld [vmem:[#allocation2 + $0x150] sm:$0xff]
    %v2297 = vld [vmem:[#allocation2 + $0x158] sm:$0xff]
    %v2298 = vld [vmem:[#allocation2 + $0x160] sm:$0xff]
    %v2299 = vld [vmem:[#allocation2 + $0x168] sm:$0xff]
    %v2300 = vld [vmem:[#allocation2 + $0x170] sm:$0xff]
    %v2301 = vld [vmem:[#allocation2 + $0x178] sm:$0xff]
    %v2302 = vld [vmem:[#allocation2 + $0x180] sm:$0xff]
    %v2303 = vld [vmem:[#allocation2 + $0x188] sm:$0xff]
    %v2304 = vld [vmem:[#allocation2 + $0x190] sm:$0xff]
    %v2305 = vld [vmem:[#allocation2 + $0x198] sm:$0xff]
    %v2306 = vld [vmem:[#allocation2 + $0x1a0] sm:$0xff]
    %v2307 = vld [vmem:[#allocation2 + $0x1a8] sm:$0xff]
    %v2308 = vld [vmem:[#allocation2 + $0x1b0] sm:$0xff]
    %v2309 = vld [vmem:[#allocation2 + $0x1b8] sm:$0xff]
    %v2310 = vld [vmem:[#allocation2 + $0x1c0] sm:$0xff]
    %v2311 = vld [vmem:[#allocation2 + $0x1c8] sm:$0xff]
    %v2312 = vld [vmem:[#allocation2 + $0x1d0] sm:$0xff]
    %v2313 = vld [vmem:[#allocation2 + $0x1d8] sm:$0xff]
    %v2314 = vld [vmem:[#allocation2 + $0x1e0] sm:$0xff]
    %v2315 = vld [vmem:[#allocation2 + $0x1e8] sm:$0xff]
    %v2316 = vld [vmem:[#allocation2 + $0x1f0] sm:$0xff]
    %v2317 = vld [vmem:[#allocation2 + $0x1f8] sm:$0xff]
    %v2318 = vld [vmem:[#allocation2 + $0x200] sm:$0xff]
    %v2319 = vld [vmem:[#allocation2 + $0x208] sm:$0xff]
    %v2320 = vld [vmem:[#allocation2 + $0x210] sm:$0xff]
    %v2321 = vld [vmem:[#allocation2 + $0x218] sm:$0xff]
    %v2322 = vld [vmem:[#allocation2 + $0x220] sm:$0xff]
    %v2323 = vld [vmem:[#allocation2 + $0x228] sm:$0xff]
    %v2324 = vld [vmem:[#allocation2 + $0x230] sm:$0xff]
    %v2325 = vld [vmem:[#allocation2 + $0x238] sm:$0xff]
    %v2326 = vld [vmem:[#allocation2 + $0x240] sm:$0xff]
    %v2327 = vld [vmem:[#allocation2 + $0x248] sm:$0xff]
    %v2328 = vld [vmem:[#allocation2 + $0x250] sm:$0xff]
    %v2329 = vld [vmem:[#allocation2 + $0x258] sm:$0xff]
    %v2330 = vld [vmem:[#allocation2 + $0x260] sm:$0xff]
    %v2331 = vld [vmem:[#allocation2 + $0x268] sm:$0xff]
    %v2332 = vld [vmem:[#allocation2 + $0x270] sm:$0xff]
    %v2333 = vld [vmem:[#allocation2 + $0x278] sm:$0xff]
    %v2334 = vld [vmem:[#allocation2 + $0x280] sm:$0xff]
    %v2335 = vld [vmem:[#allocation2 + $0x288] sm:$0xff]
    %v2336 = vld [vmem:[#allocation2 + $0x290] sm:$0xff]
    %v2337 = vld [vmem:[#allocation2 + $0x298] sm:$0xff]
    %v2338 = vld [vmem:[#allocation2 + $0x2a0] sm:$0xff]
    %v2339 = vld [vmem:[#allocation2 + $0x2a8] sm:$0xff]
    %v2340 = vld [vmem:[#allocation2 + $0x2b0] sm:$0xff]
    %v2341 = vld [vmem:[#allocation2 + $0x2b8] sm:$0xff]
    %v2342 = vld [vmem:[#allocation2 + $0x2c0] sm:$0xff]
    %v2343 = vld [vmem:[#allocation2 + $0x2c8] sm:$0xff]
    %v2344 = vld [vmem:[#allocation2 + $0x2d0] sm:$0xff]
    %v2345 = vld [vmem:[#allocation2 + $0x2d8] sm:$0xff]
    %v2346 = vld [vmem:[#allocation2 + $0x2e0] sm:$0xff]
    %v2347 = vld [vmem:[#allocation2 + $0x2e8] sm:$0xff]
    %v2348 = vld [vmem:[#allocation2 + $0x2f0] sm:$0xff]
    %v2349 = vld [vmem:[#allocation2 + $0x2f8] sm:$0xff]
    %v2350 = vld [vmem:[#allocation2 + $0x300] sm:$0xff]
    %v2351 = vld [vmem:[#allocation2 + $0x308] sm:$0xff]
    %v2352 = vld [vmem:[#allocation2 + $0x310] sm:$0xff]
    %v2353 = vld [vmem:[#allocation2 + $0x318] sm:$0xff]
    %v2354 = vld [vmem:[#allocation2 + $0x320] sm:$0xff]
    %v2355 = vld [vmem:[#allocation2 + $0x328] sm:$0xff]
    %v2356 = vld [vmem:[#allocation2 + $0x330] sm:$0xff]
    %v2357 = vld [vmem:[#allocation2 + $0x338] sm:$0xff]
    %v2358 = vld [vmem:[#allocation2 + $0x340] sm:$0xff]
    %v2359 = vld [vmem:[#allocation2 + $0x348] sm:$0xff]
    %v2360 = vld [vmem:[#allocation2 + $0x350] sm:$0xff]
    %v2361 = vld [vmem:[#allocation2 + $0x358] sm:$0xff]
    %v2362 = vld [vmem:[#allocation2 + $0x360] sm:$0xff]
    %v2363 = vld [vmem:[#allocation2 + $0x368] sm:$0xff]
    %v2364 = vld [vmem:[#allocation2 + $0x370] sm:$0xff]
    %v2365 = vld [vmem:[#allocation2 + $0x378] sm:$0xff]
    %v2366 = vld [vmem:[#allocation2 + $0x380] sm:$0xff]
    %v2367 = vld [vmem:[#allocation2 + $0x388] sm:$0xff]
    %v2368 = vld [vmem:[#allocation2 + $0x390] sm:$0xff]
    %v2369 = vld [vmem:[#allocation2 + $0x398] sm:$0xff]
    %v2370 = vld [vmem:[#allocation2 + $0x3a0] sm:$0xff]
    %v2371 = vld [vmem:[#allocation2 + $0x3a8] sm:$0xff]
    %v2372 = vld [vmem:[#allocation2 + $0x3b0] sm:$0xff]
    %v2373 = vld [vmem:[#allocation2 + $0x3b8] sm:$0xff]
    %v2374 = vld [vmem:[#allocation2 + $0x3c0] sm:$0xff]
    %v2375 = vld [vmem:[#allocation2 + $0x3c8] sm:$0xff]
    %v2376 = vld [vmem:[#allocation2 + $0x3d0] sm:$0xff]
    %v2377 = vld [vmem:[#allocation2 + $0x3d8] sm:$0xff]
    %v2378 = vld [vmem:[#allocation2 + $0x3e0] sm:$0xff]
    %v2379 = vld [vmem:[#allocation2 + $0x3e8] sm:$0xff]
    %v2380 = vld [vmem:[#allocation2 + $0x3f0] sm:$0xff]
    %v2381 = vld [vmem:[#allocation2 + $0x3f8] sm:$0xff]
    %v2382 = vld [vmem:[#allocation2 + $0x400] sm:$0xff]
    %v2383 = vld [vmem:[#allocation2 + $0x408] sm:$0xff]
    %v2384 = vld [vmem:[#allocation2 + $0x410] sm:$0xff]
    %v2385 = vld [vmem:[#allocation2 + $0x418] sm:$0xff]
    %v2386 = vld [vmem:[#allocation2 + $0x420] sm:$0xff]
    %v2387 = vld [vmem:[#allocation2 + $0x428] sm:$0xff]
    %v2388 = vld [vmem:[#allocation2 + $0x430] sm:$0xff]
    %v2389 = vld [vmem:[#allocation2 + $0x438] sm:$0xff]
    %v2390 = vld [vmem:[#allocation2 + $0x440] sm:$0xff]
    %v2391 = vld [vmem:[#allocation2 + $0x448] sm:$0xff]
    %v2392 = vld [vmem:[#allocation2 + $0x450] sm:$0xff]
    %v2393 = vld [vmem:[#allocation2 + $0x458] sm:$0xff]
    %v2394 = vld [vmem:[#allocation2 + $0x460] sm:$0xff]
    %v2395 = vld [vmem:[#allocation2 + $0x468] sm:$0xff]
    %v2396 = vld [vmem:[#allocation2 + $0x470] sm:$0xff]
    %v2397 = vld [vmem:[#allocation2 + $0x478] sm:$0xff]
    %v2398 = vld [vmem:[#allocation2 + $0x480] sm:$0xff]
    %v2399 = vld [vmem:[#allocation2 + $0x488] sm:$0xff]
    %v2400 = vld [vmem:[#allocation2 + $0x490] sm:$0xff]
    %v2401 = vld [vmem:[#allocation2 + $0x498] sm:$0xff]
    %v2402 = vld [vmem:[#allocation2 + $0x4a0] sm:$0xff]
    %v2403 = vld [vmem:[#allocation2 + $0x4a8] sm:$0xff]
    %v2404 = vld [vmem:[#allocation2 + $0x4b0] sm:$0xff]
    %v2405 = vld [vmem:[#allocation2 + $0x4b8] sm:$0xff]
    %v2406 = vld [vmem:[#allocation2 + $0x4c0] sm:$0xff]
    %v2407 = vld [vmem:[#allocation2 + $0x4c8] sm:$0xff]
    %v2408 = vld [vmem:[#allocation2 + $0x4d0] sm:$0xff]
    %v2409 = vld [vmem:[#allocation2 + $0x4d8] sm:$0xff]
    %v2410 = vld [vmem:[#allocation2 + $0x4e0] sm:$0xff]
    %v2411 = vld [vmem:[#allocation2 + $0x4e8] sm:$0xff]
    %v2412 = vld [vmem:[#allocation2 + $0x4f0] sm:$0xff]
    %v2413 = vld [vmem:[#allocation2 + $0x4f8] sm:$0xff]
    %v2414 = vld [vmem:[#allocation2 + $0x500] sm:$0xff]
    %v2415 = vld [vmem:[#allocation2 + $0x508] sm:$0xff]
    %v2416 = vld [vmem:[#allocation2 + $0x510] sm:$0xff]
    %v2417 = vld [vmem:[#allocation2 + $0x518] sm:$0xff]
    %v2418 = vld [vmem:[#allocation2 + $0x520] sm:$0xff]
    %v2419 = vld [vmem:[#allocation2 + $0x528] sm:$0xff]
    %v2420 = vld [vmem:[#allocation2 + $0x530] sm:$0xff]
    %v2421 = vld [vmem:[#allocation2 + $0x538] sm:$0xff]
    %v2422 = vld [vmem:[#allocation2 + $0x540] sm:$0xff]
    %v2423 = vld [vmem:[#allocation2 + $0x548] sm:$0xff]
    %v2424 = vld [vmem:[#allocation2 + $0x550] sm:$0xff]
    %v2425 = vld [vmem:[#allocation2 + $0x558] sm:$0xff]
    %v2426 = vld [vmem:[#allocation2 + $0x560] sm:$0xff]
    %v2427 = vld [vmem:[#allocation2 + $0x568] sm:$0xff]
    %v2428 = vld [vmem:[#allocation2 + $0x570] sm:$0xff]
    %v2429 = vld [vmem:[#allocation2 + $0x578] sm:$0xff]
    %v2430 = vld [vmem:[#allocation2 + $0x580] sm:$0xff]
    %v2431 = vld [vmem:[#allocation2 + $0x588] sm:$0xff]
    %v2432 = vld [vmem:[#allocation2 + $0x590] sm:$0xff]
    %v2433 = vld [vmem:[#allocation2 + $0x598] sm:$0xff]
    %v2434 = vld [vmem:[#allocation2 + $0x5a0] sm:$0xff]
    %v2435 = vld [vmem:[#allocation2 + $0x5a8] sm:$0xff]
    %v2436 = vld [vmem:[#allocation2 + $0x5b0] sm:$0xff]
    %v2437 = vld [vmem:[#allocation2 + $0x5b8] sm:$0xff]
    %v2438 = vld [vmem:[#allocation2 + $0x5c0] sm:$0xff]
    %v2439 = vld [vmem:[#allocation2 + $0x5c8] sm:$0xff]
    %v2440 = vld [vmem:[#allocation2 + $0x5d0] sm:$0xff]
    %v2441 = vld [vmem:[#allocation2 + $0x5d8] sm:$0xff]
    %v2442 = vld [vmem:[#allocation2 + $0x5e0] sm:$0xff]
    %v2443 = vld [vmem:[#allocation2 + $0x5e8] sm:$0xff]
    %v2444 = vld [vmem:[#allocation2 + $0x5f0] sm:$0xff]
    %v2445 = vld [vmem:[#allocation2 + $0x5f8] sm:$0xff]
    %v2446 = vld [vmem:[#allocation2 + $0x600] sm:$0xff]
    %v2447 = vld [vmem:[#allocation2 + $0x608] sm:$0xff]
    %v2448 = vld [vmem:[#allocation2 + $0x610] sm:$0xff]
    %v2449 = vld [vmem:[#allocation2 + $0x618] sm:$0xff]
    %v2450 = vld [vmem:[#allocation2 + $0x620] sm:$0xff]
    %v2451 = vld [vmem:[#allocation2 + $0x628] sm:$0xff]
    %v2452 = vld [vmem:[#allocation2 + $0x630] sm:$0xff]
    %v2453 = vld [vmem:[#allocation2 + $0x638] sm:$0xff]
    %v2454 = vld [vmem:[#allocation2 + $0x640] sm:$0xff]
    %v2455 = vld [vmem:[#allocation2 + $0x648] sm:$0xff]
    %v2456 = vld [vmem:[#allocation2 + $0x650] sm:$0xff]
    %v2457 = vld [vmem:[#allocation2 + $0x658] sm:$0xff]
    %v2458 = vld [vmem:[#allocation2 + $0x660] sm:$0xff]
    %v2459 = vld [vmem:[#allocation2 + $0x668] sm:$0xff]
    %v2460 = vld [vmem:[#allocation2 + $0x670] sm:$0xff]
    %v2461 = vld [vmem:[#allocation2 + $0x678] sm:$0xff]
    %v2462 = vld [vmem:[#allocation2 + $0x680] sm:$0xff]
    %v2463 = vld [vmem:[#allocation2 + $0x688] sm:$0xff]
    %v2464 = vld [vmem:[#allocation2 + $0x690] sm:$0xff]
    %v2465 = vld [vmem:[#allocation2 + $0x698] sm:$0xff]
    %v2466 = vld [vmem:[#allocation2 + $0x6a0] sm:$0xff]
    %v2467 = vld [vmem:[#allocation2 + $0x6a8] sm:$0xff]
    %v2468 = vld [vmem:[#allocation2 + $0x6b0] sm:$0xff]
    %v2469 = vld [vmem:[#allocation2 + $0x6b8] sm:$0xff]
    %v2470 = vld [vmem:[#allocation2 + $0x6c0] sm:$0xff]
    %v2471 = vld [vmem:[#allocation2 + $0x6c8] sm:$0xff]
    %v2472 = vld [vmem:[#allocation2 + $0x6d0] sm:$0xff]
    %v2473 = vld [vmem:[#allocation2 + $0x6d8] sm:$0xff]
    %v2474 = vld [vmem:[#allocation2 + $0x6e0] sm:$0xff]
    %v2475 = vld [vmem:[#allocation2 + $0x6e8] sm:$0xff]
    %v2476 = vld [vmem:[#allocation2 + $0x6f0] sm:$0xff]
    %v2477 = vld [vmem:[#allocation2 + $0x6f8] sm:$0xff]
    %v2478 = vld [vmem:[#allocation2 + $0x700] sm:$0xff]
    %v2479 = vld [vmem:[#allocation2 + $0x708] sm:$0xff]
    %v2480 = vld [vmem:[#allocation2 + $0x710] sm:$0xff]
    %v2481 = vld [vmem:[#allocation2 + $0x718] sm:$0xff]
    %v2482 = vld [vmem:[#allocation2 + $0x720] sm:$0xff]
    %v2483 = vld [vmem:[#allocation2 + $0x728] sm:$0xff]
    %v2484 = vld [vmem:[#allocation2 + $0x730] sm:$0xff]
    %v2485 = vld [vmem:[#allocation2 + $0x738] sm:$0xff]
    %v2486 = vld [vmem:[#allocation2 + $0x740] sm:$0xff]
    %v2487 = vld [vmem:[#allocation2 + $0x748] sm:$0xff]
    %v2488 = vld [vmem:[#allocation2 + $0x750] sm:$0xff]
    %v2489 = vld [vmem:[#allocation2 + $0x758] sm:$0xff]
    %v2490 = vld [vmem:[#allocation2 + $0x760] sm:$0xff]
    %v2491 = vld [vmem:[#allocation2 + $0x768] sm:$0xff]
    %v2492 = vld [vmem:[#allocation2 + $0x770] sm:$0xff]
    %v2493 = vld [vmem:[#allocation2 + $0x778] sm:$0xff]
    %v2494 = vld [vmem:[#allocation2 + $0x780] sm:$0xff]
    %v2495 = vld [vmem:[#allocation2 + $0x788] sm:$0xff]
    %v2496 = vld [vmem:[#allocation2 + $0x790] sm:$0xff]
    %v2497 = vld [vmem:[#allocation2 + $0x798] sm:$0xff]
    %v2498 = vld [vmem:[#allocation2 + $0x7a0] sm:$0xff]
    %v2499 = vld [vmem:[#allocation2 + $0x7a8] sm:$0xff]
    %v2500 = vld [vmem:[#allocation2 + $0x7b0] sm:$0xff]
    %v2501 = vld [vmem:[#allocation2 + $0x7b8] sm:$0xff]
    %v2502 = vld [vmem:[#allocation2 + $0x7c0] sm:$0xff]
    %v2503 = vld [vmem:[#allocation2 + $0x7c8] sm:$0xff]
    %v2504 = vld [vmem:[#allocation2 + $0x7d0] sm:$0xff]
    %v2505 = vld [vmem:[#allocation2 + $0x7d8] sm:$0xff]
    %v2506 = vld [vmem:[#allocation2 + $0x7e0] sm:$0xff]
    %v2507 = vld [vmem:[#allocation2 + $0x7e8] sm:$0xff]
    %v2508 = vld [vmem:[#allocation2 + $0x7f0] sm:$0xff]
    %v2509 = vld [vmem:[#allocation2 + $0x7f8] sm:$0xff]
    %v2510 = vld [vmem:[%s6] sm:$0xf]
    %v2512 = vperm.slane %v2510, 0
    %v2513 = vperm.slane %v2510, 1
    %v2514 = vperm.slane %v2510, 2
    %v2515 = vperm.slane %v2510, 3
    %v2776 = vunpack.c.l.b16 %v2254
    %v2777 = vunpack.c.h.b16 %v2254
    %v2778 = vunpack.c.l.b16 %v2255
    %v2779 = vunpack.c.h.b16 %v2255
    %v2780 = vunpack.c.l.b16 %v2256
    %v2781 = vunpack.c.h.b16 %v2256
    %v2782 = vunpack.c.l.b16 %v2257
    %v2783 = vunpack.c.h.b16 %v2257
    %v2784 = vunpack.c.l.b16 %v2258
    %v2785 = vunpack.c.h.b16 %v2258
    %v2786 = vunpack.c.l.b16 %v2259
    %v2787 = vunpack.c.h.b16 %v2259
    %v2788 = vunpack.c.l.b16 %v2260
    %v2789 = vunpack.c.h.b16 %v2260
    %v2790 = vunpack.c.l.b16 %v2261
    %v2791 = vunpack.c.h.b16 %v2261
    %v2792 = vunpack.c.l.b16 %v2262
    %v2793 = vunpack.c.h.b16 %v2262
    %v2794 = vunpack.c.l.b16 %v2263
    %v2795 = vunpack.c.h.b16 %v2263
    %v2796 = vunpack.c.l.b16 %v2264
    %v2797 = vunpack.c.h.b16 %v2264
    %v2798 = vunpack.c.l.b16 %v2265
    %v2799 = vunpack.c.h.b16 %v2265
    %v2800 = vunpack.c.l.b16 %v2266
    %v2801 = vunpack.c.h.b16 %v2266
    %v2802 = vunpack.c.l.b16 %v2267
    %v2803 = vunpack.c.h.b16 %v2267
    %v2804 = vunpack.c.l.b16 %v2268
    %v2805 = vunpack.c.h.b16 %v2268
    %v2806 = vunpack.c.l.b16 %v2269
    %v2807 = vunpack.c.h.b16 %v2269
    %v2808 = vunpack.c.l.b16 %v2270
    %v2809 = vunpack.c.h.b16 %v2270
    %v2810 = vunpack.c.l.b16 %v2271
    %v2811 = vunpack.c.h.b16 %v2271
    %v2812 = vunpack.c.l.b16 %v2272
    %v2813 = vunpack.c.h.b16 %v2272
    %v2814 = vunpack.c.l.b16 %v2273
    %v2815 = vunpack.c.h.b16 %v2273
    %v2816 = vunpack.c.l.b16 %v2274
    %v2817 = vunpack.c.h.b16 %v2274
    %v2818 = vunpack.c.l.b16 %v2275
    %v2819 = vunpack.c.h.b16 %v2275
    %v2820 = vunpack.c.l.b16 %v2276
    %v2821 = vunpack.c.h.b16 %v2276
    %v2822 = vunpack.c.l.b16 %v2277
    %v2823 = vunpack.c.h.b16 %v2277
    %v2824 = vunpack.c.l.b16 %v2278
    %v2825 = vunpack.c.h.b16 %v2278
    %v2826 = vunpack.c.l.b16 %v2279
    %v2827 = vunpack.c.h.b16 %v2279
    %v2828 = vunpack.c.l.b16 %v2280
    %v2829 = vunpack.c.h.b16 %v2280
    %v2830 = vunpack.c.l.b16 %v2281
    %v2831 = vunpack.c.h.b16 %v2281
    %v2832 = vunpack.c.l.b16 %v2282
    %v2833 = vunpack.c.h.b16 %v2282
    %v2834 = vunpack.c.l.b16 %v2283
    %v2835 = vunpack.c.h.b16 %v2283
    %v2836 = vunpack.c.l.b16 %v2284
    %v2837 = vunpack.c.h.b16 %v2284
    %v2838 = vunpack.c.l.b16 %v2285
    %v2839 = vunpack.c.h.b16 %v2285
    %v2840 = vunpack.c.l.b16 %v2286
    %v2841 = vunpack.c.h.b16 %v2286
    %v2842 = vunpack.c.l.b16 %v2287
    %v2843 = vunpack.c.h.b16 %v2287
    %v2844 = vunpack.c.l.b16 %v2288
    %v2845 = vunpack.c.h.b16 %v2288
    %v2846 = vunpack.c.l.b16 %v2289
    %v2847 = vunpack.c.h.b16 %v2289
    %v2848 = vunpack.c.l.b16 %v2290
    %v2849 = vunpack.c.h.b16 %v2290
    %v2850 = vunpack.c.l.b16 %v2291
    %v2851 = vunpack.c.h.b16 %v2291
    %v2852 = vunpack.c.l.b16 %v2292
    %v2853 = vunpack.c.h.b16 %v2292
    %v2854 = vunpack.c.l.b16 %v2293
    %v2855 = vunpack.c.h.b16 %v2293
    %v2856 = vunpack.c.l.b16 %v2294
    %v2857 = vunpack.c.h.b16 %v2294
    %v2858 = vunpack.c.l.b16 %v2295
    %v2859 = vunpack.c.h.b16 %v2295
    %v2860 = vunpack.c.l.b16 %v2296
    %v2861 = vunpack.c.h.b16 %v2296
    %v2862 = vunpack.c.l.b16 %v2297
    %v2863 = vunpack.c.h.b16 %v2297
    %v2864 = vunpack.c.l.b16 %v2298
    %v2865 = vunpack.c.h.b16 %v2298
    %v2866 = vunpack.c.l.b16 %v2299
    %v2867 = vunpack.c.h.b16 %v2299
    %v2868 = vunpack.c.l.b16 %v2300
    %v2869 = vunpack.c.h.b16 %v2300
    %v2870 = vunpack.c.l.b16 %v2301
    %v2871 = vunpack.c.h.b16 %v2301
    %v2872 = vunpack.c.l.b16 %v2302
    %v2873 = vunpack.c.h.b16 %v2302
    %v2874 = vunpack.c.l.b16 %v2303
    %v2875 = vunpack.c.h.b16 %v2303
    %v2876 = vunpack.c.l.b16 %v2304
    %v2877 = vunpack.c.h.b16 %v2304
    %v2878 = vunpack.c.l.b16 %v2305
    %v2879 = vunpack.c.h.b16 %v2305
    %v2880 = vunpack.c.l.b16 %v2306
    %v2881 = vunpack.c.h.b16 %v2306
    %v2882 = vunpack.c.l.b16 %v2307
    %v2883 = vunpack.c.h.b16 %v2307
    %v2884 = vunpack.c.l.b16 %v2308
    %v2885 = vunpack.c.h.b16 %v2308
    %v2886 = vunpack.c.l.b16 %v2309
    %v2887 = vunpack.c.h.b16 %v2309
    %v2888 = vunpack.c.l.b16 %v2310
    %v2889 = vunpack.c.h.b16 %v2310
    %v2890 = vunpack.c.l.b16 %v2311
    %v2891 = vunpack.c.h.b16 %v2311
    %v2892 = vunpack.c.l.b16 %v2312
    %v2893 = vunpack.c.h.b16 %v2312
    %v2894 = vunpack.c.l.b16 %v2313
    %v2895 = vunpack.c.h.b16 %v2313
    %v2896 = vunpack.c.l.b16 %v2314
    %v2897 = vunpack.c.h.b16 %v2314
    %v2898 = vunpack.c.l.b16 %v2315
    %v2899 = vunpack.c.h.b16 %v2315
    %v2900 = vunpack.c.l.b16 %v2316
    %v2901 = vunpack.c.h.b16 %v2316
    %v2902 = vunpack.c.l.b16 %v2317
    %v2903 = vunpack.c.h.b16 %v2317
    %v2904 = vunpack.c.l.b16 %v2318
    %v2905 = vunpack.c.h.b16 %v2318
    %v2906 = vunpack.c.l.b16 %v2319
    %v2907 = vunpack.c.h.b16 %v2319
    %v2908 = vunpack.c.l.b16 %v2320
    %v2909 = vunpack.c.h.b16 %v2320
    %v2910 = vunpack.c.l.b16 %v2321
    %v2911 = vunpack.c.h.b16 %v2321
    %v2912 = vunpack.c.l.b16 %v2322
    %v2913 = vunpack.c.h.b16 %v2322
    %v2914 = vunpack.c.l.b16 %v2323
    %v2915 = vunpack.c.h.b16 %v2323
    %v2916 = vunpack.c.l.b16 %v2324
    %v2917 = vunpack.c.h.b16 %v2324
    %v2918 = vunpack.c.l.b16 %v2325
    %v2919 = vunpack.c.h.b16 %v2325
    %v2920 = vunpack.c.l.b16 %v2326
    %v2921 = vunpack.c.h.b16 %v2326
    %v2922 = vunpack.c.l.b16 %v2327
    %v2923 = vunpack.c.h.b16 %v2327
    %v2924 = vunpack.c.l.b16 %v2328
    %v2925 = vunpack.c.h.b16 %v2328
    %v2926 = vunpack.c.l.b16 %v2329
    %v2927 = vunpack.c.h.b16 %v2329
    %v2928 = vunpack.c.l.b16 %v2330
    %v2929 = vunpack.c.h.b16 %v2330
    %v2930 = vunpack.c.l.b16 %v2331
    %v2931 = vunpack.c.h.b16 %v2331
    %v2932 = vunpack.c.l.b16 %v2332
    %v2933 = vunpack.c.h.b16 %v2332
    %v2934 = vunpack.c.l.b16 %v2333
    %v2935 = vunpack.c.h.b16 %v2333
    %v2936 = vunpack.c.l.b16 %v2334
    %v2937 = vunpack.c.h.b16 %v2334
    %v2938 = vunpack.c.l.b16 %v2335
    %v2939 = vunpack.c.h.b16 %v2335
    %v2940 = vunpack.c.l.b16 %v2336
    %v2941 = vunpack.c.h.b16 %v2336
    %v2942 = vunpack.c.l.b16 %v2337
    %v2943 = vunpack.c.h.b16 %v2337
    %v2944 = vunpack.c.l.b16 %v2338
    %v2945 = vunpack.c.h.b16 %v2338
    %v2946 = vunpack.c.l.b16 %v2339
    %v2947 = vunpack.c.h.b16 %v2339
    %v2948 = vunpack.c.l.b16 %v2340
    %v2949 = vunpack.c.h.b16 %v2340
    %v2950 = vunpack.c.l.b16 %v2341
    %v2951 = vunpack.c.h.b16 %v2341
    %v2952 = vunpack.c.l.b16 %v2342
    %v2953 = vunpack.c.h.b16 %v2342
    %v2954 = vunpack.c.l.b16 %v2343
    %v2955 = vunpack.c.h.b16 %v2343
    %v2956 = vunpack.c.l.b16 %v2344
    %v2957 = vunpack.c.h.b16 %v2344
    %v2958 = vunpack.c.l.b16 %v2345
    %v2959 = vunpack.c.h.b16 %v2345
    %v2960 = vunpack.c.l.b16 %v2346
    %v2961 = vunpack.c.h.b16 %v2346
    %v2962 = vunpack.c.l.b16 %v2347
    %v2963 = vunpack.c.h.b16 %v2347
    %v2964 = vunpack.c.l.b16 %v2348
    %v2965 = vunpack.c.h.b16 %v2348
    %v2966 = vunpack.c.l.b16 %v2349
    %v2967 = vunpack.c.h.b16 %v2349
    %v2968 = vunpack.c.l.b16 %v2350
    %v2969 = vunpack.c.h.b16 %v2350
    %v2970 = vunpack.c.l.b16 %v2351
    %v2971 = vunpack.c.h.b16 %v2351
    %v2972 = vunpack.c.l.b16 %v2352
    %v2973 = vunpack.c.h.b16 %v2352
    %v2974 = vunpack.c.l.b16 %v2353
    %v2975 = vunpack.c.h.b16 %v2353
    %v2976 = vunpack.c.l.b16 %v2354
    %v2977 = vunpack.c.h.b16 %v2354
    %v2978 = vunpack.c.l.b16 %v2355
    %v2979 = vunpack.c.h.b16 %v2355
    %v2980 = vunpack.c.l.b16 %v2356
    %v2981 = vunpack.c.h.b16 %v2356
    %v2982 = vunpack.c.l.b16 %v2357
    %v2983 = vunpack.c.h.b16 %v2357
    %v2984 = vunpack.c.l.b16 %v2358
    %v2985 = vunpack.c.h.b16 %v2358
    %v2986 = vunpack.c.l.b16 %v2359
    %v2987 = vunpack.c.h.b16 %v2359
    %v2988 = vunpack.c.l.b16 %v2360
    %v2989 = vunpack.c.h.b16 %v2360
    %v2990 = vunpack.c.l.b16 %v2361
    %v2991 = vunpack.c.h.b16 %v2361
    %v2992 = vunpack.c.l.b16 %v2362
    %v2993 = vunpack.c.h.b16 %v2362
    %v2994 = vunpack.c.l.b16 %v2363
    %v2995 = vunpack.c.h.b16 %v2363
    %v2996 = vunpack.c.l.b16 %v2364
    %v2997 = vunpack.c.h.b16 %v2364
    %v2998 = vunpack.c.l.b16 %v2365
    %v2999 = vunpack.c.h.b16 %v2365
    %v3000 = vunpack.c.l.b16 %v2366
    %v3001 = vunpack.c.h.b16 %v2366
    %v3002 = vunpack.c.l.b16 %v2367
    %v3003 = vunpack.c.h.b16 %v2367
    %v3004 = vunpack.c.l.b16 %v2368
    %v3005 = vunpack.c.h.b16 %v2368
    %v3006 = vunpack.c.l.b16 %v2369
    %v3007 = vunpack.c.h.b16 %v2369
    %v3008 = vunpack.c.l.b16 %v2370
    %v3009 = vunpack.c.h.b16 %v2370
    %v3010 = vunpack.c.l.b16 %v2371
    %v3011 = vunpack.c.h.b16 %v2371
    %v3012 = vunpack.c.l.b16 %v2372
    %v3013 = vunpack.c.h.b16 %v2372
    %v3014 = vunpack.c.l.b16 %v2373
    %v3015 = vunpack.c.h.b16 %v2373
    %v3016 = vunpack.c.l.b16 %v2374
    %v3017 = vunpack.c.h.b16 %v2374
    %v3018 = vunpack.c.l.b16 %v2375
    %v3019 = vunpack.c.h.b16 %v2375
    %v3020 = vunpack.c.l.b16 %v2376
    %v3021 = vunpack.c.h.b16 %v2376
    %v3022 = vunpack.c.l.b16 %v2377
    %v3023 = vunpack.c.h.b16 %v2377
    %v3024 = vunpack.c.l.b16 %v2378
    %v3025 = vunpack.c.h.b16 %v2378
    %v3026 = vunpack.c.l.b16 %v2379
    %v3027 = vunpack.c.h.b16 %v2379
    %v3028 = vunpack.c.l.b16 %v2380
    %v3029 = vunpack.c.h.b16 %v2380
    %v3030 = vunpack.c.l.b16 %v2381
    %v3031 = vunpack.c.h.b16 %v2381
    %v3032 = vunpack.c.l.b16 %v2382
    %v3033 = vunpack.c.h.b16 %v2382
    %v3034 = vunpack.c.l.b16 %v2383
    %v3035 = vunpack.c.h.b16 %v2383
    %v3036 = vunpack.c.l.b16 %v2384
    %v3037 = vunpack.c.h.b16 %v2384
    %v3038 = vunpack.c.l.b16 %v2385
    %v3039 = vunpack.c.h.b16 %v2385
    %v3040 = vunpack.c.l.b16 %v2386
    %v3041 = vunpack.c.h.b16 %v2386
    %v3042 = vunpack.c.l.b16 %v2387
    %v3043 = vunpack.c.h.b16 %v2387
    %v3044 = vunpack.c.l.b16 %v2388
    %v3045 = vunpack.c.h.b16 %v2388
    %v3046 = vunpack.c.l.b16 %v2389
    %v3047 = vunpack.c.h.b16 %v2389
    %v3048 = vunpack.c.l.b16 %v2390
    %v3049 = vunpack.c.h.b16 %v2390
    %v3050 = vunpack.c.l.b16 %v2391
    %v3051 = vunpack.c.h.b16 %v2391
    %v3052 = vunpack.c.l.b16 %v2392
    %v3053 = vunpack.c.h.b16 %v2392
    %v3054 = vunpack.c.l.b16 %v2393
    %v3055 = vunpack.c.h.b16 %v2393
    %v3056 = vunpack.c.l.b16 %v2394
    %v3057 = vunpack.c.h.b16 %v2394
    %v3058 = vunpack.c.l.b16 %v2395
    %v3059 = vunpack.c.h.b16 %v2395
    %v3060 = vunpack.c.l.b16 %v2396
    %v3061 = vunpack.c.h.b16 %v2396
    %v3062 = vunpack.c.l.b16 %v2397
    %v3063 = vunpack.c.h.b16 %v2397
    %v3064 = vunpack.c.l.b16 %v2398
    %v3065 = vunpack.c.h.b16 %v2398
    %v3066 = vunpack.c.l.b16 %v2399
    %v3067 = vunpack.c.h.b16 %v2399
    %v3068 = vunpack.c.l.b16 %v2400
    %v3069 = vunpack.c.h.b16 %v2400
    %v3070 = vunpack.c.l.b16 %v2401
    %v3071 = vunpack.c.h.b16 %v2401
    %v3072 = vunpack.c.l.b16 %v2402
    %v3073 = vunpack.c.h.b16 %v2402
    %v3074 = vunpack.c.l.b16 %v2403
    %v3075 = vunpack.c.h.b16 %v2403
    %v3076 = vunpack.c.l.b16 %v2404
    %v3077 = vunpack.c.h.b16 %v2404
    %v3078 = vunpack.c.l.b16 %v2405
    %v3079 = vunpack.c.h.b16 %v2405
    %v3080 = vunpack.c.l.b16 %v2406
    %v3081 = vunpack.c.h.b16 %v2406
    %v3082 = vunpack.c.l.b16 %v2407
    %v3083 = vunpack.c.h.b16 %v2407
    %v3084 = vunpack.c.l.b16 %v2408
    %v3085 = vunpack.c.h.b16 %v2408
    %v3086 = vunpack.c.l.b16 %v2409
    %v3087 = vunpack.c.h.b16 %v2409
    %v3088 = vunpack.c.l.b16 %v2410
    %v3089 = vunpack.c.h.b16 %v2410
    %v3090 = vunpack.c.l.b16 %v2411
    %v3091 = vunpack.c.h.b16 %v2411
    %v3092 = vunpack.c.l.b16 %v2412
    %v3093 = vunpack.c.h.b16 %v2412
    %v3094 = vunpack.c.l.b16 %v2413
    %v3095 = vunpack.c.h.b16 %v2413
    %v3096 = vunpack.c.l.b16 %v2414
    %v3097 = vunpack.c.h.b16 %v2414
    %v3098 = vunpack.c.l.b16 %v2415
    %v3099 = vunpack.c.h.b16 %v2415
    %v3100 = vunpack.c.l.b16 %v2416
    %v3101 = vunpack.c.h.b16 %v2416
    %v3102 = vunpack.c.l.b16 %v2417
    %v3103 = vunpack.c.h.b16 %v2417
    %v3104 = vunpack.c.l.b16 %v2418
    %v3105 = vunpack.c.h.b16 %v2418
    %v3106 = vunpack.c.l.b16 %v2419
    %v3107 = vunpack.c.h.b16 %v2419
    %v3108 = vunpack.c.l.b16 %v2420
    %v3109 = vunpack.c.h.b16 %v2420
    %v3110 = vunpack.c.l.b16 %v2421
    %v3111 = vunpack.c.h.b16 %v2421
    %v3112 = vunpack.c.l.b16 %v2422
    %v3113 = vunpack.c.h.b16 %v2422
    %v3114 = vunpack.c.l.b16 %v2423
    %v3115 = vunpack.c.h.b16 %v2423
    %v3116 = vunpack.c.l.b16 %v2424
    %v3117 = vunpack.c.h.b16 %v2424
    %v3118 = vunpack.c.l.b16 %v2425
    %v3119 = vunpack.c.h.b16 %v2425
    %v3120 = vunpack.c.l.b16 %v2426
    %v3121 = vunpack.c.h.b16 %v2426
    %v3122 = vunpack.c.l.b16 %v2427
    %v3123 = vunpack.c.h.b16 %v2427
    %v3124 = vunpack.c.l.b16 %v2428
    %v3125 = vunpack.c.h.b16 %v2428
    %v3126 = vunpack.c.l.b16 %v2429
    %v3127 = vunpack.c.h.b16 %v2429
    %v3128 = vunpack.c.l.b16 %v2430
    %v3129 = vunpack.c.h.b16 %v2430
    %v3130 = vunpack.c.l.b16 %v2431
    %v3131 = vunpack.c.h.b16 %v2431
    %v3132 = vunpack.c.l.b16 %v2432
    %v3133 = vunpack.c.h.b16 %v2432
    %v3134 = vunpack.c.l.b16 %v2433
    %v3135 = vunpack.c.h.b16 %v2433
    %v3136 = vunpack.c.l.b16 %v2434
    %v3137 = vunpack.c.h.b16 %v2434
    %v3138 = vunpack.c.l.b16 %v2435
    %v3139 = vunpack.c.h.b16 %v2435
    %v3140 = vunpack.c.l.b16 %v2436
    %v3141 = vunpack.c.h.b16 %v2436
    %v3142 = vunpack.c.l.b16 %v2437
    %v3143 = vunpack.c.h.b16 %v2437
    %v3144 = vunpack.c.l.b16 %v2438
    %v3145 = vunpack.c.h.b16 %v2438
    %v3146 = vunpack.c.l.b16 %v2439
    %v3147 = vunpack.c.h.b16 %v2439
    %v3148 = vunpack.c.l.b16 %v2440
    %v3149 = vunpack.c.h.b16 %v2440
    %v3150 = vunpack.c.l.b16 %v2441
    %v3151 = vunpack.c.h.b16 %v2441
    %v3152 = vunpack.c.l.b16 %v2442
    %v3153 = vunpack.c.h.b16 %v2442
    %v3154 = vunpack.c.l.b16 %v2443
    %v3155 = vunpack.c.h.b16 %v2443
    %v3156 = vunpack.c.l.b16 %v2444
    %v3157 = vunpack.c.h.b16 %v2444
    %v3158 = vunpack.c.l.b16 %v2445
    %v3159 = vunpack.c.h.b16 %v2445
    %v3160 = vunpack.c.l.b16 %v2446
    %v3161 = vunpack.c.h.b16 %v2446
    %v3162 = vunpack.c.l.b16 %v2447
    %v3163 = vunpack.c.h.b16 %v2447
    %v3164 = vunpack.c.l.b16 %v2448
    %v3165 = vunpack.c.h.b16 %v2448
    %v3166 = vunpack.c.l.b16 %v2449
    %v3167 = vunpack.c.h.b16 %v2449
    %v3168 = vunpack.c.l.b16 %v2450
    %v3169 = vunpack.c.h.b16 %v2450
    %v3170 = vunpack.c.l.b16 %v2451
    %v3171 = vunpack.c.h.b16 %v2451
    %v3172 = vunpack.c.l.b16 %v2452
    %v3173 = vunpack.c.h.b16 %v2452
    %v3174 = vunpack.c.l.b16 %v2453
    %v3175 = vunpack.c.h.b16 %v2453
    %v3176 = vunpack.c.l.b16 %v2454
    %v3177 = vunpack.c.h.b16 %v2454
    %v3178 = vunpack.c.l.b16 %v2455
    %v3179 = vunpack.c.h.b16 %v2455
    %v3180 = vunpack.c.l.b16 %v2456
    %v3181 = vunpack.c.h.b16 %v2456
    %v3182 = vunpack.c.l.b16 %v2457
    %v3183 = vunpack.c.h.b16 %v2457
    %v3184 = vunpack.c.l.b16 %v2458
    %v3185 = vunpack.c.h.b16 %v2458
    %v3186 = vunpack.c.l.b16 %v2459
    %v3187 = vunpack.c.h.b16 %v2459
    %v3188 = vunpack.c.l.b16 %v2460
    %v3189 = vunpack.c.h.b16 %v2460
    %v3190 = vunpack.c.l.b16 %v2461
    %v3191 = vunpack.c.h.b16 %v2461
    %v3192 = vunpack.c.l.b16 %v2462
    %v3193 = vunpack.c.h.b16 %v2462
    %v3194 = vunpack.c.l.b16 %v2463
    %v3195 = vunpack.c.h.b16 %v2463
    %v3196 = vunpack.c.l.b16 %v2464
    %v3197 = vunpack.c.h.b16 %v2464
    %v3198 = vunpack.c.l.b16 %v2465
    %v3199 = vunpack.c.h.b16 %v2465
    %v3200 = vunpack.c.l.b16 %v2466
    %v3201 = vunpack.c.h.b16 %v2466
    %v3202 = vunpack.c.l.b16 %v2467
    %v3203 = vunpack.c.h.b16 %v2467
    %v3204 = vunpack.c.l.b16 %v2468
    %v3205 = vunpack.c.h.b16 %v2468
    %v3206 = vunpack.c.l.b16 %v2469
    %v3207 = vunpack.c.h.b16 %v2469
    %v3208 = vunpack.c.l.b16 %v2470
    %v3209 = vunpack.c.h.b16 %v2470
    %v3210 = vunpack.c.l.b16 %v2471
    %v3211 = vunpack.c.h.b16 %v2471
    %v3212 = vunpack.c.l.b16 %v2472
    %v3213 = vunpack.c.h.b16 %v2472
    %v3214 = vunpack.c.l.b16 %v2473
    %v3215 = vunpack.c.h.b16 %v2473
    %v3216 = vunpack.c.l.b16 %v2474
    %v3217 = vunpack.c.h.b16 %v2474
    %v3218 = vunpack.c.l.b16 %v2475
    %v3219 = vunpack.c.h.b16 %v2475
    %v3220 = vunpack.c.l.b16 %v2476
    %v3221 = vunpack.c.h.b16 %v2476
    %v3222 = vunpack.c.l.b16 %v2477
    %v3223 = vunpack.c.h.b16 %v2477
    %v3224 = vunpack.c.l.b16 %v2478
    %v3225 = vunpack.c.h.b16 %v2478
    %v3226 = vunpack.c.l.b16 %v2479
    %v3227 = vunpack.c.h.b16 %v2479
    %v3228 = vunpack.c.l.b16 %v2480
    %v3229 = vunpack.c.h.b16 %v2480
    %v3230 = vunpack.c.l.b16 %v2481
    %v3231 = vunpack.c.h.b16 %v2481
    %v3232 = vunpack.c.l.b16 %v2482
    %v3233 = vunpack.c.h.b16 %v2482
    %v3234 = vunpack.c.l.b16 %v2483
    %v3235 = vunpack.c.h.b16 %v2483
    %v3236 = vunpack.c.l.b16 %v2484
    %v3237 = vunpack.c.h.b16 %v2484
    %v3238 = vunpack.c.l.b16 %v2485
    %v3239 = vunpack.c.h.b16 %v2485
    %v3240 = vunpack.c.l.b16 %v2486
    %v3241 = vunpack.c.h.b16 %v2486
    %v3242 = vunpack.c.l.b16 %v2487
    %v3243 = vunpack.c.h.b16 %v2487
    %v3244 = vunpack.c.l.b16 %v2488
    %v3245 = vunpack.c.h.b16 %v2488
    %v3246 = vunpack.c.l.b16 %v2489
    %v3247 = vunpack.c.h.b16 %v2489
    %v3248 = vunpack.c.l.b16 %v2490
    %v3249 = vunpack.c.h.b16 %v2490
    %v3250 = vunpack.c.l.b16 %v2491
    %v3251 = vunpack.c.h.b16 %v2491
    %v3252 = vunpack.c.l.b16 %v2492
    %v3253 = vunpack.c.h.b16 %v2492
    %v3254 = vunpack.c.l.b16 %v2493
    %v3255 = vunpack.c.h.b16 %v2493
    %v3256 = vunpack.c.l.b16 %v2494
    %v3257 = vunpack.c.h.b16 %v2494
    %v3258 = vunpack.c.l.b16 %v2495
    %v3259 = vunpack.c.h.b16 %v2495
    %v3260 = vunpack.c.l.b16 %v2496
    %v3261 = vunpack.c.h.b16 %v2496
    %v3262 = vunpack.c.l.b16 %v2497
    %v3263 = vunpack.c.h.b16 %v2497
    %v3264 = vunpack.c.l.b16 %v2498
    %v3265 = vunpack.c.h.b16 %v2498
    %v3266 = vunpack.c.l.b16 %v2499
    %v3267 = vunpack.c.h.b16 %v2499
    %v3268 = vunpack.c.l.b16 %v2500
    %v3269 = vunpack.c.h.b16 %v2500
    %v3270 = vunpack.c.l.b16 %v2501
    %v3271 = vunpack.c.h.b16 %v2501
    %v3272 = vunpack.c.l.b16 %v2502
    %v3273 = vunpack.c.h.b16 %v2502
    %v3274 = vunpack.c.l.b16 %v2503
    %v3275 = vunpack.c.h.b16 %v2503
    %v3276 = vunpack.c.l.b16 %v2504
    %v3277 = vunpack.c.h.b16 %v2504
    %v3278 = vunpack.c.l.b16 %v2505
    %v3279 = vunpack.c.h.b16 %v2505
    %v3280 = vunpack.c.l.b16 %v2506
    %v3281 = vunpack.c.h.b16 %v2506
    %v3282 = vunpack.c.l.b16 %v2507
    %v3283 = vunpack.c.h.b16 %v2507
    %v3284 = vunpack.c.l.b16 %v2508
    %v3285 = vunpack.c.h.b16 %v2508
    %v3286 = vunpack.c.l.b16 %v2509
    %v3287 = vunpack.c.h.b16 %v2509
    %v3288 = vpack.c.b16 %v2780, %v2776
    %v3289 = vpack.c.b16 %v2781, %v2777
    %v3290 = vpack.c.b16 %v2782, %v2778
    %v3291 = vpack.c.b16 %v2783, %v2779
    %v3292 = vpack.c.b16 %v2788, %v2784
    %v3293 = vpack.c.b16 %v2789, %v2785
    %v3294 = vpack.c.b16 %v2790, %v2786
    %v3295 = vpack.c.b16 %v2791, %v2787
    %v3296 = vpack.c.b16 %v2796, %v2792
    %v3297 = vpack.c.b16 %v2797, %v2793
    %v3298 = vpack.c.b16 %v2798, %v2794
    %v3299 = vpack.c.b16 %v2799, %v2795
    %v3300 = vpack.c.b16 %v2804, %v2800
    %v3301 = vpack.c.b16 %v2805, %v2801
    %v3302 = vpack.c.b16 %v2806, %v2802
    %v3303 = vpack.c.b16 %v2807, %v2803
    %v3304 = vpack.c.b16 %v2812, %v2808
    %v3305 = vpack.c.b16 %v2813, %v2809
    %v3306 = vpack.c.b16 %v2814, %v2810
    %v3307 = vpack.c.b16 %v2815, %v2811
    %v3308 = vpack.c.b16 %v2820, %v2816
    %v3309 = vpack.c.b16 %v2821, %v2817
    %v3310 = vpack.c.b16 %v2822, %v2818
    %v3311 = vpack.c.b16 %v2823, %v2819
    %v3312 = vpack.c.b16 %v2828, %v2824
    %v3313 = vpack.c.b16 %v2829, %v2825
    %v3314 = vpack.c.b16 %v2830, %v2826
    %v3315 = vpack.c.b16 %v2831, %v2827
    %v3316 = vpack.c.b16 %v2836, %v2832
    %v3317 = vpack.c.b16 %v2837, %v2833
    %v3318 = vpack.c.b16 %v2838, %v2834
    %v3319 = vpack.c.b16 %v2839, %v2835
    %v3320 = vpack.c.b16 %v2844, %v2840
    %v3321 = vpack.c.b16 %v2845, %v2841
    %v3322 = vpack.c.b16 %v2846, %v2842
    %v3323 = vpack.c.b16 %v2847, %v2843
    %v3324 = vpack.c.b16 %v2852, %v2848
    %v3325 = vpack.c.b16 %v2853, %v2849
    %v3326 = vpack.c.b16 %v2854, %v2850
    %v3327 = vpack.c.b16 %v2855, %v2851
    %v3328 = vpack.c.b16 %v2860, %v2856
    %v3329 = vpack.c.b16 %v2861, %v2857
    %v3330 = vpack.c.b16 %v2862, %v2858
    %v3331 = vpack.c.b16 %v2863, %v2859
    %v3332 = vpack.c.b16 %v2868, %v2864
    %v3333 = vpack.c.b16 %v2869, %v2865
    %v3334 = vpack.c.b16 %v2870, %v2866
    %v3335 = vpack.c.b16 %v2871, %v2867
    %v3336 = vpack.c.b16 %v2876, %v2872
    %v3337 = vpack.c.b16 %v2877, %v2873
    %v3338 = vpack.c.b16 %v2878, %v2874
    %v3339 = vpack.c.b16 %v2879, %v2875
    %v3340 = vpack.c.b16 %v2884, %v2880
    %v3341 = vpack.c.b16 %v2885, %v2881
    %v3342 = vpack.c.b16 %v2886, %v2882
    %v3343 = vpack.c.b16 %v2887, %v2883
    %v3344 = vpack.c.b16 %v2892, %v2888
    %v3345 = vpack.c.b16 %v2893, %v2889
    %v3346 = vpack.c.b16 %v2894, %v2890
    %v3347 = vpack.c.b16 %v2895, %v2891
    %v3348 = vpack.c.b16 %v2900, %v2896
    %v3349 = vpack.c.b16 %v2901, %v2897
    %v3350 = vpack.c.b16 %v2902, %v2898
    %v3351 = vpack.c.b16 %v2903, %v2899
    %v3352 = vpack.c.b16 %v2908, %v2904
    %v3353 = vpack.c.b16 %v2909, %v2905
    %v3354 = vpack.c.b16 %v2910, %v2906
    %v3355 = vpack.c.b16 %v2911, %v2907
    %v3356 = vpack.c.b16 %v2916, %v2912
    %v3357 = vpack.c.b16 %v2917, %v2913
    %v3358 = vpack.c.b16 %v2918, %v2914
    %v3359 = vpack.c.b16 %v2919, %v2915
    %v3360 = vpack.c.b16 %v2924, %v2920
    %v3361 = vpack.c.b16 %v2925, %v2921
    %v3362 = vpack.c.b16 %v2926, %v2922
    %v3363 = vpack.c.b16 %v2927, %v2923
    %v3364 = vpack.c.b16 %v2932, %v2928
    %v3365 = vpack.c.b16 %v2933, %v2929
    %v3366 = vpack.c.b16 %v2934, %v2930
    %v3367 = vpack.c.b16 %v2935, %v2931
    %v3368 = vpack.c.b16 %v2940, %v2936
    %v3369 = vpack.c.b16 %v2941, %v2937
    %v3370 = vpack.c.b16 %v2942, %v2938
    %v3371 = vpack.c.b16 %v2943, %v2939
    %v3372 = vpack.c.b16 %v2948, %v2944
    %v3373 = vpack.c.b16 %v2949, %v2945
    %v3374 = vpack.c.b16 %v2950, %v2946
    %v3375 = vpack.c.b16 %v2951, %v2947
    %v3376 = vpack.c.b16 %v2956, %v2952
    %v3377 = vpack.c.b16 %v2957, %v2953
    %v3378 = vpack.c.b16 %v2958, %v2954
    %v3379 = vpack.c.b16 %v2959, %v2955
    %v3380 = vpack.c.b16 %v2964, %v2960
    %v3381 = vpack.c.b16 %v2965, %v2961
    %v3382 = vpack.c.b16 %v2966, %v2962
    %v3383 = vpack.c.b16 %v2967, %v2963
    %v3384 = vpack.c.b16 %v2972, %v2968
    %v3385 = vpack.c.b16 %v2973, %v2969
    %v3386 = vpack.c.b16 %v2974, %v2970
    %v3387 = vpack.c.b16 %v2975, %v2971
    %v3388 = vpack.c.b16 %v2980, %v2976
    %v3389 = vpack.c.b16 %v2981, %v2977
    %v3390 = vpack.c.b16 %v2982, %v2978
    %v3391 = vpack.c.b16 %v2983, %v2979
    %v3392 = vpack.c.b16 %v2988, %v2984
    %v3393 = vpack.c.b16 %v2989, %v2985
    %v3394 = vpack.c.b16 %v2990, %v2986
    %v3395 = vpack.c.b16 %v2991, %v2987
    %v3396 = vpack.c.b16 %v2996, %v2992
    %v3397 = vpack.c.b16 %v2997, %v2993
    %v3398 = vpack.c.b16 %v2998, %v2994
    %v3399 = vpack.c.b16 %v2999, %v2995
    %v3400 = vpack.c.b16 %v3004, %v3000
    %v3401 = vpack.c.b16 %v3005, %v3001
    %v3402 = vpack.c.b16 %v3006, %v3002
    %v3403 = vpack.c.b16 %v3007, %v3003
    %v3404 = vpack.c.b16 %v3012, %v3008
    %v3405 = vpack.c.b16 %v3013, %v3009
    %v3406 = vpack.c.b16 %v3014, %v3010
    %v3407 = vpack.c.b16 %v3015, %v3011
    %v3408 = vpack.c.b16 %v3020, %v3016
    %v3409 = vpack.c.b16 %v3021, %v3017
    %v3410 = vpack.c.b16 %v3022, %v3018
    %v3411 = vpack.c.b16 %v3023, %v3019
    %v3412 = vpack.c.b16 %v3028, %v3024
    %v3413 = vpack.c.b16 %v3029, %v3025
    %v3414 = vpack.c.b16 %v3030, %v3026
    %v3415 = vpack.c.b16 %v3031, %v3027
    %v3416 = vpack.c.b16 %v3036, %v3032
    %v3417 = vpack.c.b16 %v3037, %v3033
    %v3418 = vpack.c.b16 %v3038, %v3034
    %v3419 = vpack.c.b16 %v3039, %v3035
    %v3420 = vpack.c.b16 %v3044, %v3040
    %v3421 = vpack.c.b16 %v3045, %v3041
    %v3422 = vpack.c.b16 %v3046, %v3042
    %v3423 = vpack.c.b16 %v3047, %v3043
    %v3424 = vpack.c.b16 %v3052, %v3048
    %v3425 = vpack.c.b16 %v3053, %v3049
    %v3426 = vpack.c.b16 %v3054, %v3050
    %v3427 = vpack.c.b16 %v3055, %v3051
    %v3428 = vpack.c.b16 %v3060, %v3056
    %v3429 = vpack.c.b16 %v3061, %v3057
    %v3430 = vpack.c.b16 %v3062, %v3058
    %v3431 = vpack.c.b16 %v3063, %v3059
    %v3432 = vpack.c.b16 %v3068, %v3064
    %v3433 = vpack.c.b16 %v3069, %v3065
    %v3434 = vpack.c.b16 %v3070, %v3066
    %v3435 = vpack.c.b16 %v3071, %v3067
    %v3436 = vpack.c.b16 %v3076, %v3072
    %v3437 = vpack.c.b16 %v3077, %v3073
    %v3438 = vpack.c.b16 %v3078, %v3074
    %v3439 = vpack.c.b16 %v3079, %v3075
    %v3440 = vpack.c.b16 %v3084, %v3080
    %v3441 = vpack.c.b16 %v3085, %v3081
    %v3442 = vpack.c.b16 %v3086, %v3082
    %v3443 = vpack.c.b16 %v3087, %v3083
    %v3444 = vpack.c.b16 %v3092, %v3088
    %v3445 = vpack.c.b16 %v3093, %v3089
    %v3446 = vpack.c.b16 %v3094, %v3090
    %v3447 = vpack.c.b16 %v3095, %v3091
    %v3448 = vpack.c.b16 %v3100, %v3096
    %v3449 = vpack.c.b16 %v3101, %v3097
    %v3450 = vpack.c.b16 %v3102, %v3098
    %v3451 = vpack.c.b16 %v3103, %v3099
    %v3452 = vpack.c.b16 %v3108, %v3104
    %v3453 = vpack.c.b16 %v3109, %v3105
    %v3454 = vpack.c.b16 %v3110, %v3106
    %v3455 = vpack.c.b16 %v3111, %v3107
    %v3456 = vpack.c.b16 %v3116, %v3112
    %v3457 = vpack.c.b16 %v3117, %v3113
    %v3458 = vpack.c.b16 %v3118, %v3114
    %v3459 = vpack.c.b16 %v3119, %v3115
    %v3460 = vpack.c.b16 %v3124, %v3120
    %v3461 = vpack.c.b16 %v3125, %v3121
    %v3462 = vpack.c.b16 %v3126, %v3122
    %v3463 = vpack.c.b16 %v3127, %v3123
    %v3464 = vpack.c.b16 %v3132, %v3128
    %v3465 = vpack.c.b16 %v3133, %v3129
    %v3466 = vpack.c.b16 %v3134, %v3130
    %v3467 = vpack.c.b16 %v3135, %v3131
    %v3468 = vpack.c.b16 %v3140, %v3136
    %v3469 = vpack.c.b16 %v3141, %v3137
    %v3470 = vpack.c.b16 %v3142, %v3138
    %v3471 = vpack.c.b16 %v3143, %v3139
    %v3472 = vpack.c.b16 %v3148, %v3144
    %v3473 = vpack.c.b16 %v3149, %v3145
    %v3474 = vpack.c.b16 %v3150, %v3146
    %v3475 = vpack.c.b16 %v3151, %v3147
    %v3476 = vpack.c.b16 %v3156, %v3152
    %v3477 = vpack.c.b16 %v3157, %v3153
    %v3478 = vpack.c.b16 %v3158, %v3154
    %v3479 = vpack.c.b16 %v3159, %v3155
    %v3480 = vpack.c.b16 %v3164, %v3160
    %v3481 = vpack.c.b16 %v3165, %v3161
    %v3482 = vpack.c.b16 %v3166, %v3162
    %v3483 = vpack.c.b16 %v3167, %v3163
    %v3484 = vpack.c.b16 %v3172, %v3168
    %v3485 = vpack.c.b16 %v3173, %v3169
    %v3486 = vpack.c.b16 %v3174, %v3170
    %v3487 = vpack.c.b16 %v3175, %v3171
    %v3488 = vpack.c.b16 %v3180, %v3176
    %v3489 = vpack.c.b16 %v3181, %v3177
    %v3490 = vpack.c.b16 %v3182, %v3178
    %v3491 = vpack.c.b16 %v3183, %v3179
    %v3492 = vpack.c.b16 %v3188, %v3184
    %v3493 = vpack.c.b16 %v3189, %v3185
    %v3494 = vpack.c.b16 %v3190, %v3186
    %v3495 = vpack.c.b16 %v3191, %v3187
    %v3496 = vpack.c.b16 %v3196, %v3192
    %v3497 = vpack.c.b16 %v3197, %v3193
    %v3498 = vpack.c.b16 %v3198, %v3194
    %v3499 = vpack.c.b16 %v3199, %v3195
    %v3500 = vpack.c.b16 %v3204, %v3200
    %v3501 = vpack.c.b16 %v3205, %v3201
    %v3502 = vpack.c.b16 %v3206, %v3202
    %v3503 = vpack.c.b16 %v3207, %v3203
    %v3504 = vpack.c.b16 %v3212, %v3208
    %v3505 = vpack.c.b16 %v3213, %v3209
    %v3506 = vpack.c.b16 %v3214, %v3210
    %v3507 = vpack.c.b16 %v3215, %v3211
    %v3508 = vpack.c.b16 %v3220, %v3216
    %v3509 = vpack.c.b16 %v3221, %v3217
    %v3510 = vpack.c.b16 %v3222, %v3218
    %v3511 = vpack.c.b16 %v3223, %v3219
    %v3512 = vpack.c.b16 %v3228, %v3224
    %v3513 = vpack.c.b16 %v3229, %v3225
    %v3514 = vpack.c.b16 %v3230, %v3226
    %v3515 = vpack.c.b16 %v3231, %v3227
    %v3516 = vpack.c.b16 %v3236, %v3232
    %v3517 = vpack.c.b16 %v3237, %v3233
    %v3518 = vpack.c.b16 %v3238, %v3234
    %v3519 = vpack.c.b16 %v3239, %v3235
    %v3520 = vpack.c.b16 %v3244, %v3240
    %v3521 = vpack.c.b16 %v3245, %v3241
    %v3522 = vpack.c.b16 %v3246, %v3242
    %v3523 = vpack.c.b16 %v3247, %v3243
    %v3524 = vpack.c.b16 %v3252, %v3248
    %v3525 = vpack.c.b16 %v3253, %v3249
    %v3526 = vpack.c.b16 %v3254, %v3250
    %v3527 = vpack.c.b16 %v3255, %v3251
    %v3528 = vpack.c.b16 %v3260, %v3256
    %v3529 = vpack.c.b16 %v3261, %v3257
    %v3530 = vpack.c.b16 %v3262, %v3258
    %v3531 = vpack.c.b16 %v3263, %v3259
    %v3532 = vpack.c.b16 %v3268, %v3264
    %v3533 = vpack.c.b16 %v3269, %v3265
    %v3534 = vpack.c.b16 %v3270, %v3266
    %v3535 = vpack.c.b16 %v3271, %v3267
    %v3536 = vpack.c.b16 %v3276, %v3272
    %v3537 = vpack.c.b16 %v3277, %v3273
    %v3538 = vpack.c.b16 %v3278, %v3274
    %v3539 = vpack.c.b16 %v3279, %v3275
    %v3540 = vpack.c.b16 %v3284, %v3280
    %v3541 = vpack.c.b16 %v3285, %v3281
    %v3542 = vpack.c.b16 %v3286, %v3282
    %v3543 = vpack.c.b16 %v3287, %v3283
    %3800 = vmatpush.bf16.msra.mxu0 %v3316
    %3801 = vmatpush.bf16.msra.mxu0 %v3312
    %3802 = vmatpush.bf16.msra.mxu0 %v3308
    %3803 = vmatpush.bf16.msra.mxu0 %v3304
    %3804 = vmatpush.bf16.msra.mxu0 %v3300
    %3805 = vmatpush.bf16.msra.mxu0 %v3296
    %3806 = vmatpush.bf16.msra.mxu0 %v3292
    %3807 = vmatpush.bf16.msra.mxu0 %v3288
    %3808 = vmatmul.bf16.gmra.mxu0 %v2150
    %v3809 = vpop.f32.mrf.mxu0
    %v3810 = vadd.f32 %v2512, %v3809
    %v3811 = vpop.f32.mrf.mxu0
    %v3812 = vadd.f32 %v2512, %v3811
    %3813 = vmatmul.bf16.gmra.mxu0 %v2158
    %v3814 = vpop.f32.mrf.mxu0
    %v3815 = vadd.f32 %v2512, %v3814
    %v3816 = vpop.f32.mrf.mxu0
    %v3817 = vadd.f32 %v2512, %v3816
    %3818 = vmatmul.bf16.gmra.mxu0 %v2166
    %v3819 = vpop.f32.mrf.mxu0
    %v3820 = vadd.f32 %v2512, %v3819
    %v3821 = vpop.f32.mrf.mxu0
    %v3822 = vadd.f32 %v2512, %v3821
    %3823 = vmatmul.bf16.gmra.mxu0 %v2174
    %v3824 = vpop.f32.mrf.mxu0
    %v3825 = vadd.f32 %v2512, %v3824
    %v3826 = vpop.f32.mrf.mxu0
    %v3827 = vadd.f32 %v2512, %v3826
    %3828 = vmatmul.bf16.gmra.mxu0 %v2182
    %v3829 = vpop.f32.mrf.mxu0
    %v3830 = vadd.f32 %v2512, %v3829
    %v3831 = vpop.f32.mrf.mxu0
    %v3832 = vadd.f32 %v2512, %v3831
    %3833 = vmatmul.bf16.gmra.mxu0 %v2190
    %v3834 = vpop.f32.mrf.mxu0
    %v3835 = vadd.f32 %v2512, %v3834
    %v3836 = vpop.f32.mrf.mxu0
    %v3837 = vadd.f32 %v2512, %v3836
    %3838 = vmatmul.bf16.gmra.mxu0 %v2198
    %v3839 = vpop.f32.mrf.mxu0
    %v3840 = vadd.f32 %v2512, %v3839
    %v3841 = vpop.f32.mrf.mxu0
    %v3842 = vadd.f32 %v2512, %v3841
    %3843 = vmatmul.bf16.gmra.mxu0 %v2206
    %v3844 = vpop.f32.mrf.mxu0
    %v3845 = vadd.f32 %v2512, %v3844
    %v3846 = vpop.f32.mrf.mxu0
    %v3847 = vadd.f32 %v2512, %v3846
    %3848 = vmatmul.bf16.gmra.mxu0 %v2214
    %v3849 = vpop.f32.mrf.mxu0
    %v3850 = vadd.f32 %v2512, %v3849
    %v3851 = vpop.f32.mrf.mxu0
    %v3852 = vadd.f32 %v2512, %v3851
    %3853 = vmatmul.bf16.gmra.mxu0 %v2222
    %v3854 = vpop.f32.mrf.mxu0
    %v3855 = vadd.f32 %v2512, %v3854
    %v3856 = vpop.f32.mrf.mxu0
    %v3857 = vadd.f32 %v2512, %v3856
    %3858 = vmatmul.bf16.gmra.mxu0 %v2230
    %v3859 = vpop.f32.mrf.mxu0
    %v3860 = vadd.f32 %v2512, %v3859
    %v3861 = vpop.f32.mrf.mxu0
    %v3862 = vadd.f32 %v2512, %v3861
    %3863 = vmatmul.bf16.gmra.mxu0 %v2238
    %v3864 = vpop.f32.mrf.mxu0
    %v3865 = vadd.f32 %v2512, %v3864
    %v3866 = vpop.f32.mrf.mxu0
    %v3867 = vadd.f32 %v2512, %v3866
    %3868 = vmatmul.bf16.gmra.mxu0 %v2246
    %v3869 = vpop.f32.mrf.mxu0
    %v3870 = vadd.f32 %v2512, %v3869
    %v3871 = vpop.f32.mrf.mxu0
    %v3872 = vadd.f32 %v2512, %v3871
    %3873 = vdwg.mxu0
    %3874 = vmatpush.bf16.msra.mxu0 %v3348
    %3875 = vmatpush.bf16.msra.mxu0 %v3344
    %3876 = vmatpush.bf16.msra.mxu0 %v3340
    %3877 = vmatpush.bf16.msra.mxu0 %v3336
    %3878 = vmatpush.bf16.msra.mxu0 %v3332
    %3879 = vmatpush.bf16.msra.mxu0 %v3328
    %3880 = vmatpush.bf16.msra.mxu0 %v3324
    %3881 = vmatpush.bf16.msra.mxu0 %v3320
    %3882 = vmatmul.bf16.gmra.mxu0 %v2151
    %v3883 = vpop.f32.mrf.mxu0
    %v3884 = vadd.f32 %v3810, %v3883
    %v3885 = vpop.f32.mrf.mxu0
    %v3886 = vadd.f32 %v3812, %v3885
    %3887 = vmatmul.bf16.gmra.mxu0 %v2159
    %v3888 = vpop.f32.mrf.mxu0
    %v3889 = vadd.f32 %v3815, %v3888
    %v3890 = vpop.f32.mrf.mxu0
    %v3891 = vadd.f32 %v3817, %v3890
    %3892 = vmatmul.bf16.gmra.mxu0 %v2167
    %v3893 = vpop.f32.mrf.mxu0
    %v3894 = vadd.f32 %v3820, %v3893
    %v3895 = vpop.f32.mrf.mxu0
    %v3896 = vadd.f32 %v3822, %v3895
    %3897 = vmatmul.bf16.gmra.mxu0 %v2175
    %v3898 = vpop.f32.mrf.mxu0
    %v3899 = vadd.f32 %v3825, %v3898
    %v3900 = vpop.f32.mrf.mxu0
    %v3901 = vadd.f32 %v3827, %v3900
    %3902 = vmatmul.bf16.gmra.mxu0 %v2183
    %v3903 = vpop.f32.mrf.mxu0
    %v3904 = vadd.f32 %v3830, %v3903
    %v3905 = vpop.f32.mrf.mxu0
    %v3906 = vadd.f32 %v3832, %v3905
    %3907 = vmatmul.bf16.gmra.mxu0 %v2191
    %v3908 = vpop.f32.mrf.mxu0
    %v3909 = vadd.f32 %v3835, %v3908
    %v3910 = vpop.f32.mrf.mxu0
    %v3911 = vadd.f32 %v3837, %v3910
    %3912 = vmatmul.bf16.gmra.mxu0 %v2199
    %v3913 = vpop.f32.mrf.mxu0
    %v3914 = vadd.f32 %v3840, %v3913
    %v3915 = vpop.f32.mrf.mxu0
    %v3916 = vadd.f32 %v3842, %v3915
    %3917 = vmatmul.bf16.gmra.mxu0 %v2207
    %v3918 = vpop.f32.mrf.mxu0
    %v3919 = vadd.f32 %v3845, %v3918
    %v3920 = vpop.f32.mrf.mxu0
    %v3921 = vadd.f32 %v3847, %v3920
    %3922 = vmatmul.bf16.gmra.mxu0 %v2215
    %v3923 = vpop.f32.mrf.mxu0
    %v3924 = vadd.f32 %v3850, %v3923
    %v3925 = vpop.f32.mrf.mxu0
    %v3926 = vadd.f32 %v3852, %v3925
    %3927 = vmatmul.bf16.gmra.mxu0 %v2223
    %v3928 = vpop.f32.mrf.mxu0
    %v3929 = vadd.f32 %v3855, %v3928
    %v3930 = vpop.f32.mrf.mxu0
    %v3931 = vadd.f32 %v3857, %v3930
    %3932 = vmatmul.bf16.gmra.mxu0 %v2231
    %v3933 = vpop.f32.mrf.mxu0
    %v3934 = vadd.f32 %v3860, %v3933
    %v3935 = vpop.f32.mrf.mxu0
    %v3936 = vadd.f32 %v3862, %v3935
    %3937 = vmatmul.bf16.gmra.mxu0 %v2239
    %v3938 = vpop.f32.mrf.mxu0
    %v3939 = vadd.f32 %v3865, %v3938
    %v3940 = vpop.f32.mrf.mxu0
    %v3941 = vadd.f32 %v3867, %v3940
    %3942 = vmatmul.bf16.gmra.mxu0 %v2247
    %v3943 = vpop.f32.mrf.mxu0
    %v3944 = vadd.f32 %v3870, %v3943
    %v3945 = vpop.f32.mrf.mxu0
    %v3946 = vadd.f32 %v3872, %v3945
    %3947 = vdwg.mxu0
    %3948 = vmatpush.bf16.msra.mxu0 %v3380
    %3949 = vmatpush.bf16.msra.mxu0 %v3376
    %3950 = vmatpush.bf16.msra.mxu0 %v3372
    %3951 = vmatpush.bf16.msra.mxu0 %v3368
    %3952 = vmatpush.bf16.msra.mxu0 %v3364
    %3953 = vmatpush.bf16.msra.mxu0 %v3360
    %3954 = vmatpush.bf16.msra.mxu0 %v3356
    %3955 = vmatpush.bf16.msra.mxu0 %v3352
    %3956 = vmatmul.bf16.gmra.mxu0 %v2152
    %v3957 = vpop.f32.mrf.mxu0
    %v3958 = vadd.f32 %v3884, %v3957
    %v3959 = vpop.f32.mrf.mxu0
    %v3960 = vadd.f32 %v3886, %v3959
    %3961 = vmatmul.bf16.gmra.mxu0 %v2160
    %v3962 = vpop.f32.mrf.mxu0
    %v3963 = vadd.f32 %v3889, %v3962
    %v3964 = vpop.f32.mrf.mxu0
    %v3965 = vadd.f32 %v3891, %v3964
    %3966 = vmatmul.bf16.gmra.mxu0 %v2168
    %v3967 = vpop.f32.mrf.mxu0
    %v3968 = vadd.f32 %v3894, %v3967
    %v3969 = vpop.f32.mrf.mxu0
    %v3970 = vadd.f32 %v3896, %v3969
    %3971 = vmatmul.bf16.gmra.mxu0 %v2176
    %v3972 = vpop.f32.mrf.mxu0
    %v3973 = vadd.f32 %v3899, %v3972
    %v3974 = vpop.f32.mrf.mxu0
    %v3975 = vadd.f32 %v3901, %v3974
    %3976 = vmatmul.bf16.gmra.mxu0 %v2184
    %v3977 = vpop.f32.mrf.mxu0
    %v3978 = vadd.f32 %v3904, %v3977
    %v3979 = vpop.f32.mrf.mxu0
    %v3980 = vadd.f32 %v3906, %v3979
    %3981 = vmatmul.bf16.gmra.mxu0 %v2192
    %v3982 = vpop.f32.mrf.mxu0
    %v3983 = vadd.f32 %v3909, %v3982
    %v3984 = vpop.f32.mrf.mxu0
    %v3985 = vadd.f32 %v3911, %v3984
    %3986 = vmatmul.bf16.gmra.mxu0 %v2200
    %v3987 = vpop.f32.mrf.mxu0
    %v3988 = vadd.f32 %v3914, %v3987
    %v3989 = vpop.f32.mrf.mxu0
    %v3990 = vadd.f32 %v3916, %v3989
    %3991 = vmatmul.bf16.gmra.mxu0 %v2208
    %v3992 = vpop.f32.mrf.mxu0
    %v3993 = vadd.f32 %v3919, %v3992
    %v3994 = vpop.f32.mrf.mxu0
    %v3995 = vadd.f32 %v3921, %v3994
    %3996 = vmatmul.bf16.gmra.mxu0 %v2216
    %v3997 = vpop.f32.mrf.mxu0
    %v3998 = vadd.f32 %v3924, %v3997
    %v3999 = vpop.f32.mrf.mxu0
    %v4000 = vadd.f32 %v3926, %v3999
    %4001 = vmatmul.bf16.gmra.mxu0 %v2224
    %v4002 = vpop.f32.mrf.mxu0
    %v4003 = vadd.f32 %v3929, %v4002
    %v4004 = vpop.f32.mrf.mxu0
    %v4005 = vadd.f32 %v3931, %v4004
    %4006 = vmatmul.bf16.gmra.mxu0 %v2232
    %v4007 = vpop.f32.mrf.mxu0
    %v4008 = vadd.f32 %v3934, %v4007
    %v4009 = vpop.f32.mrf.mxu0
    %v4010 = vadd.f32 %v3936, %v4009
    %4011 = vmatmul.bf16.gmra.mxu0 %v2240
    %v4012 = vpop.f32.mrf.mxu0
    %v4013 = vadd.f32 %v3939, %v4012
    %v4014 = vpop.f32.mrf.mxu0
    %v4015 = vadd.f32 %v3941, %v4014
    %4016 = vmatmul.bf16.gmra.mxu0 %v2248
    %v4017 = vpop.f32.mrf.mxu0
    %v4018 = vadd.f32 %v3944, %v4017
    %v4019 = vpop.f32.mrf.mxu0
    %v4020 = vadd.f32 %v3946, %v4019
    %4021 = vdwg.mxu0
    %4022 = vmatpush.bf16.msra.mxu0 %v3412
    %4023 = vmatpush.bf16.msra.mxu0 %v3408
    %4024 = vmatpush.bf16.msra.mxu0 %v3404
    %4025 = vmatpush.bf16.msra.mxu0 %v3400
    %4026 = vmatpush.bf16.msra.mxu0 %v3396
    %4027 = vmatpush.bf16.msra.mxu0 %v3392
    %4028 = vmatpush.bf16.msra.mxu0 %v3388
    %4029 = vmatpush.bf16.msra.mxu0 %v3384
    %4030 = vmatmul.bf16.gmra.mxu0 %v2153
    %v4031 = vpop.f32.mrf.mxu0
    %v4032 = vadd.f32 %v3958, %v4031
    %v4033 = vpop.f32.mrf.mxu0
    %v4034 = vadd.f32 %v3960, %v4033
    %4035 = vmatmul.bf16.gmra.mxu0 %v2161
    %v4036 = vpop.f32.mrf.mxu0
    %v4037 = vadd.f32 %v3963, %v4036
    %v4038 = vpop.f32.mrf.mxu0
    %v4039 = vadd.f32 %v3965, %v4038
    %4040 = vmatmul.bf16.gmra.mxu0 %v2169
    %v4041 = vpop.f32.mrf.mxu0
    %v4042 = vadd.f32 %v3968, %v4041
    %v4043 = vpop.f32.mrf.mxu0
    %v4044 = vadd.f32 %v3970, %v4043
    %4045 = vmatmul.bf16.gmra.mxu0 %v2177
    %v4046 = vpop.f32.mrf.mxu0
    %v4047 = vadd.f32 %v3973, %v4046
    %v4048 = vpop.f32.mrf.mxu0
    %v4049 = vadd.f32 %v3975, %v4048
    %4050 = vmatmul.bf16.gmra.mxu0 %v2185
    %v4051 = vpop.f32.mrf.mxu0
    %v4052 = vadd.f32 %v3978, %v4051
    %v4053 = vpop.f32.mrf.mxu0
    %v4054 = vadd.f32 %v3980, %v4053
    %4055 = vmatmul.bf16.gmra.mxu0 %v2193
    %v4056 = vpop.f32.mrf.mxu0
    %v4057 = vadd.f32 %v3983, %v4056
    %v4058 = vpop.f32.mrf.mxu0
    %v4059 = vadd.f32 %v3985, %v4058
    %4060 = vmatmul.bf16.gmra.mxu0 %v2201
    %v4061 = vpop.f32.mrf.mxu0
    %v4062 = vadd.f32 %v3988, %v4061
    %v4063 = vpop.f32.mrf.mxu0
    %v4064 = vadd.f32 %v3990, %v4063
    %4065 = vmatmul.bf16.gmra.mxu0 %v2209
    %v4066 = vpop.f32.mrf.mxu0
    %v4067 = vadd.f32 %v3993, %v4066
    %v4068 = vpop.f32.mrf.mxu0
    %v4069 = vadd.f32 %v3995, %v4068
    %4070 = vmatmul.bf16.gmra.mxu0 %v2217
    %v4071 = vpop.f32.mrf.mxu0
    %v4072 = vadd.f32 %v3998, %v4071
    %v4073 = vpop.f32.mrf.mxu0
    %v4074 = vadd.f32 %v4000, %v4073
    %4075 = vmatmul.bf16.gmra.mxu0 %v2225
    %v4076 = vpop.f32.mrf.mxu0
    %v4077 = vadd.f32 %v4003, %v4076
    %v4078 = vpop.f32.mrf.mxu0
    %v4079 = vadd.f32 %v4005, %v4078
    %4080 = vmatmul.bf16.gmra.mxu0 %v2233
    %v4081 = vpop.f32.mrf.mxu0
    %v4082 = vadd.f32 %v4008, %v4081
    %v4083 = vpop.f32.mrf.mxu0
    %v4084 = vadd.f32 %v4010, %v4083
    %4085 = vmatmul.bf16.gmra.mxu0 %v2241
    %v4086 = vpop.f32.mrf.mxu0
    %v4087 = vadd.f32 %v4013, %v4086
    %v4088 = vpop.f32.mrf.mxu0
    %v4089 = vadd.f32 %v4015, %v4088
    %4090 = vmatmul.bf16.gmra.mxu0 %v2249
    %v4091 = vpop.f32.mrf.mxu0
    %v4092 = vadd.f32 %v4018, %v4091
    %v4093 = vpop.f32.mrf.mxu0
    %v4094 = vadd.f32 %v4020, %v4093
    %4095 = vdwg.mxu0
    %4096 = vmatpush.bf16.msra.mxu0 %v3444
    %4097 = vmatpush.bf16.msra.mxu0 %v3440
    %4098 = vmatpush.bf16.msra.mxu0 %v3436
    %4099 = vmatpush.bf16.msra.mxu0 %v3432
    %4100 = vmatpush.bf16.msra.mxu0 %v3428
    %4101 = vmatpush.bf16.msra.mxu0 %v3424
    %4102 = vmatpush.bf16.msra.mxu0 %v3420
    %4103 = vmatpush.bf16.msra.mxu0 %v3416
    %4104 = vmatmul.bf16.gmra.mxu0 %v2154
    %v4105 = vpop.f32.mrf.mxu0
    %v4106 = vadd.f32 %v4032, %v4105
    %v4107 = vpop.f32.mrf.mxu0
    %v4108 = vadd.f32 %v4034, %v4107
    %4109 = vmatmul.bf16.gmra.mxu0 %v2162
    %v4110 = vpop.f32.mrf.mxu0
    %v4111 = vadd.f32 %v4037, %v4110
    %v4112 = vpop.f32.mrf.mxu0
    %v4113 = vadd.f32 %v4039, %v4112
    %4114 = vmatmul.bf16.gmra.mxu0 %v2170
    %v4115 = vpop.f32.mrf.mxu0
    %v4116 = vadd.f32 %v4042, %v4115
    %v4117 = vpop.f32.mrf.mxu0
    %v4118 = vadd.f32 %v4044, %v4117
    %4119 = vmatmul.bf16.gmra.mxu0 %v2178
    %v4120 = vpop.f32.mrf.mxu0
    %v4121 = vadd.f32 %v4047, %v4120
    %v4122 = vpop.f32.mrf.mxu0
    %v4123 = vadd.f32 %v4049, %v4122
    %4124 = vmatmul.bf16.gmra.mxu0 %v2186
    %v4125 = vpop.f32.mrf.mxu0
    %v4126 = vadd.f32 %v4052, %v4125
    %v4127 = vpop.f32.mrf.mxu0
    %v4128 = vadd.f32 %v4054, %v4127
    %4129 = vmatmul.bf16.gmra.mxu0 %v2194
    %v4130 = vpop.f32.mrf.mxu0
    %v4131 = vadd.f32 %v4057, %v4130
    %v4132 = vpop.f32.mrf.mxu0
    %v4133 = vadd.f32 %v4059, %v4132
    %4134 = vmatmul.bf16.gmra.mxu0 %v2202
    %v4135 = vpop.f32.mrf.mxu0
    %v4136 = vadd.f32 %v4062, %v4135
    %v4137 = vpop.f32.mrf.mxu0
    %v4138 = vadd.f32 %v4064, %v4137
    %4139 = vmatmul.bf16.gmra.mxu0 %v2210
    %v4140 = vpop.f32.mrf.mxu0
    %v4141 = vadd.f32 %v4067, %v4140
    %v4142 = vpop.f32.mrf.mxu0
    %v4143 = vadd.f32 %v4069, %v4142
    %4144 = vmatmul.bf16.gmra.mxu0 %v2218
    %v4145 = vpop.f32.mrf.mxu0
    %v4146 = vadd.f32 %v4072, %v4145
    %v4147 = vpop.f32.mrf.mxu0
    %v4148 = vadd.f32 %v4074, %v4147
    %4149 = vmatmul.bf16.gmra.mxu0 %v2226
    %v4150 = vpop.f32.mrf.mxu0
    %v4151 = vadd.f32 %v4077, %v4150
    %v4152 = vpop.f32.mrf.mxu0
    %v4153 = vadd.f32 %v4079, %v4152
    %4154 = vmatmul.bf16.gmra.mxu0 %v2234
    %v4155 = vpop.f32.mrf.mxu0
    %v4156 = vadd.f32 %v4082, %v4155
    %v4157 = vpop.f32.mrf.mxu0
    %v4158 = vadd.f32 %v4084, %v4157
    %4159 = vmatmul.bf16.gmra.mxu0 %v2242
    %v4160 = vpop.f32.mrf.mxu0
    %v4161 = vadd.f32 %v4087, %v4160
    %v4162 = vpop.f32.mrf.mxu0
    %v4163 = vadd.f32 %v4089, %v4162
    %4164 = vmatmul.bf16.gmra.mxu0 %v2250
    %v4165 = vpop.f32.mrf.mxu0
    %v4166 = vadd.f32 %v4092, %v4165
    %v4167 = vpop.f32.mrf.mxu0
    %v4168 = vadd.f32 %v4094, %v4167
    %4169 = vdwg.mxu0
    %4170 = vmatpush.bf16.msra.mxu0 %v3476
    %4171 = vmatpush.bf16.msra.mxu0 %v3472
    %4172 = vmatpush.bf16.msra.mxu0 %v3468
    %4173 = vmatpush.bf16.msra.mxu0 %v3464
    %4174 = vmatpush.bf16.msra.mxu0 %v3460
    %4175 = vmatpush.bf16.msra.mxu0 %v3456
    %4176 = vmatpush.bf16.msra.mxu0 %v3452
    %4177 = vmatpush.bf16.msra.mxu0 %v3448
    %4178 = vmatmul.bf16.gmra.mxu0 %v2155
    %v4179 = vpop.f32.mrf.mxu0
    %v4180 = vadd.f32 %v4106, %v4179
    %v4181 = vpop.f32.mrf.mxu0
    %v4182 = vadd.f32 %v4108, %v4181
    %4183 = vmatmul.bf16.gmra.mxu0 %v2163
    %v4184 = vpop.f32.mrf.mxu0
    %v4185 = vadd.f32 %v4111, %v4184
    %v4186 = vpop.f32.mrf.mxu0
    %v4187 = vadd.f32 %v4113, %v4186
    %4188 = vmatmul.bf16.gmra.mxu0 %v2171
    %v4189 = vpop.f32.mrf.mxu0
    %v4190 = vadd.f32 %v4116, %v4189
    %v4191 = vpop.f32.mrf.mxu0
    %v4192 = vadd.f32 %v4118, %v4191
    %4193 = vmatmul.bf16.gmra.mxu0 %v2179
    %v4194 = vpop.f32.mrf.mxu0
    %v4195 = vadd.f32 %v4121, %v4194
    %v4196 = vpop.f32.mrf.mxu0
    %v4197 = vadd.f32 %v4123, %v4196
    %4198 = vmatmul.bf16.gmra.mxu0 %v2187
    %v4199 = vpop.f32.mrf.mxu0
    %v4200 = vadd.f32 %v4126, %v4199
    %v4201 = vpop.f32.mrf.mxu0
    %v4202 = vadd.f32 %v4128, %v4201
    %4203 = vmatmul.bf16.gmra.mxu0 %v2195
    %v4204 = vpop.f32.mrf.mxu0
    %v4205 = vadd.f32 %v4131, %v4204
    %v4206 = vpop.f32.mrf.mxu0
    %v4207 = vadd.f32 %v4133, %v4206
    %4208 = vmatmul.bf16.gmra.mxu0 %v2203
    %v4209 = vpop.f32.mrf.mxu0
    %v4210 = vadd.f32 %v4136, %v4209
    %v4211 = vpop.f32.mrf.mxu0
    %v4212 = vadd.f32 %v4138, %v4211
    %4213 = vmatmul.bf16.gmra.mxu0 %v2211
    %v4214 = vpop.f32.mrf.mxu0
    %v4215 = vadd.f32 %v4141, %v4214
    %v4216 = vpop.f32.mrf.mxu0
    %v4217 = vadd.f32 %v4143, %v4216
    %4218 = vmatmul.bf16.gmra.mxu0 %v2219
    %v4219 = vpop.f32.mrf.mxu0
    %v4220 = vadd.f32 %v4146, %v4219
    %v4221 = vpop.f32.mrf.mxu0
    %v4222 = vadd.f32 %v4148, %v4221
    %4223 = vmatmul.bf16.gmra.mxu0 %v2227
    %v4224 = vpop.f32.mrf.mxu0
    %v4225 = vadd.f32 %v4151, %v4224
    %v4226 = vpop.f32.mrf.mxu0
    %v4227 = vadd.f32 %v4153, %v4226
    %4228 = vmatmul.bf16.gmra.mxu0 %v2235
    %v4229 = vpop.f32.mrf.mxu0
    %v4230 = vadd.f32 %v4156, %v4229
    %v4231 = vpop.f32.mrf.mxu0
    %v4232 = vadd.f32 %v4158, %v4231
    %4233 = vmatmul.bf16.gmra.mxu0 %v2243
    %v4234 = vpop.f32.mrf.mxu0
    %v4235 = vadd.f32 %v4161, %v4234
    %v4236 = vpop.f32.mrf.mxu0
    %v4237 = vadd.f32 %v4163, %v4236
    %4238 = vmatmul.bf16.gmra.mxu0 %v2251
    %v4239 = vpop.f32.mrf.mxu0
    %v4240 = vadd.f32 %v4166, %v4239
    %v4241 = vpop.f32.mrf.mxu0
    %v4242 = vadd.f32 %v4168, %v4241
    %4243 = vdwg.mxu0
    %4244 = vmatpush.bf16.msra.mxu0 %v3508
    %4245 = vmatpush.bf16.msra.mxu0 %v3504
    %4246 = vmatpush.bf16.msra.mxu0 %v3500
    %4247 = vmatpush.bf16.msra.mxu0 %v3496
    %4248 = vmatpush.bf16.msra.mxu0 %v3492
    %4249 = vmatpush.bf16.msra.mxu0 %v3488
    %4250 = vmatpush.bf16.msra.mxu0 %v3484
    %4251 = vmatpush.bf16.msra.mxu0 %v3480
    %4252 = vmatmul.bf16.gmra.mxu0 %v2156
    %v4253 = vpop.f32.mrf.mxu0
    %v4254 = vadd.f32 %v4180, %v4253
    %v4255 = vpop.f32.mrf.mxu0
    %v4256 = vadd.f32 %v4182, %v4255
    %4257 = vmatmul.bf16.gmra.mxu0 %v2164
    %v4258 = vpop.f32.mrf.mxu0
    %v4259 = vadd.f32 %v4185, %v4258
    %v4260 = vpop.f32.mrf.mxu0
    %v4261 = vadd.f32 %v4187, %v4260
    %4262 = vmatmul.bf16.gmra.mxu0 %v2172
    %v4263 = vpop.f32.mrf.mxu0
    %v4264 = vadd.f32 %v4190, %v4263
    %v4265 = vpop.f32.mrf.mxu0
    %v4266 = vadd.f32 %v4192, %v4265
    %4267 = vmatmul.bf16.gmra.mxu0 %v2180
    %v4268 = vpop.f32.mrf.mxu0
    %v4269 = vadd.f32 %v4195, %v4268
    %v4270 = vpop.f32.mrf.mxu0
    %v4271 = vadd.f32 %v4197, %v4270
    %4272 = vmatmul.bf16.gmra.mxu0 %v2188
    %v4273 = vpop.f32.mrf.mxu0
    %v4274 = vadd.f32 %v4200, %v4273
    %v4275 = vpop.f32.mrf.mxu0
    %v4276 = vadd.f32 %v4202, %v4275
    %4277 = vmatmul.bf16.gmra.mxu0 %v2196
    %v4278 = vpop.f32.mrf.mxu0
    %v4279 = vadd.f32 %v4205, %v4278
    %v4280 = vpop.f32.mrf.mxu0
    %v4281 = vadd.f32 %v4207, %v4280
    %4282 = vmatmul.bf16.gmra.mxu0 %v2204
    %v4283 = vpop.f32.mrf.mxu0
    %v4284 = vadd.f32 %v4210, %v4283
    %v4285 = vpop.f32.mrf.mxu0
    %v4286 = vadd.f32 %v4212, %v4285
    %4287 = vmatmul.bf16.gmra.mxu0 %v2212
    %v4288 = vpop.f32.mrf.mxu0
    %v4289 = vadd.f32 %v4215, %v4288
    %v4290 = vpop.f32.mrf.mxu0
    %v4291 = vadd.f32 %v4217, %v4290
    %4292 = vmatmul.bf16.gmra.mxu0 %v2220
    %v4293 = vpop.f32.mrf.mxu0
    %v4294 = vadd.f32 %v4220, %v4293
    %v4295 = vpop.f32.mrf.mxu0
    %v4296 = vadd.f32 %v4222, %v4295
    %4297 = vmatmul.bf16.gmra.mxu0 %v2228
    %v4298 = vpop.f32.mrf.mxu0
    %v4299 = vadd.f32 %v4225, %v4298
    %v4300 = vpop.f32.mrf.mxu0
    %v4301 = vadd.f32 %v4227, %v4300
    %4302 = vmatmul.bf16.gmra.mxu0 %v2236
    %v4303 = vpop.f32.mrf.mxu0
    %v4304 = vadd.f32 %v4230, %v4303
    %v4305 = vpop.f32.mrf.mxu0
    %v4306 = vadd.f32 %v4232, %v4305
    %4307 = vmatmul.bf16.gmra.mxu0 %v2244
    %v4308 = vpop.f32.mrf.mxu0
    %v4309 = vadd.f32 %v4235, %v4308
    %v4310 = vpop.f32.mrf.mxu0
    %v4311 = vadd.f32 %v4237, %v4310
    %4312 = vmatmul.bf16.gmra.mxu0 %v2252
    %v4313 = vpop.f32.mrf.mxu0
    %v4314 = vadd.f32 %v4240, %v4313
    %v4315 = vpop.f32.mrf.mxu0
    %v4316 = vadd.f32 %v4242, %v4315
    %4317 = vdwg.mxu0
    %4318 = vmatpush.bf16.msra.mxu0 %v3540
    %4319 = vmatpush.bf16.msra.mxu0 %v3536
    %4320 = vmatpush.bf16.msra.mxu0 %v3532
    %4321 = vmatpush.bf16.msra.mxu0 %v3528
    %4322 = vmatpush.bf16.msra.mxu0 %v3524
    %4323 = vmatpush.bf16.msra.mxu0 %v3520
    %4324 = vmatpush.bf16.msra.mxu0 %v3516
    %4325 = vmatpush.bf16.msra.mxu0 %v3512
    %4326 = vmatmul.bf16.gmra.mxu0 %v2157
    %v4327 = vpop.f32.mrf.mxu0
    %v4328 = vadd.f32 %v4254, %v4327
    %v4329 = vpop.f32.mrf.mxu0
    %v4330 = vadd.f32 %v4256, %v4329
    %4331 = vmatmul.bf16.gmra.mxu0 %v2165
    %v4332 = vpop.f32.mrf.mxu0
    %v4333 = vadd.f32 %v4259, %v4332
    %v4334 = vpop.f32.mrf.mxu0
    %v4335 = vadd.f32 %v4261, %v4334
    %4336 = vmatmul.bf16.gmra.mxu0 %v2173
    %v4337 = vpop.f32.mrf.mxu0
    %v4338 = vadd.f32 %v4264, %v4337
    %v4339 = vpop.f32.mrf.mxu0
    %v4340 = vadd.f32 %v4266, %v4339
    %4341 = vmatmul.bf16.gmra.mxu0 %v2181
    %v4342 = vpop.f32.mrf.mxu0
    %v4343 = vadd.f32 %v4269, %v4342
    %v4344 = vpop.f32.mrf.mxu0
    %v4345 = vadd.f32 %v4271, %v4344
    %4346 = vmatmul.bf16.gmra.mxu0 %v2189
    %v4347 = vpop.f32.mrf.mxu0
    %v4348 = vadd.f32 %v4274, %v4347
    %v4349 = vpop.f32.mrf.mxu0
    %v4350 = vadd.f32 %v4276, %v4349
    %4351 = vmatmul.bf16.gmra.mxu0 %v2197
    %v4352 = vpop.f32.mrf.mxu0
    %v4353 = vadd.f32 %v4279, %v4352
    %v4354 = vpop.f32.mrf.mxu0
    %v4355 = vadd.f32 %v4281, %v4354
    %4356 = vmatmul.bf16.gmra.mxu0 %v2205
    %v4357 = vpop.f32.mrf.mxu0
    %v4358 = vadd.f32 %v4284, %v4357
    %v4359 = vpop.f32.mrf.mxu0
    %v4360 = vadd.f32 %v4286, %v4359
    %4361 = vmatmul.bf16.gmra.mxu0 %v2213
    %v4362 = vpop.f32.mrf.mxu0
    %v4363 = vadd.f32 %v4289, %v4362
    %v4364 = vpop.f32.mrf.mxu0
    %v4365 = vadd.f32 %v4291, %v4364
    %4366 = vmatmul.bf16.gmra.mxu0 %v2221
    %v4367 = vpop.f32.mrf.mxu0
    %v4368 = vadd.f32 %v4294, %v4367
    %v4369 = vpop.f32.mrf.mxu0
    %v4370 = vadd.f32 %v4296, %v4369
    %4371 = vmatmul.bf16.gmra.mxu0 %v2229
    %v4372 = vpop.f32.mrf.mxu0
    %v4373 = vadd.f32 %v4299, %v4372
    %v4374 = vpop.f32.mrf.mxu0
    %v4375 = vadd.f32 %v4301, %v4374
    %4376 = vmatmul.bf16.gmra.mxu0 %v2237
    %v4377 = vpop.f32.mrf.mxu0
    %v4378 = vadd.f32 %v4304, %v4377
    %v4379 = vpop.f32.mrf.mxu0
    %v4380 = vadd.f32 %v4306, %v4379
    %4381 = vmatmul.bf16.gmra.mxu0 %v2245
    %v4382 = vpop.f32.mrf.mxu0
    %v4383 = vadd.f32 %v4309, %v4382
    %v4384 = vpop.f32.mrf.mxu0
    %v4385 = vadd.f32 %v4311, %v4384
    %4386 = vmatmul.bf16.gmra.mxu0 %v2253
    %v4387 = vpop.f32.mrf.mxu0
    %v4388 = vadd.f32 %v4314, %v4387
    %v4389 = vpop.f32.mrf.mxu0
    %v4390 = vadd.f32 %v4316, %v4389
    %4391 = vdwg.mxu0
    %4392 = vmatpush.bf16.msra.mxu0 %v3317
    %4393 = vmatpush.bf16.msra.mxu0 %v3313
    %4394 = vmatpush.bf16.msra.mxu0 %v3309
    %4395 = vmatpush.bf16.msra.mxu0 %v3305
    %4396 = vmatpush.bf16.msra.mxu0 %v3301
    %4397 = vmatpush.bf16.msra.mxu0 %v3297
    %4398 = vmatpush.bf16.msra.mxu0 %v3293
    %4399 = vmatpush.bf16.msra.mxu0 %v3289
    %4400 = vmatmul.bf16.gmra.mxu0 %v2150
    %v4401 = vpop.f32.mrf.mxu0
    %v4402 = vadd.f32 %v2513, %v4401
    %v4403 = vpop.f32.mrf.mxu0
    %v4404 = vadd.f32 %v2513, %v4403
    %4405 = vmatmul.bf16.gmra.mxu0 %v2158
    %v4406 = vpop.f32.mrf.mxu0
    %v4407 = vadd.f32 %v2513, %v4406
    %v4408 = vpop.f32.mrf.mxu0
    %v4409 = vadd.f32 %v2513, %v4408
    %4410 = vmatmul.bf16.gmra.mxu0 %v2166
    %v4411 = vpop.f32.mrf.mxu0
    %v4412 = vadd.f32 %v2513, %v4411
    %v4413 = vpop.f32.mrf.mxu0
    %v4414 = vadd.f32 %v2513, %v4413
    %4415 = vmatmul.bf16.gmra.mxu0 %v2174
    %v4416 = vpop.f32.mrf.mxu0
    %v4417 = vadd.f32 %v2513, %v4416
    %v4418 = vpop.f32.mrf.mxu0
    %v4419 = vadd.f32 %v2513, %v4418
    %4420 = vmatmul.bf16.gmra.mxu0 %v2182
    %v4421 = vpop.f32.mrf.mxu0
    %v4422 = vadd.f32 %v2513, %v4421
    %v4423 = vpop.f32.mrf.mxu0
    %v4424 = vadd.f32 %v2513, %v4423
    %4425 = vmatmul.bf16.gmra.mxu0 %v2190
    %v4426 = vpop.f32.mrf.mxu0
    %v4427 = vadd.f32 %v2513, %v4426
    %v4428 = vpop.f32.mrf.mxu0
    %v4429 = vadd.f32 %v2513, %v4428
    %4430 = vmatmul.bf16.gmra.mxu0 %v2198
    %v4431 = vpop.f32.mrf.mxu0
    %v4432 = vadd.f32 %v2513, %v4431
    %v4433 = vpop.f32.mrf.mxu0
    %v4434 = vadd.f32 %v2513, %v4433
    %4435 = vmatmul.bf16.gmra.mxu0 %v2206
    %v4436 = vpop.f32.mrf.mxu0
    %v4437 = vadd.f32 %v2513, %v4436
    %v4438 = vpop.f32.mrf.mxu0
    %v4439 = vadd.f32 %v2513, %v4438
    %4440 = vmatmul.bf16.gmra.mxu0 %v2214
    %v4441 = vpop.f32.mrf.mxu0
    %v4442 = vadd.f32 %v2513, %v4441
    %v4443 = vpop.f32.mrf.mxu0
    %v4444 = vadd.f32 %v2513, %v4443
    %4445 = vmatmul.bf16.gmra.mxu0 %v2222
    %v4446 = vpop.f32.mrf.mxu0
    %v4447 = vadd.f32 %v2513, %v4446
    %v4448 = vpop.f32.mrf.mxu0
    %v4449 = vadd.f32 %v2513, %v4448
    %4450 = vmatmul.bf16.gmra.mxu0 %v2230
    %v4451 = vpop.f32.mrf.mxu0
    %v4452 = vadd.f32 %v2513, %v4451
    %v4453 = vpop.f32.mrf.mxu0
    %v4454 = vadd.f32 %v2513, %v4453
    %4455 = vmatmul.bf16.gmra.mxu0 %v2238
    %v4456 = vpop.f32.mrf.mxu0
    %v4457 = vadd.f32 %v2513, %v4456
    %v4458 = vpop.f32.mrf.mxu0
    %v4459 = vadd.f32 %v2513, %v4458
    %4460 = vmatmul.bf16.gmra.mxu0 %v2246
    %v4461 = vpop.f32.mrf.mxu0
    %v4462 = vadd.f32 %v2513, %v4461
    %v4463 = vpop.f32.mrf.mxu0
    %v4464 = vadd.f32 %v2513, %v4463
    %4465 = vdwg.mxu0
    %4466 = vmatpush.bf16.msra.mxu0 %v3349
    %4467 = vmatpush.bf16.msra.mxu0 %v3345
    %4468 = vmatpush.bf16.msra.mxu0 %v3341
    %4469 = vmatpush.bf16.msra.mxu0 %v3337
    %4470 = vmatpush.bf16.msra.mxu0 %v3333
    %4471 = vmatpush.bf16.msra.mxu0 %v3329
    %4472 = vmatpush.bf16.msra.mxu0 %v3325
    %4473 = vmatpush.bf16.msra.mxu0 %v3321
    %4474 = vmatmul.bf16.gmra.mxu0 %v2151
    %v4475 = vpop.f32.mrf.mxu0
    %v4476 = vadd.f32 %v4402, %v4475
    %v4477 = vpop.f32.mrf.mxu0
    %v4478 = vadd.f32 %v4404, %v4477
    %4479 = vmatmul.bf16.gmra.mxu0 %v2159
    %v4480 = vpop.f32.mrf.mxu0
    %v4481 = vadd.f32 %v4407, %v4480
    %v4482 = vpop.f32.mrf.mxu0
    %v4483 = vadd.f32 %v4409, %v4482
    %4484 = vmatmul.bf16.gmra.mxu0 %v2167
    %v4485 = vpop.f32.mrf.mxu0
    %v4486 = vadd.f32 %v4412, %v4485
    %v4487 = vpop.f32.mrf.mxu0
    %v4488 = vadd.f32 %v4414, %v4487
    %4489 = vmatmul.bf16.gmra.mxu0 %v2175
    %v4490 = vpop.f32.mrf.mxu0
    %v4491 = vadd.f32 %v4417, %v4490
    %v4492 = vpop.f32.mrf.mxu0
    %v4493 = vadd.f32 %v4419, %v4492
    %4494 = vmatmul.bf16.gmra.mxu0 %v2183
    %v4495 = vpop.f32.mrf.mxu0
    %v4496 = vadd.f32 %v4422, %v4495
    %v4497 = vpop.f32.mrf.mxu0
    %v4498 = vadd.f32 %v4424, %v4497
    %4499 = vmatmul.bf16.gmra.mxu0 %v2191
    %v4500 = vpop.f32.mrf.mxu0
    %v4501 = vadd.f32 %v4427, %v4500
    %v4502 = vpop.f32.mrf.mxu0
    %v4503 = vadd.f32 %v4429, %v4502
    %4504 = vmatmul.bf16.gmra.mxu0 %v2199
    %v4505 = vpop.f32.mrf.mxu0
    %v4506 = vadd.f32 %v4432, %v4505
    %v4507 = vpop.f32.mrf.mxu0
    %v4508 = vadd.f32 %v4434, %v4507
    %4509 = vmatmul.bf16.gmra.mxu0 %v2207
    %v4510 = vpop.f32.mrf.mxu0
    %v4511 = vadd.f32 %v4437, %v4510
    %v4512 = vpop.f32.mrf.mxu0
    %v4513 = vadd.f32 %v4439, %v4512
    %4514 = vmatmul.bf16.gmra.mxu0 %v2215
    %v4515 = vpop.f32.mrf.mxu0
    %v4516 = vadd.f32 %v4442, %v4515
    %v4517 = vpop.f32.mrf.mxu0
    %v4518 = vadd.f32 %v4444, %v4517
    %4519 = vmatmul.bf16.gmra.mxu0 %v2223
    %v4520 = vpop.f32.mrf.mxu0
    %v4521 = vadd.f32 %v4447, %v4520
    %v4522 = vpop.f32.mrf.mxu0
    %v4523 = vadd.f32 %v4449, %v4522
    %4524 = vmatmul.bf16.gmra.mxu0 %v2231
    %v4525 = vpop.f32.mrf.mxu0
    %v4526 = vadd.f32 %v4452, %v4525
    %v4527 = vpop.f32.mrf.mxu0
    %v4528 = vadd.f32 %v4454, %v4527
    %4529 = vmatmul.bf16.gmra.mxu0 %v2239
    %v4530 = vpop.f32.mrf.mxu0
    %v4531 = vadd.f32 %v4457, %v4530
    %v4532 = vpop.f32.mrf.mxu0
    %v4533 = vadd.f32 %v4459, %v4532
    %4534 = vmatmul.bf16.gmra.mxu0 %v2247
    %v4535 = vpop.f32.mrf.mxu0
    %v4536 = vadd.f32 %v4462, %v4535
    %v4537 = vpop.f32.mrf.mxu0
    %v4538 = vadd.f32 %v4464, %v4537
    %4539 = vdwg.mxu0
    %4540 = vmatpush.bf16.msra.mxu0 %v3381
    %4541 = vmatpush.bf16.msra.mxu0 %v3377
    %4542 = vmatpush.bf16.msra.mxu0 %v3373
    %4543 = vmatpush.bf16.msra.mxu0 %v3369
    %4544 = vmatpush.bf16.msra.mxu0 %v3365
    %4545 = vmatpush.bf16.msra.mxu0 %v3361
    %4546 = vmatpush.bf16.msra.mxu0 %v3357
    %4547 = vmatpush.bf16.msra.mxu0 %v3353
    %4548 = vmatmul.bf16.gmra.mxu0 %v2152
    %v4549 = vpop.f32.mrf.mxu0
    %v4550 = vadd.f32 %v4476, %v4549
    %v4551 = vpop.f32.mrf.mxu0
    %v4552 = vadd.f32 %v4478, %v4551
    %4553 = vmatmul.bf16.gmra.mxu0 %v2160
    %v4554 = vpop.f32.mrf.mxu0
    %v4555 = vadd.f32 %v4481, %v4554
    %v4556 = vpop.f32.mrf.mxu0
    %v4557 = vadd.f32 %v4483, %v4556
    %4558 = vmatmul.bf16.gmra.mxu0 %v2168
    %v4559 = vpop.f32.mrf.mxu0
    %v4560 = vadd.f32 %v4486, %v4559
    %v4561 = vpop.f32.mrf.mxu0
    %v4562 = vadd.f32 %v4488, %v4561
    %4563 = vmatmul.bf16.gmra.mxu0 %v2176
    %v4564 = vpop.f32.mrf.mxu0
    %v4565 = vadd.f32 %v4491, %v4564
    %v4566 = vpop.f32.mrf.mxu0
    %v4567 = vadd.f32 %v4493, %v4566
    %4568 = vmatmul.bf16.gmra.mxu0 %v2184
    %v4569 = vpop.f32.mrf.mxu0
    %v4570 = vadd.f32 %v4496, %v4569
    %v4571 = vpop.f32.mrf.mxu0
    %v4572 = vadd.f32 %v4498, %v4571
    %4573 = vmatmul.bf16.gmra.mxu0 %v2192
    %v4574 = vpop.f32.mrf.mxu0
    %v4575 = vadd.f32 %v4501, %v4574
    %v4576 = vpop.f32.mrf.mxu0
    %v4577 = vadd.f32 %v4503, %v4576
    %4578 = vmatmul.bf16.gmra.mxu0 %v2200
    %v4579 = vpop.f32.mrf.mxu0
    %v4580 = vadd.f32 %v4506, %v4579
    %v4581 = vpop.f32.mrf.mxu0
    %v4582 = vadd.f32 %v4508, %v4581
    %4583 = vmatmul.bf16.gmra.mxu0 %v2208
    %v4584 = vpop.f32.mrf.mxu0
    %v4585 = vadd.f32 %v4511, %v4584
    %v4586 = vpop.f32.mrf.mxu0
    %v4587 = vadd.f32 %v4513, %v4586
    %4588 = vmatmul.bf16.gmra.mxu0 %v2216
    %v4589 = vpop.f32.mrf.mxu0
    %v4590 = vadd.f32 %v4516, %v4589
    %v4591 = vpop.f32.mrf.mxu0
    %v4592 = vadd.f32 %v4518, %v4591
    %4593 = vmatmul.bf16.gmra.mxu0 %v2224
    %v4594 = vpop.f32.mrf.mxu0
    %v4595 = vadd.f32 %v4521, %v4594
    %v4596 = vpop.f32.mrf.mxu0
    %v4597 = vadd.f32 %v4523, %v4596
    %4598 = vmatmul.bf16.gmra.mxu0 %v2232
    %v4599 = vpop.f32.mrf.mxu0
    %v4600 = vadd.f32 %v4526, %v4599
    %v4601 = vpop.f32.mrf.mxu0
    %v4602 = vadd.f32 %v4528, %v4601
    %4603 = vmatmul.bf16.gmra.mxu0 %v2240
    %v4604 = vpop.f32.mrf.mxu0
    %v4605 = vadd.f32 %v4531, %v4604
    %v4606 = vpop.f32.mrf.mxu0
    %v4607 = vadd.f32 %v4533, %v4606
    %4608 = vmatmul.bf16.gmra.mxu0 %v2248
    %v4609 = vpop.f32.mrf.mxu0
    %v4610 = vadd.f32 %v4536, %v4609
    %v4611 = vpop.f32.mrf.mxu0
    %v4612 = vadd.f32 %v4538, %v4611
    %4613 = vdwg.mxu0
    %4614 = vmatpush.bf16.msra.mxu0 %v3413
    %4615 = vmatpush.bf16.msra.mxu0 %v3409
    %4616 = vmatpush.bf16.msra.mxu0 %v3405
    %4617 = vmatpush.bf16.msra.mxu0 %v3401
    %4618 = vmatpush.bf16.msra.mxu0 %v3397
    %4619 = vmatpush.bf16.msra.mxu0 %v3393
    %4620 = vmatpush.bf16.msra.mxu0 %v3389
    %4621 = vmatpush.bf16.msra.mxu0 %v3385
    %4622 = vmatmul.bf16.gmra.mxu0 %v2153
    %v4623 = vpop.f32.mrf.mxu0
    %v4624 = vadd.f32 %v4550, %v4623
    %v4625 = vpop.f32.mrf.mxu0
    %v4626 = vadd.f32 %v4552, %v4625
    %4627 = vmatmul.bf16.gmra.mxu0 %v2161
    %v4628 = vpop.f32.mrf.mxu0
    %v4629 = vadd.f32 %v4555, %v4628
    %v4630 = vpop.f32.mrf.mxu0
    %v4631 = vadd.f32 %v4557, %v4630
    %4632 = vmatmul.bf16.gmra.mxu0 %v2169
    %v4633 = vpop.f32.mrf.mxu0
    %v4634 = vadd.f32 %v4560, %v4633
    %v4635 = vpop.f32.mrf.mxu0
    %v4636 = vadd.f32 %v4562, %v4635
    %4637 = vmatmul.bf16.gmra.mxu0 %v2177
    %v4638 = vpop.f32.mrf.mxu0
    %v4639 = vadd.f32 %v4565, %v4638
    %v4640 = vpop.f32.mrf.mxu0
    %v4641 = vadd.f32 %v4567, %v4640
    %4642 = vmatmul.bf16.gmra.mxu0 %v2185
    %v4643 = vpop.f32.mrf.mxu0
    %v4644 = vadd.f32 %v4570, %v4643
    %v4645 = vpop.f32.mrf.mxu0
    %v4646 = vadd.f32 %v4572, %v4645
    %4647 = vmatmul.bf16.gmra.mxu0 %v2193
    %v4648 = vpop.f32.mrf.mxu0
    %v4649 = vadd.f32 %v4575, %v4648
    %v4650 = vpop.f32.mrf.mxu0
    %v4651 = vadd.f32 %v4577, %v4650
    %4652 = vmatmul.bf16.gmra.mxu0 %v2201
    %v4653 = vpop.f32.mrf.mxu0
    %v4654 = vadd.f32 %v4580, %v4653
    %v4655 = vpop.f32.mrf.mxu0
    %v4656 = vadd.f32 %v4582, %v4655
    %4657 = vmatmul.bf16.gmra.mxu0 %v2209
    %v4658 = vpop.f32.mrf.mxu0
    %v4659 = vadd.f32 %v4585, %v4658
    %v4660 = vpop.f32.mrf.mxu0
    %v4661 = vadd.f32 %v4587, %v4660
    %4662 = vmatmul.bf16.gmra.mxu0 %v2217
    %v4663 = vpop.f32.mrf.mxu0
    %v4664 = vadd.f32 %v4590, %v4663
    %v4665 = vpop.f32.mrf.mxu0
    %v4666 = vadd.f32 %v4592, %v4665
    %4667 = vmatmul.bf16.gmra.mxu0 %v2225
    %v4668 = vpop.f32.mrf.mxu0
    %v4669 = vadd.f32 %v4595, %v4668
    %v4670 = vpop.f32.mrf.mxu0
    %v4671 = vadd.f32 %v4597, %v4670
    %4672 = vmatmul.bf16.gmra.mxu0 %v2233
    %v4673 = vpop.f32.mrf.mxu0
    %v4674 = vadd.f32 %v4600, %v4673
    %v4675 = vpop.f32.mrf.mxu0
    %v4676 = vadd.f32 %v4602, %v4675
    %4677 = vmatmul.bf16.gmra.mxu0 %v2241
    %v4678 = vpop.f32.mrf.mxu0
    %v4679 = vadd.f32 %v4605, %v4678
    %v4680 = vpop.f32.mrf.mxu0
    %v4681 = vadd.f32 %v4607, %v4680
    %4682 = vmatmul.bf16.gmra.mxu0 %v2249
    %v4683 = vpop.f32.mrf.mxu0
    %v4684 = vadd.f32 %v4610, %v4683
    %v4685 = vpop.f32.mrf.mxu0
    %v4686 = vadd.f32 %v4612, %v4685
    %4687 = vdwg.mxu0
    %4688 = vmatpush.bf16.msra.mxu0 %v3445
    %4689 = vmatpush.bf16.msra.mxu0 %v3441
    %4690 = vmatpush.bf16.msra.mxu0 %v3437
    %4691 = vmatpush.bf16.msra.mxu0 %v3433
    %4692 = vmatpush.bf16.msra.mxu0 %v3429
    %4693 = vmatpush.bf16.msra.mxu0 %v3425
    %4694 = vmatpush.bf16.msra.mxu0 %v3421
    %4695 = vmatpush.bf16.msra.mxu0 %v3417
    %4696 = vmatmul.bf16.gmra.mxu0 %v2154
    %v4697 = vpop.f32.mrf.mxu0
    %v4698 = vadd.f32 %v4624, %v4697
    %v4699 = vpop.f32.mrf.mxu0
    %v4700 = vadd.f32 %v4626, %v4699
    %4701 = vmatmul.bf16.gmra.mxu0 %v2162
    %v4702 = vpop.f32.mrf.mxu0
    %v4703 = vadd.f32 %v4629, %v4702
    %v4704 = vpop.f32.mrf.mxu0
    %v4705 = vadd.f32 %v4631, %v4704
    %4706 = vmatmul.bf16.gmra.mxu0 %v2170
    %v4707 = vpop.f32.mrf.mxu0
    %v4708 = vadd.f32 %v4634, %v4707
    %v4709 = vpop.f32.mrf.mxu0
    %v4710 = vadd.f32 %v4636, %v4709
    %4711 = vmatmul.bf16.gmra.mxu0 %v2178
    %v4712 = vpop.f32.mrf.mxu0
    %v4713 = vadd.f32 %v4639, %v4712
    %v4714 = vpop.f32.mrf.mxu0
    %v4715 = vadd.f32 %v4641, %v4714
    %4716 = vmatmul.bf16.gmra.mxu0 %v2186
    %v4717 = vpop.f32.mrf.mxu0
    %v4718 = vadd.f32 %v4644, %v4717
    %v4719 = vpop.f32.mrf.mxu0
    %v4720 = vadd.f32 %v4646, %v4719
    %4721 = vmatmul.bf16.gmra.mxu0 %v2194
    %v4722 = vpop.f32.mrf.mxu0
    %v4723 = vadd.f32 %v4649, %v4722
    %v4724 = vpop.f32.mrf.mxu0
    %v4725 = vadd.f32 %v4651, %v4724
    %4726 = vmatmul.bf16.gmra.mxu0 %v2202
    %v4727 = vpop.f32.mrf.mxu0
    %v4728 = vadd.f32 %v4654, %v4727
    %v4729 = vpop.f32.mrf.mxu0
    %v4730 = vadd.f32 %v4656, %v4729
    %4731 = vmatmul.bf16.gmra.mxu0 %v2210
    %v4732 = vpop.f32.mrf.mxu0
    %v4733 = vadd.f32 %v4659, %v4732
    %v4734 = vpop.f32.mrf.mxu0
    %v4735 = vadd.f32 %v4661, %v4734
    %4736 = vmatmul.bf16.gmra.mxu0 %v2218
    %v4737 = vpop.f32.mrf.mxu0
    %v4738 = vadd.f32 %v4664, %v4737
    %v4739 = vpop.f32.mrf.mxu0
    %v4740 = vadd.f32 %v4666, %v4739
    %4741 = vmatmul.bf16.gmra.mxu0 %v2226
    %v4742 = vpop.f32.mrf.mxu0
    %v4743 = vadd.f32 %v4669, %v4742
    %v4744 = vpop.f32.mrf.mxu0
    %v4745 = vadd.f32 %v4671, %v4744
    %4746 = vmatmul.bf16.gmra.mxu0 %v2234
    %v4747 = vpop.f32.mrf.mxu0
    %v4748 = vadd.f32 %v4674, %v4747
    %v4749 = vpop.f32.mrf.mxu0
    %v4750 = vadd.f32 %v4676, %v4749
    %4751 = vmatmul.bf16.gmra.mxu0 %v2242
    %v4752 = vpop.f32.mrf.mxu0
    %v4753 = vadd.f32 %v4679, %v4752
    %v4754 = vpop.f32.mrf.mxu0
    %v4755 = vadd.f32 %v4681, %v4754
    %4756 = vmatmul.bf16.gmra.mxu0 %v2250
    %v4757 = vpop.f32.mrf.mxu0
    %v4758 = vadd.f32 %v4684, %v4757
    %v4759 = vpop.f32.mrf.mxu0
    %v4760 = vadd.f32 %v4686, %v4759
    %4761 = vdwg.mxu0
    %4762 = vmatpush.bf16.msra.mxu0 %v3477
    %4763 = vmatpush.bf16.msra.mxu0 %v3473
    %4764 = vmatpush.bf16.msra.mxu0 %v3469
    %4765 = vmatpush.bf16.msra.mxu0 %v3465
    %4766 = vmatpush.bf16.msra.mxu0 %v3461
    %4767 = vmatpush.bf16.msra.mxu0 %v3457
    %4768 = vmatpush.bf16.msra.mxu0 %v3453
    %4769 = vmatpush.bf16.msra.mxu0 %v3449
    %4770 = vmatmul.bf16.gmra.mxu0 %v2155
    %v4771 = vpop.f32.mrf.mxu0
    %v4772 = vadd.f32 %v4698, %v4771
    %v4773 = vpop.f32.mrf.mxu0
    %v4774 = vadd.f32 %v4700, %v4773
    %4775 = vmatmul.bf16.gmra.mxu0 %v2163
    %v4776 = vpop.f32.mrf.mxu0
    %v4777 = vadd.f32 %v4703, %v4776
    %v4778 = vpop.f32.mrf.mxu0
    %v4779 = vadd.f32 %v4705, %v4778
    %4780 = vmatmul.bf16.gmra.mxu0 %v2171
    %v4781 = vpop.f32.mrf.mxu0
    %v4782 = vadd.f32 %v4708, %v4781
    %v4783 = vpop.f32.mrf.mxu0
    %v4784 = vadd.f32 %v4710, %v4783
    %4785 = vmatmul.bf16.gmra.mxu0 %v2179
    %v4786 = vpop.f32.mrf.mxu0
    %v4787 = vadd.f32 %v4713, %v4786
    %v4788 = vpop.f32.mrf.mxu0
    %v4789 = vadd.f32 %v4715, %v4788
    %4790 = vmatmul.bf16.gmra.mxu0 %v2187
    %v4791 = vpop.f32.mrf.mxu0
    %v4792 = vadd.f32 %v4718, %v4791
    %v4793 = vpop.f32.mrf.mxu0
    %v4794 = vadd.f32 %v4720, %v4793
    %4795 = vmatmul.bf16.gmra.mxu0 %v2195
    %v4796 = vpop.f32.mrf.mxu0
    %v4797 = vadd.f32 %v4723, %v4796
    %v4798 = vpop.f32.mrf.mxu0
    %v4799 = vadd.f32 %v4725, %v4798
    %4800 = vmatmul.bf16.gmra.mxu0 %v2203
    %v4801 = vpop.f32.mrf.mxu0
    %v4802 = vadd.f32 %v4728, %v4801
    %v4803 = vpop.f32.mrf.mxu0
    %v4804 = vadd.f32 %v4730, %v4803
    %4805 = vmatmul.bf16.gmra.mxu0 %v2211
    %v4806 = vpop.f32.mrf.mxu0
    %v4807 = vadd.f32 %v4733, %v4806
    %v4808 = vpop.f32.mrf.mxu0
    %v4809 = vadd.f32 %v4735, %v4808
    %4810 = vmatmul.bf16.gmra.mxu0 %v2219
    %v4811 = vpop.f32.mrf.mxu0
    %v4812 = vadd.f32 %v4738, %v4811
    %v4813 = vpop.f32.mrf.mxu0
    %v4814 = vadd.f32 %v4740, %v4813
    %4815 = vmatmul.bf16.gmra.mxu0 %v2227
    %v4816 = vpop.f32.mrf.mxu0
    %v4817 = vadd.f32 %v4743, %v4816
    %v4818 = vpop.f32.mrf.mxu0
    %v4819 = vadd.f32 %v4745, %v4818
    %4820 = vmatmul.bf16.gmra.mxu0 %v2235
    %v4821 = vpop.f32.mrf.mxu0
    %v4822 = vadd.f32 %v4748, %v4821
    %v4823 = vpop.f32.mrf.mxu0
    %v4824 = vadd.f32 %v4750, %v4823
    %4825 = vmatmul.bf16.gmra.mxu0 %v2243
    %v4826 = vpop.f32.mrf.mxu0
    %v4827 = vadd.f32 %v4753, %v4826
    %v4828 = vpop.f32.mrf.mxu0
    %v4829 = vadd.f32 %v4755, %v4828
    %4830 = vmatmul.bf16.gmra.mxu0 %v2251
    %v4831 = vpop.f32.mrf.mxu0
    %v4832 = vadd.f32 %v4758, %v4831
    %v4833 = vpop.f32.mrf.mxu0
    %v4834 = vadd.f32 %v4760, %v4833
    %4835 = vdwg.mxu0
    %4836 = vmatpush.bf16.msra.mxu0 %v3509
    %4837 = vmatpush.bf16.msra.mxu0 %v3505
    %4838 = vmatpush.bf16.msra.mxu0 %v3501
    %4839 = vmatpush.bf16.msra.mxu0 %v3497
    %4840 = vmatpush.bf16.msra.mxu0 %v3493
    %4841 = vmatpush.bf16.msra.mxu0 %v3489
    %4842 = vmatpush.bf16.msra.mxu0 %v3485
    %4843 = vmatpush.bf16.msra.mxu0 %v3481
    %4844 = vmatmul.bf16.gmra.mxu0 %v2156
    %v4845 = vpop.f32.mrf.mxu0
    %v4846 = vadd.f32 %v4772, %v4845
    %v4847 = vpop.f32.mrf.mxu0
    %v4848 = vadd.f32 %v4774, %v4847
    %4849 = vmatmul.bf16.gmra.mxu0 %v2164
    %v4850 = vpop.f32.mrf.mxu0
    %v4851 = vadd.f32 %v4777, %v4850
    %v4852 = vpop.f32.mrf.mxu0
    %v4853 = vadd.f32 %v4779, %v4852
    %4854 = vmatmul.bf16.gmra.mxu0 %v2172
    %v4855 = vpop.f32.mrf.mxu0
    %v4856 = vadd.f32 %v4782, %v4855
    %v4857 = vpop.f32.mrf.mxu0
    %v4858 = vadd.f32 %v4784, %v4857
    %4859 = vmatmul.bf16.gmra.mxu0 %v2180
    %v4860 = vpop.f32.mrf.mxu0
    %v4861 = vadd.f32 %v4787, %v4860
    %v4862 = vpop.f32.mrf.mxu0
    %v4863 = vadd.f32 %v4789, %v4862
    %4864 = vmatmul.bf16.gmra.mxu0 %v2188
    %v4865 = vpop.f32.mrf.mxu0
    %v4866 = vadd.f32 %v4792, %v4865
    %v4867 = vpop.f32.mrf.mxu0
    %v4868 = vadd.f32 %v4794, %v4867
    %4869 = vmatmul.bf16.gmra.mxu0 %v2196
    %v4870 = vpop.f32.mrf.mxu0
    %v4871 = vadd.f32 %v4797, %v4870
    %v4872 = vpop.f32.mrf.mxu0
    %v4873 = vadd.f32 %v4799, %v4872
    %4874 = vmatmul.bf16.gmra.mxu0 %v2204
    %v4875 = vpop.f32.mrf.mxu0
    %v4876 = vadd.f32 %v4802, %v4875
    %v4877 = vpop.f32.mrf.mxu0
    %v4878 = vadd.f32 %v4804, %v4877
    %4879 = vmatmul.bf16.gmra.mxu0 %v2212
    %v4880 = vpop.f32.mrf.mxu0
    %v4881 = vadd.f32 %v4807, %v4880
    %v4882 = vpop.f32.mrf.mxu0
    %v4883 = vadd.f32 %v4809, %v4882
    %4884 = vmatmul.bf16.gmra.mxu0 %v2220
    %v4885 = vpop.f32.mrf.mxu0
    %v4886 = vadd.f32 %v4812, %v4885
    %v4887 = vpop.f32.mrf.mxu0
    %v4888 = vadd.f32 %v4814, %v4887
    %4889 = vmatmul.bf16.gmra.mxu0 %v2228
    %v4890 = vpop.f32.mrf.mxu0
    %v4891 = vadd.f32 %v4817, %v4890
    %v4892 = vpop.f32.mrf.mxu0
    %v4893 = vadd.f32 %v4819, %v4892
    %4894 = vmatmul.bf16.gmra.mxu0 %v2236
    %v4895 = vpop.f32.mrf.mxu0
    %v4896 = vadd.f32 %v4822, %v4895
    %v4897 = vpop.f32.mrf.mxu0
    %v4898 = vadd.f32 %v4824, %v4897
    %4899 = vmatmul.bf16.gmra.mxu0 %v2244
    %v4900 = vpop.f32.mrf.mxu0
    %v4901 = vadd.f32 %v4827, %v4900
    %v4902 = vpop.f32.mrf.mxu0
    %v4903 = vadd.f32 %v4829, %v4902
    %4904 = vmatmul.bf16.gmra.mxu0 %v2252
    %v4905 = vpop.f32.mrf.mxu0
    %v4906 = vadd.f32 %v4832, %v4905
    %v4907 = vpop.f32.mrf.mxu0
    %v4908 = vadd.f32 %v4834, %v4907
    %4909 = vdwg.mxu0
    %4910 = vmatpush.bf16.msra.mxu0 %v3541
    %4911 = vmatpush.bf16.msra.mxu0 %v3537
    %4912 = vmatpush.bf16.msra.mxu0 %v3533
    %4913 = vmatpush.bf16.msra.mxu0 %v3529
    %4914 = vmatpush.bf16.msra.mxu0 %v3525
    %4915 = vmatpush.bf16.msra.mxu0 %v3521
    %4916 = vmatpush.bf16.msra.mxu0 %v3517
    %4917 = vmatpush.bf16.msra.mxu0 %v3513
    %4918 = vmatmul.bf16.gmra.mxu0 %v2157
    %v4919 = vpop.f32.mrf.mxu0
    %v4920 = vadd.f32 %v4846, %v4919
    %v4921 = vpop.f32.mrf.mxu0
    %v4922 = vadd.f32 %v4848, %v4921
    %4923 = vmatmul.bf16.gmra.mxu0 %v2165
    %v4924 = vpop.f32.mrf.mxu0
    %v4925 = vadd.f32 %v4851, %v4924
    %v4926 = vpop.f32.mrf.mxu0
    %v4927 = vadd.f32 %v4853, %v4926
    %4928 = vmatmul.bf16.gmra.mxu0 %v2173
    %v4929 = vpop.f32.mrf.mxu0
    %v4930 = vadd.f32 %v4856, %v4929
    %v4931 = vpop.f32.mrf.mxu0
    %v4932 = vadd.f32 %v4858, %v4931
    %4933 = vmatmul.bf16.gmra.mxu0 %v2181
    %v4934 = vpop.f32.mrf.mxu0
    %v4935 = vadd.f32 %v4861, %v4934
    %v4936 = vpop.f32.mrf.mxu0
    %v4937 = vadd.f32 %v4863, %v4936
    %4938 = vmatmul.bf16.gmra.mxu0 %v2189
    %v4939 = vpop.f32.mrf.mxu0
    %v4940 = vadd.f32 %v4866, %v4939
    %v4941 = vpop.f32.mrf.mxu0
    %v4942 = vadd.f32 %v4868, %v4941
    %4943 = vmatmul.bf16.gmra.mxu0 %v2197
    %v4944 = vpop.f32.mrf.mxu0
    %v4945 = vadd.f32 %v4871, %v4944
    %v4946 = vpop.f32.mrf.mxu0
    %v4947 = vadd.f32 %v4873, %v4946
    %4948 = vmatmul.bf16.gmra.mxu0 %v2205
    %v4949 = vpop.f32.mrf.mxu0
    %v4950 = vadd.f32 %v4876, %v4949
    %v4951 = vpop.f32.mrf.mxu0
    %v4952 = vadd.f32 %v4878, %v4951
    %4953 = vmatmul.bf16.gmra.mxu0 %v2213
    %v4954 = vpop.f32.mrf.mxu0
    %v4955 = vadd.f32 %v4881, %v4954
    %v4956 = vpop.f32.mrf.mxu0
    %v4957 = vadd.f32 %v4883, %v4956
    %4958 = vmatmul.bf16.gmra.mxu0 %v2221
    %v4959 = vpop.f32.mrf.mxu0
    %v4960 = vadd.f32 %v4886, %v4959
    %v4961 = vpop.f32.mrf.mxu0
    %v4962 = vadd.f32 %v4888, %v4961
    %4963 = vmatmul.bf16.gmra.mxu0 %v2229
    %v4964 = vpop.f32.mrf.mxu0
    %v4965 = vadd.f32 %v4891, %v4964
    %v4966 = vpop.f32.mrf.mxu0
    %v4967 = vadd.f32 %v4893, %v4966
    %4968 = vmatmul.bf16.gmra.mxu0 %v2237
    %v4969 = vpop.f32.mrf.mxu0
    %v4970 = vadd.f32 %v4896, %v4969
    %v4971 = vpop.f32.mrf.mxu0
    %v4972 = vadd.f32 %v4898, %v4971
    %4973 = vmatmul.bf16.gmra.mxu0 %v2245
    %v4974 = vpop.f32.mrf.mxu0
    %v4975 = vadd.f32 %v4901, %v4974
    %v4976 = vpop.f32.mrf.mxu0
    %v4977 = vadd.f32 %v4903, %v4976
    %4978 = vmatmul.bf16.gmra.mxu0 %v2253
    %v4979 = vpop.f32.mrf.mxu0
    %v4980 = vadd.f32 %v4906, %v4979
    %v4981 = vpop.f32.mrf.mxu0
    %v4982 = vadd.f32 %v4908, %v4981
    %4983 = vdwg.mxu0
    %4984 = vmatpush.bf16.msra.mxu0 %v3318
    %4985 = vmatpush.bf16.msra.mxu0 %v3314
    %4986 = vmatpush.bf16.msra.mxu0 %v3310
    %4987 = vmatpush.bf16.msra.mxu0 %v3306
    %4988 = vmatpush.bf16.msra.mxu0 %v3302
    %4989 = vmatpush.bf16.msra.mxu0 %v3298
    %4990 = vmatpush.bf16.msra.mxu0 %v3294
    %4991 = vmatpush.bf16.msra.mxu0 %v3290
    %4992 = vmatmul.bf16.gmra.mxu0 %v2150
    %v4993 = vpop.f32.mrf.mxu0
    %v4994 = vadd.f32 %v2514, %v4993
    %v4995 = vpop.f32.mrf.mxu0
    %v4996 = vadd.f32 %v2514, %v4995
    %4997 = vmatmul.bf16.gmra.mxu0 %v2158
    %v4998 = vpop.f32.mrf.mxu0
    %v4999 = vadd.f32 %v2514, %v4998
    %v5000 = vpop.f32.mrf.mxu0
    %v5001 = vadd.f32 %v2514, %v5000
    %5002 = vmatmul.bf16.gmra.mxu0 %v2166
    %v5003 = vpop.f32.mrf.mxu0
    %v5004 = vadd.f32 %v2514, %v5003
    %v5005 = vpop.f32.mrf.mxu0
    %v5006 = vadd.f32 %v2514, %v5005
    %5007 = vmatmul.bf16.gmra.mxu0 %v2174
    %v5008 = vpop.f32.mrf.mxu0
    %v5009 = vadd.f32 %v2514, %v5008
    %v5010 = vpop.f32.mrf.mxu0
    %v5011 = vadd.f32 %v2514, %v5010
    %5012 = vmatmul.bf16.gmra.mxu0 %v2182
    %v5013 = vpop.f32.mrf.mxu0
    %v5014 = vadd.f32 %v2514, %v5013
    %v5015 = vpop.f32.mrf.mxu0
    %v5016 = vadd.f32 %v2514, %v5015
    %5017 = vmatmul.bf16.gmra.mxu0 %v2190
    %v5018 = vpop.f32.mrf.mxu0
    %v5019 = vadd.f32 %v2514, %v5018
    %v5020 = vpop.f32.mrf.mxu0
    %v5021 = vadd.f32 %v2514, %v5020
    %5022 = vmatmul.bf16.gmra.mxu0 %v2198
    %v5023 = vpop.f32.mrf.mxu0
    %v5024 = vadd.f32 %v2514, %v5023
    %v5025 = vpop.f32.mrf.mxu0
    %v5026 = vadd.f32 %v2514, %v5025
    %5027 = vmatmul.bf16.gmra.mxu0 %v2206
    %v5028 = vpop.f32.mrf.mxu0
    %v5029 = vadd.f32 %v2514, %v5028
    %v5030 = vpop.f32.mrf.mxu0
    %v5031 = vadd.f32 %v2514, %v5030
    %5032 = vmatmul.bf16.gmra.mxu0 %v2214
    %v5033 = vpop.f32.mrf.mxu0
    %v5034 = vadd.f32 %v2514, %v5033
    %v5035 = vpop.f32.mrf.mxu0
    %v5036 = vadd.f32 %v2514, %v5035
    %5037 = vmatmul.bf16.gmra.mxu0 %v2222
    %v5038 = vpop.f32.mrf.mxu0
    %v5039 = vadd.f32 %v2514, %v5038
    %v5040 = vpop.f32.mrf.mxu0
    %v5041 = vadd.f32 %v2514, %v5040
    %5042 = vmatmul.bf16.gmra.mxu0 %v2230
    %v5043 = vpop.f32.mrf.mxu0
    %v5044 = vadd.f32 %v2514, %v5043
    %v5045 = vpop.f32.mrf.mxu0
    %v5046 = vadd.f32 %v2514, %v5045
    %5047 = vmatmul.bf16.gmra.mxu0 %v2238
    %v5048 = vpop.f32.mrf.mxu0
    %v5049 = vadd.f32 %v2514, %v5048
    %v5050 = vpop.f32.mrf.mxu0
    %v5051 = vadd.f32 %v2514, %v5050
    %5052 = vmatmul.bf16.gmra.mxu0 %v2246
    %v5053 = vpop.f32.mrf.mxu0
    %v5054 = vadd.f32 %v2514, %v5053
    %v5055 = vpop.f32.mrf.mxu0
    %v5056 = vadd.f32 %v2514, %v5055
    %5057 = vdwg.mxu0
    %5058 = vmatpush.bf16.msra.mxu0 %v3350
    %5059 = vmatpush.bf16.msra.mxu0 %v3346
    %5060 = vmatpush.bf16.msra.mxu0 %v3342
    %5061 = vmatpush.bf16.msra.mxu0 %v3338
    %5062 = vmatpush.bf16.msra.mxu0 %v3334
    %5063 = vmatpush.bf16.msra.mxu0 %v3330
    %5064 = vmatpush.bf16.msra.mxu0 %v3326
    %5065 = vmatpush.bf16.msra.mxu0 %v3322
    %5066 = vmatmul.bf16.gmra.mxu0 %v2151
    %v5067 = vpop.f32.mrf.mxu0
    %v5068 = vadd.f32 %v4994, %v5067
    %v5069 = vpop.f32.mrf.mxu0
    %v5070 = vadd.f32 %v4996, %v5069
    %5071 = vmatmul.bf16.gmra.mxu0 %v2159
    %v5072 = vpop.f32.mrf.mxu0
    %v5073 = vadd.f32 %v4999, %v5072
    %v5074 = vpop.f32.mrf.mxu0
    %v5075 = vadd.f32 %v5001, %v5074
    %5076 = vmatmul.bf16.gmra.mxu0 %v2167
    %v5077 = vpop.f32.mrf.mxu0
    %v5078 = vadd.f32 %v5004, %v5077
    %v5079 = vpop.f32.mrf.mxu0
    %v5080 = vadd.f32 %v5006, %v5079
    %5081 = vmatmul.bf16.gmra.mxu0 %v2175
    %v5082 = vpop.f32.mrf.mxu0
    %v5083 = vadd.f32 %v5009, %v5082
    %v5084 = vpop.f32.mrf.mxu0
    %v5085 = vadd.f32 %v5011, %v5084
    %5086 = vmatmul.bf16.gmra.mxu0 %v2183
    %v5087 = vpop.f32.mrf.mxu0
    %v5088 = vadd.f32 %v5014, %v5087
    %v5089 = vpop.f32.mrf.mxu0
    %v5090 = vadd.f32 %v5016, %v5089
    %5091 = vmatmul.bf16.gmra.mxu0 %v2191
    %v5092 = vpop.f32.mrf.mxu0
    %v5093 = vadd.f32 %v5019, %v5092
    %v5094 = vpop.f32.mrf.mxu0
    %v5095 = vadd.f32 %v5021, %v5094
    %5096 = vmatmul.bf16.gmra.mxu0 %v2199
    %v5097 = vpop.f32.mrf.mxu0
    %v5098 = vadd.f32 %v5024, %v5097
    %v5099 = vpop.f32.mrf.mxu0
    %v5100 = vadd.f32 %v5026, %v5099
    %5101 = vmatmul.bf16.gmra.mxu0 %v2207
    %v5102 = vpop.f32.mrf.mxu0
    %v5103 = vadd.f32 %v5029, %v5102
    %v5104 = vpop.f32.mrf.mxu0
    %v5105 = vadd.f32 %v5031, %v5104
    %5106 = vmatmul.bf16.gmra.mxu0 %v2215
    %v5107 = vpop.f32.mrf.mxu0
    %v5108 = vadd.f32 %v5034, %v5107
    %v5109 = vpop.f32.mrf.mxu0
    %v5110 = vadd.f32 %v5036, %v5109
    %5111 = vmatmul.bf16.gmra.mxu0 %v2223
    %v5112 = vpop.f32.mrf.mxu0
    %v5113 = vadd.f32 %v5039, %v5112
    %v5114 = vpop.f32.mrf.mxu0
    %v5115 = vadd.f32 %v5041, %v5114
    %5116 = vmatmul.bf16.gmra.mxu0 %v2231
    %v5117 = vpop.f32.mrf.mxu0
    %v5118 = vadd.f32 %v5044, %v5117
    %v5119 = vpop.f32.mrf.mxu0
    %v5120 = vadd.f32 %v5046, %v5119
    %5121 = vmatmul.bf16.gmra.mxu0 %v2239
    %v5122 = vpop.f32.mrf.mxu0
    %v5123 = vadd.f32 %v5049, %v5122
    %v5124 = vpop.f32.mrf.mxu0
    %v5125 = vadd.f32 %v5051, %v5124
    %5126 = vmatmul.bf16.gmra.mxu0 %v2247
    %v5127 = vpop.f32.mrf.mxu0
    %v5128 = vadd.f32 %v5054, %v5127
    %v5129 = vpop.f32.mrf.mxu0
    %v5130 = vadd.f32 %v5056, %v5129
    %5131 = vdwg.mxu0
    %5132 = vmatpush.bf16.msra.mxu0 %v3382
    %5133 = vmatpush.bf16.msra.mxu0 %v3378
    %5134 = vmatpush.bf16.msra.mxu0 %v3374
    %5135 = vmatpush.bf16.msra.mxu0 %v3370
    %5136 = vmatpush.bf16.msra.mxu0 %v3366
    %5137 = vmatpush.bf16.msra.mxu0 %v3362
    %5138 = vmatpush.bf16.msra.mxu0 %v3358
    %5139 = vmatpush.bf16.msra.mxu0 %v3354
    %5140 = vmatmul.bf16.gmra.mxu0 %v2152
    %v5141 = vpop.f32.mrf.mxu0
    %v5142 = vadd.f32 %v5068, %v5141
    %v5143 = vpop.f32.mrf.mxu0
    %v5144 = vadd.f32 %v5070, %v5143
    %5145 = vmatmul.bf16.gmra.mxu0 %v2160
    %v5146 = vpop.f32.mrf.mxu0
    %v5147 = vadd.f32 %v5073, %v5146
    %v5148 = vpop.f32.mrf.mxu0
    %v5149 = vadd.f32 %v5075, %v5148
    %5150 = vmatmul.bf16.gmra.mxu0 %v2168
    %v5151 = vpop.f32.mrf.mxu0
    %v5152 = vadd.f32 %v5078, %v5151
    %v5153 = vpop.f32.mrf.mxu0
    %v5154 = vadd.f32 %v5080, %v5153
    %5155 = vmatmul.bf16.gmra.mxu0 %v2176
    %v5156 = vpop.f32.mrf.mxu0
    %v5157 = vadd.f32 %v5083, %v5156
    %v5158 = vpop.f32.mrf.mxu0
    %v5159 = vadd.f32 %v5085, %v5158
    %5160 = vmatmul.bf16.gmra.mxu0 %v2184
    %v5161 = vpop.f32.mrf.mxu0
    %v5162 = vadd.f32 %v5088, %v5161
    %v5163 = vpop.f32.mrf.mxu0
    %v5164 = vadd.f32 %v5090, %v5163
    %5165 = vmatmul.bf16.gmra.mxu0 %v2192
    %v5166 = vpop.f32.mrf.mxu0
    %v5167 = vadd.f32 %v5093, %v5166
    %v5168 = vpop.f32.mrf.mxu0
    %v5169 = vadd.f32 %v5095, %v5168
    %5170 = vmatmul.bf16.gmra.mxu0 %v2200
    %v5171 = vpop.f32.mrf.mxu0
    %v5172 = vadd.f32 %v5098, %v5171
    %v5173 = vpop.f32.mrf.mxu0
    %v5174 = vadd.f32 %v5100, %v5173
    %5175 = vmatmul.bf16.gmra.mxu0 %v2208
    %v5176 = vpop.f32.mrf.mxu0
    %v5177 = vadd.f32 %v5103, %v5176
    %v5178 = vpop.f32.mrf.mxu0
    %v5179 = vadd.f32 %v5105, %v5178
    %5180 = vmatmul.bf16.gmra.mxu0 %v2216
    %v5181 = vpop.f32.mrf.mxu0
    %v5182 = vadd.f32 %v5108, %v5181
    %v5183 = vpop.f32.mrf.mxu0
    %v5184 = vadd.f32 %v5110, %v5183
    %5185 = vmatmul.bf16.gmra.mxu0 %v2224
    %v5186 = vpop.f32.mrf.mxu0
    %v5187 = vadd.f32 %v5113, %v5186
    %v5188 = vpop.f32.mrf.mxu0
    %v5189 = vadd.f32 %v5115, %v5188
    %5190 = vmatmul.bf16.gmra.mxu0 %v2232
    %v5191 = vpop.f32.mrf.mxu0
    %v5192 = vadd.f32 %v5118, %v5191
    %v5193 = vpop.f32.mrf.mxu0
    %v5194 = vadd.f32 %v5120, %v5193
    %5195 = vmatmul.bf16.gmra.mxu0 %v2240
    %v5196 = vpop.f32.mrf.mxu0
    %v5197 = vadd.f32 %v5123, %v5196
    %v5198 = vpop.f32.mrf.mxu0
    %v5199 = vadd.f32 %v5125, %v5198
    %5200 = vmatmul.bf16.gmra.mxu0 %v2248
    %v5201 = vpop.f32.mrf.mxu0
    %v5202 = vadd.f32 %v5128, %v5201
    %v5203 = vpop.f32.mrf.mxu0
    %v5204 = vadd.f32 %v5130, %v5203
    %5205 = vdwg.mxu0
    %5206 = vmatpush.bf16.msra.mxu0 %v3414
    %5207 = vmatpush.bf16.msra.mxu0 %v3410
    %5208 = vmatpush.bf16.msra.mxu0 %v3406
    %5209 = vmatpush.bf16.msra.mxu0 %v3402
    %5210 = vmatpush.bf16.msra.mxu0 %v3398
    %5211 = vmatpush.bf16.msra.mxu0 %v3394
    %5212 = vmatpush.bf16.msra.mxu0 %v3390
    %5213 = vmatpush.bf16.msra.mxu0 %v3386
    %5214 = vmatmul.bf16.gmra.mxu0 %v2153
    %v5215 = vpop.f32.mrf.mxu0
    %v5216 = vadd.f32 %v5142, %v5215
    %v5217 = vpop.f32.mrf.mxu0
    %v5218 = vadd.f32 %v5144, %v5217
    %5219 = vmatmul.bf16.gmra.mxu0 %v2161
    %v5220 = vpop.f32.mrf.mxu0
    %v5221 = vadd.f32 %v5147, %v5220
    %v5222 = vpop.f32.mrf.mxu0
    %v5223 = vadd.f32 %v5149, %v5222
    %5224 = vmatmul.bf16.gmra.mxu0 %v2169
    %v5225 = vpop.f32.mrf.mxu0
    %v5226 = vadd.f32 %v5152, %v5225
    %v5227 = vpop.f32.mrf.mxu0
    %v5228 = vadd.f32 %v5154, %v5227
    %5229 = vmatmul.bf16.gmra.mxu0 %v2177
    %v5230 = vpop.f32.mrf.mxu0
    %v5231 = vadd.f32 %v5157, %v5230
    %v5232 = vpop.f32.mrf.mxu0
    %v5233 = vadd.f32 %v5159, %v5232
    %5234 = vmatmul.bf16.gmra.mxu0 %v2185
    %v5235 = vpop.f32.mrf.mxu0
    %v5236 = vadd.f32 %v5162, %v5235
    %v5237 = vpop.f32.mrf.mxu0
    %v5238 = vadd.f32 %v5164, %v5237
    %5239 = vmatmul.bf16.gmra.mxu0 %v2193
    %v5240 = vpop.f32.mrf.mxu0
    %v5241 = vadd.f32 %v5167, %v5240
    %v5242 = vpop.f32.mrf.mxu0
    %v5243 = vadd.f32 %v5169, %v5242
    %5244 = vmatmul.bf16.gmra.mxu0 %v2201
    %v5245 = vpop.f32.mrf.mxu0
    %v5246 = vadd.f32 %v5172, %v5245
    %v5247 = vpop.f32.mrf.mxu0
    %v5248 = vadd.f32 %v5174, %v5247
    %5249 = vmatmul.bf16.gmra.mxu0 %v2209
    %v5250 = vpop.f32.mrf.mxu0
    %v5251 = vadd.f32 %v5177, %v5250
    %v5252 = vpop.f32.mrf.mxu0
    %v5253 = vadd.f32 %v5179, %v5252
    %5254 = vmatmul.bf16.gmra.mxu0 %v2217
    %v5255 = vpop.f32.mrf.mxu0
    %v5256 = vadd.f32 %v5182, %v5255
    %v5257 = vpop.f32.mrf.mxu0
    %v5258 = vadd.f32 %v5184, %v5257
    %5259 = vmatmul.bf16.gmra.mxu0 %v2225
    %v5260 = vpop.f32.mrf.mxu0
    %v5261 = vadd.f32 %v5187, %v5260
    %v5262 = vpop.f32.mrf.mxu0
    %v5263 = vadd.f32 %v5189, %v5262
    %5264 = vmatmul.bf16.gmra.mxu0 %v2233
    %v5265 = vpop.f32.mrf.mxu0
    %v5266 = vadd.f32 %v5192, %v5265
    %v5267 = vpop.f32.mrf.mxu0
    %v5268 = vadd.f32 %v5194, %v5267
    %5269 = vmatmul.bf16.gmra.mxu0 %v2241
    %v5270 = vpop.f32.mrf.mxu0
    %v5271 = vadd.f32 %v5197, %v5270
    %v5272 = vpop.f32.mrf.mxu0
    %v5273 = vadd.f32 %v5199, %v5272
    %5274 = vmatmul.bf16.gmra.mxu0 %v2249
    %v5275 = vpop.f32.mrf.mxu0
    %v5276 = vadd.f32 %v5202, %v5275
    %v5277 = vpop.f32.mrf.mxu0
    %v5278 = vadd.f32 %v5204, %v5277
    %5279 = vdwg.mxu0
    %5280 = vmatpush.bf16.msra.mxu0 %v3446
    %5281 = vmatpush.bf16.msra.mxu0 %v3442
    %5282 = vmatpush.bf16.msra.mxu0 %v3438
    %5283 = vmatpush.bf16.msra.mxu0 %v3434
    %5284 = vmatpush.bf16.msra.mxu0 %v3430
    %5285 = vmatpush.bf16.msra.mxu0 %v3426
    %5286 = vmatpush.bf16.msra.mxu0 %v3422
    %5287 = vmatpush.bf16.msra.mxu0 %v3418
    %5288 = vmatmul.bf16.gmra.mxu0 %v2154
    %v5289 = vpop.f32.mrf.mxu0
    %v5290 = vadd.f32 %v5216, %v5289
    %v5291 = vpop.f32.mrf.mxu0
    %v5292 = vadd.f32 %v5218, %v5291
    %5293 = vmatmul.bf16.gmra.mxu0 %v2162
    %v5294 = vpop.f32.mrf.mxu0
    %v5295 = vadd.f32 %v5221, %v5294
    %v5296 = vpop.f32.mrf.mxu0
    %v5297 = vadd.f32 %v5223, %v5296
    %5298 = vmatmul.bf16.gmra.mxu0 %v2170
    %v5299 = vpop.f32.mrf.mxu0
    %v5300 = vadd.f32 %v5226, %v5299
    %v5301 = vpop.f32.mrf.mxu0
    %v5302 = vadd.f32 %v5228, %v5301
    %5303 = vmatmul.bf16.gmra.mxu0 %v2178
    %v5304 = vpop.f32.mrf.mxu0
    %v5305 = vadd.f32 %v5231, %v5304
    %v5306 = vpop.f32.mrf.mxu0
    %v5307 = vadd.f32 %v5233, %v5306
    %5308 = vmatmul.bf16.gmra.mxu0 %v2186
    %v5309 = vpop.f32.mrf.mxu0
    %v5310 = vadd.f32 %v5236, %v5309
    %v5311 = vpop.f32.mrf.mxu0
    %v5312 = vadd.f32 %v5238, %v5311
    %5313 = vmatmul.bf16.gmra.mxu0 %v2194
    %v5314 = vpop.f32.mrf.mxu0
    %v5315 = vadd.f32 %v5241, %v5314
    %v5316 = vpop.f32.mrf.mxu0
    %v5317 = vadd.f32 %v5243, %v5316
    %5318 = vmatmul.bf16.gmra.mxu0 %v2202
    %v5319 = vpop.f32.mrf.mxu0
    %v5320 = vadd.f32 %v5246, %v5319
    %v5321 = vpop.f32.mrf.mxu0
    %v5322 = vadd.f32 %v5248, %v5321
    %5323 = vmatmul.bf16.gmra.mxu0 %v2210
    %v5324 = vpop.f32.mrf.mxu0
    %v5325 = vadd.f32 %v5251, %v5324
    %v5326 = vpop.f32.mrf.mxu0
    %v5327 = vadd.f32 %v5253, %v5326
    %5328 = vmatmul.bf16.gmra.mxu0 %v2218
    %v5329 = vpop.f32.mrf.mxu0
    %v5330 = vadd.f32 %v5256, %v5329
    %v5331 = vpop.f32.mrf.mxu0
    %v5332 = vadd.f32 %v5258, %v5331
    %5333 = vmatmul.bf16.gmra.mxu0 %v2226
    %v5334 = vpop.f32.mrf.mxu0
    %v5335 = vadd.f32 %v5261, %v5334
    %v5336 = vpop.f32.mrf.mxu0
    %v5337 = vadd.f32 %v5263, %v5336
    %5338 = vmatmul.bf16.gmra.mxu0 %v2234
    %v5339 = vpop.f32.mrf.mxu0
    %v5340 = vadd.f32 %v5266, %v5339
    %v5341 = vpop.f32.mrf.mxu0
    %v5342 = vadd.f32 %v5268, %v5341
    %5343 = vmatmul.bf16.gmra.mxu0 %v2242
    %v5344 = vpop.f32.mrf.mxu0
    %v5345 = vadd.f32 %v5271, %v5344
    %v5346 = vpop.f32.mrf.mxu0
    %v5347 = vadd.f32 %v5273, %v5346
    %5348 = vmatmul.bf16.gmra.mxu0 %v2250
    %v5349 = vpop.f32.mrf.mxu0
    %v5350 = vadd.f32 %v5276, %v5349
    %v5351 = vpop.f32.mrf.mxu0
    %v5352 = vadd.f32 %v5278, %v5351
    %5353 = vdwg.mxu0
    %5354 = vmatpush.bf16.msra.mxu0 %v3478
    %5355 = vmatpush.bf16.msra.mxu0 %v3474
    %5356 = vmatpush.bf16.msra.mxu0 %v3470
    %5357 = vmatpush.bf16.msra.mxu0 %v3466
    %5358 = vmatpush.bf16.msra.mxu0 %v3462
    %5359 = vmatpush.bf16.msra.mxu0 %v3458
    %5360 = vmatpush.bf16.msra.mxu0 %v3454
    %5361 = vmatpush.bf16.msra.mxu0 %v3450
    %5362 = vmatmul.bf16.gmra.mxu0 %v2155
    %v5363 = vpop.f32.mrf.mxu0
    %v5364 = vadd.f32 %v5290, %v5363
    %v5365 = vpop.f32.mrf.mxu0
    %v5366 = vadd.f32 %v5292, %v5365
    %5367 = vmatmul.bf16.gmra.mxu0 %v2163
    %v5368 = vpop.f32.mrf.mxu0
    %v5369 = vadd.f32 %v5295, %v5368
    %v5370 = vpop.f32.mrf.mxu0
    %v5371 = vadd.f32 %v5297, %v5370
    %5372 = vmatmul.bf16.gmra.mxu0 %v2171
    %v5373 = vpop.f32.mrf.mxu0
    %v5374 = vadd.f32 %v5300, %v5373
    %v5375 = vpop.f32.mrf.mxu0
    %v5376 = vadd.f32 %v5302, %v5375
    %5377 = vmatmul.bf16.gmra.mxu0 %v2179
    %v5378 = vpop.f32.mrf.mxu0
    %v5379 = vadd.f32 %v5305, %v5378
    %v5380 = vpop.f32.mrf.mxu0
    %v5381 = vadd.f32 %v5307, %v5380
    %5382 = vmatmul.bf16.gmra.mxu0 %v2187
    %v5383 = vpop.f32.mrf.mxu0
    %v5384 = vadd.f32 %v5310, %v5383
    %v5385 = vpop.f32.mrf.mxu0
    %v5386 = vadd.f32 %v5312, %v5385
    %5387 = vmatmul.bf16.gmra.mxu0 %v2195
    %v5388 = vpop.f32.mrf.mxu0
    %v5389 = vadd.f32 %v5315, %v5388
    %v5390 = vpop.f32.mrf.mxu0
    %v5391 = vadd.f32 %v5317, %v5390
    %5392 = vmatmul.bf16.gmra.mxu0 %v2203
    %v5393 = vpop.f32.mrf.mxu0
    %v5394 = vadd.f32 %v5320, %v5393
    %v5395 = vpop.f32.mrf.mxu0
    %v5396 = vadd.f32 %v5322, %v5395
    %5397 = vmatmul.bf16.gmra.mxu0 %v2211
    %v5398 = vpop.f32.mrf.mxu0
    %v5399 = vadd.f32 %v5325, %v5398
    %v5400 = vpop.f32.mrf.mxu0
    %v5401 = vadd.f32 %v5327, %v5400
    %5402 = vmatmul.bf16.gmra.mxu0 %v2219
    %v5403 = vpop.f32.mrf.mxu0
    %v5404 = vadd.f32 %v5330, %v5403
    %v5405 = vpop.f32.mrf.mxu0
    %v5406 = vadd.f32 %v5332, %v5405
    %5407 = vmatmul.bf16.gmra.mxu0 %v2227
    %v5408 = vpop.f32.mrf.mxu0
    %v5409 = vadd.f32 %v5335, %v5408
    %v5410 = vpop.f32.mrf.mxu0
    %v5411 = vadd.f32 %v5337, %v5410
    %5412 = vmatmul.bf16.gmra.mxu0 %v2235
    %v5413 = vpop.f32.mrf.mxu0
    %v5414 = vadd.f32 %v5340, %v5413
    %v5415 = vpop.f32.mrf.mxu0
    %v5416 = vadd.f32 %v5342, %v5415
    %5417 = vmatmul.bf16.gmra.mxu0 %v2243
    %v5418 = vpop.f32.mrf.mxu0
    %v5419 = vadd.f32 %v5345, %v5418
    %v5420 = vpop.f32.mrf.mxu0
    %v5421 = vadd.f32 %v5347, %v5420
    %5422 = vmatmul.bf16.gmra.mxu0 %v2251
    %v5423 = vpop.f32.mrf.mxu0
    %v5424 = vadd.f32 %v5350, %v5423
    %v5425 = vpop.f32.mrf.mxu0
    %v5426 = vadd.f32 %v5352, %v5425
    %5427 = vdwg.mxu0
    %5428 = vmatpush.bf16.msra.mxu0 %v3510
    %5429 = vmatpush.bf16.msra.mxu0 %v3506
    %5430 = vmatpush.bf16.msra.mxu0 %v3502
    %5431 = vmatpush.bf16.msra.mxu0 %v3498
    %5432 = vmatpush.bf16.msra.mxu0 %v3494
    %5433 = vmatpush.bf16.msra.mxu0 %v3490
    %5434 = vmatpush.bf16.msra.mxu0 %v3486
    %5435 = vmatpush.bf16.msra.mxu0 %v3482
    %5436 = vmatmul.bf16.gmra.mxu0 %v2156
    %v5437 = vpop.f32.mrf.mxu0
    %v5438 = vadd.f32 %v5364, %v5437
    %v5439 = vpop.f32.mrf.mxu0
    %v5440 = vadd.f32 %v5366, %v5439
    %5441 = vmatmul.bf16.gmra.mxu0 %v2164
    %v5442 = vpop.f32.mrf.mxu0
    %v5443 = vadd.f32 %v5369, %v5442
    %v5444 = vpop.f32.mrf.mxu0
    %v5445 = vadd.f32 %v5371, %v5444
    %5446 = vmatmul.bf16.gmra.mxu0 %v2172
    %v5447 = vpop.f32.mrf.mxu0
    %v5448 = vadd.f32 %v5374, %v5447
    %v5449 = vpop.f32.mrf.mxu0
    %v5450 = vadd.f32 %v5376, %v5449
    %5451 = vmatmul.bf16.gmra.mxu0 %v2180
    %v5452 = vpop.f32.mrf.mxu0
    %v5453 = vadd.f32 %v5379, %v5452
    %v5454 = vpop.f32.mrf.mxu0
    %v5455 = vadd.f32 %v5381, %v5454
    %5456 = vmatmul.bf16.gmra.mxu0 %v2188
    %v5457 = vpop.f32.mrf.mxu0
    %v5458 = vadd.f32 %v5384, %v5457
    %v5459 = vpop.f32.mrf.mxu0
    %v5460 = vadd.f32 %v5386, %v5459
    %5461 = vmatmul.bf16.gmra.mxu0 %v2196
    %v5462 = vpop.f32.mrf.mxu0
    %v5463 = vadd.f32 %v5389, %v5462
    %v5464 = vpop.f32.mrf.mxu0
    %v5465 = vadd.f32 %v5391, %v5464
    %5466 = vmatmul.bf16.gmra.mxu0 %v2204
    %v5467 = vpop.f32.mrf.mxu0
    %v5468 = vadd.f32 %v5394, %v5467
    %v5469 = vpop.f32.mrf.mxu0
    %v5470 = vadd.f32 %v5396, %v5469
    %5471 = vmatmul.bf16.gmra.mxu0 %v2212
    %v5472 = vpop.f32.mrf.mxu0
    %v5473 = vadd.f32 %v5399, %v5472
    %v5474 = vpop.f32.mrf.mxu0
    %v5475 = vadd.f32 %v5401, %v5474
    %5476 = vmatmul.bf16.gmra.mxu0 %v2220
    %v5477 = vpop.f32.mrf.mxu0
    %v5478 = vadd.f32 %v5404, %v5477
    %v5479 = vpop.f32.mrf.mxu0
    %v5480 = vadd.f32 %v5406, %v5479
    %5481 = vmatmul.bf16.gmra.mxu0 %v2228
    %v5482 = vpop.f32.mrf.mxu0
    %v5483 = vadd.f32 %v5409, %v5482
    %v5484 = vpop.f32.mrf.mxu0
    %v5485 = vadd.f32 %v5411, %v5484
    %5486 = vmatmul.bf16.gmra.mxu0 %v2236
    %v5487 = vpop.f32.mrf.mxu0
    %v5488 = vadd.f32 %v5414, %v5487
    %v5489 = vpop.f32.mrf.mxu0
    %v5490 = vadd.f32 %v5416, %v5489
    %5491 = vmatmul.bf16.gmra.mxu0 %v2244
    %v5492 = vpop.f32.mrf.mxu0
    %v5493 = vadd.f32 %v5419, %v5492
    %v5494 = vpop.f32.mrf.mxu0
    %v5495 = vadd.f32 %v5421, %v5494
    %5496 = vmatmul.bf16.gmra.mxu0 %v2252
    %v5497 = vpop.f32.mrf.mxu0
    %v5498 = vadd.f32 %v5424, %v5497
    %v5499 = vpop.f32.mrf.mxu0
    %v5500 = vadd.f32 %v5426, %v5499
    %5501 = vdwg.mxu0
    %5502 = vmatpush.bf16.msra.mxu0 %v3542
    %5503 = vmatpush.bf16.msra.mxu0 %v3538
    %5504 = vmatpush.bf16.msra.mxu0 %v3534
    %5505 = vmatpush.bf16.msra.mxu0 %v3530
    %5506 = vmatpush.bf16.msra.mxu0 %v3526
    %5507 = vmatpush.bf16.msra.mxu0 %v3522
    %5508 = vmatpush.bf16.msra.mxu0 %v3518
    %5509 = vmatpush.bf16.msra.mxu0 %v3514
    %5510 = vmatmul.bf16.gmra.mxu0 %v2157
    %v5511 = vpop.f32.mrf.mxu0
    %v5512 = vadd.f32 %v5438, %v5511
    %v5513 = vpop.f32.mrf.mxu0
    %v5514 = vadd.f32 %v5440, %v5513
    %5515 = vmatmul.bf16.gmra.mxu0 %v2165
    %v5516 = vpop.f32.mrf.mxu0
    %v5517 = vadd.f32 %v5443, %v5516
    %v5518 = vpop.f32.mrf.mxu0
    %v5519 = vadd.f32 %v5445, %v5518
    %5520 = vmatmul.bf16.gmra.mxu0 %v2173
    %v5521 = vpop.f32.mrf.mxu0
    %v5522 = vadd.f32 %v5448, %v5521
    %v5523 = vpop.f32.mrf.mxu0
    %v5524 = vadd.f32 %v5450, %v5523
    %5525 = vmatmul.bf16.gmra.mxu0 %v2181
    %v5526 = vpop.f32.mrf.mxu0
    %v5527 = vadd.f32 %v5453, %v5526
    %v5528 = vpop.f32.mrf.mxu0
    %v5529 = vadd.f32 %v5455, %v5528
    %5530 = vmatmul.bf16.gmra.mxu0 %v2189
    %v5531 = vpop.f32.mrf.mxu0
    %v5532 = vadd.f32 %v5458, %v5531
    %v5533 = vpop.f32.mrf.mxu0
    %v5534 = vadd.f32 %v5460, %v5533
    %5535 = vmatmul.bf16.gmra.mxu0 %v2197
    %v5536 = vpop.f32.mrf.mxu0
    %v5537 = vadd.f32 %v5463, %v5536
    %v5538 = vpop.f32.mrf.mxu0
    %v5539 = vadd.f32 %v5465, %v5538
    %5540 = vmatmul.bf16.gmra.mxu0 %v2205
    %v5541 = vpop.f32.mrf.mxu0
    %v5542 = vadd.f32 %v5468, %v5541
    %v5543 = vpop.f32.mrf.mxu0
    %v5544 = vadd.f32 %v5470, %v5543
    %5545 = vmatmul.bf16.gmra.mxu0 %v2213
    %v5546 = vpop.f32.mrf.mxu0
    %v5547 = vadd.f32 %v5473, %v5546
    %v5548 = vpop.f32.mrf.mxu0
    %v5549 = vadd.f32 %v5475, %v5548
    %5550 = vmatmul.bf16.gmra.mxu0 %v2221
    %v5551 = vpop.f32.mrf.mxu0
    %v5552 = vadd.f32 %v5478, %v5551
    %v5553 = vpop.f32.mrf.mxu0
    %v5554 = vadd.f32 %v5480, %v5553
    %5555 = vmatmul.bf16.gmra.mxu0 %v2229
    %v5556 = vpop.f32.mrf.mxu0
    %v5557 = vadd.f32 %v5483, %v5556
    %v5558 = vpop.f32.mrf.mxu0
    %v5559 = vadd.f32 %v5485, %v5558
    %5560 = vmatmul.bf16.gmra.mxu0 %v2237
    %v5561 = vpop.f32.mrf.mxu0
    %v5562 = vadd.f32 %v5488, %v5561
    %v5563 = vpop.f32.mrf.mxu0
    %v5564 = vadd.f32 %v5490, %v5563
    %5565 = vmatmul.bf16.gmra.mxu0 %v2245
    %v5566 = vpop.f32.mrf.mxu0
    %v5567 = vadd.f32 %v5493, %v5566
    %v5568 = vpop.f32.mrf.mxu0
    %v5569 = vadd.f32 %v5495, %v5568
    %5570 = vmatmul.bf16.gmra.mxu0 %v2253
    %v5571 = vpop.f32.mrf.mxu0
    %v5572 = vadd.f32 %v5498, %v5571
    %v5573 = vpop.f32.mrf.mxu0
    %v5574 = vadd.f32 %v5500, %v5573
    %5575 = vdwg.mxu0
    %5576 = vmatpush.bf16.msra.mxu0 %v3319
    %5577 = vmatpush.bf16.msra.mxu0 %v3315
    %5578 = vmatpush.bf16.msra.mxu0 %v3311
    %5579 = vmatpush.bf16.msra.mxu0 %v3307
    %5580 = vmatpush.bf16.msra.mxu0 %v3303
    %5581 = vmatpush.bf16.msra.mxu0 %v3299
    %5582 = vmatpush.bf16.msra.mxu0 %v3295
    %5583 = vmatpush.bf16.msra.mxu0 %v3291
    %5584 = vmatmul.bf16.gmra.mxu0 %v2150
    %v5585 = vpop.f32.mrf.mxu0
    %v5586 = vadd.f32 %v2515, %v5585
    %v5587 = vpop.f32.mrf.mxu0
    %v5588 = vadd.f32 %v2515, %v5587
    %5589 = vmatmul.bf16.gmra.mxu0 %v2158
    %v5590 = vpop.f32.mrf.mxu0
    %v5591 = vadd.f32 %v2515, %v5590
    %v5592 = vpop.f32.mrf.mxu0
    %v5593 = vadd.f32 %v2515, %v5592
    %5594 = vmatmul.bf16.gmra.mxu0 %v2166
    %v5595 = vpop.f32.mrf.mxu0
    %v5596 = vadd.f32 %v2515, %v5595
    %v5597 = vpop.f32.mrf.mxu0
    %v5598 = vadd.f32 %v2515, %v5597
    %5599 = vmatmul.bf16.gmra.mxu0 %v2174
    %v5600 = vpop.f32.mrf.mxu0
    %v5601 = vadd.f32 %v2515, %v5600
    %v5602 = vpop.f32.mrf.mxu0
    %v5603 = vadd.f32 %v2515, %v5602
    %5604 = vmatmul.bf16.gmra.mxu0 %v2182
    %v5605 = vpop.f32.mrf.mxu0
    %v5606 = vadd.f32 %v2515, %v5605
    %v5607 = vpop.f32.mrf.mxu0
    %v5608 = vadd.f32 %v2515, %v5607
    %5609 = vmatmul.bf16.gmra.mxu0 %v2190
    %v5610 = vpop.f32.mrf.mxu0
    %v5611 = vadd.f32 %v2515, %v5610
    %v5612 = vpop.f32.mrf.mxu0
    %v5613 = vadd.f32 %v2515, %v5612
    %5614 = vmatmul.bf16.gmra.mxu0 %v2198
    %v5615 = vpop.f32.mrf.mxu0
    %v5616 = vadd.f32 %v2515, %v5615
    %v5617 = vpop.f32.mrf.mxu0
    %v5618 = vadd.f32 %v2515, %v5617
    %5619 = vmatmul.bf16.gmra.mxu0 %v2206
    %v5620 = vpop.f32.mrf.mxu0
    %v5621 = vadd.f32 %v2515, %v5620
    %v5622 = vpop.f32.mrf.mxu0
    %v5623 = vadd.f32 %v2515, %v5622
    %5624 = vmatmul.bf16.gmra.mxu0 %v2214
    %v5625 = vpop.f32.mrf.mxu0
    %v5626 = vadd.f32 %v2515, %v5625
    %v5627 = vpop.f32.mrf.mxu0
    %v5628 = vadd.f32 %v2515, %v5627
    %5629 = vmatmul.bf16.gmra.mxu0 %v2222
    %v5630 = vpop.f32.mrf.mxu0
    %v5631 = vadd.f32 %v2515, %v5630
    %v5632 = vpop.f32.mrf.mxu0
    %v5633 = vadd.f32 %v2515, %v5632
    %5634 = vmatmul.bf16.gmra.mxu0 %v2230
    %v5635 = vpop.f32.mrf.mxu0
    %v5636 = vadd.f32 %v2515, %v5635
    %v5637 = vpop.f32.mrf.mxu0
    %v5638 = vadd.f32 %v2515, %v5637
    %5639 = vmatmul.bf16.gmra.mxu0 %v2238
    %v5640 = vpop.f32.mrf.mxu0
    %v5641 = vadd.f32 %v2515, %v5640
    %v5642 = vpop.f32.mrf.mxu0
    %v5643 = vadd.f32 %v2515, %v5642
    %5644 = vmatmul.bf16.gmra.mxu0 %v2246
    %v5645 = vpop.f32.mrf.mxu0
    %v5646 = vadd.f32 %v2515, %v5645
    %v5647 = vpop.f32.mrf.mxu0
    %v5648 = vadd.f32 %v2515, %v5647
    %5649 = vdwg.mxu0
    %5650 = vmatpush.bf16.msra.mxu0 %v3351
    %5651 = vmatpush.bf16.msra.mxu0 %v3347
    %5652 = vmatpush.bf16.msra.mxu0 %v3343
    %5653 = vmatpush.bf16.msra.mxu0 %v3339
    %5654 = vmatpush.bf16.msra.mxu0 %v3335
    %5655 = vmatpush.bf16.msra.mxu0 %v3331
    %5656 = vmatpush.bf16.msra.mxu0 %v3327
    %5657 = vmatpush.bf16.msra.mxu0 %v3323
    %5658 = vmatmul.bf16.gmra.mxu0 %v2151
    %v5659 = vpop.f32.mrf.mxu0
    %v5660 = vadd.f32 %v5586, %v5659
    %v5661 = vpop.f32.mrf.mxu0
    %v5662 = vadd.f32 %v5588, %v5661
    %5663 = vmatmul.bf16.gmra.mxu0 %v2159
    %v5664 = vpop.f32.mrf.mxu0
    %v5665 = vadd.f32 %v5591, %v5664
    %v5666 = vpop.f32.mrf.mxu0
    %v5667 = vadd.f32 %v5593, %v5666
    %5668 = vmatmul.bf16.gmra.mxu0 %v2167
    %v5669 = vpop.f32.mrf.mxu0
    %v5670 = vadd.f32 %v5596, %v5669
    %v5671 = vpop.f32.mrf.mxu0
    %v5672 = vadd.f32 %v5598, %v5671
    %5673 = vmatmul.bf16.gmra.mxu0 %v2175
    %v5674 = vpop.f32.mrf.mxu0
    %v5675 = vadd.f32 %v5601, %v5674
    %v5676 = vpop.f32.mrf.mxu0
    %v5677 = vadd.f32 %v5603, %v5676
    %5678 = vmatmul.bf16.gmra.mxu0 %v2183
    %v5679 = vpop.f32.mrf.mxu0
    %v5680 = vadd.f32 %v5606, %v5679
    %v5681 = vpop.f32.mrf.mxu0
    %v5682 = vadd.f32 %v5608, %v5681
    %5683 = vmatmul.bf16.gmra.mxu0 %v2191
    %v5684 = vpop.f32.mrf.mxu0
    %v5685 = vadd.f32 %v5611, %v5684
    %v5686 = vpop.f32.mrf.mxu0
    %v5687 = vadd.f32 %v5613, %v5686
    %5688 = vmatmul.bf16.gmra.mxu0 %v2199
    %v5689 = vpop.f32.mrf.mxu0
    %v5690 = vadd.f32 %v5616, %v5689
    %v5691 = vpop.f32.mrf.mxu0
    %v5692 = vadd.f32 %v5618, %v5691
    %5693 = vmatmul.bf16.gmra.mxu0 %v2207
    %v5694 = vpop.f32.mrf.mxu0
    %v5695 = vadd.f32 %v5621, %v5694
    %v5696 = vpop.f32.mrf.mxu0
    %v5697 = vadd.f32 %v5623, %v5696
    %5698 = vmatmul.bf16.gmra.mxu0 %v2215
    %v5699 = vpop.f32.mrf.mxu0
    %v5700 = vadd.f32 %v5626, %v5699
    %v5701 = vpop.f32.mrf.mxu0
    %v5702 = vadd.f32 %v5628, %v5701
    %5703 = vmatmul.bf16.gmra.mxu0 %v2223
    %v5704 = vpop.f32.mrf.mxu0
    %v5705 = vadd.f32 %v5631, %v5704
    %v5706 = vpop.f32.mrf.mxu0
    %v5707 = vadd.f32 %v5633, %v5706
    %5708 = vmatmul.bf16.gmra.mxu0 %v2231
    %v5709 = vpop.f32.mrf.mxu0
    %v5710 = vadd.f32 %v5636, %v5709
    %v5711 = vpop.f32.mrf.mxu0
    %v5712 = vadd.f32 %v5638, %v5711
    %5713 = vmatmul.bf16.gmra.mxu0 %v2239
    %v5714 = vpop.f32.mrf.mxu0
    %v5715 = vadd.f32 %v5641, %v5714
    %v5716 = vpop.f32.mrf.mxu0
    %v5717 = vadd.f32 %v5643, %v5716
    %5718 = vmatmul.bf16.gmra.mxu0 %v2247
    %v5719 = vpop.f32.mrf.mxu0
    %v5720 = vadd.f32 %v5646, %v5719
    %v5721 = vpop.f32.mrf.mxu0
    %v5722 = vadd.f32 %v5648, %v5721
    %5723 = vdwg.mxu0
    %5724 = vmatpush.bf16.msra.mxu0 %v3383
    %5725 = vmatpush.bf16.msra.mxu0 %v3379
    %5726 = vmatpush.bf16.msra.mxu0 %v3375
    %5727 = vmatpush.bf16.msra.mxu0 %v3371
    %5728 = vmatpush.bf16.msra.mxu0 %v3367
    %5729 = vmatpush.bf16.msra.mxu0 %v3363
    %5730 = vmatpush.bf16.msra.mxu0 %v3359
    %5731 = vmatpush.bf16.msra.mxu0 %v3355
    %5732 = vmatmul.bf16.gmra.mxu0 %v2152
    %v5733 = vpop.f32.mrf.mxu0
    %v5734 = vadd.f32 %v5660, %v5733
    %v5735 = vpop.f32.mrf.mxu0
    %v5736 = vadd.f32 %v5662, %v5735
    %5737 = vmatmul.bf16.gmra.mxu0 %v2160
    %v5738 = vpop.f32.mrf.mxu0
    %v5739 = vadd.f32 %v5665, %v5738
    %v5740 = vpop.f32.mrf.mxu0
    %v5741 = vadd.f32 %v5667, %v5740
    %5742 = vmatmul.bf16.gmra.mxu0 %v2168
    %v5743 = vpop.f32.mrf.mxu0
    %v5744 = vadd.f32 %v5670, %v5743
    %v5745 = vpop.f32.mrf.mxu0
    %v5746 = vadd.f32 %v5672, %v5745
    %5747 = vmatmul.bf16.gmra.mxu0 %v2176
    %v5748 = vpop.f32.mrf.mxu0
    %v5749 = vadd.f32 %v5675, %v5748
    %v5750 = vpop.f32.mrf.mxu0
    %v5751 = vadd.f32 %v5677, %v5750
    %5752 = vmatmul.bf16.gmra.mxu0 %v2184
    %v5753 = vpop.f32.mrf.mxu0
    %v5754 = vadd.f32 %v5680, %v5753
    %v5755 = vpop.f32.mrf.mxu0
    %v5756 = vadd.f32 %v5682, %v5755
    %5757 = vmatmul.bf16.gmra.mxu0 %v2192
    %v5758 = vpop.f32.mrf.mxu0
    %v5759 = vadd.f32 %v5685, %v5758
    %v5760 = vpop.f32.mrf.mxu0
    %v5761 = vadd.f32 %v5687, %v5760
    %5762 = vmatmul.bf16.gmra.mxu0 %v2200
    %v5763 = vpop.f32.mrf.mxu0
    %v5764 = vadd.f32 %v5690, %v5763
    %v5765 = vpop.f32.mrf.mxu0
    %v5766 = vadd.f32 %v5692, %v5765
    %5767 = vmatmul.bf16.gmra.mxu0 %v2208
    %v5768 = vpop.f32.mrf.mxu0
    %v5769 = vadd.f32 %v5695, %v5768
    %v5770 = vpop.f32.mrf.mxu0
    %v5771 = vadd.f32 %v5697, %v5770
    %5772 = vmatmul.bf16.gmra.mxu0 %v2216
    %v5773 = vpop.f32.mrf.mxu0
    %v5774 = vadd.f32 %v5700, %v5773
    %v5775 = vpop.f32.mrf.mxu0
    %v5776 = vadd.f32 %v5702, %v5775
    %5777 = vmatmul.bf16.gmra.mxu0 %v2224
    %v5778 = vpop.f32.mrf.mxu0
    %v5779 = vadd.f32 %v5705, %v5778
    %v5780 = vpop.f32.mrf.mxu0
    %v5781 = vadd.f32 %v5707, %v5780
    %5782 = vmatmul.bf16.gmra.mxu0 %v2232
    %v5783 = vpop.f32.mrf.mxu0
    %v5784 = vadd.f32 %v5710, %v5783
    %v5785 = vpop.f32.mrf.mxu0
    %v5786 = vadd.f32 %v5712, %v5785
    %5787 = vmatmul.bf16.gmra.mxu0 %v2240
    %v5788 = vpop.f32.mrf.mxu0
    %v5789 = vadd.f32 %v5715, %v5788
    %v5790 = vpop.f32.mrf.mxu0
    %v5791 = vadd.f32 %v5717, %v5790
    %5792 = vmatmul.bf16.gmra.mxu0 %v2248
    %v5793 = vpop.f32.mrf.mxu0
    %v5794 = vadd.f32 %v5720, %v5793
    %v5795 = vpop.f32.mrf.mxu0
    %v5796 = vadd.f32 %v5722, %v5795
    %5797 = vdwg.mxu0
    %5798 = vmatpush.bf16.msra.mxu0 %v3415
    %5799 = vmatpush.bf16.msra.mxu0 %v3411
    %5800 = vmatpush.bf16.msra.mxu0 %v3407
    %5801 = vmatpush.bf16.msra.mxu0 %v3403
    %5802 = vmatpush.bf16.msra.mxu0 %v3399
    %5803 = vmatpush.bf16.msra.mxu0 %v3395
    %5804 = vmatpush.bf16.msra.mxu0 %v3391
    %5805 = vmatpush.bf16.msra.mxu0 %v3387
    %5806 = vmatmul.bf16.gmra.mxu0 %v2153
    %v5807 = vpop.f32.mrf.mxu0
    %v5808 = vadd.f32 %v5734, %v5807
    %v5809 = vpop.f32.mrf.mxu0
    %v5810 = vadd.f32 %v5736, %v5809
    %5811 = vmatmul.bf16.gmra.mxu0 %v2161
    %v5812 = vpop.f32.mrf.mxu0
    %v5813 = vadd.f32 %v5739, %v5812
    %v5814 = vpop.f32.mrf.mxu0
    %v5815 = vadd.f32 %v5741, %v5814
    %5816 = vmatmul.bf16.gmra.mxu0 %v2169
    %v5817 = vpop.f32.mrf.mxu0
    %v5818 = vadd.f32 %v5744, %v5817
    %v5819 = vpop.f32.mrf.mxu0
    %v5820 = vadd.f32 %v5746, %v5819
    %5821 = vmatmul.bf16.gmra.mxu0 %v2177
    %v5822 = vpop.f32.mrf.mxu0
    %v5823 = vadd.f32 %v5749, %v5822
    %v5824 = vpop.f32.mrf.mxu0
    %v5825 = vadd.f32 %v5751, %v5824
    %5826 = vmatmul.bf16.gmra.mxu0 %v2185
    %v5827 = vpop.f32.mrf.mxu0
    %v5828 = vadd.f32 %v5754, %v5827
    %v5829 = vpop.f32.mrf.mxu0
    %v5830 = vadd.f32 %v5756, %v5829
    %5831 = vmatmul.bf16.gmra.mxu0 %v2193
    %v5832 = vpop.f32.mrf.mxu0
    %v5833 = vadd.f32 %v5759, %v5832
    %v5834 = vpop.f32.mrf.mxu0
    %v5835 = vadd.f32 %v5761, %v5834
    %5836 = vmatmul.bf16.gmra.mxu0 %v2201
    %v5837 = vpop.f32.mrf.mxu0
    %v5838 = vadd.f32 %v5764, %v5837
    %v5839 = vpop.f32.mrf.mxu0
    %v5840 = vadd.f32 %v5766, %v5839
    %5841 = vmatmul.bf16.gmra.mxu0 %v2209
    %v5842 = vpop.f32.mrf.mxu0
    %v5843 = vadd.f32 %v5769, %v5842
    %v5844 = vpop.f32.mrf.mxu0
    %v5845 = vadd.f32 %v5771, %v5844
    %5846 = vmatmul.bf16.gmra.mxu0 %v2217
    %v5847 = vpop.f32.mrf.mxu0
    %v5848 = vadd.f32 %v5774, %v5847
    %v5849 = vpop.f32.mrf.mxu0
    %v5850 = vadd.f32 %v5776, %v5849
    %5851 = vmatmul.bf16.gmra.mxu0 %v2225
    %v5852 = vpop.f32.mrf.mxu0
    %v5853 = vadd.f32 %v5779, %v5852
    %v5854 = vpop.f32.mrf.mxu0
    %v5855 = vadd.f32 %v5781, %v5854
    %5856 = vmatmul.bf16.gmra.mxu0 %v2233
    %v5857 = vpop.f32.mrf.mxu0
    %v5858 = vadd.f32 %v5784, %v5857
    %v5859 = vpop.f32.mrf.mxu0
    %v5860 = vadd.f32 %v5786, %v5859
    %5861 = vmatmul.bf16.gmra.mxu0 %v2241
    %v5862 = vpop.f32.mrf.mxu0
    %v5863 = vadd.f32 %v5789, %v5862
    %v5864 = vpop.f32.mrf.mxu0
    %v5865 = vadd.f32 %v5791, %v5864
    %5866 = vmatmul.bf16.gmra.mxu0 %v2249
    %v5867 = vpop.f32.mrf.mxu0
    %v5868 = vadd.f32 %v5794, %v5867
    %v5869 = vpop.f32.mrf.mxu0
    %v5870 = vadd.f32 %v5796, %v5869
    %5871 = vdwg.mxu0
    %5872 = vmatpush.bf16.msra.mxu0 %v3447
    %5873 = vmatpush.bf16.msra.mxu0 %v3443
    %5874 = vmatpush.bf16.msra.mxu0 %v3439
    %5875 = vmatpush.bf16.msra.mxu0 %v3435
    %5876 = vmatpush.bf16.msra.mxu0 %v3431
    %5877 = vmatpush.bf16.msra.mxu0 %v3427
    %5878 = vmatpush.bf16.msra.mxu0 %v3423
    %5879 = vmatpush.bf16.msra.mxu0 %v3419
    %5880 = vmatmul.bf16.gmra.mxu0 %v2154
    %v5881 = vpop.f32.mrf.mxu0
    %v5882 = vadd.f32 %v5808, %v5881
    %v5883 = vpop.f32.mrf.mxu0
    %v5884 = vadd.f32 %v5810, %v5883
    %5885 = vmatmul.bf16.gmra.mxu0 %v2162
    %v5886 = vpop.f32.mrf.mxu0
    %v5887 = vadd.f32 %v5813, %v5886
    %v5888 = vpop.f32.mrf.mxu0
    %v5889 = vadd.f32 %v5815, %v5888
    %5890 = vmatmul.bf16.gmra.mxu0 %v2170
    %v5891 = vpop.f32.mrf.mxu0
    %v5892 = vadd.f32 %v5818, %v5891
    %v5893 = vpop.f32.mrf.mxu0
    %v5894 = vadd.f32 %v5820, %v5893
    %5895 = vmatmul.bf16.gmra.mxu0 %v2178
    %v5896 = vpop.f32.mrf.mxu0
    %v5897 = vadd.f32 %v5823, %v5896
    %v5898 = vpop.f32.mrf.mxu0
    %v5899 = vadd.f32 %v5825, %v5898
    %5900 = vmatmul.bf16.gmra.mxu0 %v2186
    %v5901 = vpop.f32.mrf.mxu0
    %v5902 = vadd.f32 %v5828, %v5901
    %v5903 = vpop.f32.mrf.mxu0
    %v5904 = vadd.f32 %v5830, %v5903
    %5905 = vmatmul.bf16.gmra.mxu0 %v2194
    %v5906 = vpop.f32.mrf.mxu0
    %v5907 = vadd.f32 %v5833, %v5906
    %v5908 = vpop.f32.mrf.mxu0
    %v5909 = vadd.f32 %v5835, %v5908
    %5910 = vmatmul.bf16.gmra.mxu0 %v2202
    %v5911 = vpop.f32.mrf.mxu0
    %v5912 = vadd.f32 %v5838, %v5911
    %v5913 = vpop.f32.mrf.mxu0
    %v5914 = vadd.f32 %v5840, %v5913
    %5915 = vmatmul.bf16.gmra.mxu0 %v2210
    %v5916 = vpop.f32.mrf.mxu0
    %v5917 = vadd.f32 %v5843, %v5916
    %v5918 = vpop.f32.mrf.mxu0
    %v5919 = vadd.f32 %v5845, %v5918
    %5920 = vmatmul.bf16.gmra.mxu0 %v2218
    %v5921 = vpop.f32.mrf.mxu0
    %v5922 = vadd.f32 %v5848, %v5921
    %v5923 = vpop.f32.mrf.mxu0
    %v5924 = vadd.f32 %v5850, %v5923
    %5925 = vmatmul.bf16.gmra.mxu0 %v2226
    %v5926 = vpop.f32.mrf.mxu0
    %v5927 = vadd.f32 %v5853, %v5926
    %v5928 = vpop.f32.mrf.mxu0
    %v5929 = vadd.f32 %v5855, %v5928
    %5930 = vmatmul.bf16.gmra.mxu0 %v2234
    %v5931 = vpop.f32.mrf.mxu0
    %v5932 = vadd.f32 %v5858, %v5931
    %v5933 = vpop.f32.mrf.mxu0
    %v5934 = vadd.f32 %v5860, %v5933
    %5935 = vmatmul.bf16.gmra.mxu0 %v2242
    %v5936 = vpop.f32.mrf.mxu0
    %v5937 = vadd.f32 %v5863, %v5936
    %v5938 = vpop.f32.mrf.mxu0
    %v5939 = vadd.f32 %v5865, %v5938
    %5940 = vmatmul.bf16.gmra.mxu0 %v2250
    %v5941 = vpop.f32.mrf.mxu0
    %v5942 = vadd.f32 %v5868, %v5941
    %v5943 = vpop.f32.mrf.mxu0
    %v5944 = vadd.f32 %v5870, %v5943
    %5945 = vdwg.mxu0
    %5946 = vmatpush.bf16.msra.mxu0 %v3479
    %5947 = vmatpush.bf16.msra.mxu0 %v3475
    %5948 = vmatpush.bf16.msra.mxu0 %v3471
    %5949 = vmatpush.bf16.msra.mxu0 %v3467
    %5950 = vmatpush.bf16.msra.mxu0 %v3463
    %5951 = vmatpush.bf16.msra.mxu0 %v3459
    %5952 = vmatpush.bf16.msra.mxu0 %v3455
    %5953 = vmatpush.bf16.msra.mxu0 %v3451
    %5954 = vmatmul.bf16.gmra.mxu0 %v2155
    %v5955 = vpop.f32.mrf.mxu0
    %v5956 = vadd.f32 %v5882, %v5955
    %v5957 = vpop.f32.mrf.mxu0
    %v5958 = vadd.f32 %v5884, %v5957
    %5959 = vmatmul.bf16.gmra.mxu0 %v2163
    %v5960 = vpop.f32.mrf.mxu0
    %v5961 = vadd.f32 %v5887, %v5960
    %v5962 = vpop.f32.mrf.mxu0
    %v5963 = vadd.f32 %v5889, %v5962
    %5964 = vmatmul.bf16.gmra.mxu0 %v2171
    %v5965 = vpop.f32.mrf.mxu0
    %v5966 = vadd.f32 %v5892, %v5965
    %v5967 = vpop.f32.mrf.mxu0
    %v5968 = vadd.f32 %v5894, %v5967
    %5969 = vmatmul.bf16.gmra.mxu0 %v2179
    %v5970 = vpop.f32.mrf.mxu0
    %v5971 = vadd.f32 %v5897, %v5970
    %v5972 = vpop.f32.mrf.mxu0
    %v5973 = vadd.f32 %v5899, %v5972
    %5974 = vmatmul.bf16.gmra.mxu0 %v2187
    %v5975 = vpop.f32.mrf.mxu0
    %v5976 = vadd.f32 %v5902, %v5975
    %v5977 = vpop.f32.mrf.mxu0
    %v5978 = vadd.f32 %v5904, %v5977
    %5979 = vmatmul.bf16.gmra.mxu0 %v2195
    %v5980 = vpop.f32.mrf.mxu0
    %v5981 = vadd.f32 %v5907, %v5980
    %v5982 = vpop.f32.mrf.mxu0
    %v5983 = vadd.f32 %v5909, %v5982
    %5984 = vmatmul.bf16.gmra.mxu0 %v2203
    %v5985 = vpop.f32.mrf.mxu0
    %v5986 = vadd.f32 %v5912, %v5985
    %v5987 = vpop.f32.mrf.mxu0
    %v5988 = vadd.f32 %v5914, %v5987
    %5989 = vmatmul.bf16.gmra.mxu0 %v2211
    %v5990 = vpop.f32.mrf.mxu0
    %v5991 = vadd.f32 %v5917, %v5990
    %v5992 = vpop.f32.mrf.mxu0
    %v5993 = vadd.f32 %v5919, %v5992
    %5994 = vmatmul.bf16.gmra.mxu0 %v2219
    %v5995 = vpop.f32.mrf.mxu0
    %v5996 = vadd.f32 %v5922, %v5995
    %v5997 = vpop.f32.mrf.mxu0
    %v5998 = vadd.f32 %v5924, %v5997
    %5999 = vmatmul.bf16.gmra.mxu0 %v2227
    %v6000 = vpop.f32.mrf.mxu0
    %v6001 = vadd.f32 %v5927, %v6000
    %v6002 = vpop.f32.mrf.mxu0
    %v6003 = vadd.f32 %v5929, %v6002
    %6004 = vmatmul.bf16.gmra.mxu0 %v2235
    %v6005 = vpop.f32.mrf.mxu0
    %v6006 = vadd.f32 %v5932, %v6005
    %v6007 = vpop.f32.mrf.mxu0
    %v6008 = vadd.f32 %v5934, %v6007
    %6009 = vmatmul.bf16.gmra.mxu0 %v2243
    %v6010 = vpop.f32.mrf.mxu0
    %v6011 = vadd.f32 %v5937, %v6010
    %v6012 = vpop.f32.mrf.mxu0
    %v6013 = vadd.f32 %v5939, %v6012
    %6014 = vmatmul.bf16.gmra.mxu0 %v2251
    %v6015 = vpop.f32.mrf.mxu0
    %v6016 = vadd.f32 %v5942, %v6015
    %v6017 = vpop.f32.mrf.mxu0
    %v6018 = vadd.f32 %v5944, %v6017
    %6019 = vdwg.mxu0
    %6020 = vmatpush.bf16.msra.mxu0 %v3511
    %6021 = vmatpush.bf16.msra.mxu0 %v3507
    %6022 = vmatpush.bf16.msra.mxu0 %v3503
    %6023 = vmatpush.bf16.msra.mxu0 %v3499
    %6024 = vmatpush.bf16.msra.mxu0 %v3495
    %6025 = vmatpush.bf16.msra.mxu0 %v3491
    %6026 = vmatpush.bf16.msra.mxu0 %v3487
    %6027 = vmatpush.bf16.msra.mxu0 %v3483
    %6028 = vmatmul.bf16.gmra.mxu0 %v2156
    %v6029 = vpop.f32.mrf.mxu0
    %v6030 = vadd.f32 %v5956, %v6029
    %v6031 = vpop.f32.mrf.mxu0
    %v6032 = vadd.f32 %v5958, %v6031
    %6033 = vmatmul.bf16.gmra.mxu0 %v2164
    %v6034 = vpop.f32.mrf.mxu0
    %v6035 = vadd.f32 %v5961, %v6034
    %v6036 = vpop.f32.mrf.mxu0
    %v6037 = vadd.f32 %v5963, %v6036
    %6038 = vmatmul.bf16.gmra.mxu0 %v2172
    %v6039 = vpop.f32.mrf.mxu0
    %v6040 = vadd.f32 %v5966, %v6039
    %v6041 = vpop.f32.mrf.mxu0
    %v6042 = vadd.f32 %v5968, %v6041
    %6043 = vmatmul.bf16.gmra.mxu0 %v2180
    %v6044 = vpop.f32.mrf.mxu0
    %v6045 = vadd.f32 %v5971, %v6044
    %v6046 = vpop.f32.mrf.mxu0
    %v6047 = vadd.f32 %v5973, %v6046
    %6048 = vmatmul.bf16.gmra.mxu0 %v2188
    %v6049 = vpop.f32.mrf.mxu0
    %v6050 = vadd.f32 %v5976, %v6049
    %v6051 = vpop.f32.mrf.mxu0
    %v6052 = vadd.f32 %v5978, %v6051
    %6053 = vmatmul.bf16.gmra.mxu0 %v2196
    %v6054 = vpop.f32.mrf.mxu0
    %v6055 = vadd.f32 %v5981, %v6054
    %v6056 = vpop.f32.mrf.mxu0
    %v6057 = vadd.f32 %v5983, %v6056
    %6058 = vmatmul.bf16.gmra.mxu0 %v2204
    %v6059 = vpop.f32.mrf.mxu0
    %v6060 = vadd.f32 %v5986, %v6059
    %v6061 = vpop.f32.mrf.mxu0
    %v6062 = vadd.f32 %v5988, %v6061
    %6063 = vmatmul.bf16.gmra.mxu0 %v2212
    %v6064 = vpop.f32.mrf.mxu0
    %v6065 = vadd.f32 %v5991, %v6064
    %v6066 = vpop.f32.mrf.mxu0
    %v6067 = vadd.f32 %v5993, %v6066
    %6068 = vmatmul.bf16.gmra.mxu0 %v2220
    %v6069 = vpop.f32.mrf.mxu0
    %v6070 = vadd.f32 %v5996, %v6069
    %v6071 = vpop.f32.mrf.mxu0
    %v6072 = vadd.f32 %v5998, %v6071
    %6073 = vmatmul.bf16.gmra.mxu0 %v2228
    %v6074 = vpop.f32.mrf.mxu0
    %v6075 = vadd.f32 %v6001, %v6074
    %v6076 = vpop.f32.mrf.mxu0
    %v6077 = vadd.f32 %v6003, %v6076
    %6078 = vmatmul.bf16.gmra.mxu0 %v2236
    %v6079 = vpop.f32.mrf.mxu0
    %v6080 = vadd.f32 %v6006, %v6079
    %v6081 = vpop.f32.mrf.mxu0
    %v6082 = vadd.f32 %v6008, %v6081
    %6083 = vmatmul.bf16.gmra.mxu0 %v2244
    %v6084 = vpop.f32.mrf.mxu0
    %v6085 = vadd.f32 %v6011, %v6084
    %v6086 = vpop.f32.mrf.mxu0
    %v6087 = vadd.f32 %v6013, %v6086
    %6088 = vmatmul.bf16.gmra.mxu0 %v2252
    %v6089 = vpop.f32.mrf.mxu0
    %v6090 = vadd.f32 %v6016, %v6089
    %v6091 = vpop.f32.mrf.mxu0
    %v6092 = vadd.f32 %v6018, %v6091
    %6093 = vdwg.mxu0
    %6094 = vmatpush.bf16.msra.mxu0 %v3543
    %6095 = vmatpush.bf16.msra.mxu0 %v3539
    %6096 = vmatpush.bf16.msra.mxu0 %v3535
    %6097 = vmatpush.bf16.msra.mxu0 %v3531
    %6098 = vmatpush.bf16.msra.mxu0 %v3527
    %6099 = vmatpush.bf16.msra.mxu0 %v3523
    %6100 = vmatpush.bf16.msra.mxu0 %v3519
    %6101 = vmatpush.bf16.msra.mxu0 %v3515
    %6102 = vmatmul.bf16.gmra.mxu0 %v2157
    %v6103 = vpop.f32.mrf.mxu0
    %v6104 = vadd.f32 %v6030, %v6103
    %v6105 = vpop.f32.mrf.mxu0
    %v6106 = vadd.f32 %v6032, %v6105
    %6107 = vmatmul.bf16.gmra.mxu0 %v2165
    %v6108 = vpop.f32.mrf.mxu0
    %v6109 = vadd.f32 %v6035, %v6108
    %v6110 = vpop.f32.mrf.mxu0
    %v6111 = vadd.f32 %v6037, %v6110
    %6112 = vmatmul.bf16.gmra.mxu0 %v2173
    %v6113 = vpop.f32.mrf.mxu0
    %v6114 = vadd.f32 %v6040, %v6113
    %v6115 = vpop.f32.mrf.mxu0
    %v6116 = vadd.f32 %v6042, %v6115
    %6117 = vmatmul.bf16.gmra.mxu0 %v2181
    %v6118 = vpop.f32.mrf.mxu0
    %v6119 = vadd.f32 %v6045, %v6118
    %v6120 = vpop.f32.mrf.mxu0
    %v6121 = vadd.f32 %v6047, %v6120
    %6122 = vmatmul.bf16.gmra.mxu0 %v2189
    %v6123 = vpop.f32.mrf.mxu0
    %v6124 = vadd.f32 %v6050, %v6123
    %v6125 = vpop.f32.mrf.mxu0
    %v6126 = vadd.f32 %v6052, %v6125
    %6127 = vmatmul.bf16.gmra.mxu0 %v2197
    %v6128 = vpop.f32.mrf.mxu0
    %v6129 = vadd.f32 %v6055, %v6128
    %v6130 = vpop.f32.mrf.mxu0
    %v6131 = vadd.f32 %v6057, %v6130
    %6132 = vmatmul.bf16.gmra.mxu0 %v2205
    %v6133 = vpop.f32.mrf.mxu0
    %v6134 = vadd.f32 %v6060, %v6133
    %v6135 = vpop.f32.mrf.mxu0
    %v6136 = vadd.f32 %v6062, %v6135
    %6137 = vmatmul.bf16.gmra.mxu0 %v2213
    %v6138 = vpop.f32.mrf.mxu0
    %v6139 = vadd.f32 %v6065, %v6138
    %v6140 = vpop.f32.mrf.mxu0
    %v6141 = vadd.f32 %v6067, %v6140
    %6142 = vmatmul.bf16.gmra.mxu0 %v2221
    %v6143 = vpop.f32.mrf.mxu0
    %v6144 = vadd.f32 %v6070, %v6143
    %v6145 = vpop.f32.mrf.mxu0
    %v6146 = vadd.f32 %v6072, %v6145
    %6147 = vmatmul.bf16.gmra.mxu0 %v2229
    %v6148 = vpop.f32.mrf.mxu0
    %v6149 = vadd.f32 %v6075, %v6148
    %v6150 = vpop.f32.mrf.mxu0
    %v6151 = vadd.f32 %v6077, %v6150
    %6152 = vmatmul.bf16.gmra.mxu0 %v2237
    %v6153 = vpop.f32.mrf.mxu0
    %v6154 = vadd.f32 %v6080, %v6153
    %v6155 = vpop.f32.mrf.mxu0
    %v6156 = vadd.f32 %v6082, %v6155
    %6157 = vmatmul.bf16.gmra.mxu0 %v2245
    %v6158 = vpop.f32.mrf.mxu0
    %v6159 = vadd.f32 %v6085, %v6158
    %v6160 = vpop.f32.mrf.mxu0
    %v6161 = vadd.f32 %v6087, %v6160
    %6162 = vmatmul.bf16.gmra.mxu0 %v2253
    %v6163 = vpop.f32.mrf.mxu0
    %v6164 = vadd.f32 %v6090, %v6163
    %v6165 = vpop.f32.mrf.mxu0
    %v6166 = vadd.f32 %v6092, %v6165
    %6167 = vdwg.mxu0
    %v6168 = vmax.f32 %v4328, 0.0
    %v6169 = vmax.f32 %v4920, 0.0
    %v6170 = vmax.f32 %v5512, 0.0
    %v6171 = vmax.f32 %v6104, 0.0
    %v6172 = vmax.f32 %v4330, 0.0
    %v6173 = vmax.f32 %v4922, 0.0
    %v6174 = vmax.f32 %v5514, 0.0
    %v6175 = vmax.f32 %v6106, 0.0
    %v6176 = vmax.f32 %v4333, 0.0
    %v6177 = vmax.f32 %v4925, 0.0
    %v6178 = vmax.f32 %v5517, 0.0
    %v6179 = vmax.f32 %v6109, 0.0
    %v6180 = vmax.f32 %v4335, 0.0
    %v6181 = vmax.f32 %v4927, 0.0
    %v6182 = vmax.f32 %v5519, 0.0
    %v6183 = vmax.f32 %v6111, 0.0
    %v6184 = vmax.f32 %v4338, 0.0
    %v6185 = vmax.f32 %v4930, 0.0
    %v6186 = vmax.f32 %v5522, 0.0
    %v6187 = vmax.f32 %v6114, 0.0
    %v6188 = vmax.f32 %v4340, 0.0
    %v6189 = vmax.f32 %v4932, 0.0
    %v6190 = vmax.f32 %v5524, 0.0
    %v6191 = vmax.f32 %v6116, 0.0
    %v6192 = vmax.f32 %v4343, 0.0
    %v6193 = vmax.f32 %v4935, 0.0
    %v6194 = vmax.f32 %v5527, 0.0
    %v6195 = vmax.f32 %v6119, 0.0
    %v6196 = vmax.f32 %v4345, 0.0
    %v6197 = vmax.f32 %v4937, 0.0
    %v6198 = vmax.f32 %v5529, 0.0
    %v6199 = vmax.f32 %v6121, 0.0
    %v6200 = vmax.f32 %v4348, 0.0
    %v6201 = vmax.f32 %v4940, 0.0
    %v6202 = vmax.f32 %v5532, 0.0
    %v6203 = vmax.f32 %v6124, 0.0
    %v6204 = vmax.f32 %v4350, 0.0
    %v6205 = vmax.f32 %v4942, 0.0
    %v6206 = vmax.f32 %v5534, 0.0
    %v6207 = vmax.f32 %v6126, 0.0
    %v6208 = vmax.f32 %v4353, 0.0
    %v6209 = vmax.f32 %v4945, 0.0
    %v6210 = vmax.f32 %v5537, 0.0
    %v6211 = vmax.f32 %v6129, 0.0
    %v6212 = vmax.f32 %v4355, 0.0
    %v6213 = vmax.f32 %v4947, 0.0
    %v6214 = vmax.f32 %v5539, 0.0
    %v6215 = vmax.f32 %v6131, 0.0
    %v6216 = vmax.f32 %v4358, 0.0
    %v6217 = vmax.f32 %v4950, 0.0
    %v6218 = vmax.f32 %v5542, 0.0
    %v6219 = vmax.f32 %v6134, 0.0
    %v6220 = vmax.f32 %v4360, 0.0
    %v6221 = vmax.f32 %v4952, 0.0
    %v6222 = vmax.f32 %v5544, 0.0
    %v6223 = vmax.f32 %v6136, 0.0
    %v6224 = vmax.f32 %v4363, 0.0
    %v6225 = vmax.f32 %v4955, 0.0
    %v6226 = vmax.f32 %v5547, 0.0
    %v6227 = vmax.f32 %v6139, 0.0
    %v6228 = vmax.f32 %v4365, 0.0
    %v6229 = vmax.f32 %v4957, 0.0
    %v6230 = vmax.f32 %v5549, 0.0
    %v6231 = vmax.f32 %v6141, 0.0
    %v6232 = vmax.f32 %v4368, 0.0
    %v6233 = vmax.f32 %v4960, 0.0
    %v6234 = vmax.f32 %v5552, 0.0
    %v6235 = vmax.f32 %v6144, 0.0
    %v6236 = vmax.f32 %v4370, 0.0
    %v6237 = vmax.f32 %v4962, 0.0
    %v6238 = vmax.f32 %v5554, 0.0
    %v6239 = vmax.f32 %v6146, 0.0
    %v6240 = vmax.f32 %v4373, 0.0
    %v6241 = vmax.f32 %v4965, 0.0
    %v6242 = vmax.f32 %v5557, 0.0
    %v6243 = vmax.f32 %v6149, 0.0
    %v6244 = vmax.f32 %v4375, 0.0
    %v6245 = vmax.f32 %v4967, 0.0
    %v6246 = vmax.f32 %v5559, 0.0
    %v6247 = vmax.f32 %v6151, 0.0
    %v6248 = vmax.f32 %v4378, 0.0
    %v6249 = vmax.f32 %v4970, 0.0
    %v6250 = vmax.f32 %v5562, 0.0
    %v6251 = vmax.f32 %v6154, 0.0
    %v6252 = vmax.f32 %v4380, 0.0
    %v6253 = vmax.f32 %v4972, 0.0
    %v6254 = vmax.f32 %v5564, 0.0
    %v6255 = vmax.f32 %v6156, 0.0
    %v6256 = vmax.f32 %v4383, 0.0
    %v6257 = vmax.f32 %v4975, 0.0
    %v6258 = vmax.f32 %v5567, 0.0
    %v6259 = vmax.f32 %v6159, 0.0
    %v6260 = vmax.f32 %v4385, 0.0
    %v6261 = vmax.f32 %v4977, 0.0
    %v6262 = vmax.f32 %v5569, 0.0
    %v6263 = vmax.f32 %v6161, 0.0
    %v6264 = vmax.f32 %v4388, 0.0
    %v6265 = vmax.f32 %v4980, 0.0
    %v6266 = vmax.f32 %v5572, 0.0
    %v6267 = vmax.f32 %v6164, 0.0
    %v6268 = vmax.f32 %v4390, 0.0
    %v6269 = vmax.f32 %v4982, 0.0
    %v6270 = vmax.f32 %v5574, 0.0
    %v6271 = vmax.f32 %v6166, 0.0
    %v6272 = vpack.c.bf16 %v6172, %v6168
    %v6273 = vpack.c.bf16 %v6173, %v6169
    %v6274 = vpack.c.bf16 %v6174, %v6170
    %v6275 = vpack.c.bf16 %v6175, %v6171
    %v6276 = vpack.c.bf16 %v6180, %v6176
    %v6277 = vpack.c.bf16 %v6181, %v6177
    %v6278 = vpack.c.bf16 %v6182, %v6178
    %v6279 = vpack.c.bf16 %v6183, %v6179
    %v6280 = vpack.c.bf16 %v6188, %v6184
    %v6281 = vpack.c.bf16 %v6189, %v6185
    %v6282 = vpack.c.bf16 %v6190, %v6186
    %v6283 = vpack.c.bf16 %v6191, %v6187
    %v6284 = vpack.c.bf16 %v6196, %v6192
    %v6285 = vpack.c.bf16 %v6197, %v6193
    %v6286 = vpack.c.bf16 %v6198, %v6194
    %v6287 = vpack.c.bf16 %v6199, %v6195
    %v6288 = vpack.c.bf16 %v6204, %v6200
    %v6289 = vpack.c.bf16 %v6205, %v6201
    %v6290 = vpack.c.bf16 %v6206, %v6202
    %v6291 = vpack.c.bf16 %v6207, %v6203
    %v6292 = vpack.c.bf16 %v6212, %v6208
    %v6293 = vpack.c.bf16 %v6213, %v6209
    %v6294 = vpack.c.bf16 %v6214, %v6210
    %v6295 = vpack.c.bf16 %v6215, %v6211
    %v6296 = vpack.c.bf16 %v6220, %v6216
    %v6297 = vpack.c.bf16 %v6221, %v6217
    %v6298 = vpack.c.bf16 %v6222, %v6218
    %v6299 = vpack.c.bf16 %v6223, %v6219
    %v6300 = vpack.c.bf16 %v6228, %v6224
    %v6301 = vpack.c.bf16 %v6229, %v6225
    %v6302 = vpack.c.bf16 %v6230, %v6226
    %v6303 = vpack.c.bf16 %v6231, %v6227
    %v6304 = vpack.c.bf16 %v6236, %v6232
    %v6305 = vpack.c.bf16 %v6237, %v6233
    %v6306 = vpack.c.bf16 %v6238, %v6234
    %v6307 = vpack.c.bf16 %v6239, %v6235
    %v6308 = vpack.c.bf16 %v6244, %v6240
    %v6309 = vpack.c.bf16 %v6245, %v6241
    %v6310 = vpack.c.bf16 %v6246, %v6242
    %v6311 = vpack.c.bf16 %v6247, %v6243
    %v6312 = vpack.c.bf16 %v6252, %v6248
    %v6313 = vpack.c.bf16 %v6253, %v6249
    %v6314 = vpack.c.bf16 %v6254, %v6250
    %v6315 = vpack.c.bf16 %v6255, %v6251
    %v6316 = vpack.c.bf16 %v6260, %v6256
    %v6317 = vpack.c.bf16 %v6261, %v6257
    %v6318 = vpack.c.bf16 %v6262, %v6258
    %v6319 = vpack.c.bf16 %v6263, %v6259
    %v6320 = vpack.c.bf16 %v6268, %v6264
    %v6321 = vpack.c.bf16 %v6269, %v6265
    %v6322 = vpack.c.bf16 %v6270, %v6266
    %v6323 = vpack.c.bf16 %v6271, %v6267
    %v6324 = vld [vmem:[#allocation5] sm:$0xff]
    %v6325 = vld [vmem:[#allocation5 + $0x8] sm:$0xff]
    %v6326 = vld [vmem:[#allocation5 + $0x10] sm:$0xff]
    %v6327 = vld [vmem:[#allocation5 + $0x18] sm:$0xff]
    %v6328 = vld [vmem:[#allocation5 + $0x20] sm:$0xff]
    %v6329 = vld [vmem:[#allocation5 + $0x28] sm:$0xff]
    %v6330 = vld [vmem:[#allocation5 + $0x30] sm:$0xff]
    %v6331 = vld [vmem:[#allocation5 + $0x38] sm:$0xff]
    %v6332 = vld [vmem:[#allocation5 + $0x40] sm:$0xff]
    %v6333 = vld [vmem:[#allocation5 + $0x48] sm:$0xff]
    %v6334 = vld [vmem:[#allocation5 + $0x50] sm:$0xff]
    %v6335 = vld [vmem:[#allocation5 + $0x58] sm:$0xff]
    %v6336 = vld [vmem:[#allocation5 + $0x60] sm:$0xff]
    %v6337 = vld [vmem:[#allocation5 + $0x68] sm:$0xff]
    %v6338 = vld [vmem:[#allocation5 + $0x70] sm:$0xff]
    %v6339 = vld [vmem:[#allocation5 + $0x78] sm:$0xff]
    %v6340 = vld [vmem:[#allocation5 + $0x80] sm:$0xff]
    %v6341 = vld [vmem:[#allocation5 + $0x88] sm:$0xff]
    %v6342 = vld [vmem:[#allocation5 + $0x90] sm:$0xff]
    %v6343 = vld [vmem:[#allocation5 + $0x98] sm:$0xff]
    %v6344 = vld [vmem:[#allocation5 + $0xa0] sm:$0xff]
    %v6345 = vld [vmem:[#allocation5 + $0xa8] sm:$0xff]
    %v6346 = vld [vmem:[#allocation5 + $0xb0] sm:$0xff]
    %v6347 = vld [vmem:[#allocation5 + $0xb8] sm:$0xff]
    %v6348 = vld [vmem:[#allocation5 + $0xc0] sm:$0xff]
    %v6349 = vld [vmem:[#allocation5 + $0xc8] sm:$0xff]
    %v6350 = vld [vmem:[#allocation5 + $0xd0] sm:$0xff]
    %v6351 = vld [vmem:[#allocation5 + $0xd8] sm:$0xff]
    %v6352 = vld [vmem:[#allocation5 + $0xe0] sm:$0xff]
    %v6353 = vld [vmem:[#allocation5 + $0xe8] sm:$0xff]
    %v6354 = vld [vmem:[#allocation5 + $0xf0] sm:$0xff]
    %v6355 = vld [vmem:[#allocation5 + $0xf8] sm:$0xff]
    %v6356 = vld [vmem:[#allocation5 + $0x100] sm:$0xff]
    %v6357 = vld [vmem:[#allocation5 + $0x108] sm:$0xff]
    %v6358 = vld [vmem:[#allocation5 + $0x110] sm:$0xff]
    %v6359 = vld [vmem:[#allocation5 + $0x118] sm:$0xff]
    %v6360 = vld [vmem:[#allocation5 + $0x120] sm:$0xff]
    %v6361 = vld [vmem:[#allocation5 + $0x128] sm:$0xff]
    %v6362 = vld [vmem:[#allocation5 + $0x130] sm:$0xff]
    %v6363 = vld [vmem:[#allocation5 + $0x138] sm:$0xff]
    %v6364 = vld [vmem:[#allocation5 + $0x140] sm:$0xff]
    %v6365 = vld [vmem:[#allocation5 + $0x148] sm:$0xff]
    %v6366 = vld [vmem:[#allocation5 + $0x150] sm:$0xff]
    %v6367 = vld [vmem:[#allocation5 + $0x158] sm:$0xff]
    %v6368 = vld [vmem:[#allocation5 + $0x160] sm:$0xff]
    %v6369 = vld [vmem:[#allocation5 + $0x168] sm:$0xff]
    %v6370 = vld [vmem:[#allocation5 + $0x170] sm:$0xff]
    %v6371 = vld [vmem:[#allocation5 + $0x178] sm:$0xff]
    %v6372 = vld [vmem:[#allocation5 + $0x180] sm:$0xff]
    %v6373 = vld [vmem:[#allocation5 + $0x188] sm:$0xff]
    %v6374 = vld [vmem:[#allocation5 + $0x190] sm:$0xff]
    %v6375 = vld [vmem:[#allocation5 + $0x198] sm:$0xff]
    %v6376 = vld [vmem:[#allocation5 + $0x1a0] sm:$0xff]
    %v6377 = vld [vmem:[#allocation5 + $0x1a8] sm:$0xff]
    %v6378 = vld [vmem:[#allocation5 + $0x1b0] sm:$0xff]
    %v6379 = vld [vmem:[#allocation5 + $0x1b8] sm:$0xff]
    %v6380 = vld [vmem:[#allocation5 + $0x1c0] sm:$0xff]
    %v6381 = vld [vmem:[#allocation5 + $0x1c8] sm:$0xff]
    %v6382 = vld [vmem:[#allocation5 + $0x1d0] sm:$0xff]
    %v6383 = vld [vmem:[#allocation5 + $0x1d8] sm:$0xff]
    %v6384 = vld [vmem:[#allocation5 + $0x1e0] sm:$0xff]
    %v6385 = vld [vmem:[#allocation5 + $0x1e8] sm:$0xff]
    %v6386 = vld [vmem:[#allocation5 + $0x1f0] sm:$0xff]
    %v6387 = vld [vmem:[#allocation5 + $0x1f8] sm:$0xff]
    %v6388 = vld [vmem:[%s8] sm:$0x3]
    %v6390 = vperm.slane %v6388, 0
    %v6391 = vperm.slane %v6388, 1
    %v6458 = vunpack.c.l.b16 %v6324
    %v6459 = vunpack.c.h.b16 %v6324
    %v6460 = vunpack.c.l.b16 %v6325
    %v6461 = vunpack.c.h.b16 %v6325
    %v6462 = vunpack.c.l.b16 %v6326
    %v6463 = vunpack.c.h.b16 %v6326
    %v6464 = vunpack.c.l.b16 %v6327
    %v6465 = vunpack.c.h.b16 %v6327
    %v6466 = vunpack.c.l.b16 %v6328
    %v6467 = vunpack.c.h.b16 %v6328
    %v6468 = vunpack.c.l.b16 %v6329
    %v6469 = vunpack.c.h.b16 %v6329
    %v6470 = vunpack.c.l.b16 %v6330
    %v6471 = vunpack.c.h.b16 %v6330
    %v6472 = vunpack.c.l.b16 %v6331
    %v6473 = vunpack.c.h.b16 %v6331
    %v6474 = vunpack.c.l.b16 %v6332
    %v6475 = vunpack.c.h.b16 %v6332
    %v6476 = vunpack.c.l.b16 %v6333
    %v6477 = vunpack.c.h.b16 %v6333
    %v6478 = vunpack.c.l.b16 %v6334
    %v6479 = vunpack.c.h.b16 %v6334
    %v6480 = vunpack.c.l.b16 %v6335
    %v6481 = vunpack.c.h.b16 %v6335
    %v6482 = vunpack.c.l.b16 %v6336
    %v6483 = vunpack.c.h.b16 %v6336
    %v6484 = vunpack.c.l.b16 %v6337
    %v6485 = vunpack.c.h.b16 %v6337
    %v6486 = vunpack.c.l.b16 %v6338
    %v6487 = vunpack.c.h.b16 %v6338
    %v6488 = vunpack.c.l.b16 %v6339
    %v6489 = vunpack.c.h.b16 %v6339
    %v6490 = vunpack.c.l.b16 %v6340
    %v6491 = vunpack.c.h.b16 %v6340
    %v6492 = vunpack.c.l.b16 %v6341
    %v6493 = vunpack.c.h.b16 %v6341
    %v6494 = vunpack.c.l.b16 %v6342
    %v6495 = vunpack.c.h.b16 %v6342
    %v6496 = vunpack.c.l.b16 %v6343
    %v6497 = vunpack.c.h.b16 %v6343
    %v6498 = vunpack.c.l.b16 %v6344
    %v6499 = vunpack.c.h.b16 %v6344
    %v6500 = vunpack.c.l.b16 %v6345
    %v6501 = vunpack.c.h.b16 %v6345
    %v6502 = vunpack.c.l.b16 %v6346
    %v6503 = vunpack.c.h.b16 %v6346
    %v6504 = vunpack.c.l.b16 %v6347
    %v6505 = vunpack.c.h.b16 %v6347
    %v6506 = vunpack.c.l.b16 %v6348
    %v6507 = vunpack.c.h.b16 %v6348
    %v6508 = vunpack.c.l.b16 %v6349
    %v6509 = vunpack.c.h.b16 %v6349
    %v6510 = vunpack.c.l.b16 %v6350
    %v6511 = vunpack.c.h.b16 %v6350
    %v6512 = vunpack.c.l.b16 %v6351
    %v6513 = vunpack.c.h.b16 %v6351
    %v6514 = vunpack.c.l.b16 %v6352
    %v6515 = vunpack.c.h.b16 %v6352
    %v6516 = vunpack.c.l.b16 %v6353
    %v6517 = vunpack.c.h.b16 %v6353
    %v6518 = vunpack.c.l.b16 %v6354
    %v6519 = vunpack.c.h.b16 %v6354
    %v6520 = vunpack.c.l.b16 %v6355
    %v6521 = vunpack.c.h.b16 %v6355
    %v6522 = vunpack.c.l.b16 %v6356
    %v6523 = vunpack.c.h.b16 %v6356
    %v6524 = vunpack.c.l.b16 %v6357
    %v6525 = vunpack.c.h.b16 %v6357
    %v6526 = vunpack.c.l.b16 %v6358
    %v6527 = vunpack.c.h.b16 %v6358
    %v6528 = vunpack.c.l.b16 %v6359
    %v6529 = vunpack.c.h.b16 %v6359
    %v6530 = vunpack.c.l.b16 %v6360
    %v6531 = vunpack.c.h.b16 %v6360
    %v6532 = vunpack.c.l.b16 %v6361
    %v6533 = vunpack.c.h.b16 %v6361
    %v6534 = vunpack.c.l.b16 %v6362
    %v6535 = vunpack.c.h.b16 %v6362
    %v6536 = vunpack.c.l.b16 %v6363
    %v6537 = vunpack.c.h.b16 %v6363
    %v6538 = vunpack.c.l.b16 %v6364
    %v6539 = vunpack.c.h.b16 %v6364
    %v6540 = vunpack.c.l.b16 %v6365
    %v6541 = vunpack.c.h.b16 %v6365
    %v6542 = vunpack.c.l.b16 %v6366
    %v6543 = vunpack.c.h.b16 %v6366
    %v6544 = vunpack.c.l.b16 %v6367
    %v6545 = vunpack.c.h.b16 %v6367
    %v6546 = vunpack.c.l.b16 %v6368
    %v6547 = vunpack.c.h.b16 %v6368
    %v6548 = vunpack.c.l.b16 %v6369
    %v6549 = vunpack.c.h.b16 %v6369
    %v6550 = vunpack.c.l.b16 %v6370
    %v6551 = vunpack.c.h.b16 %v6370
    %v6552 = vunpack.c.l.b16 %v6371
    %v6553 = vunpack.c.h.b16 %v6371
    %v6554 = vunpack.c.l.b16 %v6372
    %v6555 = vunpack.c.h.b16 %v6372
    %v6556 = vunpack.c.l.b16 %v6373
    %v6557 = vunpack.c.h.b16 %v6373
    %v6558 = vunpack.c.l.b16 %v6374
    %v6559 = vunpack.c.h.b16 %v6374
    %v6560 = vunpack.c.l.b16 %v6375
    %v6561 = vunpack.c.h.b16 %v6375
    %v6562 = vunpack.c.l.b16 %v6376
    %v6563 = vunpack.c.h.b16 %v6376
    %v6564 = vunpack.c.l.b16 %v6377
    %v6565 = vunpack.c.h.b16 %v6377
    %v6566 = vunpack.c.l.b16 %v6378
    %v6567 = vunpack.c.h.b16 %v6378
    %v6568 = vunpack.c.l.b16 %v6379
    %v6569 = vunpack.c.h.b16 %v6379
    %v6570 = vunpack.c.l.b16 %v6380
    %v6571 = vunpack.c.h.b16 %v6380
    %v6572 = vunpack.c.l.b16 %v6381
    %v6573 = vunpack.c.h.b16 %v6381
    %v6574 = vunpack.c.l.b16 %v6382
    %v6575 = vunpack.c.h.b16 %v6382
    %v6576 = vunpack.c.l.b16 %v6383
    %v6577 = vunpack.c.h.b16 %v6383
    %v6578 = vunpack.c.l.b16 %v6384
    %v6579 = vunpack.c.h.b16 %v6384
    %v6580 = vunpack.c.l.b16 %v6385
    %v6581 = vunpack.c.h.b16 %v6385
    %v6582 = vunpack.c.l.b16 %v6386
    %v6583 = vunpack.c.h.b16 %v6386
    %v6584 = vunpack.c.l.b16 %v6387
    %v6585 = vunpack.c.h.b16 %v6387
    %v6586 = vpack.c.b16 %v6460, %v6458
    %v6587 = vpack.c.b16 %v6461, %v6459
    %v6588 = vpack.c.b16 %v6464, %v6462
    %v6589 = vpack.c.b16 %v6465, %v6463
    %v6590 = vpack.c.b16 %v6468, %v6466
    %v6591 = vpack.c.b16 %v6469, %v6467
    %v6592 = vpack.c.b16 %v6472, %v6470
    %v6593 = vpack.c.b16 %v6473, %v6471
    %v6594 = vpack.c.b16 %v6476, %v6474
    %v6595 = vpack.c.b16 %v6477, %v6475
    %v6596 = vpack.c.b16 %v6480, %v6478
    %v6597 = vpack.c.b16 %v6481, %v6479
    %v6598 = vpack.c.b16 %v6484, %v6482
    %v6599 = vpack.c.b16 %v6485, %v6483
    %v6600 = vpack.c.b16 %v6488, %v6486
    %v6601 = vpack.c.b16 %v6489, %v6487
    %v6602 = vpack.c.b16 %v6492, %v6490
    %v6603 = vpack.c.b16 %v6493, %v6491
    %v6604 = vpack.c.b16 %v6496, %v6494
    %v6605 = vpack.c.b16 %v6497, %v6495
    %v6606 = vpack.c.b16 %v6500, %v6498
    %v6607 = vpack.c.b16 %v6501, %v6499
    %v6608 = vpack.c.b16 %v6504, %v6502
    %v6609 = vpack.c.b16 %v6505, %v6503
    %v6610 = vpack.c.b16 %v6508, %v6506
    %v6611 = vpack.c.b16 %v6509, %v6507
    %v6612 = vpack.c.b16 %v6512, %v6510
    %v6613 = vpack.c.b16 %v6513, %v6511
    %v6614 = vpack.c.b16 %v6516, %v6514
    %v6615 = vpack.c.b16 %v6517, %v6515
    %v6616 = vpack.c.b16 %v6520, %v6518
    %v6617 = vpack.c.b16 %v6521, %v6519
    %v6618 = vpack.c.b16 %v6524, %v6522
    %v6619 = vpack.c.b16 %v6525, %v6523
    %v6620 = vpack.c.b16 %v6528, %v6526
    %v6621 = vpack.c.b16 %v6529, %v6527
    %v6622 = vpack.c.b16 %v6532, %v6530
    %v6623 = vpack.c.b16 %v6533, %v6531
    %v6624 = vpack.c.b16 %v6536, %v6534
    %v6625 = vpack.c.b16 %v6537, %v6535
    %v6626 = vpack.c.b16 %v6540, %v6538
    %v6627 = vpack.c.b16 %v6541, %v6539
    %v6628 = vpack.c.b16 %v6544, %v6542
    %v6629 = vpack.c.b16 %v6545, %v6543
    %v6630 = vpack.c.b16 %v6548, %v6546
    %v6631 = vpack.c.b16 %v6549, %v6547
    %v6632 = vpack.c.b16 %v6552, %v6550
    %v6633 = vpack.c.b16 %v6553, %v6551
    %v6634 = vpack.c.b16 %v6556, %v6554
    %v6635 = vpack.c.b16 %v6557, %v6555
    %v6636 = vpack.c.b16 %v6560, %v6558
    %v6637 = vpack.c.b16 %v6561, %v6559
    %v6638 = vpack.c.b16 %v6564, %v6562
    %v6639 = vpack.c.b16 %v6565, %v6563
    %v6640 = vpack.c.b16 %v6568, %v6566
    %v6641 = vpack.c.b16 %v6569, %v6567
    %v6642 = vpack.c.b16 %v6572, %v6570
    %v6643 = vpack.c.b16 %v6573, %v6571
    %v6644 = vpack.c.b16 %v6576, %v6574
    %v6645 = vpack.c.b16 %v6577, %v6575
    %v6646 = vpack.c.b16 %v6580, %v6578
    %v6647 = vpack.c.b16 %v6581, %v6579
    %v6648 = vpack.c.b16 %v6584, %v6582
    %v6649 = vpack.c.b16 %v6585, %v6583
    %6714 = vmatpush.bf16.msra.mxu0 %v6600
    %6715 = vmatpush.bf16.msra.mxu0 %v6598
    %6716 = vmatpush.bf16.msra.mxu0 %v6596
    %6717 = vmatpush.bf16.msra.mxu0 %v6594
    %6718 = vmatpush.bf16.msra.mxu0 %v6592
    %6719 = vmatpush.bf16.msra.mxu0 %v6590
    %6720 = vmatpush.bf16.msra.mxu0 %v6588
    %6721 = vmatpush.bf16.msra.mxu0 %v6586
    %6722 = vmatmul.bf16.gmra.mxu0 %v6272
    %v6723 = vpop.f32.mrf.mxu0
    %v6724 = vadd.f32 %v6390, %v6723
    %v6725 = vpop.f32.mrf.mxu0
    %v6726 = vadd.f32 %v6390, %v6725
    %6727 = vmatmul.bf16.gmra.mxu0 %v6276
    %v6728 = vpop.f32.mrf.mxu0
    %v6729 = vadd.f32 %v6390, %v6728
    %v6730 = vpop.f32.mrf.mxu0
    %v6731 = vadd.f32 %v6390, %v6730
    %6732 = vmatmul.bf16.gmra.mxu0 %v6280
    %v6733 = vpop.f32.mrf.mxu0
    %v6734 = vadd.f32 %v6390, %v6733
    %v6735 = vpop.f32.mrf.mxu0
    %v6736 = vadd.f32 %v6390, %v6735
    %6737 = vmatmul.bf16.gmra.mxu0 %v6284
    %v6738 = vpop.f32.mrf.mxu0
    %v6739 = vadd.f32 %v6390, %v6738
    %v6740 = vpop.f32.mrf.mxu0
    %v6741 = vadd.f32 %v6390, %v6740
    %6742 = vmatmul.bf16.gmra.mxu0 %v6288
    %v6743 = vpop.f32.mrf.mxu0
    %v6744 = vadd.f32 %v6390, %v6743
    %v6745 = vpop.f32.mrf.mxu0
    %v6746 = vadd.f32 %v6390, %v6745
    %6747 = vmatmul.bf16.gmra.mxu0 %v6292
    %v6748 = vpop.f32.mrf.mxu0
    %v6749 = vadd.f32 %v6390, %v6748
    %v6750 = vpop.f32.mrf.mxu0
    %v6751 = vadd.f32 %v6390, %v6750
    %6752 = vmatmul.bf16.gmra.mxu0 %v6296
    %v6753 = vpop.f32.mrf.mxu0
    %v6754 = vadd.f32 %v6390, %v6753
    %v6755 = vpop.f32.mrf.mxu0
    %v6756 = vadd.f32 %v6390, %v6755
    %6757 = vmatmul.bf16.gmra.mxu0 %v6300
    %v6758 = vpop.f32.mrf.mxu0
    %v6759 = vadd.f32 %v6390, %v6758
    %v6760 = vpop.f32.mrf.mxu0
    %v6761 = vadd.f32 %v6390, %v6760
    %6762 = vmatmul.bf16.gmra.mxu0 %v6304
    %v6763 = vpop.f32.mrf.mxu0
    %v6764 = vadd.f32 %v6390, %v6763
    %v6765 = vpop.f32.mrf.mxu0
    %v6766 = vadd.f32 %v6390, %v6765
    %6767 = vmatmul.bf16.gmra.mxu0 %v6308
    %v6768 = vpop.f32.mrf.mxu0
    %v6769 = vadd.f32 %v6390, %v6768
    %v6770 = vpop.f32.mrf.mxu0
    %v6771 = vadd.f32 %v6390, %v6770
    %6772 = vmatmul.bf16.gmra.mxu0 %v6312
    %v6773 = vpop.f32.mrf.mxu0
    %v6774 = vadd.f32 %v6390, %v6773
    %v6775 = vpop.f32.mrf.mxu0
    %v6776 = vadd.f32 %v6390, %v6775
    %6777 = vmatmul.bf16.gmra.mxu0 %v6316
    %v6778 = vpop.f32.mrf.mxu0
    %v6779 = vadd.f32 %v6390, %v6778
    %v6780 = vpop.f32.mrf.mxu0
    %v6781 = vadd.f32 %v6390, %v6780
    %6782 = vmatmul.bf16.gmra.mxu0 %v6320
    %v6783 = vpop.f32.mrf.mxu0
    %v6784 = vadd.f32 %v6390, %v6783
    %v6785 = vpop.f32.mrf.mxu0
    %v6786 = vadd.f32 %v6390, %v6785
    %6787 = vdwg.mxu0
    %6788 = vmatpush.bf16.msra.mxu0 %v6616
    %6789 = vmatpush.bf16.msra.mxu0 %v6614
    %6790 = vmatpush.bf16.msra.mxu0 %v6612
    %6791 = vmatpush.bf16.msra.mxu0 %v6610
    %6792 = vmatpush.bf16.msra.mxu0 %v6608
    %6793 = vmatpush.bf16.msra.mxu0 %v6606
    %6794 = vmatpush.bf16.msra.mxu0 %v6604
    %6795 = vmatpush.bf16.msra.mxu0 %v6602
    %6796 = vmatmul.bf16.gmra.mxu0 %v6273
    %v6797 = vpop.f32.mrf.mxu0
    %v6798 = vadd.f32 %v6724, %v6797
    %v6799 = vpop.f32.mrf.mxu0
    %v6800 = vadd.f32 %v6726, %v6799
    %6801 = vmatmul.bf16.gmra.mxu0 %v6277
    %v6802 = vpop.f32.mrf.mxu0
    %v6803 = vadd.f32 %v6729, %v6802
    %v6804 = vpop.f32.mrf.mxu0
    %v6805 = vadd.f32 %v6731, %v6804
    %6806 = vmatmul.bf16.gmra.mxu0 %v6281
    %v6807 = vpop.f32.mrf.mxu0
    %v6808 = vadd.f32 %v6734, %v6807
    %v6809 = vpop.f32.mrf.mxu0
    %v6810 = vadd.f32 %v6736, %v6809
    %6811 = vmatmul.bf16.gmra.mxu0 %v6285
    %v6812 = vpop.f32.mrf.mxu0
    %v6813 = vadd.f32 %v6739, %v6812
    %v6814 = vpop.f32.mrf.mxu0
    %v6815 = vadd.f32 %v6741, %v6814
    %6816 = vmatmul.bf16.gmra.mxu0 %v6289
    %v6817 = vpop.f32.mrf.mxu0
    %v6818 = vadd.f32 %v6744, %v6817
    %v6819 = vpop.f32.mrf.mxu0
    %v6820 = vadd.f32 %v6746, %v6819
    %6821 = vmatmul.bf16.gmra.mxu0 %v6293
    %v6822 = vpop.f32.mrf.mxu0
    %v6823 = vadd.f32 %v6749, %v6822
    %v6824 = vpop.f32.mrf.mxu0
    %v6825 = vadd.f32 %v6751, %v6824
    %6826 = vmatmul.bf16.gmra.mxu0 %v6297
    %v6827 = vpop.f32.mrf.mxu0
    %v6828 = vadd.f32 %v6754, %v6827
    %v6829 = vpop.f32.mrf.mxu0
    %v6830 = vadd.f32 %v6756, %v6829
    %6831 = vmatmul.bf16.gmra.mxu0 %v6301
    %v6832 = vpop.f32.mrf.mxu0
    %v6833 = vadd.f32 %v6759, %v6832
    %v6834 = vpop.f32.mrf.mxu0
    %v6835 = vadd.f32 %v6761, %v6834
    %6836 = vmatmul.bf16.gmra.mxu0 %v6305
    %v6837 = vpop.f32.mrf.mxu0
    %v6838 = vadd.f32 %v6764, %v6837
    %v6839 = vpop.f32.mrf.mxu0
    %v6840 = vadd.f32 %v6766, %v6839
    %6841 = vmatmul.bf16.gmra.mxu0 %v6309
    %v6842 = vpop.f32.mrf.mxu0
    %v6843 = vadd.f32 %v6769, %v6842
    %v6844 = vpop.f32.mrf.mxu0
    %v6845 = vadd.f32 %v6771, %v6844
    %6846 = vmatmul.bf16.gmra.mxu0 %v6313
    %v6847 = vpop.f32.mrf.mxu0
    %v6848 = vadd.f32 %v6774, %v6847
    %v6849 = vpop.f32.mrf.mxu0
    %v6850 = vadd.f32 %v6776, %v6849
    %6851 = vmatmul.bf16.gmra.mxu0 %v6317
    %v6852 = vpop.f32.mrf.mxu0
    %v6853 = vadd.f32 %v6779, %v6852
    %v6854 = vpop.f32.mrf.mxu0
    %v6855 = vadd.f32 %v6781, %v6854
    %6856 = vmatmul.bf16.gmra.mxu0 %v6321
    %v6857 = vpop.f32.mrf.mxu0
    %v6858 = vadd.f32 %v6784, %v6857
    %v6859 = vpop.f32.mrf.mxu0
    %v6860 = vadd.f32 %v6786, %v6859
    %6861 = vdwg.mxu0
    %6862 = vmatpush.bf16.msra.mxu0 %v6632
    %6863 = vmatpush.bf16.msra.mxu0 %v6630
    %6864 = vmatpush.bf16.msra.mxu0 %v6628
    %6865 = vmatpush.bf16.msra.mxu0 %v6626
    %6866 = vmatpush.bf16.msra.mxu0 %v6624
    %6867 = vmatpush.bf16.msra.mxu0 %v6622
    %6868 = vmatpush.bf16.msra.mxu0 %v6620
    %6869 = vmatpush.bf16.msra.mxu0 %v6618
    %6870 = vmatmul.bf16.gmra.mxu0 %v6274
    %v6871 = vpop.f32.mrf.mxu0
    %v6872 = vadd.f32 %v6798, %v6871
    %v6873 = vpop.f32.mrf.mxu0
    %v6874 = vadd.f32 %v6800, %v6873
    %6875 = vmatmul.bf16.gmra.mxu0 %v6278
    %v6876 = vpop.f32.mrf.mxu0
    %v6877 = vadd.f32 %v6803, %v6876
    %v6878 = vpop.f32.mrf.mxu0
    %v6879 = vadd.f32 %v6805, %v6878
    %6880 = vmatmul.bf16.gmra.mxu0 %v6282
    %v6881 = vpop.f32.mrf.mxu0
    %v6882 = vadd.f32 %v6808, %v6881
    %v6883 = vpop.f32.mrf.mxu0
    %v6884 = vadd.f32 %v6810, %v6883
    %6885 = vmatmul.bf16.gmra.mxu0 %v6286
    %v6886 = vpop.f32.mrf.mxu0
    %v6887 = vadd.f32 %v6813, %v6886
    %v6888 = vpop.f32.mrf.mxu0
    %v6889 = vadd.f32 %v6815, %v6888
    %6890 = vmatmul.bf16.gmra.mxu0 %v6290
    %v6891 = vpop.f32.mrf.mxu0
    %v6892 = vadd.f32 %v6818, %v6891
    %v6893 = vpop.f32.mrf.mxu0
    %v6894 = vadd.f32 %v6820, %v6893
    %6895 = vmatmul.bf16.gmra.mxu0 %v6294
    %v6896 = vpop.f32.mrf.mxu0
    %v6897 = vadd.f32 %v6823, %v6896
    %v6898 = vpop.f32.mrf.mxu0
    %v6899 = vadd.f32 %v6825, %v6898
    %6900 = vmatmul.bf16.gmra.mxu0 %v6298
    %v6901 = vpop.f32.mrf.mxu0
    %v6902 = vadd.f32 %v6828, %v6901
    %v6903 = vpop.f32.mrf.mxu0
    %v6904 = vadd.f32 %v6830, %v6903
    %6905 = vmatmul.bf16.gmra.mxu0 %v6302
    %v6906 = vpop.f32.mrf.mxu0
    %v6907 = vadd.f32 %v6833, %v6906
    %v6908 = vpop.f32.mrf.mxu0
    %v6909 = vadd.f32 %v6835, %v6908
    %6910 = vmatmul.bf16.gmra.mxu0 %v6306
    %v6911 = vpop.f32.mrf.mxu0
    %v6912 = vadd.f32 %v6838, %v6911
    %v6913 = vpop.f32.mrf.mxu0
    %v6914 = vadd.f32 %v6840, %v6913
    %6915 = vmatmul.bf16.gmra.mxu0 %v6310
    %v6916 = vpop.f32.mrf.mxu0
    %v6917 = vadd.f32 %v6843, %v6916
    %v6918 = vpop.f32.mrf.mxu0
    %v6919 = vadd.f32 %v6845, %v6918
    %6920 = vmatmul.bf16.gmra.mxu0 %v6314
    %v6921 = vpop.f32.mrf.mxu0
    %v6922 = vadd.f32 %v6848, %v6921
    %v6923 = vpop.f32.mrf.mxu0
    %v6924 = vadd.f32 %v6850, %v6923
    %6925 = vmatmul.bf16.gmra.mxu0 %v6318
    %v6926 = vpop.f32.mrf.mxu0
    %v6927 = vadd.f32 %v6853, %v6926
    %v6928 = vpop.f32.mrf.mxu0
    %v6929 = vadd.f32 %v6855, %v6928
    %6930 = vmatmul.bf16.gmra.mxu0 %v6322
    %v6931 = vpop.f32.mrf.mxu0
    %v6932 = vadd.f32 %v6858, %v6931
    %v6933 = vpop.f32.mrf.mxu0
    %v6934 = vadd.f32 %v6860, %v6933
    %6935 = vdwg.mxu0
    %6936 = vmatpush.bf16.msra.mxu0 %v6648
    %6937 = vmatpush.bf16.msra.mxu0 %v6646
    %6938 = vmatpush.bf16.msra.mxu0 %v6644
    %6939 = vmatpush.bf16.msra.mxu0 %v6642
    %6940 = vmatpush.bf16.msra.mxu0 %v6640
    %6941 = vmatpush.bf16.msra.mxu0 %v6638
    %6942 = vmatpush.bf16.msra.mxu0 %v6636
    %6943 = vmatpush.bf16.msra.mxu0 %v6634
    %6944 = vmatmul.bf16.gmra.mxu0 %v6275
    %v6945 = vpop.f32.mrf.mxu0
    %v6946 = vadd.f32 %v6872, %v6945
    %v6947 = vpop.f32.mrf.mxu0
    %v6948 = vadd.f32 %v6874, %v6947
    %6949 = vmatmul.bf16.gmra.mxu0 %v6279
    %v6950 = vpop.f32.mrf.mxu0
    %v6951 = vadd.f32 %v6877, %v6950
    %v6952 = vpop.f32.mrf.mxu0
    %v6953 = vadd.f32 %v6879, %v6952
    %6954 = vmatmul.bf16.gmra.mxu0 %v6283
    %v6955 = vpop.f32.mrf.mxu0
    %v6956 = vadd.f32 %v6882, %v6955
    %v6957 = vpop.f32.mrf.mxu0
    %v6958 = vadd.f32 %v6884, %v6957
    %6959 = vmatmul.bf16.gmra.mxu0 %v6287
    %v6960 = vpop.f32.mrf.mxu0
    %v6961 = vadd.f32 %v6887, %v6960
    %v6962 = vpop.f32.mrf.mxu0
    %v6963 = vadd.f32 %v6889, %v6962
    %6964 = vmatmul.bf16.gmra.mxu0 %v6291
    %v6965 = vpop.f32.mrf.mxu0
    %v6966 = vadd.f32 %v6892, %v6965
    %v6967 = vpop.f32.mrf.mxu0
    %v6968 = vadd.f32 %v6894, %v6967
    %6969 = vmatmul.bf16.gmra.mxu0 %v6295
    %v6970 = vpop.f32.mrf.mxu0
    %v6971 = vadd.f32 %v6897, %v6970
    %v6972 = vpop.f32.mrf.mxu0
    %v6973 = vadd.f32 %v6899, %v6972
    %6974 = vmatmul.bf16.gmra.mxu0 %v6299
    %v6975 = vpop.f32.mrf.mxu0
    %v6976 = vadd.f32 %v6902, %v6975
    %v6977 = vpop.f32.mrf.mxu0
    %v6978 = vadd.f32 %v6904, %v6977
    %6979 = vmatmul.bf16.gmra.mxu0 %v6303
    %v6980 = vpop.f32.mrf.mxu0
    %v6981 = vadd.f32 %v6907, %v6980
    %v6982 = vpop.f32.mrf.mxu0
    %v6983 = vadd.f32 %v6909, %v6982
    %6984 = vmatmul.bf16.gmra.mxu0 %v6307
    %v6985 = vpop.f32.mrf.mxu0
    %v6986 = vadd.f32 %v6912, %v6985
    %v6987 = vpop.f32.mrf.mxu0
    %v6988 = vadd.f32 %v6914, %v6987
    %6989 = vmatmul.bf16.gmra.mxu0 %v6311
    %v6990 = vpop.f32.mrf.mxu0
    %v6991 = vadd.f32 %v6917, %v6990
    %v6992 = vpop.f32.mrf.mxu0
    %v6993 = vadd.f32 %v6919, %v6992
    %6994 = vmatmul.bf16.gmra.mxu0 %v6315
    %v6995 = vpop.f32.mrf.mxu0
    %v6996 = vadd.f32 %v6922, %v6995
    %v6997 = vpop.f32.mrf.mxu0
    %v6998 = vadd.f32 %v6924, %v6997
    %6999 = vmatmul.bf16.gmra.mxu0 %v6319
    %v7000 = vpop.f32.mrf.mxu0
    %v7001 = vadd.f32 %v6927, %v7000
    %v7002 = vpop.f32.mrf.mxu0
    %v7003 = vadd.f32 %v6929, %v7002
    %7004 = vmatmul.bf16.gmra.mxu0 %v6323
    %v7005 = vpop.f32.mrf.mxu0
    %v7006 = vadd.f32 %v6932, %v7005
    %v7007 = vpop.f32.mrf.mxu0
    %v7008 = vadd.f32 %v6934, %v7007
    %7009 = vdwg.mxu0
    %7010 = vmatpush.bf16.msra.mxu0 %v6601
    %7011 = vmatpush.bf16.msra.mxu0 %v6599
    %7012 = vmatpush.bf16.msra.mxu0 %v6597
    %7013 = vmatpush.bf16.msra.mxu0 %v6595
    %7014 = vmatpush.bf16.msra.mxu0 %v6593
    %7015 = vmatpush.bf16.msra.mxu0 %v6591
    %7016 = vmatpush.bf16.msra.mxu0 %v6589
    %7017 = vmatpush.bf16.msra.mxu0 %v6587
    %7018 = vmatmul.bf16.gmra.mxu0 %v6272
    %v7019 = vpop.f32.mrf.mxu0
    %v7020 = vadd.f32 %v6391, %v7019
    %v7021 = vpop.f32.mrf.mxu0
    %v7022 = vadd.f32 %v6391, %v7021
    %7023 = vmatmul.bf16.gmra.mxu0 %v6276
    %v7024 = vpop.f32.mrf.mxu0
    %v7025 = vadd.f32 %v6391, %v7024
    %v7026 = vpop.f32.mrf.mxu0
    %v7027 = vadd.f32 %v6391, %v7026
    %7028 = vmatmul.bf16.gmra.mxu0 %v6280
    %v7029 = vpop.f32.mrf.mxu0
    %v7030 = vadd.f32 %v6391, %v7029
    %v7031 = vpop.f32.mrf.mxu0
    %v7032 = vadd.f32 %v6391, %v7031
    %7033 = vmatmul.bf16.gmra.mxu0 %v6284
    %v7034 = vpop.f32.mrf.mxu0
    %v7035 = vadd.f32 %v6391, %v7034
    %v7036 = vpop.f32.mrf.mxu0
    %v7037 = vadd.f32 %v6391, %v7036
    %7038 = vmatmul.bf16.gmra.mxu0 %v6288
    %v7039 = vpop.f32.mrf.mxu0
    %v7040 = vadd.f32 %v6391, %v7039
    %v7041 = vpop.f32.mrf.mxu0
    %v7042 = vadd.f32 %v6391, %v7041
    %7043 = vmatmul.bf16.gmra.mxu0 %v6292
    %v7044 = vpop.f32.mrf.mxu0
    %v7045 = vadd.f32 %v6391, %v7044
    %v7046 = vpop.f32.mrf.mxu0
    %v7047 = vadd.f32 %v6391, %v7046
    %7048 = vmatmul.bf16.gmra.mxu0 %v6296
    %v7049 = vpop.f32.mrf.mxu0
    %v7050 = vadd.f32 %v6391, %v7049
    %v7051 = vpop.f32.mrf.mxu0
    %v7052 = vadd.f32 %v6391, %v7051
    %7053 = vmatmul.bf16.gmra.mxu0 %v6300
    %v7054 = vpop.f32.mrf.mxu0
    %v7055 = vadd.f32 %v6391, %v7054
    %v7056 = vpop.f32.mrf.mxu0
    %v7057 = vadd.f32 %v6391, %v7056
    %7058 = vmatmul.bf16.gmra.mxu0 %v6304
    %v7059 = vpop.f32.mrf.mxu0
    %v7060 = vadd.f32 %v6391, %v7059
    %v7061 = vpop.f32.mrf.mxu0
    %v7062 = vadd.f32 %v6391, %v7061
    %7063 = vmatmul.bf16.gmra.mxu0 %v6308
    %v7064 = vpop.f32.mrf.mxu0
    %v7065 = vadd.f32 %v6391, %v7064
    %v7066 = vpop.f32.mrf.mxu0
    %v7067 = vadd.f32 %v6391, %v7066
    %7068 = vmatmul.bf16.gmra.mxu0 %v6312
    %v7069 = vpop.f32.mrf.mxu0
    %v7070 = vadd.f32 %v6391, %v7069
    %v7071 = vpop.f32.mrf.mxu0
    %v7072 = vadd.f32 %v6391, %v7071
    %7073 = vmatmul.bf16.gmra.mxu0 %v6316
    %v7074 = vpop.f32.mrf.mxu0
    %v7075 = vadd.f32 %v6391, %v7074
    %v7076 = vpop.f32.mrf.mxu0
    %v7077 = vadd.f32 %v6391, %v7076
    %7078 = vmatmul.bf16.gmra.mxu0 %v6320
    %v7079 = vpop.f32.mrf.mxu0
    %v7080 = vadd.f32 %v6391, %v7079
    %v7081 = vpop.f32.mrf.mxu0
    %v7082 = vadd.f32 %v6391, %v7081
    %7083 = vdwg.mxu0
    %7084 = vmatpush.bf16.msra.mxu0 %v6617
    %7085 = vmatpush.bf16.msra.mxu0 %v6615
    %7086 = vmatpush.bf16.msra.mxu0 %v6613
    %7087 = vmatpush.bf16.msra.mxu0 %v6611
    %7088 = vmatpush.bf16.msra.mxu0 %v6609
    %7089 = vmatpush.bf16.msra.mxu0 %v6607
    %7090 = vmatpush.bf16.msra.mxu0 %v6605
    %7091 = vmatpush.bf16.msra.mxu0 %v6603
    %7092 = vmatmul.bf16.gmra.mxu0 %v6273
    %v7093 = vpop.f32.mrf.mxu0
    %v7094 = vadd.f32 %v7020, %v7093
    %v7095 = vpop.f32.mrf.mxu0
    %v7096 = vadd.f32 %v7022, %v7095
    %7097 = vmatmul.bf16.gmra.mxu0 %v6277
    %v7098 = vpop.f32.mrf.mxu0
    %v7099 = vadd.f32 %v7025, %v7098
    %v7100 = vpop.f32.mrf.mxu0
    %v7101 = vadd.f32 %v7027, %v7100
    %7102 = vmatmul.bf16.gmra.mxu0 %v6281
    %v7103 = vpop.f32.mrf.mxu0
    %v7104 = vadd.f32 %v7030, %v7103
    %v7105 = vpop.f32.mrf.mxu0
    %v7106 = vadd.f32 %v7032, %v7105
    %7107 = vmatmul.bf16.gmra.mxu0 %v6285
    %v7108 = vpop.f32.mrf.mxu0
    %v7109 = vadd.f32 %v7035, %v7108
    %v7110 = vpop.f32.mrf.mxu0
    %v7111 = vadd.f32 %v7037, %v7110
    %7112 = vmatmul.bf16.gmra.mxu0 %v6289
    %v7113 = vpop.f32.mrf.mxu0
    %v7114 = vadd.f32 %v7040, %v7113
    %v7115 = vpop.f32.mrf.mxu0
    %v7116 = vadd.f32 %v7042, %v7115
    %7117 = vmatmul.bf16.gmra.mxu0 %v6293
    %v7118 = vpop.f32.mrf.mxu0
    %v7119 = vadd.f32 %v7045, %v7118
    %v7120 = vpop.f32.mrf.mxu0
    %v7121 = vadd.f32 %v7047, %v7120
    %7122 = vmatmul.bf16.gmra.mxu0 %v6297
    %v7123 = vpop.f32.mrf.mxu0
    %v7124 = vadd.f32 %v7050, %v7123
    %v7125 = vpop.f32.mrf.mxu0
    %v7126 = vadd.f32 %v7052, %v7125
    %7127 = vmatmul.bf16.gmra.mxu0 %v6301
    %v7128 = vpop.f32.mrf.mxu0
    %v7129 = vadd.f32 %v7055, %v7128
    %v7130 = vpop.f32.mrf.mxu0
    %v7131 = vadd.f32 %v7057, %v7130
    %7132 = vmatmul.bf16.gmra.mxu0 %v6305
    %v7133 = vpop.f32.mrf.mxu0
    %v7134 = vadd.f32 %v7060, %v7133
    %v7135 = vpop.f32.mrf.mxu0
    %v7136 = vadd.f32 %v7062, %v7135
    %7137 = vmatmul.bf16.gmra.mxu0 %v6309
    %v7138 = vpop.f32.mrf.mxu0
    %v7139 = vadd.f32 %v7065, %v7138
    %v7140 = vpop.f32.mrf.mxu0
    %v7141 = vadd.f32 %v7067, %v7140
    %7142 = vmatmul.bf16.gmra.mxu0 %v6313
    %v7143 = vpop.f32.mrf.mxu0
    %v7144 = vadd.f32 %v7070, %v7143
    %v7145 = vpop.f32.mrf.mxu0
    %v7146 = vadd.f32 %v7072, %v7145
    %7147 = vmatmul.bf16.gmra.mxu0 %v6317
    %v7148 = vpop.f32.mrf.mxu0
    %v7149 = vadd.f32 %v7075, %v7148
    %v7150 = vpop.f32.mrf.mxu0
    %v7151 = vadd.f32 %v7077, %v7150
    %7152 = vmatmul.bf16.gmra.mxu0 %v6321
    %v7153 = vpop.f32.mrf.mxu0
    %v7154 = vadd.f32 %v7080, %v7153
    %v7155 = vpop.f32.mrf.mxu0
    %v7156 = vadd.f32 %v7082, %v7155
    %7157 = vdwg.mxu0
    %7158 = vmatpush.bf16.msra.mxu0 %v6633
    %7159 = vmatpush.bf16.msra.mxu0 %v6631
    %7160 = vmatpush.bf16.msra.mxu0 %v6629
    %7161 = vmatpush.bf16.msra.mxu0 %v6627
    %7162 = vmatpush.bf16.msra.mxu0 %v6625
    %7163 = vmatpush.bf16.msra.mxu0 %v6623
    %7164 = vmatpush.bf16.msra.mxu0 %v6621
    %7165 = vmatpush.bf16.msra.mxu0 %v6619
    %7166 = vmatmul.bf16.gmra.mxu0 %v6274
    %v7167 = vpop.f32.mrf.mxu0
    %v7168 = vadd.f32 %v7094, %v7167
    %v7169 = vpop.f32.mrf.mxu0
    %v7170 = vadd.f32 %v7096, %v7169
    %7171 = vmatmul.bf16.gmra.mxu0 %v6278
    %v7172 = vpop.f32.mrf.mxu0
    %v7173 = vadd.f32 %v7099, %v7172
    %v7174 = vpop.f32.mrf.mxu0
    %v7175 = vadd.f32 %v7101, %v7174
    %7176 = vmatmul.bf16.gmra.mxu0 %v6282
    %v7177 = vpop.f32.mrf.mxu0
    %v7178 = vadd.f32 %v7104, %v7177
    %v7179 = vpop.f32.mrf.mxu0
    %v7180 = vadd.f32 %v7106, %v7179
    %7181 = vmatmul.bf16.gmra.mxu0 %v6286
    %v7182 = vpop.f32.mrf.mxu0
    %v7183 = vadd.f32 %v7109, %v7182
    %v7184 = vpop.f32.mrf.mxu0
    %v7185 = vadd.f32 %v7111, %v7184
    %7186 = vmatmul.bf16.gmra.mxu0 %v6290
    %v7187 = vpop.f32.mrf.mxu0
    %v7188 = vadd.f32 %v7114, %v7187
    %v7189 = vpop.f32.mrf.mxu0
    %v7190 = vadd.f32 %v7116, %v7189
    %7191 = vmatmul.bf16.gmra.mxu0 %v6294
    %v7192 = vpop.f32.mrf.mxu0
    %v7193 = vadd.f32 %v7119, %v7192
    %v7194 = vpop.f32.mrf.mxu0
    %v7195 = vadd.f32 %v7121, %v7194
    %7196 = vmatmul.bf16.gmra.mxu0 %v6298
    %v7197 = vpop.f32.mrf.mxu0
    %v7198 = vadd.f32 %v7124, %v7197
    %v7199 = vpop.f32.mrf.mxu0
    %v7200 = vadd.f32 %v7126, %v7199
    %7201 = vmatmul.bf16.gmra.mxu0 %v6302
    %v7202 = vpop.f32.mrf.mxu0
    %v7203 = vadd.f32 %v7129, %v7202
    %v7204 = vpop.f32.mrf.mxu0
    %v7205 = vadd.f32 %v7131, %v7204
    %7206 = vmatmul.bf16.gmra.mxu0 %v6306
    %v7207 = vpop.f32.mrf.mxu0
    %v7208 = vadd.f32 %v7134, %v7207
    %v7209 = vpop.f32.mrf.mxu0
    %v7210 = vadd.f32 %v7136, %v7209
    %7211 = vmatmul.bf16.gmra.mxu0 %v6310
    %v7212 = vpop.f32.mrf.mxu0
    %v7213 = vadd.f32 %v7139, %v7212
    %v7214 = vpop.f32.mrf.mxu0
    %v7215 = vadd.f32 %v7141, %v7214
    %7216 = vmatmul.bf16.gmra.mxu0 %v6314
    %v7217 = vpop.f32.mrf.mxu0
    %v7218 = vadd.f32 %v7144, %v7217
    %v7219 = vpop.f32.mrf.mxu0
    %v7220 = vadd.f32 %v7146, %v7219
    %7221 = vmatmul.bf16.gmra.mxu0 %v6318
    %v7222 = vpop.f32.mrf.mxu0
    %v7223 = vadd.f32 %v7149, %v7222
    %v7224 = vpop.f32.mrf.mxu0
    %v7225 = vadd.f32 %v7151, %v7224
    %7226 = vmatmul.bf16.gmra.mxu0 %v6322
    %v7227 = vpop.f32.mrf.mxu0
    %v7228 = vadd.f32 %v7154, %v7227
    %v7229 = vpop.f32.mrf.mxu0
    %v7230 = vadd.f32 %v7156, %v7229
    %7231 = vdwg.mxu0
    %7232 = vmatpush.bf16.msra.mxu0 %v6649
    %7233 = vmatpush.bf16.msra.mxu0 %v6647
    %7234 = vmatpush.bf16.msra.mxu0 %v6645
    %7235 = vmatpush.bf16.msra.mxu0 %v6643
    %7236 = vmatpush.bf16.msra.mxu0 %v6641
    %7237 = vmatpush.bf16.msra.mxu0 %v6639
    %7238 = vmatpush.bf16.msra.mxu0 %v6637
    %7239 = vmatpush.bf16.msra.mxu0 %v6635
    %7240 = vmatmul.bf16.gmra.mxu0 %v6275
    %v7241 = vpop.f32.mrf.mxu0
    %v7242 = vadd.f32 %v7168, %v7241
    %v7243 = vpop.f32.mrf.mxu0
    %v7244 = vadd.f32 %v7170, %v7243
    %7245 = vmatmul.bf16.gmra.mxu0 %v6279
    %v7246 = vpop.f32.mrf.mxu0
    %v7247 = vadd.f32 %v7173, %v7246
    %v7248 = vpop.f32.mrf.mxu0
    %v7249 = vadd.f32 %v7175, %v7248
    %7250 = vmatmul.bf16.gmra.mxu0 %v6283
    %v7251 = vpop.f32.mrf.mxu0
    %v7252 = vadd.f32 %v7178, %v7251
    %v7253 = vpop.f32.mrf.mxu0
    %v7254 = vadd.f32 %v7180, %v7253
    %7255 = vmatmul.bf16.gmra.mxu0 %v6287
    %v7256 = vpop.f32.mrf.mxu0
    %v7257 = vadd.f32 %v7183, %v7256
    %v7258 = vpop.f32.mrf.mxu0
    %v7259 = vadd.f32 %v7185, %v7258
    %7260 = vmatmul.bf16.gmra.mxu0 %v6291
    %v7261 = vpop.f32.mrf.mxu0
    %v7262 = vadd.f32 %v7188, %v7261
    %v7263 = vpop.f32.mrf.mxu0
    %v7264 = vadd.f32 %v7190, %v7263
    %7265 = vmatmul.bf16.gmra.mxu0 %v6295
    %v7266 = vpop.f32.mrf.mxu0
    %v7267 = vadd.f32 %v7193, %v7266
    %v7268 = vpop.f32.mrf.mxu0
    %v7269 = vadd.f32 %v7195, %v7268
    %7270 = vmatmul.bf16.gmra.mxu0 %v6299
    %v7271 = vpop.f32.mrf.mxu0
    %v7272 = vadd.f32 %v7198, %v7271
    %v7273 = vpop.f32.mrf.mxu0
    %v7274 = vadd.f32 %v7200, %v7273
    %7275 = vmatmul.bf16.gmra.mxu0 %v6303
    %v7276 = vpop.f32.mrf.mxu0
    %v7277 = vadd.f32 %v7203, %v7276
    %v7278 = vpop.f32.mrf.mxu0
    %v7279 = vadd.f32 %v7205, %v7278
    %7280 = vmatmul.bf16.gmra.mxu0 %v6307
    %v7281 = vpop.f32.mrf.mxu0
    %v7282 = vadd.f32 %v7208, %v7281
    %v7283 = vpop.f32.mrf.mxu0
    %v7284 = vadd.f32 %v7210, %v7283
    %7285 = vmatmul.bf16.gmra.mxu0 %v6311
    %v7286 = vpop.f32.mrf.mxu0
    %v7287 = vadd.f32 %v7213, %v7286
    %v7288 = vpop.f32.mrf.mxu0
    %v7289 = vadd.f32 %v7215, %v7288
    %7290 = vmatmul.bf16.gmra.mxu0 %v6315
    %v7291 = vpop.f32.mrf.mxu0
    %v7292 = vadd.f32 %v7218, %v7291
    %v7293 = vpop.f32.mrf.mxu0
    %v7294 = vadd.f32 %v7220, %v7293
    %7295 = vmatmul.bf16.gmra.mxu0 %v6319
    %v7296 = vpop.f32.mrf.mxu0
    %v7297 = vadd.f32 %v7223, %v7296
    %v7298 = vpop.f32.mrf.mxu0
    %v7299 = vadd.f32 %v7225, %v7298
    %7300 = vmatmul.bf16.gmra.mxu0 %v6323
    %v7301 = vpop.f32.mrf.mxu0
    %v7302 = vadd.f32 %v7228, %v7301
    %v7303 = vpop.f32.mrf.mxu0
    %v7304 = vadd.f32 %v7230, %v7303
    %7305 = vdwg.mxu0
    %v7306 = vmax.f32 %v6946, 0.0
    %v7307 = vmax.f32 %v7242, 0.0
    %v7308 = vmax.f32 %v6948, 0.0
    %v7309 = vmax.f32 %v7244, 0.0
    %v7310 = vmax.f32 %v6951, 0.0
    %v7311 = vmax.f32 %v7247, 0.0
    %v7312 = vmax.f32 %v6953, 0.0
    %v7313 = vmax.f32 %v7249, 0.0
    %v7314 = vmax.f32 %v6956, 0.0
    %v7315 = vmax.f32 %v7252, 0.0
    %v7316 = vmax.f32 %v6958, 0.0
    %v7317 = vmax.f32 %v7254, 0.0
    %v7318 = vmax.f32 %v6961, 0.0
    %v7319 = vmax.f32 %v7257, 0.0
    %v7320 = vmax.f32 %v6963, 0.0
    %v7321 = vmax.f32 %v7259, 0.0
    %v7322 = vmax.f32 %v6966, 0.0
    %v7323 = vmax.f32 %v7262, 0.0
    %v7324 = vmax.f32 %v6968, 0.0
    %v7325 = vmax.f32 %v7264, 0.0
    %v7326 = vmax.f32 %v6971, 0.0
    %v7327 = vmax.f32 %v7267, 0.0
    %v7328 = vmax.f32 %v6973, 0.0
    %v7329 = vmax.f32 %v7269, 0.0
    %v7330 = vmax.f32 %v6976, 0.0
    %v7331 = vmax.f32 %v7272, 0.0
    %v7332 = vmax.f32 %v6978, 0.0
    %v7333 = vmax.f32 %v7274, 0.0
    %v7334 = vmax.f32 %v6981, 0.0
    %v7335 = vmax.f32 %v7277, 0.0
    %v7336 = vmax.f32 %v6983, 0.0
    %v7337 = vmax.f32 %v7279, 0.0
    %v7338 = vmax.f32 %v6986, 0.0
    %v7339 = vmax.f32 %v7282, 0.0
    %v7340 = vmax.f32 %v6988, 0.0
    %v7341 = vmax.f32 %v7284, 0.0
    %v7342 = vmax.f32 %v6991, 0.0
    %v7343 = vmax.f32 %v7287, 0.0
    %v7344 = vmax.f32 %v6993, 0.0
    %v7345 = vmax.f32 %v7289, 0.0
    %v7346 = vmax.f32 %v6996, 0.0
    %v7347 = vmax.f32 %v7292, 0.0
    %v7348 = vmax.f32 %v6998, 0.0
    %v7349 = vmax.f32 %v7294, 0.0
    %v7350 = vmax.f32 %v7001, 0.0
    %v7351 = vmax.f32 %v7297, 0.0
    %v7352 = vmax.f32 %v7003, 0.0
    %v7353 = vmax.f32 %v7299, 0.0
    %v7354 = vmax.f32 %v7006, 0.0
    %v7355 = vmax.f32 %v7302, 0.0
    %v7356 = vmax.f32 %v7008, 0.0
    %v7357 = vmax.f32 %v7304, 0.0
    %v7358 = vpack.c.bf16 %v7308, %v7306
    %v7359 = vpack.c.bf16 %v7309, %v7307
    %v7360 = vpack.c.bf16 %v7312, %v7310
    %v7361 = vpack.c.bf16 %v7313, %v7311
    %v7362 = vpack.c.bf16 %v7316, %v7314
    %v7363 = vpack.c.bf16 %v7317, %v7315
    %v7364 = vpack.c.bf16 %v7320, %v7318
    %v7365 = vpack.c.bf16 %v7321, %v7319
    %v7366 = vpack.c.bf16 %v7324, %v7322
    %v7367 = vpack.c.bf16 %v7325, %v7323
    %v7368 = vpack.c.bf16 %v7328, %v7326
    %v7369 = vpack.c.bf16 %v7329, %v7327
    %v7370 = vpack.c.bf16 %v7332, %v7330
    %v7371 = vpack.c.bf16 %v7333, %v7331
    %v7372 = vpack.c.bf16 %v7336, %v7334
    %v7373 = vpack.c.bf16 %v7337, %v7335
    %v7374 = vpack.c.bf16 %v7340, %v7338
    %v7375 = vpack.c.bf16 %v7341, %v7339
    %v7376 = vpack.c.bf16 %v7344, %v7342
    %v7377 = vpack.c.bf16 %v7345, %v7343
    %v7378 = vpack.c.bf16 %v7348, %v7346
    %v7379 = vpack.c.bf16 %v7349, %v7347
    %v7380 = vpack.c.bf16 %v7352, %v7350
    %v7381 = vpack.c.bf16 %v7353, %v7351
    %v7382 = vpack.c.bf16 %v7356, %v7354
    %v7383 = vpack.c.bf16 %v7357, %v7355
    %v7384 = vld [vmem:[%s9] sm:$0xf]
    %v7385 = vld [vmem:[%s9 + $0x4] sm:$0xf]
    %v7386 = vld [vmem:[%s9 + $0x8] sm:$0xf]
    %v7387 = vld [vmem:[%s9 + $0xc] sm:$0xf]
    %v7388 = vld [vmem:[%s9 + $0x10] sm:$0xf]
    %v7389 = vld [vmem:[%s9 + $0x14] sm:$0xf]
    %v7390 = vld [vmem:[%s9 + $0x18] sm:$0xf]
    %v7391 = vld [vmem:[%s9 + $0x1c] sm:$0xf]
    %v7392 = vld [vmem:[%s9 + $0x20] sm:$0xf]
    %v7393 = vld [vmem:[%s9 + $0x24] sm:$0xf]
    %v7394 = vld [vmem:[%s9 + $0x28] sm:$0xf]
    %v7395 = vld [vmem:[%s9 + $0x2c] sm:$0xf]
    %v7396 = vld [vmem:[%s9 + $0x30] sm:$0xf]
    %v7397 = vld [vmem:[%s9 + $0x34] sm:$0xf]
    %v7398 = vld [vmem:[%s9 + $0x38] sm:$0xf]
    %v7399 = vld [vmem:[%s9 + $0x3c] sm:$0xf]
    %v7400 = vld [vmem:[%s9 + $0x40] sm:$0xf]
    %v7401 = vld [vmem:[%s9 + $0x44] sm:$0xf]
    %v7402 = vld [vmem:[%s9 + $0x48] sm:$0xf]
    %v7403 = vld [vmem:[%s9 + $0x4c] sm:$0xf]
    %v7404 = vld [vmem:[%s9 + $0x50] sm:$0xf]
    %v7405 = vld [vmem:[%s9 + $0x54] sm:$0xf]
    %v7406 = vld [vmem:[%s9 + $0x58] sm:$0xf]
    %v7407 = vld [vmem:[%s9 + $0x5c] sm:$0xf]
    %v7408 = vld [vmem:[%s9 + $0x60] sm:$0xf]
    %v7409 = vld [vmem:[%s9 + $0x64] sm:$0xf]
    %v7410 = vld [vmem:[%s9 + $0x68] sm:$0xf]
    %v7411 = vld [vmem:[%s9 + $0x6c] sm:$0xf]
    %v7412 = vld [vmem:[%s9 + $0x70] sm:$0xf]
    %v7413 = vld [vmem:[%s9 + $0x74] sm:$0xf]
    %v7414 = vld [vmem:[%s9 + $0x78] sm:$0xf]
    %v7415 = vld [vmem:[%s9 + $0x7c] sm:$0xf]
    %v7416 = vld [vmem:[%s10] sm:$0x1]
    %v7418 = vperm.slane %v7416, 0
    %v7452 = vunpack.c.l.b16 %v7384
    %v7453 = vunpack.c.l.b16 %v7385
    %v7454 = vunpack.c.l.b16 %v7386
    %v7455 = vunpack.c.l.b16 %v7387
    %v7456 = vunpack.c.l.b16 %v7388
    %v7457 = vunpack.c.l.b16 %v7389
    %v7458 = vunpack.c.l.b16 %v7390
    %v7459 = vunpack.c.l.b16 %v7391
    %v7460 = vunpack.c.l.b16 %v7392
    %v7461 = vunpack.c.l.b16 %v7393
    %v7462 = vunpack.c.l.b16 %v7394
    %v7463 = vunpack.c.l.b16 %v7395
    %v7464 = vunpack.c.l.b16 %v7396
    %v7465 = vunpack.c.l.b16 %v7397
    %v7466 = vunpack.c.l.b16 %v7398
    %v7467 = vunpack.c.l.b16 %v7399
    %v7468 = vunpack.c.l.b16 %v7400
    %v7469 = vunpack.c.l.b16 %v7401
    %v7470 = vunpack.c.l.b16 %v7402
    %v7471 = vunpack.c.l.b16 %v7403
    %v7472 = vunpack.c.l.b16 %v7404
    %v7473 = vunpack.c.l.b16 %v7405
    %v7474 = vunpack.c.l.b16 %v7406
    %v7475 = vunpack.c.l.b16 %v7407
    %v7476 = vunpack.c.l.b16 %v7408
    %v7477 = vunpack.c.l.b16 %v7409
    %v7478 = vunpack.c.l.b16 %v7410
    %v7479 = vunpack.c.l.b16 %v7411
    %v7480 = vunpack.c.l.b16 %v7412
    %v7481 = vunpack.c.l.b16 %v7413
    %v7482 = vunpack.c.l.b16 %v7414
    %v7483 = vunpack.c.l.b16 %v7415
    %v7484 = vpack.c.b16 %v7453, %v7452
    %v7485 = vpack.c.b16 %v7455, %v7454
    %v7486 = vpack.c.b16 %v7457, %v7456
    %v7487 = vpack.c.b16 %v7459, %v7458
    %v7488 = vpack.c.b16 %v7461, %v7460
    %v7489 = vpack.c.b16 %v7463, %v7462
    %v7490 = vpack.c.b16 %v7465, %v7464
    %v7491 = vpack.c.b16 %v7467, %v7466
    %v7492 = vpack.c.b16 %v7469, %v7468
    %v7493 = vpack.c.b16 %v7471, %v7470
    %v7494 = vpack.c.b16 %v7473, %v7472
    %v7495 = vpack.c.b16 %v7475, %v7474
    %v7496 = vpack.c.b16 %v7477, %v7476
    %v7497 = vpack.c.b16 %v7479, %v7478
    %v7498 = vpack.c.b16 %v7481, %v7480
    %v7499 = vpack.c.b16 %v7483, %v7482
    %7516 = vmatpush.bf16.msra.mxu0 %v7491
    %7517 = vmatpush.bf16.msra.mxu0 %v7490
    %7518 = vmatpush.bf16.msra.mxu0 %v7489
    %7519 = vmatpush.bf16.msra.mxu0 %v7488
    %7520 = vmatpush.bf16.msra.mxu0 %v7487
    %7521 = vmatpush.bf16.msra.mxu0 %v7486
    %7522 = vmatpush.bf16.msra.mxu0 %v7485
    %7523 = vmatpush.bf16.msra.mxu0 %v7484
    %7524 = vmatmul.bf16.gmra.mxu0 %v7358
    %v7525 = vpop.f32.mrf.mxu0
    %v7526 = vadd.f32 %v7418, %v7525
    %v7527 = vpop.f32.mrf.mxu0
    %v7528 = vadd.f32 %v7418, %v7527
    %7529 = vmatmul.bf16.gmra.mxu0 %v7360
    %v7530 = vpop.f32.mrf.mxu0
    %v7531 = vadd.f32 %v7418, %v7530
    %v7532 = vpop.f32.mrf.mxu0
    %v7533 = vadd.f32 %v7418, %v7532
    %7534 = vmatmul.bf16.gmra.mxu0 %v7362
    %v7535 = vpop.f32.mrf.mxu0
    %v7536 = vadd.f32 %v7418, %v7535
    %v7537 = vpop.f32.mrf.mxu0
    %v7538 = vadd.f32 %v7418, %v7537
    %7539 = vmatmul.bf16.gmra.mxu0 %v7364
    %v7540 = vpop.f32.mrf.mxu0
    %v7541 = vadd.f32 %v7418, %v7540
    %v7542 = vpop.f32.mrf.mxu0
    %v7543 = vadd.f32 %v7418, %v7542
    %7544 = vmatmul.bf16.gmra.mxu0 %v7366
    %v7545 = vpop.f32.mrf.mxu0
    %v7546 = vadd.f32 %v7418, %v7545
    %v7547 = vpop.f32.mrf.mxu0
    %v7548 = vadd.f32 %v7418, %v7547
    %7549 = vmatmul.bf16.gmra.mxu0 %v7368
    %v7550 = vpop.f32.mrf.mxu0
    %v7551 = vadd.f32 %v7418, %v7550
    %v7552 = vpop.f32.mrf.mxu0
    %v7553 = vadd.f32 %v7418, %v7552
    %7554 = vmatmul.bf16.gmra.mxu0 %v7370
    %v7555 = vpop.f32.mrf.mxu0
    %v7556 = vadd.f32 %v7418, %v7555
    %v7557 = vpop.f32.mrf.mxu0
    %v7558 = vadd.f32 %v7418, %v7557
    %7559 = vmatmul.bf16.gmra.mxu0 %v7372
    %v7560 = vpop.f32.mrf.mxu0
    %v7561 = vadd.f32 %v7418, %v7560
    %v7562 = vpop.f32.mrf.mxu0
    %v7563 = vadd.f32 %v7418, %v7562
    %7564 = vmatmul.bf16.gmra.mxu0 %v7374
    %v7565 = vpop.f32.mrf.mxu0
    %v7566 = vadd.f32 %v7418, %v7565
    %v7567 = vpop.f32.mrf.mxu0
    %v7568 = vadd.f32 %v7418, %v7567
    %7569 = vmatmul.bf16.gmra.mxu0 %v7376
    %v7570 = vpop.f32.mrf.mxu0
    %v7571 = vadd.f32 %v7418, %v7570
    %v7572 = vpop.f32.mrf.mxu0
    %v7573 = vadd.f32 %v7418, %v7572
    %7574 = vmatmul.bf16.gmra.mxu0 %v7378
    %v7575 = vpop.f32.mrf.mxu0
    %v7576 = vadd.f32 %v7418, %v7575
    %v7577 = vpop.f32.mrf.mxu0
    %v7578 = vadd.f32 %v7418, %v7577
    %7579 = vmatmul.bf16.gmra.mxu0 %v7380
    %v7580 = vpop.f32.mrf.mxu0
    %v7581 = vadd.f32 %v7418, %v7580
    %v7582 = vpop.f32.mrf.mxu0
    %v7583 = vadd.f32 %v7418, %v7582
    %7584 = vmatmul.bf16.gmra.mxu0 %v7382
    %v7585 = vpop.f32.mrf.mxu0
    %v7586 = vadd.f32 %v7418, %v7585
    %v7587 = vpop.f32.mrf.mxu0
    %v7588 = vadd.f32 %v7418, %v7587
    %7589 = vdwg.mxu0
    %7590 = vmatpush.bf16.msra.mxu0 %v7499
    %7591 = vmatpush.bf16.msra.mxu0 %v7498
    %7592 = vmatpush.bf16.msra.mxu0 %v7497
    %7593 = vmatpush.bf16.msra.mxu0 %v7496
    %7594 = vmatpush.bf16.msra.mxu0 %v7495
    %7595 = vmatpush.bf16.msra.mxu0 %v7494
    %7596 = vmatpush.bf16.msra.mxu0 %v7493
    %7597 = vmatpush.bf16.msra.mxu0 %v7492
    %7598 = vmatmul.bf16.gmra.mxu0 %v7359
    %v7599 = vpop.f32.mrf.mxu0
    %v7600 = vadd.f32 %v7526, %v7599
    %v7601 = vpop.f32.mrf.mxu0
    %v7602 = vadd.f32 %v7528, %v7601
    %7603 = vmatmul.bf16.gmra.mxu0 %v7361
    %v7604 = vpop.f32.mrf.mxu0
    %v7605 = vadd.f32 %v7531, %v7604
    %v7606 = vpop.f32.mrf.mxu0
    %v7607 = vadd.f32 %v7533, %v7606
    %7608 = vmatmul.bf16.gmra.mxu0 %v7363
    %v7609 = vpop.f32.mrf.mxu0
    %v7610 = vadd.f32 %v7536, %v7609
    %v7611 = vpop.f32.mrf.mxu0
    %v7612 = vadd.f32 %v7538, %v7611
    %7613 = vmatmul.bf16.gmra.mxu0 %v7365
    %v7614 = vpop.f32.mrf.mxu0
    %v7615 = vadd.f32 %v7541, %v7614
    %v7616 = vpop.f32.mrf.mxu0
    %v7617 = vadd.f32 %v7543, %v7616
    %7618 = vmatmul.bf16.gmra.mxu0 %v7367
    %v7619 = vpop.f32.mrf.mxu0
    %v7620 = vadd.f32 %v7546, %v7619
    %v7621 = vpop.f32.mrf.mxu0
    %v7622 = vadd.f32 %v7548, %v7621
    %7623 = vmatmul.bf16.gmra.mxu0 %v7369
    %v7624 = vpop.f32.mrf.mxu0
    %v7625 = vadd.f32 %v7551, %v7624
    %v7626 = vpop.f32.mrf.mxu0
    %v7627 = vadd.f32 %v7553, %v7626
    %7628 = vmatmul.bf16.gmra.mxu0 %v7371
    %v7629 = vpop.f32.mrf.mxu0
    %v7630 = vadd.f32 %v7556, %v7629
    %v7631 = vpop.f32.mrf.mxu0
    %v7632 = vadd.f32 %v7558, %v7631
    %7633 = vmatmul.bf16.gmra.mxu0 %v7373
    %v7634 = vpop.f32.mrf.mxu0
    %v7635 = vadd.f32 %v7561, %v7634
    %v7636 = vpop.f32.mrf.mxu0
    %v7637 = vadd.f32 %v7563, %v7636
    %7638 = vmatmul.bf16.gmra.mxu0 %v7375
    %v7639 = vpop.f32.mrf.mxu0
    %v7640 = vadd.f32 %v7566, %v7639
    %v7641 = vpop.f32.mrf.mxu0
    %v7642 = vadd.f32 %v7568, %v7641
    %7643 = vmatmul.bf16.gmra.mxu0 %v7377
    %v7644 = vpop.f32.mrf.mxu0
    %v7645 = vadd.f32 %v7571, %v7644
    %v7646 = vpop.f32.mrf.mxu0
    %v7647 = vadd.f32 %v7573, %v7646
    %7648 = vmatmul.bf16.gmra.mxu0 %v7379
    %v7649 = vpop.f32.mrf.mxu0
    %v7650 = vadd.f32 %v7576, %v7649
    %v7651 = vpop.f32.mrf.mxu0
    %v7652 = vadd.f32 %v7578, %v7651
    %7653 = vmatmul.bf16.gmra.mxu0 %v7381
    %v7654 = vpop.f32.mrf.mxu0
    %v7655 = vadd.f32 %v7581, %v7654
    %v7656 = vpop.f32.mrf.mxu0
    %v7657 = vadd.f32 %v7583, %v7656
    %7658 = vmatmul.bf16.gmra.mxu0 %v7383
    %v7659 = vpop.f32.mrf.mxu0
    %v7660 = vadd.f32 %v7586, %v7659
    %v7661 = vpop.f32.mrf.mxu0
    %v7662 = vadd.f32 %v7588, %v7661
    %7663 = vdwg.mxu0
    %v7664 = vsub.f32 0.0, %v7600
    %v7665 = vsub.f32 0.0, %v7602
    %v7666 = vsub.f32 0.0, %v7605
    %v7667 = vsub.f32 0.0, %v7607
    %v7668 = vsub.f32 0.0, %v7610
    %v7669 = vsub.f32 0.0, %v7612
    %v7670 = vsub.f32 0.0, %v7615
    %v7671 = vsub.f32 0.0, %v7617
    %v7672 = vsub.f32 0.0, %v7620
    %v7673 = vsub.f32 0.0, %v7622
    %v7674 = vsub.f32 0.0, %v7625
    %v7675 = vsub.f32 0.0, %v7627
    %v7676 = vsub.f32 0.0, %v7630
    %v7677 = vsub.f32 0.0, %v7632
    %v7678 = vsub.f32 0.0, %v7635
    %v7679 = vsub.f32 0.0, %v7637
    %v7680 = vsub.f32 0.0, %v7640
    %v7681 = vsub.f32 0.0, %v7642
    %v7682 = vsub.f32 0.0, %v7645
    %v7683 = vsub.f32 0.0, %v7647
    %v7684 = vsub.f32 0.0, %v7650
    %v7685 = vsub.f32 0.0, %v7652
    %v7686 = vsub.f32 0.0, %v7655
    %v7687 = vsub.f32 0.0, %v7657
    %v7688 = vsub.f32 0.0, %v7660
    %v7689 = vsub.f32 0.0, %v7662
    %v7690 = vmul.f32 %v7664, 1.442695
    %v7691 = vpow.pop %v7690
    %v7692 = vmul.f32 %v7665, 1.442695
    %v7693 = vpow.pop %v7692
    %v7694 = vmul.f32 %v7666, 1.442695
    %v7695 = vpow.pop %v7694
    %v7696 = vmul.f32 %v7667, 1.442695
    %v7697 = vpow.pop %v7696
    %v7698 = vmul.f32 %v7668, 1.442695
    %v7699 = vpow.pop %v7698
    %v7700 = vmul.f32 %v7669, 1.442695
    %v7701 = vpow.pop %v7700
    %v7702 = vmul.f32 %v7670, 1.442695
    %v7703 = vpow.pop %v7702
    %v7704 = vmul.f32 %v7671, 1.442695
    %v7705 = vpow.pop %v7704
    %v7706 = vmul.f32 %v7672, 1.442695
    %v7707 = vpow.pop %v7706
    %v7708 = vmul.f32 %v7673, 1.442695
    %v7709 = vpow.pop %v7708
    %v7710 = vmul.f32 %v7674, 1.442695
    %v7711 = vpow.pop %v7710
    %v7712 = vmul.f32 %v7675, 1.442695
    %v7713 = vpow.pop %v7712
    %v7714 = vmul.f32 %v7676, 1.442695
    %v7715 = vpow.pop %v7714
    %v7716 = vmul.f32 %v7677, 1.442695
    %v7717 = vpow.pop %v7716
    %v7718 = vmul.f32 %v7678, 1.442695
    %v7719 = vpow.pop %v7718
    %v7720 = vmul.f32 %v7679, 1.442695
    %v7721 = vpow.pop %v7720
    %v7722 = vmul.f32 %v7680, 1.442695
    %v7723 = vpow.pop %v7722
    %v7724 = vmul.f32 %v7681, 1.442695
    %v7725 = vpow.pop %v7724
    %v7726 = vmul.f32 %v7682, 1.442695
    %v7727 = vpow.pop %v7726
    %v7728 = vmul.f32 %v7683, 1.442695
    %v7729 = vpow.pop %v7728
    %v7730 = vmul.f32 %v7684, 1.442695
    %v7731 = vpow.pop %v7730
    %v7732 = vmul.f32 %v7685, 1.442695
    %v7733 = vpow.pop %v7732
    %v7734 = vmul.f32 %v7686, 1.442695
    %v7735 = vpow.pop %v7734
    %v7736 = vmul.f32 %v7687, 1.442695
    %v7737 = vpow.pop %v7736
    %v7738 = vmul.f32 %v7688, 1.442695
    %v7739 = vpow.pop %v7738
    %v7740 = vmul.f32 %v7689, 1.442695
    %v7741 = vpow.pop %v7740
    %v7742 = vadd.f32 %v7691, 1.0
    %v7743 = vadd.f32 %v7693, 1.0
    %v7744 = vadd.f32 %v7695, 1.0
    %v7745 = vadd.f32 %v7697, 1.0
    %v7746 = vadd.f32 %v7699, 1.0
    %v7747 = vadd.f32 %v7701, 1.0
    %v7748 = vadd.f32 %v7703, 1.0
    %v7749 = vadd.f32 %v7705, 1.0
    %v7750 = vadd.f32 %v7707, 1.0
    %v7751 = vadd.f32 %v7709, 1.0
    %v7752 = vadd.f32 %v7711, 1.0
    %v7753 = vadd.f32 %v7713, 1.0
    %v7754 = vadd.f32 %v7715, 1.0
    %v7755 = vadd.f32 %v7717, 1.0
    %v7756 = vadd.f32 %v7719, 1.0
    %v7757 = vadd.f32 %v7721, 1.0
    %v7758 = vadd.f32 %v7723, 1.0
    %v7759 = vadd.f32 %v7725, 1.0
    %v7760 = vadd.f32 %v7727, 1.0
    %v7761 = vadd.f32 %v7729, 1.0
    %v7762 = vadd.f32 %v7731, 1.0
    %v7763 = vadd.f32 %v7733, 1.0
    %v7764 = vadd.f32 %v7735, 1.0
    %v7765 = vadd.f32 %v7737, 1.0
    %v7766 = vadd.f32 %v7739, 1.0
    %v7767 = vadd.f32 %v7741, 1.0
    %v7768 = vrcp.pop %v7742
    %v7769 = vrcp.pop %v7743
    %v7770 = vrcp.pop %v7744
    %v7771 = vrcp.pop %v7745
    %v7772 = vrcp.pop %v7746
    %v7773 = vrcp.pop %v7747
    %v7774 = vrcp.pop %v7748
    %v7775 = vrcp.pop %v7749
    %v7776 = vrcp.pop %v7750
    %v7777 = vrcp.pop %v7751
    %v7778 = vrcp.pop %v7752
    %v7779 = vrcp.pop %v7753
    %v7780 = vrcp.pop %v7754
    %v7781 = vrcp.pop %v7755
    %v7782 = vrcp.pop %v7756
    %v7783 = vrcp.pop %v7757
    %v7784 = vrcp.pop %v7758
    %v7785 = vrcp.pop %v7759
    %v7786 = vrcp.pop %v7760
    %v7787 = vrcp.pop %v7761
    %v7788 = vrcp.pop %v7762
    %v7789 = vrcp.pop %v7763
    %v7790 = vrcp.pop %v7764
    %v7791 = vrcp.pop %v7765
    %v7792 = vrcp.pop %v7766
    %v7793 = vrcp.pop %v7767
    %v7794 = vmin.f32 %v7768, 1.0
    %v7795 = vmin.f32 %v7769, 1.0
    %v7796 = vmin.f32 %v7770, 1.0
    %v7797 = vmin.f32 %v7771, 1.0
    %v7798 = vmin.f32 %v7772, 1.0
    %v7799 = vmin.f32 %v7773, 1.0
    %v7800 = vmin.f32 %v7774, 1.0
    %v7801 = vmin.f32 %v7775, 1.0
    %v7802 = vmin.f32 %v7776, 1.0
    %v7803 = vmin.f32 %v7777, 1.0
    %v7804 = vmin.f32 %v7778, 1.0
    %v7805 = vmin.f32 %v7779, 1.0
    %v7806 = vmin.f32 %v7780, 1.0
    %v7807 = vmin.f32 %v7781, 1.0
    %v7808 = vmin.f32 %v7782, 1.0
    %v7809 = vmin.f32 %v7783, 1.0
    %v7810 = vmin.f32 %v7784, 1.0
    %v7811 = vmin.f32 %v7785, 1.0
    %v7812 = vmin.f32 %v7786, 1.0
    %v7813 = vmin.f32 %v7787, 1.0
    %v7814 = vmin.f32 %v7788, 1.0
    %v7815 = vmin.f32 %v7789, 1.0
    %v7816 = vmin.f32 %v7790, 1.0
    %v7817 = vmin.f32 %v7791, 1.0
    %v7818 = vmin.f32 %v7792, 1.0
    %v7819 = vmin.f32 %v7793, 1.0
    %v7820 = vpack.c.bf16 %v7794, %v7794
    %v7821 = vpack.c.bf16 %v7795, %v7795
    %v7822 = vpack.c.bf16 %v7796, %v7796
    %v7823 = vpack.c.bf16 %v7797, %v7797
    %v7824 = vpack.c.bf16 %v7798, %v7798
    %v7825 = vpack.c.bf16 %v7799, %v7799
    %v7826 = vpack.c.bf16 %v7800, %v7800
    %v7827 = vpack.c.bf16 %v7801, %v7801
    %v7828 = vpack.c.bf16 %v7802, %v7802
    %v7829 = vpack.c.bf16 %v7803, %v7803
    %v7830 = vpack.c.bf16 %v7804, %v7804
    %v7831 = vpack.c.bf16 %v7805, %v7805
    %v7832 = vpack.c.bf16 %v7806, %v7806
    %v7833 = vpack.c.bf16 %v7807, %v7807
    %v7834 = vpack.c.bf16 %v7808, %v7808
    %v7835 = vpack.c.bf16 %v7809, %v7809
    %v7836 = vpack.c.bf16 %v7810, %v7810
    %v7837 = vpack.c.bf16 %v7811, %v7811
    %v7838 = vpack.c.bf16 %v7812, %v7812
    %v7839 = vpack.c.bf16 %v7813, %v7813
    %v7840 = vpack.c.bf16 %v7814, %v7814
    %v7841 = vpack.c.bf16 %v7815, %v7815
    %v7842 = vpack.c.bf16 %v7816, %v7816
    %v7843 = vpack.c.bf16 %v7817, %v7817
    %v7844 = vpack.c.bf16 %v7818, %v7818
    %v7845 = vpack.c.bf16 %v7819, %v7819
    %7846 = vst [vmem:[#allocation7] sm:$0xf] %v7820
    %7847 = vst [vmem:[#allocation7 + $0x4] sm:$0xf] %v7821
    %7848 = vst [vmem:[#allocation7 + $0x8] sm:$0xf] %v7822
    %7849 = vst [vmem:[#allocation7 + $0xc] sm:$0xf] %v7823
    %7850 = vst [vmem:[#allocation7 + $0x10] sm:$0xf] %v7824
    %7851 = vst [vmem:[#allocation7 + $0x14] sm:$0xf] %v7825
    %7852 = vst [vmem:[#allocation7 + $0x18] sm:$0xf] %v7826
    %7853 = vst [vmem:[#allocation7 + $0x1c] sm:$0xf] %v7827
    %7854 = vst [vmem:[#allocation7 + $0x20] sm:$0xf] %v7828
    %7855 = vst [vmem:[#allocation7 + $0x24] sm:$0xf] %v7829
    %7856 = vst [vmem:[#allocation7 + $0x28] sm:$0xf] %v7830
    %7857 = vst [vmem:[#allocation7 + $0x2c] sm:$0xf] %v7831
    %7858 = vst [vmem:[#allocation7 + $0x30] sm:$0xf] %v7832
    %7859 = vst [vmem:[#allocation7 + $0x34] sm:$0xf] %v7833
    %7860 = vst [vmem:[#allocation7 + $0x38] sm:$0xf] %v7834
    %7861 = vst [vmem:[#allocation7 + $0x3c] sm:$0xf] %v7835
    %7862 = vst [vmem:[#allocation7 + $0x40] sm:$0xf] %v7836
    %7863 = vst [vmem:[#allocation7 + $0x44] sm:$0xf] %v7837
    %7864 = vst [vmem:[#allocation7 + $0x48] sm:$0xf] %v7838
    %7865 = vst [vmem:[#allocation7 + $0x4c] sm:$0xf] %v7839
    %7866 = vst [vmem:[#allocation7 + $0x50] sm:$0xf] %v7840
    %7867 = vst [vmem:[#allocation7 + $0x54] sm:$0xf] %v7841
    %7868 = vst [vmem:[#allocation7 + $0x58] sm:$0xf] %v7842
    %7869 = vst [vmem:[#allocation7 + $0x5c] sm:$0xf] %v7843
    %7870 = vst [vmem:[#allocation7 + $0x60] sm:$0xf] %v7844
    %7871 = vst [vmem:[#allocation7 + $0x64] sm:$0xf] %v7845
    // Predicated region
    $region54: #{tpu_custom_call.1} parent=1 // pred_check
      _
    $region55: #{tpu_custom_call.1} parent=1 // pred_check_branch
      %7873 = sbr.rel (0) target = $region57
    $region56: #{tpu_custom_call.1} parent=1 // pred_region
      %7875 = vsyncadd [#allocation4], 0
      %s7876 = sshll.u32 [#allocation7], 4
      %s7877 = int_to_ptr.vmem [resolvable:$true] %s7876
      %s7878 = sshll.u32 %s11, 4
      %s7879 = int_to_ptr.hbm [resolvable:$true] %s7878
      %7884 = dma.vmem_to_hbm [thread:$0]  %s7877, 1664, %s7879, [#allocation4], 64, 64, 4
    $region57: #{tpu_custom_call.1} parent=1 // pred_fallthru
      _
    // Predicated region
    $region58: #{tpu_custom_call.1} parent=1 // pred_check
      _
    $region59: #{tpu_custom_call.1} parent=1 // pred_check_branch
      %7886 = sbr.rel (0) target = $region61
    $region60: #{tpu_custom_call.1} parent=1 // pred_region
      %7888 = dma.done [#allocation4], 1664
    $region61: #{tpu_custom_call.1} parent=1 // pred_fallthru
      _
    %7889 = vsyncpa [#allocation3], 1
    %7890 = vsyncpa [#allocation6], 1
    %7891 = vsyncpa [#allocation4], 1

</llo_original>
